<compile_context>
chip_gen: v6e
topology: v6e:2x2x1
jax: 0.10.0
libtpu: 0.0.40
codegen_flags: <defaults>
</compile_context>

<pallas_src>
import math
import numpy as np

import jax
import jax.numpy as jnp
from jax import lax
from jax.experimental import pallas as pl
from jax.experimental.pallas import tpu as pltpu

VOCAB = 50
D_MODEL = 32
N_LAYERS = 2
HEADS = 4
D_K = D_MODEL // HEADS
D_FF = 64            # tutorial default is 2048; kept small per task
EPS = 1e-6
MAX_SEQ = 64
NEG_INF = -1e9


# ----------------------------- fused Pallas kernel --------------------------

def _decoder_kernel(ids_ref, enc_ref, tmask_ref, smask_ref,
                    embed_ref, pe_ref,
                    na_ref, nb_ref,
                    wq_ref, bq_ref, wk_ref, bk_ref, wv_ref, bv_ref,
                    wo_ref, bo_ref,
                    ffw1_ref, ffb1_ref, ffw2_ref, ffb2_ref,
                    fa_ref, fb_ref,
                    o_ref):
    D = D_MODEL
    f32 = jnp.float32

    # ---- Embedder + PositionalEncoder, fused (one-hot MXU gather) ----------
    ids = ids_ref[0]                                              # (St, 1) i32
    St = ids.shape[0]
    vocab_iota = lax.broadcasted_iota(jnp.int32, (St, VOCAB), 1)  # (St, VOCAB)
    onehot = (vocab_iota == ids).astype(f32)
    x = jnp.dot(onehot, embed_ref[...], preferred_element_type=f32)
    x = x * math.sqrt(D) + pe_ref[...]                            # (St, D)

    enc = enc_ref[0]                                              # (Ss, D)

    # additive masks (0 keep / -1e9 drop) built once from the 0/1 masks
    tadd = jnp.where(tmask_ref[0] == 0.0, f32(NEG_INF), f32(0.0))  # (*, St)
    sadd = jnp.where(smask_ref[0] == 0.0, f32(NEG_INF), f32(0.0))  # (*, Ss)

    def norm(v, a, b):
        # torch-style Norm: unbiased std, eps added to std (exact reciprocal)
        mean = jnp.mean(v, axis=-1, keepdims=True)
        c = v - mean
        var = jnp.sum(c * c, axis=-1, keepdims=True) * (1.0 / (D - 1))
        inv = pl.reciprocal(jnp.sqrt(var) + EPS, approx=False)
        return a * (c * inv) + b

    scale = 1.0 / math.sqrt(D_K)
    lane = lax.broadcasted_iota(jnp.int32, (1, D), 1)             # lane index

    def attention(q, k, v, add_mask):
        # Heads via lane masks: q @ (k*mask_h)^T gives head-h scores, and
        # p_h @ (v*mask_h) lands in head-h lanes -> sum == lane concat.
        out = None
        for h in range(HEADS):
            hm = ((lane >= h * D_K) & (lane < (h + 1) * D_K)).astype(f32)
            s = lax.dot_general(q, k * hm, (((1,), (1,)), ((), ())),
                                preferred_element_type=f32) * scale
            s = s + add_mask
            s = s - jnp.max(s, axis=-1, keepdims=True)            # stable softmax
            p = jnp.exp(s)
            p = p * pl.reciprocal(jnp.sum(p, axis=-1, keepdims=True), approx=True)
            oh = jnp.dot(p, v * hm, preferred_element_type=f32)   # (M, D)
            out = oh if out is None else out + oh
        return out

    def proj(v, w, b):
        return jnp.dot(v, w, preferred_element_type=f32) + b

    for l in range(N_LAYERS):
        # ---- self-attention sublayer ----
        x2 = norm(x, na_ref[l, 0], nb_ref[l, 0])
        a1 = attention(proj(x2, wq_ref[l, 0], bq_ref[l, 0]),
                       proj(x2, wk_ref[l, 0], bk_ref[l, 0]),
                       proj(x2, wv_ref[l, 0], bv_ref[l, 0]), tadd)
        x = x + proj(a1, wo_ref[l, 0], bo_ref[l, 0])

        # ---- cross-attention sublayer (Q from x2, K/V from encoder) ----
        x2 = norm(x, na_ref[l, 1], nb_ref[l, 1])
        a2 = attention(proj(x2, wq_ref[l, 1], bq_ref[l, 1]),
                       proj(enc, wk_ref[l, 1], bk_ref[l, 1]),
                       proj(enc, wv_ref[l, 1], bv_ref[l, 1]), sadd)
        x = x + proj(a2, wo_ref[l, 1], bo_ref[l, 1])

        # ---- feed-forward sublayer ----
        x2 = norm(x, na_ref[l, 2], nb_ref[l, 2])
        h1 = jnp.maximum(proj(x2, ffw1_ref[l], ffb1_ref[l]), 0.0)
        x = x + proj(h1, ffw2_ref[l], ffb2_ref[l])

    # final Norm; single store of the (St, D) slab for this batch element
    o_ref[0] = norm(x, fa_ref[...], fb_ref[...]).astype(o_ref.dtype)


# ----------------------------- parameters ----------------------------------

def make_pe(max_len, d_model):
    # replicates the tutorial PositionalEncoder table exactly (incl. its quirk)
    pe = np.zeros((max_len, d_model), dtype=np.float32)
    for pos in range(max_len):
        for i in range(0, d_model, 2):
            pe[pos, i] = math.sin(pos / (10000 ** ((2 * i) / d_model)))
            pe[pos, i + 1] = math.cos(pos / (10000 ** ((2 * (i + 1)) / d_model)))
    return pe


def init_params(key):
    ks = jax.random.split(key, 7)
    s = 0.05
    L, D = N_LAYERS, D_MODEL
    return {
        'embed': jax.random.normal(ks[0], (VOCAB, D), jnp.float32),
        'pe': jnp.asarray(make_pe(MAX_SEQ, D)),
        # layer axis first; second axis = [self-attn, cross-attn] / norm index
        'norm_a': jnp.ones((L, 3, 1, D), jnp.float32),
        'norm_b': jnp.zeros((L, 3, 1, D), jnp.float32),
        'wq': jax.random.normal(ks[1], (L, 2, D, D), jnp.float32) * s,
        'wk': jax.random.normal(ks[2], (L, 2, D, D), jnp.float32) * s,
        'wv': jax.random.normal(ks[3], (L, 2, D, D), jnp.float32) * s,
        'bq': jnp.zeros((L, 2, 1, D), jnp.float32),
        'bk': jnp.zeros((L, 2, 1, D), jnp.float32),
        'bv': jnp.zeros((L, 2, 1, D), jnp.float32),
        'wo': jax.random.normal(ks[4], (L, 2, D, D), jnp.float32) * s,
        'bo': jnp.zeros((L, 2, 1, D), jnp.float32),
        'ff_w1': jax.random.normal(ks[5], (L, D, D_FF), jnp.float32) * s,
        'ff_b1': jnp.zeros((L, 1, D_FF), jnp.float32),
        'ff_w2': jax.random.normal(ks[6], (L, D_FF, D), jnp.float32) * s,
        'ff_b2': jnp.zeros((L, 1, D), jnp.float32),
        'final_a': jnp.ones((1, D), jnp.float32),
        'final_b': jnp.zeros((1, D), jnp.float32),
    }


# ----------------------------- forward pass ---------------------------------

def decoder_forward(params, trg, e_outputs, src_mask, trg_mask):
    B, St = trg.shape
    Ss = e_outputs.shape[1]
    D = D_MODEL

    ids = trg.astype(jnp.int32).reshape(B, St, 1)
    tmask = trg_mask.astype(jnp.float32)          # (B, Tm, St), Tm in {1, St}
    smask = src_mask.astype(jnp.float32)          # (B, Sm, Ss), Sm in {1, St}
    Tm, Sm = tmask.shape[1], smask.shape[1]
    pe = params['pe'][:St]

    def full_spec(arr):
        nd = arr.ndim
        return pl.BlockSpec(tuple(arr.shape), lambda b: (0,) * nd)

    in_specs = [
        pl.BlockSpec((1, St, 1), lambda b: (b, 0, 0)),   # token ids
        pl.BlockSpec((1, Ss, D), lambda b: (b, 0, 0)),   # encoder outputs
        pl.BlockSpec((1, Tm, St), lambda b: (b, 0, 0)),  # trg mask (0/1)
        pl.BlockSpec((1, Sm, Ss), lambda b: (b, 0, 0)),  # src mask (0/1)
        full_spec(params['embed']), full_spec(pe),
        full_spec(params['norm_a']), full_spec(params['norm_b']),
        full_spec(params['wq']), full_spec(params['bq']),
        full_spec(params['wk']), full_spec(params['bk']),
        full_spec(params['wv']), full_spec(params['bv']),
        full_spec(params['wo']), full_spec(params['bo']),
        full_spec(params['ff_w1']), full_spec(params['ff_b1']),
        full_spec(params['ff_w2']), full_spec(params['ff_b2']),
        full_spec(params['final_a']), full_spec(params['final_b']),
    ]

    return pl.pallas_call(
        _decoder_kernel,
        out_shape=jax.ShapeDtypeStruct((B, St, D), jnp.float32),
        grid=(B,),
        in_specs=in_specs,
        out_specs=pl.BlockSpec((1, St, D), lambda b: (b, 0, 0)),
        compiler_params=pltpu.CompilerParams(
            dimension_semantics=("parallel",)),
    )(ids, e_outputs.astype(jnp.float32), tmask, smask,
      params['embed'], pe,
      params['norm_a'], params['norm_b'],
      params['wq'], params['bq'], params['wk'], params['bk'],
      params['wv'], params['bv'], params['wo'], params['bo'],
      params['ff_w1'], params['ff_b1'], params['ff_w2'], params['ff_b2'],
      params['final_a'], params['final_b'])


# ----------------------------- pure-JAX reference ---------------------------

def decoder_reference(params, trg, e_outputs, src_mask, trg_mask):
    B, St = trg.shape
    D = D_MODEL
    x = jnp.take(params['embed'], trg, axis=0) * math.sqrt(D) + params['pe'][:St][None]
    enc = e_outputs.astype(jnp.float32)

    def norm(v, a, b):
        mean = jnp.mean(v, -1, keepdims=True)
        c = v - mean
        std = jnp.sqrt(jnp.sum(c * c, -1, keepdims=True) / (D - 1))
        return a * c / (std + EPS) + b

    def proj(v, w, b):
        return jnp.einsum('bnd,de->bne', v, w) + b

    def attn(q, k, v, mask):
        qh = q.reshape(B, -1, HEADS, D_K).transpose(0, 2, 1, 3)
        kh = k.reshape(B, -1, HEADS, D_K).transpose(0, 2, 1, 3)
        vh = v.reshape(B, -1, HEADS, D_K).transpose(0, 2, 1, 3)
        s = jnp.einsum('bhmd,bhnd->bhmn', qh, kh) / math.sqrt(D_K)
        s = jnp.where(mask[:, None, :, :] == 0, NEG_INF, s)
        p = jax.nn.softmax(s, axis=-1)
        o = jnp.einsum('bhmn,bhnd->bhmd', p, vh)
        return o.transpose(0, 2, 1, 3).reshape(B, -1, D)

    for l in range(N_LAYERS):
        x2 = norm(x, params['norm_a'][l, 0], params['norm_b'][l, 0])
        a1 = attn(proj(x2, params['wq'][l, 0], params['bq'][l, 0]),
                  proj(x2, params['wk'][l, 0], params['bk'][l, 0]),
                  proj(x2, params['wv'][l, 0], params['bv'][l, 0]), trg_mask)
        x = x + proj(a1, params['wo'][l, 0], params['bo'][l, 0])

        x2 = norm(x, params['norm_a'][l, 1], params['norm_b'][l, 1])
        a2 = attn(proj(x2, params['wq'][l, 1], params['bq'][l, 1]),
                  proj(enc, params['wk'][l, 1], params['bk'][l, 1]),
                  proj(enc, params['wv'][l, 1], params['bv'][l, 1]), src_mask)
        x = x + proj(a2, params['wo'][l, 1], params['bo'][l, 1])

        x2 = norm(x, params['norm_a'][l, 2], params['norm_b'][l, 2])
        h1 = jax.nn.relu(proj(x2, params['ff_w1'][l], params['ff_b1'][l]))
        x = x + proj(h1, params['ff_w2'][l], params['ff_b2'][l])

    return norm(x, params['final_a'], params['final_b'])


# ----------------------------- main ------------------------------------------

if __name__ == "__main__":
    key = jax.random.PRNGKey(0)
    kp, kt, ke = jax.random.split(key, 3)
    params = init_params(kp)

    B, St, Ss = 2, 8, 8
    trg = jax.random.randint(kt, (B, St), 0, VOCAB, dtype=jnp.int32)
    e_outputs = jax.random.normal(ke, (B, Ss, D_MODEL), jnp.float32)
    # causal (no-peek) target mask, and a source mask with one padded key in batch 1
    trg_mask = jnp.broadcast_to(jnp.tril(jnp.ones((St, St), jnp.int32))[None],
                                (B, St, St))
    src_mask = jnp.ones((B, 1, Ss), jnp.int32).at[1, 0, Ss - 1].set(0)

    out = jax.jit(decoder_forward)(params, trg, e_outputs, src_mask, trg_mask)
    out = jax.block_until_ready(out)

    ref = decoder_reference(params, trg, e_outputs, src_mask, trg_mask)

    assert out.shape == (B, St, D_MODEL), out.shape
    assert bool(jnp.all(jnp.isfinite(out)))
    assert bool(jnp.allclose(out, ref, atol=1e-2, rtol=1e-2)), \
        float(jnp.max(jnp.abs(out - ref)))
    print("KERNEL_OK")
</pallas_src>

<mosaic_0001>
module attributes {stable_mosaic.version = 11 : i64} {
  func.func @_decoder_kernel(%arg0: i32, %arg1: memref<1x8x1xi32, #tpu.memory_space<vmem>>, %arg2: memref<1x8x32xf32, #tpu.memory_space<vmem>>, %arg3: memref<1x8x8xf32, #tpu.memory_space<vmem>>, %arg4: memref<1x1x8xf32, #tpu.memory_space<vmem>>, %arg5: memref<50x32xf32, #tpu.memory_space<vmem>>, %arg6: memref<8x32xf32, #tpu.memory_space<vmem>>, %arg7: memref<2x3x1x32xf32, #tpu.memory_space<vmem>>, %arg8: memref<2x3x1x32xf32, #tpu.memory_space<vmem>>, %arg9: memref<2x2x32x32xf32, #tpu.memory_space<vmem>>, %arg10: memref<2x2x1x32xf32, #tpu.memory_space<vmem>>, %arg11: memref<2x2x32x32xf32, #tpu.memory_space<vmem>>, %arg12: memref<2x2x1x32xf32, #tpu.memory_space<vmem>>, %arg13: memref<2x2x32x32xf32, #tpu.memory_space<vmem>>, %arg14: memref<2x2x1x32xf32, #tpu.memory_space<vmem>>, %arg15: memref<2x2x32x32xf32, #tpu.memory_space<vmem>>, %arg16: memref<2x2x1x32xf32, #tpu.memory_space<vmem>>, %arg17: memref<2x32x64xf32, #tpu.memory_space<vmem>>, %arg18: memref<2x1x64xf32, #tpu.memory_space<vmem>>, %arg19: memref<2x64x32xf32, #tpu.memory_space<vmem>>, %arg20: memref<2x1x32xf32, #tpu.memory_space<vmem>>, %arg21: memref<1x32xf32, #tpu.memory_space<vmem>>, %arg22: memref<1x32xf32, #tpu.memory_space<vmem>>, %arg23: memref<1x8x32xf32, #tpu.memory_space<vmem>>) attributes {dimension_semantics = [#tpu.dimension_semantics<parallel>], iteration_bounds = array<i64: 2>, scalar_prefetch = 0 : i64, scratch_operands = 0 : i64, tpu.core_type = #tpu.core_type<tc>, window_params = [{transform_indices = @transform_0, window_bounds = array<i64: 1, 8, 1>}, {transform_indices = @transform_1, window_bounds = array<i64: 1, 8, 32>}, {transform_indices = @transform_2, window_bounds = array<i64: 1, 8, 8>}, {transform_indices = @transform_3, window_bounds = array<i64: 1, 1, 8>}, {pipeline_mode = #tpu.pipeline_mode<synchronous>, transform_indices = @transform_4, window_bounds = array<i64: 50, 32>}, {pipeline_mode = #tpu.pipeline_mode<synchronous>, transform_indices = @transform_5, window_bounds = array<i64: 8, 32>}, {pipeline_mode = #tpu.pipeline_mode<synchronous>, transform_indices = @transform_6, window_bounds = array<i64: 2, 3, 1, 32>}, {pipeline_mode = #tpu.pipeline_mode<synchronous>, transform_indices = @transform_7, window_bounds = array<i64: 2, 3, 1, 32>}, {pipeline_mode = #tpu.pipeline_mode<synchronous>, transform_indices = @transform_8, window_bounds = array<i64: 2, 2, 32, 32>}, {pipeline_mode = #tpu.pipeline_mode<synchronous>, transform_indices = @transform_9, window_bounds = array<i64: 2, 2, 1, 32>}, {pipeline_mode = #tpu.pipeline_mode<synchronous>, transform_indices = @transform_10, window_bounds = array<i64: 2, 2, 32, 32>}, {pipeline_mode = #tpu.pipeline_mode<synchronous>, transform_indices = @transform_11, window_bounds = array<i64: 2, 2, 1, 32>}, {pipeline_mode = #tpu.pipeline_mode<synchronous>, transform_indices = @transform_12, window_bounds = array<i64: 2, 2, 32, 32>}, {pipeline_mode = #tpu.pipeline_mode<synchronous>, transform_indices = @transform_13, window_bounds = array<i64: 2, 2, 1, 32>}, {pipeline_mode = #tpu.pipeline_mode<synchronous>, transform_indices = @transform_14, window_bounds = array<i64: 2, 2, 32, 32>}, {pipeline_mode = #tpu.pipeline_mode<synchronous>, transform_indices = @transform_15, window_bounds = array<i64: 2, 2, 1, 32>}, {pipeline_mode = #tpu.pipeline_mode<synchronous>, transform_indices = @transform_16, window_bounds = array<i64: 2, 32, 64>}, {pipeline_mode = #tpu.pipeline_mode<synchronous>, transform_indices = @transform_17, window_bounds = array<i64: 2, 1, 64>}, {pipeline_mode = #tpu.pipeline_mode<synchronous>, transform_indices = @transform_18, window_bounds = array<i64: 2, 64, 32>}, {pipeline_mode = #tpu.pipeline_mode<synchronous>, transform_indices = @transform_19, window_bounds = array<i64: 2, 1, 32>}, {pipeline_mode = #tpu.pipeline_mode<synchronous>, transform_indices = @transform_20, window_bounds = array<i64: 1, 32>}, {pipeline_mode = #tpu.pipeline_mode<synchronous>, transform_indices = @transform_21, window_bounds = array<i64: 1, 32>}, {transform_indices = @transform_22, window_bounds = array<i64: 1, 8, 32>}]} {
    %c0 = arith.constant 0 : index
    %c0_0 = arith.constant 0 : index
    %c0_1 = arith.constant 0 : index
    %0 = vector.load %arg1[%c0, %c0_0, %c0_1] : memref<1x8x1xi32, #tpu.memory_space<vmem>>, vector<1x8x1xi32>
    %1 = vector.shape_cast %0 : vector<1x8x1xi32> to vector<8x1xi32>
    %2 = tpu.iota {dimensions = array<i32: 1>} : vector<8x50xi32>
    %3 = vector.broadcast %1 : vector<8x1xi32> to vector<8x50xi32>
    %4 = arith.cmpi eq, %2, %3 : vector<8x50xi32>
    %5 = arith.extui %4 : vector<8x50xi1> to vector<8x50xi32>
    %6 = arith.sitofp %5 : vector<8x50xi32> to vector<8x50xf32>
    %c0_2 = arith.constant 0 : index
    %c0_3 = arith.constant 0 : index
    %7 = vector.load %arg5[%c0_2, %c0_3] : memref<50x32xf32, #tpu.memory_space<vmem>>, vector<50x32xf32>
    %cst = arith.constant dense<0.000000e+00> : vector<8x32xf32>
    %8 = tpu.matmul %6, %7, %cst {dimension_numbers = #tpu.dot_dimension_numbers<[1], [0], [0], [1], [0, 0, 1, 1], [], []>} : vector<8x50xf32>, vector<50x32xf32>, vector<8x32xf32> -> vector<8x32xf32>
    %cst_4 = arith.constant 5.65685415 : f32
    %9 = vector.broadcast %cst_4 : f32 to vector<8x32xf32>
    %10 = arith.mulf %8, %9 : vector<8x32xf32>
    %c0_5 = arith.constant 0 : index
    %c0_6 = arith.constant 0 : index
    %11 = vector.load %arg6[%c0_5, %c0_6] : memref<8x32xf32, #tpu.memory_space<vmem>>, vector<8x32xf32>
    %12 = arith.addf %10, %11 : vector<8x32xf32>
    %c0_7 = arith.constant 0 : index
    %c0_8 = arith.constant 0 : index
    %c0_9 = arith.constant 0 : index
    %13 = vector.load %arg2[%c0_7, %c0_8, %c0_9] : memref<1x8x32xf32, #tpu.memory_space<vmem>>, vector<1x8x32xf32>
    %14 = vector.shape_cast %13 : vector<1x8x32xf32> to vector<8x32xf32>
    %c0_10 = arith.constant 0 : index
    %c0_11 = arith.constant 0 : index
    %c0_12 = arith.constant 0 : index
    %15 = vector.load %arg3[%c0_10, %c0_11, %c0_12] : memref<1x8x8xf32, #tpu.memory_space<vmem>>, vector<1x8x8xf32>
    %16 = vector.shape_cast %15 : vector<1x8x8xf32> to vector<8x8xf32>
    %cst_13 = arith.constant 0.000000e+00 : f32
    %17 = vector.broadcast %cst_13 : f32 to vector<8x8xf32>
    %18 = arith.cmpf oeq, %16, %17 : vector<8x8xf32>
    %cst_14 = arith.constant -1.000000e+09 : f32
    %cst_15 = arith.constant 0.000000e+00 : f32
    %19 = vector.broadcast %cst_14 : f32 to vector<8x8xf32>
    %20 = vector.broadcast %cst_15 : f32 to vector<8x8xf32>
    %21 = arith.select %18, %19, %20 : vector<8x8xi1>, vector<8x8xf32>
    %c0_16 = arith.constant 0 : index
    %c0_17 = arith.constant 0 : index
    %c0_18 = arith.constant 0 : index
    %22 = vector.load %arg4[%c0_16, %c0_17, %c0_18] : memref<1x1x8xf32, #tpu.memory_space<vmem>>, vector<1x1x8xf32>
    %23 = vector.shape_cast %22 : vector<1x1x8xf32> to vector<1x8xf32>
    %cst_19 = arith.constant 0.000000e+00 : f32
    %24 = vector.broadcast %cst_19 : f32 to vector<1x8xf32>
    %25 = arith.cmpf oeq, %23, %24 : vector<1x8xf32>
    %cst_20 = arith.constant -1.000000e+09 : f32
    %cst_21 = arith.constant 0.000000e+00 : f32
    %26 = vector.broadcast %cst_20 : f32 to vector<1x8xf32>
    %27 = vector.broadcast %cst_21 : f32 to vector<1x8xf32>
    %28 = arith.select %25, %26, %27 : vector<1x8xi1>, vector<1x8xf32>
    %29 = tpu.iota {dimensions = array<i32: 1>} : vector<1x32xi32>
    %c0_22 = arith.constant 0 : index
    %c0_23 = arith.constant 0 : index
    %c0_24 = arith.constant 0 : index
    %c0_25 = arith.constant 0 : index
    %30 = vector.load %arg7[%c0_22, %c0_23, %c0_24, %c0_25] : memref<2x3x1x32xf32, #tpu.memory_space<vmem>>, vector<1x1x1x32xf32>
    %31 = vector.shape_cast %30 : vector<1x1x1x32xf32> to vector<1x32xf32>
    %c0_26 = arith.constant 0 : index
    %c0_27 = arith.constant 0 : index
    %c0_28 = arith.constant 0 : index
    %c0_29 = arith.constant 0 : index
    %32 = vector.load %arg8[%c0_26, %c0_27, %c0_28, %c0_29] : memref<2x3x1x32xf32, #tpu.memory_space<vmem>>, vector<1x1x1x32xf32>
    %33 = vector.shape_cast %32 : vector<1x1x1x32xf32> to vector<1x32xf32>
    %cst_30 = arith.constant dense<0.000000e+00> : vector<8xf32>
    %34 = vector.multi_reduction <add>, %12, %cst_30 [1] : vector<8x32xf32> to vector<8xf32>
    %35 = vector.shape_cast %34 : vector<8xf32> to vector<8x1xf32>
    %cst_31 = arith.constant 3.200000e+01 : f32
    %36 = vector.broadcast %cst_31 : f32 to vector<8x1xf32>
    %37 = arith.divf %35, %36 : vector<8x1xf32>
    %38 = vector.broadcast %37 : vector<8x1xf32> to vector<8x32xf32>
    %39 = arith.subf %12, %38 : vector<8x32xf32>
    %40 = arith.mulf %39, %39 : vector<8x32xf32>
    %cst_32 = arith.constant dense<0.000000e+00> : vector<8xf32>
    %41 = vector.multi_reduction <add>, %40, %cst_32 [1] : vector<8x32xf32> to vector<8xf32>
    %42 = vector.shape_cast %41 : vector<8xf32> to vector<8x1xf32>
    %cst_33 = arith.constant 0.0322580636 : f32
    %43 = vector.broadcast %cst_33 : f32 to vector<8x1xf32>
    %44 = arith.mulf %42, %43 : vector<8x1xf32>
    %45 = math.sqrt %44 : vector<8x1xf32>
    %cst_34 = arith.constant 9.99999997E-7 : f32
    %46 = vector.broadcast %cst_34 : f32 to vector<8x1xf32>
    %47 = arith.addf %45, %46 : vector<8x1xf32>
    %48 = tpu.reciprocal %47 : vector<8x1xf32> -> vector<8x1xf32>
    %49 = vector.broadcast %48 : vector<8x1xf32> to vector<8x32xf32>
    %50 = arith.mulf %39, %49 : vector<8x32xf32>
    %51 = vector.broadcast %31 : vector<1x32xf32> to vector<8x32xf32>
    %52 = arith.mulf %51, %50 : vector<8x32xf32>
    %53 = vector.broadcast %33 : vector<1x32xf32> to vector<8x32xf32>
    %54 = arith.addf %52, %53 : vector<8x32xf32>
    %c0_35 = arith.constant 0 : index
    %c0_36 = arith.constant 0 : index
    %c0_37 = arith.constant 0 : index
    %c0_38 = arith.constant 0 : index
    %55 = vector.load %arg9[%c0_35, %c0_36, %c0_37, %c0_38] : memref<2x2x32x32xf32, #tpu.memory_space<vmem>>, vector<1x1x32x32xf32>
    %56 = vector.shape_cast %55 : vector<1x1x32x32xf32> to vector<32x32xf32>
    %c0_39 = arith.constant 0 : index
    %c0_40 = arith.constant 0 : index
    %c0_41 = arith.constant 0 : index
    %c0_42 = arith.constant 0 : index
    %57 = vector.load %arg10[%c0_39, %c0_40, %c0_41, %c0_42] : memref<2x2x1x32xf32, #tpu.memory_space<vmem>>, vector<1x1x1x32xf32>
    %58 = vector.shape_cast %57 : vector<1x1x1x32xf32> to vector<1x32xf32>
    %cst_43 = arith.constant dense<0.000000e+00> : vector<8x32xf32>
    %59 = tpu.matmul %54, %56, %cst_43 {dimension_numbers = #tpu.dot_dimension_numbers<[1], [0], [0], [1], [0, 0, 1, 1], [], []>} : vector<8x32xf32>, vector<32x32xf32>, vector<8x32xf32> -> vector<8x32xf32>
    %60 = vector.broadcast %58 : vector<1x32xf32> to vector<8x32xf32>
    %61 = arith.addf %59, %60 : vector<8x32xf32>
    %c0_44 = arith.constant 0 : index
    %c0_45 = arith.constant 0 : index
    %c0_46 = arith.constant 0 : index
    %c0_47 = arith.constant 0 : index
    %62 = vector.load %arg11[%c0_44, %c0_45, %c0_46, %c0_47] : memref<2x2x32x32xf32, #tpu.memory_space<vmem>>, vector<1x1x32x32xf32>
    %63 = vector.shape_cast %62 : vector<1x1x32x32xf32> to vector<32x32xf32>
    %c0_48 = arith.constant 0 : index
    %c0_49 = arith.constant 0 : index
    %c0_50 = arith.constant 0 : index
    %c0_51 = arith.constant 0 : index
    %64 = vector.load %arg12[%c0_48, %c0_49, %c0_50, %c0_51] : memref<2x2x1x32xf32, #tpu.memory_space<vmem>>, vector<1x1x1x32xf32>
    %65 = vector.shape_cast %64 : vector<1x1x1x32xf32> to vector<1x32xf32>
    %cst_52 = arith.constant dense<0.000000e+00> : vector<8x32xf32>
    %66 = tpu.matmul %54, %63, %cst_52 {dimension_numbers = #tpu.dot_dimension_numbers<[1], [0], [0], [1], [0, 0, 1, 1], [], []>} : vector<8x32xf32>, vector<32x32xf32>, vector<8x32xf32> -> vector<8x32xf32>
    %67 = vector.broadcast %65 : vector<1x32xf32> to vector<8x32xf32>
    %68 = arith.addf %66, %67 : vector<8x32xf32>
    %c0_53 = arith.constant 0 : index
    %c0_54 = arith.constant 0 : index
    %c0_55 = arith.constant 0 : index
    %c0_56 = arith.constant 0 : index
    %69 = vector.load %arg13[%c0_53, %c0_54, %c0_55, %c0_56] : memref<2x2x32x32xf32, #tpu.memory_space<vmem>>, vector<1x1x32x32xf32>
    %70 = vector.shape_cast %69 : vector<1x1x32x32xf32> to vector<32x32xf32>
    %c0_57 = arith.constant 0 : index
    %c0_58 = arith.constant 0 : index
    %c0_59 = arith.constant 0 : index
    %c0_60 = arith.constant 0 : index
    %71 = vector.load %arg14[%c0_57, %c0_58, %c0_59, %c0_60] : memref<2x2x1x32xf32, #tpu.memory_space<vmem>>, vector<1x1x1x32xf32>
    %72 = vector.shape_cast %71 : vector<1x1x1x32xf32> to vector<1x32xf32>
    %cst_61 = arith.constant dense<0.000000e+00> : vector<8x32xf32>
    %73 = tpu.matmul %54, %70, %cst_61 {dimension_numbers = #tpu.dot_dimension_numbers<[1], [0], [0], [1], [0, 0, 1, 1], [], []>} : vector<8x32xf32>, vector<32x32xf32>, vector<8x32xf32> -> vector<8x32xf32>
    %74 = vector.broadcast %72 : vector<1x32xf32> to vector<8x32xf32>
    %75 = arith.addf %73, %74 : vector<8x32xf32>
    %c0_i32 = arith.constant 0 : i32
    %76 = vector.broadcast %c0_i32 : i32 to vector<1x32xi32>
    %77 = arith.cmpi sge, %29, %76 : vector<1x32xi32>
    %c8_i32 = arith.constant 8 : i32
    %78 = vector.broadcast %c8_i32 : i32 to vector<1x32xi32>
    %79 = arith.cmpi slt, %29, %78 : vector<1x32xi32>
    %80 = arith.andi %77, %79 : vector<1x32xi1>
    %81 = arith.extui %80 : vector<1x32xi1> to vector<1x32xi32>
    %82 = arith.sitofp %81 : vector<1x32xi32> to vector<1x32xf32>
    %83 = vector.broadcast %82 : vector<1x32xf32> to vector<8x32xf32>
    %84 = arith.mulf %68, %83 : vector<8x32xf32>
    %cst_62 = arith.constant dense<0.000000e+00> : vector<8x8xf32>
    %85 = tpu.matmul %61, %84, %cst_62 {dimension_numbers = #tpu.dot_dimension_numbers<[1], [1], [0], [0], [0, 0, 1, 0], [], []>} : vector<8x32xf32>, vector<8x32xf32>, vector<8x8xf32> -> vector<8x8xf32>
    %cst_63 = arith.constant 0.353553385 : f32
    %86 = vector.broadcast %cst_63 : f32 to vector<8x8xf32>
    %87 = arith.mulf %85, %86 : vector<8x8xf32>
    %88 = arith.addf %87, %21 : vector<8x8xf32>
    %cst_64 = arith.constant dense<0xFF800000> : vector<8xf32>
    %89 = vector.multi_reduction <maximumf>, %88, %cst_64 [1] : vector<8x8xf32> to vector<8xf32>
    %90 = vector.shape_cast %89 : vector<8xf32> to vector<8x1xf32>
    %91 = vector.broadcast %90 : vector<8x1xf32> to vector<8x8xf32>
    %92 = arith.subf %88, %91 : vector<8x8xf32>
    %93 = math.exp %92 : vector<8x8xf32>
    %cst_65 = arith.constant dense<0.000000e+00> : vector<8xf32>
    %94 = vector.multi_reduction <add>, %93, %cst_65 [1] : vector<8x8xf32> to vector<8xf32>
    %95 = vector.shape_cast %94 : vector<8xf32> to vector<8x1xf32>
    %96 = tpu.reciprocal %95 {approx = true} : vector<8x1xf32> -> vector<8x1xf32>
    %97 = vector.broadcast %96 : vector<8x1xf32> to vector<8x8xf32>
    %98 = arith.mulf %93, %97 : vector<8x8xf32>
    %99 = vector.broadcast %82 : vector<1x32xf32> to vector<8x32xf32>
    %100 = arith.mulf %75, %99 : vector<8x32xf32>
    %cst_66 = arith.constant dense<0.000000e+00> : vector<8x32xf32>
    %101 = tpu.matmul %98, %100, %cst_66 {dimension_numbers = #tpu.dot_dimension_numbers<[1], [0], [0], [1], [0, 0, 1, 1], [], []>} : vector<8x8xf32>, vector<8x32xf32>, vector<8x32xf32> -> vector<8x32xf32>
    %c8_i32_67 = arith.constant 8 : i32
    %102 = vector.broadcast %c8_i32_67 : i32 to vector<1x32xi32>
    %103 = arith.cmpi sge, %29, %102 : vector<1x32xi32>
    %c16_i32 = arith.constant 16 : i32
    %104 = vector.broadcast %c16_i32 : i32 to vector<1x32xi32>
    %105 = arith.cmpi slt, %29, %104 : vector<1x32xi32>
    %106 = arith.andi %103, %105 : vector<1x32xi1>
    %107 = arith.extui %106 : vector<1x32xi1> to vector<1x32xi32>
    %108 = arith.sitofp %107 : vector<1x32xi32> to vector<1x32xf32>
    %109 = vector.broadcast %108 : vector<1x32xf32> to vector<8x32xf32>
    %110 = arith.mulf %68, %109 : vector<8x32xf32>
    %cst_68 = arith.constant dense<0.000000e+00> : vector<8x8xf32>
    %111 = tpu.matmul %61, %110, %cst_68 {dimension_numbers = #tpu.dot_dimension_numbers<[1], [1], [0], [0], [0, 0, 1, 0], [], []>} : vector<8x32xf32>, vector<8x32xf32>, vector<8x8xf32> -> vector<8x8xf32>
    %cst_69 = arith.constant 0.353553385 : f32
    %112 = vector.broadcast %cst_69 : f32 to vector<8x8xf32>
    %113 = arith.mulf %111, %112 : vector<8x8xf32>
    %114 = arith.addf %113, %21 : vector<8x8xf32>
    %cst_70 = arith.constant dense<0xFF800000> : vector<8xf32>
    %115 = vector.multi_reduction <maximumf>, %114, %cst_70 [1] : vector<8x8xf32> to vector<8xf32>
    %116 = vector.shape_cast %115 : vector<8xf32> to vector<8x1xf32>
    %117 = vector.broadcast %116 : vector<8x1xf32> to vector<8x8xf32>
    %118 = arith.subf %114, %117 : vector<8x8xf32>
    %119 = math.exp %118 : vector<8x8xf32>
    %cst_71 = arith.constant dense<0.000000e+00> : vector<8xf32>
    %120 = vector.multi_reduction <add>, %119, %cst_71 [1] : vector<8x8xf32> to vector<8xf32>
    %121 = vector.shape_cast %120 : vector<8xf32> to vector<8x1xf32>
    %122 = tpu.reciprocal %121 {approx = true} : vector<8x1xf32> -> vector<8x1xf32>
    %123 = vector.broadcast %122 : vector<8x1xf32> to vector<8x8xf32>
    %124 = arith.mulf %119, %123 : vector<8x8xf32>
    %125 = vector.broadcast %108 : vector<1x32xf32> to vector<8x32xf32>
    %126 = arith.mulf %75, %125 : vector<8x32xf32>
    %cst_72 = arith.constant dense<0.000000e+00> : vector<8x32xf32>
    %127 = tpu.matmul %124, %126, %cst_72 {dimension_numbers = #tpu.dot_dimension_numbers<[1], [0], [0], [1], [0, 0, 1, 1], [], []>} : vector<8x8xf32>, vector<8x32xf32>, vector<8x32xf32> -> vector<8x32xf32>
    %128 = arith.addf %101, %127 : vector<8x32xf32>
    %c16_i32_73 = arith.constant 16 : i32
    %129 = vector.broadcast %c16_i32_73 : i32 to vector<1x32xi32>
    %130 = arith.cmpi sge, %29, %129 : vector<1x32xi32>
    %c24_i32 = arith.constant 24 : i32
    %131 = vector.broadcast %c24_i32 : i32 to vector<1x32xi32>
    %132 = arith.cmpi slt, %29, %131 : vector<1x32xi32>
    %133 = arith.andi %130, %132 : vector<1x32xi1>
    %134 = arith.extui %133 : vector<1x32xi1> to vector<1x32xi32>
    %135 = arith.sitofp %134 : vector<1x32xi32> to vector<1x32xf32>
    %136 = vector.broadcast %135 : vector<1x32xf32> to vector<8x32xf32>
    %137 = arith.mulf %68, %136 : vector<8x32xf32>
    %cst_74 = arith.constant dense<0.000000e+00> : vector<8x8xf32>
    %138 = tpu.matmul %61, %137, %cst_74 {dimension_numbers = #tpu.dot_dimension_numbers<[1], [1], [0], [0], [0, 0, 1, 0], [], []>} : vector<8x32xf32>, vector<8x32xf32>, vector<8x8xf32> -> vector<8x8xf32>
    %cst_75 = arith.constant 0.353553385 : f32
    %139 = vector.broadcast %cst_75 : f32 to vector<8x8xf32>
    %140 = arith.mulf %138, %139 : vector<8x8xf32>
    %141 = arith.addf %140, %21 : vector<8x8xf32>
    %cst_76 = arith.constant dense<0xFF800000> : vector<8xf32>
    %142 = vector.multi_reduction <maximumf>, %141, %cst_76 [1] : vector<8x8xf32> to vector<8xf32>
    %143 = vector.shape_cast %142 : vector<8xf32> to vector<8x1xf32>
    %144 = vector.broadcast %143 : vector<8x1xf32> to vector<8x8xf32>
    %145 = arith.subf %141, %144 : vector<8x8xf32>
    %146 = math.exp %145 : vector<8x8xf32>
    %cst_77 = arith.constant dense<0.000000e+00> : vector<8xf32>
    %147 = vector.multi_reduction <add>, %146, %cst_77 [1] : vector<8x8xf32> to vector<8xf32>
    %148 = vector.shape_cast %147 : vector<8xf32> to vector<8x1xf32>
    %149 = tpu.reciprocal %148 {approx = true} : vector<8x1xf32> -> vector<8x1xf32>
    %150 = vector.broadcast %149 : vector<8x1xf32> to vector<8x8xf32>
    %151 = arith.mulf %146, %150 : vector<8x8xf32>
    %152 = vector.broadcast %135 : vector<1x32xf32> to vector<8x32xf32>
    %153 = arith.mulf %75, %152 : vector<8x32xf32>
    %cst_78 = arith.constant dense<0.000000e+00> : vector<8x32xf32>
    %154 = tpu.matmul %151, %153, %cst_78 {dimension_numbers = #tpu.dot_dimension_numbers<[1], [0], [0], [1], [0, 0, 1, 1], [], []>} : vector<8x8xf32>, vector<8x32xf32>, vector<8x32xf32> -> vector<8x32xf32>
    %155 = arith.addf %128, %154 : vector<8x32xf32>
    %c24_i32_79 = arith.constant 24 : i32
    %156 = vector.broadcast %c24_i32_79 : i32 to vector<1x32xi32>
    %157 = arith.cmpi sge, %29, %156 : vector<1x32xi32>
    %c32_i32 = arith.constant 32 : i32
    %158 = vector.broadcast %c32_i32 : i32 to vector<1x32xi32>
    %159 = arith.cmpi slt, %29, %158 : vector<1x32xi32>
    %160 = arith.andi %157, %159 : vector<1x32xi1>
    %161 = arith.extui %160 : vector<1x32xi1> to vector<1x32xi32>
    %162 = arith.sitofp %161 : vector<1x32xi32> to vector<1x32xf32>
    %163 = vector.broadcast %162 : vector<1x32xf32> to vector<8x32xf32>
    %164 = arith.mulf %68, %163 : vector<8x32xf32>
    %cst_80 = arith.constant dense<0.000000e+00> : vector<8x8xf32>
    %165 = tpu.matmul %61, %164, %cst_80 {dimension_numbers = #tpu.dot_dimension_numbers<[1], [1], [0], [0], [0, 0, 1, 0], [], []>} : vector<8x32xf32>, vector<8x32xf32>, vector<8x8xf32> -> vector<8x8xf32>
    %cst_81 = arith.constant 0.353553385 : f32
    %166 = vector.broadcast %cst_81 : f32 to vector<8x8xf32>
    %167 = arith.mulf %165, %166 : vector<8x8xf32>
    %168 = arith.addf %167, %21 : vector<8x8xf32>
    %cst_82 = arith.constant dense<0xFF800000> : vector<8xf32>
    %169 = vector.multi_reduction <maximumf>, %168, %cst_82 [1] : vector<8x8xf32> to vector<8xf32>
    %170 = vector.shape_cast %169 : vector<8xf32> to vector<8x1xf32>
    %171 = vector.broadcast %170 : vector<8x1xf32> to vector<8x8xf32>
    %172 = arith.subf %168, %171 : vector<8x8xf32>
    %173 = math.exp %172 : vector<8x8xf32>
    %cst_83 = arith.constant dense<0.000000e+00> : vector<8xf32>
    %174 = vector.multi_reduction <add>, %173, %cst_83 [1] : vector<8x8xf32> to vector<8xf32>
    %175 = vector.shape_cast %174 : vector<8xf32> to vector<8x1xf32>
    %176 = tpu.reciprocal %175 {approx = true} : vector<8x1xf32> -> vector<8x1xf32>
    %177 = vector.broadcast %176 : vector<8x1xf32> to vector<8x8xf32>
    %178 = arith.mulf %173, %177 : vector<8x8xf32>
    %179 = vector.broadcast %162 : vector<1x32xf32> to vector<8x32xf32>
    %180 = arith.mulf %75, %179 : vector<8x32xf32>
    %cst_84 = arith.constant dense<0.000000e+00> : vector<8x32xf32>
    %181 = tpu.matmul %178, %180, %cst_84 {dimension_numbers = #tpu.dot_dimension_numbers<[1], [0], [0], [1], [0, 0, 1, 1], [], []>} : vector<8x8xf32>, vector<8x32xf32>, vector<8x32xf32> -> vector<8x32xf32>
    %182 = arith.addf %155, %181 : vector<8x32xf32>
    %c0_85 = arith.constant 0 : index
    %c0_86 = arith.constant 0 : index
    %c0_87 = arith.constant 0 : index
    %c0_88 = arith.constant 0 : index
    %183 = vector.load %arg15[%c0_85, %c0_86, %c0_87, %c0_88] : memref<2x2x32x32xf32, #tpu.memory_space<vmem>>, vector<1x1x32x32xf32>
    %184 = vector.shape_cast %183 : vector<1x1x32x32xf32> to vector<32x32xf32>
    %c0_89 = arith.constant 0 : index
    %c0_90 = arith.constant 0 : index
    %c0_91 = arith.constant 0 : index
    %c0_92 = arith.constant 0 : index
    %185 = vector.load %arg16[%c0_89, %c0_90, %c0_91, %c0_92] : memref<2x2x1x32xf32, #tpu.memory_space<vmem>>, vector<1x1x1x32xf32>
    %186 = vector.shape_cast %185 : vector<1x1x1x32xf32> to vector<1x32xf32>
    %cst_93 = arith.constant dense<0.000000e+00> : vector<8x32xf32>
    %187 = tpu.matmul %182, %184, %cst_93 {dimension_numbers = #tpu.dot_dimension_numbers<[1], [0], [0], [1], [0, 0, 1, 1], [], []>} : vector<8x32xf32>, vector<32x32xf32>, vector<8x32xf32> -> vector<8x32xf32>
    %188 = vector.broadcast %186 : vector<1x32xf32> to vector<8x32xf32>
    %189 = arith.addf %187, %188 : vector<8x32xf32>
    %190 = arith.addf %12, %189 : vector<8x32xf32>
    %c0_94 = arith.constant 0 : index
    %c1 = arith.constant 1 : index
    %c0_95 = arith.constant 0 : index
    %c0_96 = arith.constant 0 : index
    %191 = vector.load %arg7[%c0_94, %c1, %c0_95, %c0_96] : memref<2x3x1x32xf32, #tpu.memory_space<vmem>>, vector<1x1x1x32xf32>
    %192 = vector.shape_cast %191 : vector<1x1x1x32xf32> to vector<1x32xf32>
    %c0_97 = arith.constant 0 : index
    %c1_98 = arith.constant 1 : index
    %c0_99 = arith.constant 0 : index
    %c0_100 = arith.constant 0 : index
    %193 = vector.load %arg8[%c0_97, %c1_98, %c0_99, %c0_100] : memref<2x3x1x32xf32, #tpu.memory_space<vmem>>, vector<1x1x1x32xf32>
    %194 = vector.shape_cast %193 : vector<1x1x1x32xf32> to vector<1x32xf32>
    %cst_101 = arith.constant dense<0.000000e+00> : vector<8xf32>
    %195 = vector.multi_reduction <add>, %190, %cst_101 [1] : vector<8x32xf32> to vector<8xf32>
    %196 = vector.shape_cast %195 : vector<8xf32> to vector<8x1xf32>
    %cst_102 = arith.constant 3.200000e+01 : f32
    %197 = vector.broadcast %cst_102 : f32 to vector<8x1xf32>
    %198 = arith.divf %196, %197 : vector<8x1xf32>
    %199 = vector.broadcast %198 : vector<8x1xf32> to vector<8x32xf32>
    %200 = arith.subf %190, %199 : vector<8x32xf32>
    %201 = arith.mulf %200, %200 : vector<8x32xf32>
    %cst_103 = arith.constant dense<0.000000e+00> : vector<8xf32>
    %202 = vector.multi_reduction <add>, %201, %cst_103 [1] : vector<8x32xf32> to vector<8xf32>
    %203 = vector.shape_cast %202 : vector<8xf32> to vector<8x1xf32>
    %cst_104 = arith.constant 0.0322580636 : f32
    %204 = vector.broadcast %cst_104 : f32 to vector<8x1xf32>
    %205 = arith.mulf %203, %204 : vector<8x1xf32>
    %206 = math.sqrt %205 : vector<8x1xf32>
    %cst_105 = arith.constant 9.99999997E-7 : f32
    %207 = vector.broadcast %cst_105 : f32 to vector<8x1xf32>
    %208 = arith.addf %206, %207 : vector<8x1xf32>
    %209 = tpu.reciprocal %208 : vector<8x1xf32> -> vector<8x1xf32>
    %210 = vector.broadcast %209 : vector<8x1xf32> to vector<8x32xf32>
    %211 = arith.mulf %200, %210 : vector<8x32xf32>
    %212 = vector.broadcast %192 : vector<1x32xf32> to vector<8x32xf32>
    %213 = arith.mulf %212, %211 : vector<8x32xf32>
    %214 = vector.broadcast %194 : vector<1x32xf32> to vector<8x32xf32>
    %215 = arith.addf %213, %214 : vector<8x32xf32>
    %c0_106 = arith.constant 0 : index
    %c1_107 = arith.constant 1 : index
    %c0_108 = arith.constant 0 : index
    %c0_109 = arith.constant 0 : index
    %216 = vector.load %arg9[%c0_106, %c1_107, %c0_108, %c0_109] : memref<2x2x32x32xf32, #tpu.memory_space<vmem>>, vector<1x1x32x32xf32>
    %217 = vector.shape_cast %216 : vector<1x1x32x32xf32> to vector<32x32xf32>
    %c0_110 = arith.constant 0 : index
    %c1_111 = arith.constant 1 : index
    %c0_112 = arith.constant 0 : index
    %c0_113 = arith.constant 0 : index
    %218 = vector.load %arg10[%c0_110, %c1_111, %c0_112, %c0_113] : memref<2x2x1x32xf32, #tpu.memory_space<vmem>>, vector<1x1x1x32xf32>
    %219 = vector.shape_cast %218 : vector<1x1x1x32xf32> to vector<1x32xf32>
    %cst_114 = arith.constant dense<0.000000e+00> : vector<8x32xf32>
    %220 = tpu.matmul %215, %217, %cst_114 {dimension_numbers = #tpu.dot_dimension_numbers<[1], [0], [0], [1], [0, 0, 1, 1], [], []>} : vector<8x32xf32>, vector<32x32xf32>, vector<8x32xf32> -> vector<8x32xf32>
    %221 = vector.broadcast %219 : vector<1x32xf32> to vector<8x32xf32>
    %222 = arith.addf %220, %221 : vector<8x32xf32>
    %c0_115 = arith.constant 0 : index
    %c1_116 = arith.constant 1 : index
    %c0_117 = arith.constant 0 : index
    %c0_118 = arith.constant 0 : index
    %223 = vector.load %arg11[%c0_115, %c1_116, %c0_117, %c0_118] : memref<2x2x32x32xf32, #tpu.memory_space<vmem>>, vector<1x1x32x32xf32>
    %224 = vector.shape_cast %223 : vector<1x1x32x32xf32> to vector<32x32xf32>
    %c0_119 = arith.constant 0 : index
    %c1_120 = arith.constant 1 : index
    %c0_121 = arith.constant 0 : index
    %c0_122 = arith.constant 0 : index
    %225 = vector.load %arg12[%c0_119, %c1_120, %c0_121, %c0_122] : memref<2x2x1x32xf32, #tpu.memory_space<vmem>>, vector<1x1x1x32xf32>
    %226 = vector.shape_cast %225 : vector<1x1x1x32xf32> to vector<1x32xf32>
    %cst_123 = arith.constant dense<0.000000e+00> : vector<8x32xf32>
    %227 = tpu.matmul %14, %224, %cst_123 {dimension_numbers = #tpu.dot_dimension_numbers<[1], [0], [0], [1], [0, 0, 1, 1], [], []>} : vector<8x32xf32>, vector<32x32xf32>, vector<8x32xf32> -> vector<8x32xf32>
    %228 = vector.broadcast %226 : vector<1x32xf32> to vector<8x32xf32>
    %229 = arith.addf %227, %228 : vector<8x32xf32>
    %c0_124 = arith.constant 0 : index
    %c1_125 = arith.constant 1 : index
    %c0_126 = arith.constant 0 : index
    %c0_127 = arith.constant 0 : index
    %230 = vector.load %arg13[%c0_124, %c1_125, %c0_126, %c0_127] : memref<2x2x32x32xf32, #tpu.memory_space<vmem>>, vector<1x1x32x32xf32>
    %231 = vector.shape_cast %230 : vector<1x1x32x32xf32> to vector<32x32xf32>
    %c0_128 = arith.constant 0 : index
    %c1_129 = arith.constant 1 : index
    %c0_130 = arith.constant 0 : index
    %c0_131 = arith.constant 0 : index
    %232 = vector.load %arg14[%c0_128, %c1_129, %c0_130, %c0_131] : memref<2x2x1x32xf32, #tpu.memory_space<vmem>>, vector<1x1x1x32xf32>
    %233 = vector.shape_cast %232 : vector<1x1x1x32xf32> to vector<1x32xf32>
    %cst_132 = arith.constant dense<0.000000e+00> : vector<8x32xf32>
    %234 = tpu.matmul %14, %231, %cst_132 {dimension_numbers = #tpu.dot_dimension_numbers<[1], [0], [0], [1], [0, 0, 1, 1], [], []>} : vector<8x32xf32>, vector<32x32xf32>, vector<8x32xf32> -> vector<8x32xf32>
    %235 = vector.broadcast %233 : vector<1x32xf32> to vector<8x32xf32>
    %236 = arith.addf %234, %235 : vector<8x32xf32>
    %c0_i32_133 = arith.constant 0 : i32
    %237 = vector.broadcast %c0_i32_133 : i32 to vector<1x32xi32>
    %238 = arith.cmpi sge, %29, %237 : vector<1x32xi32>
    %c8_i32_134 = arith.constant 8 : i32
    %239 = vector.broadcast %c8_i32_134 : i32 to vector<1x32xi32>
    %240 = arith.cmpi slt, %29, %239 : vector<1x32xi32>
    %241 = arith.andi %238, %240 : vector<1x32xi1>
    %242 = arith.extui %241 : vector<1x32xi1> to vector<1x32xi32>
    %243 = arith.sitofp %242 : vector<1x32xi32> to vector<1x32xf32>
    %244 = vector.broadcast %243 : vector<1x32xf32> to vector<8x32xf32>
    %245 = arith.mulf %229, %244 : vector<8x32xf32>
    %cst_135 = arith.constant dense<0.000000e+00> : vector<8x8xf32>
    %246 = tpu.matmul %222, %245, %cst_135 {dimension_numbers = #tpu.dot_dimension_numbers<[1], [1], [0], [0], [0, 0, 1, 0], [], []>} : vector<8x32xf32>, vector<8x32xf32>, vector<8x8xf32> -> vector<8x8xf32>
    %cst_136 = arith.constant 0.353553385 : f32
    %247 = vector.broadcast %cst_136 : f32 to vector<8x8xf32>
    %248 = arith.mulf %246, %247 : vector<8x8xf32>
    %249 = vector.broadcast %28 : vector<1x8xf32> to vector<8x8xf32>
    %250 = arith.addf %248, %249 : vector<8x8xf32>
    %cst_137 = arith.constant dense<0xFF800000> : vector<8xf32>
    %251 = vector.multi_reduction <maximumf>, %250, %cst_137 [1] : vector<8x8xf32> to vector<8xf32>
    %252 = vector.shape_cast %251 : vector<8xf32> to vector<8x1xf32>
    %253 = vector.broadcast %252 : vector<8x1xf32> to vector<8x8xf32>
    %254 = arith.subf %250, %253 : vector<8x8xf32>
    %255 = math.exp %254 : vector<8x8xf32>
    %cst_138 = arith.constant dense<0.000000e+00> : vector<8xf32>
    %256 = vector.multi_reduction <add>, %255, %cst_138 [1] : vector<8x8xf32> to vector<8xf32>
    %257 = vector.shape_cast %256 : vector<8xf32> to vector<8x1xf32>
    %258 = tpu.reciprocal %257 {approx = true} : vector<8x1xf32> -> vector<8x1xf32>
    %259 = vector.broadcast %258 : vector<8x1xf32> to vector<8x8xf32>
    %260 = arith.mulf %255, %259 : vector<8x8xf32>
    %261 = vector.broadcast %243 : vector<1x32xf32> to vector<8x32xf32>
    %262 = arith.mulf %236, %261 : vector<8x32xf32>
    %cst_139 = arith.constant dense<0.000000e+00> : vector<8x32xf32>
    %263 = tpu.matmul %260, %262, %cst_139 {dimension_numbers = #tpu.dot_dimension_numbers<[1], [0], [0], [1], [0, 0, 1, 1], [], []>} : vector<8x8xf32>, vector<8x32xf32>, vector<8x32xf32> -> vector<8x32xf32>
    %c8_i32_140 = arith.constant 8 : i32
    %264 = vector.broadcast %c8_i32_140 : i32 to vector<1x32xi32>
    %265 = arith.cmpi sge, %29, %264 : vector<1x32xi32>
    %c16_i32_141 = arith.constant 16 : i32
    %266 = vector.broadcast %c16_i32_141 : i32 to vector<1x32xi32>
    %267 = arith.cmpi slt, %29, %266 : vector<1x32xi32>
    %268 = arith.andi %265, %267 : vector<1x32xi1>
    %269 = arith.extui %268 : vector<1x32xi1> to vector<1x32xi32>
    %270 = arith.sitofp %269 : vector<1x32xi32> to vector<1x32xf32>
    %271 = vector.broadcast %270 : vector<1x32xf32> to vector<8x32xf32>
    %272 = arith.mulf %229, %271 : vector<8x32xf32>
    %cst_142 = arith.constant dense<0.000000e+00> : vector<8x8xf32>
    %273 = tpu.matmul %222, %272, %cst_142 {dimension_numbers = #tpu.dot_dimension_numbers<[1], [1], [0], [0], [0, 0, 1, 0], [], []>} : vector<8x32xf32>, vector<8x32xf32>, vector<8x8xf32> -> vector<8x8xf32>
    %cst_143 = arith.constant 0.353553385 : f32
    %274 = vector.broadcast %cst_143 : f32 to vector<8x8xf32>
    %275 = arith.mulf %273, %274 : vector<8x8xf32>
    %276 = vector.broadcast %28 : vector<1x8xf32> to vector<8x8xf32>
    %277 = arith.addf %275, %276 : vector<8x8xf32>
    %cst_144 = arith.constant dense<0xFF800000> : vector<8xf32>
    %278 = vector.multi_reduction <maximumf>, %277, %cst_144 [1] : vector<8x8xf32> to vector<8xf32>
    %279 = vector.shape_cast %278 : vector<8xf32> to vector<8x1xf32>
    %280 = vector.broadcast %279 : vector<8x1xf32> to vector<8x8xf32>
    %281 = arith.subf %277, %280 : vector<8x8xf32>
    %282 = math.exp %281 : vector<8x8xf32>
    %cst_145 = arith.constant dense<0.000000e+00> : vector<8xf32>
    %283 = vector.multi_reduction <add>, %282, %cst_145 [1] : vector<8x8xf32> to vector<8xf32>
    %284 = vector.shape_cast %283 : vector<8xf32> to vector<8x1xf32>
    %285 = tpu.reciprocal %284 {approx = true} : vector<8x1xf32> -> vector<8x1xf32>
    %286 = vector.broadcast %285 : vector<8x1xf32> to vector<8x8xf32>
    %287 = arith.mulf %282, %286 : vector<8x8xf32>
    %288 = vector.broadcast %270 : vector<1x32xf32> to vector<8x32xf32>
    %289 = arith.mulf %236, %288 : vector<8x32xf32>
    %cst_146 = arith.constant dense<0.000000e+00> : vector<8x32xf32>
    %290 = tpu.matmul %287, %289, %cst_146 {dimension_numbers = #tpu.dot_dimension_numbers<[1], [0], [0], [1], [0, 0, 1, 1], [], []>} : vector<8x8xf32>, vector<8x32xf32>, vector<8x32xf32> -> vector<8x32xf32>
    %291 = arith.addf %263, %290 : vector<8x32xf32>
    %c16_i32_147 = arith.constant 16 : i32
    %292 = vector.broadcast %c16_i32_147 : i32 to vector<1x32xi32>
    %293 = arith.cmpi sge, %29, %292 : vector<1x32xi32>
    %c24_i32_148 = arith.constant 24 : i32
    %294 = vector.broadcast %c24_i32_148 : i32 to vector<1x32xi32>
    %295 = arith.cmpi slt, %29, %294 : vector<1x32xi32>
    %296 = arith.andi %293, %295 : vector<1x32xi1>
    %297 = arith.extui %296 : vector<1x32xi1> to vector<1x32xi32>
    %298 = arith.sitofp %297 : vector<1x32xi32> to vector<1x32xf32>
    %299 = vector.broadcast %298 : vector<1x32xf32> to vector<8x32xf32>
    %300 = arith.mulf %229, %299 : vector<8x32xf32>
    %cst_149 = arith.constant dense<0.000000e+00> : vector<8x8xf32>
    %301 = tpu.matmul %222, %300, %cst_149 {dimension_numbers = #tpu.dot_dimension_numbers<[1], [1], [0], [0], [0, 0, 1, 0], [], []>} : vector<8x32xf32>, vector<8x32xf32>, vector<8x8xf32> -> vector<8x8xf32>
    %cst_150 = arith.constant 0.353553385 : f32
    %302 = vector.broadcast %cst_150 : f32 to vector<8x8xf32>
    %303 = arith.mulf %301, %302 : vector<8x8xf32>
    %304 = vector.broadcast %28 : vector<1x8xf32> to vector<8x8xf32>
    %305 = arith.addf %303, %304 : vector<8x8xf32>
    %cst_151 = arith.constant dense<0xFF800000> : vector<8xf32>
    %306 = vector.multi_reduction <maximumf>, %305, %cst_151 [1] : vector<8x8xf32> to vector<8xf32>
    %307 = vector.shape_cast %306 : vector<8xf32> to vector<8x1xf32>
    %308 = vector.broadcast %307 : vector<8x1xf32> to vector<8x8xf32>
    %309 = arith.subf %305, %308 : vector<8x8xf32>
    %310 = math.exp %309 : vector<8x8xf32>
    %cst_152 = arith.constant dense<0.000000e+00> : vector<8xf32>
    %311 = vector.multi_reduction <add>, %310, %cst_152 [1] : vector<8x8xf32> to vector<8xf32>
    %312 = vector.shape_cast %311 : vector<8xf32> to vector<8x1xf32>
    %313 = tpu.reciprocal %312 {approx = true} : vector<8x1xf32> -> vector<8x1xf32>
    %314 = vector.broadcast %313 : vector<8x1xf32> to vector<8x8xf32>
    %315 = arith.mulf %310, %314 : vector<8x8xf32>
    %316 = vector.broadcast %298 : vector<1x32xf32> to vector<8x32xf32>
    %317 = arith.mulf %236, %316 : vector<8x32xf32>
    %cst_153 = arith.constant dense<0.000000e+00> : vector<8x32xf32>
    %318 = tpu.matmul %315, %317, %cst_153 {dimension_numbers = #tpu.dot_dimension_numbers<[1], [0], [0], [1], [0, 0, 1, 1], [], []>} : vector<8x8xf32>, vector<8x32xf32>, vector<8x32xf32> -> vector<8x32xf32>
    %319 = arith.addf %291, %318 : vector<8x32xf32>
    %c24_i32_154 = arith.constant 24 : i32
    %320 = vector.broadcast %c24_i32_154 : i32 to vector<1x32xi32>
    %321 = arith.cmpi sge, %29, %320 : vector<1x32xi32>
    %c32_i32_155 = arith.constant 32 : i32
    %322 = vector.broadcast %c32_i32_155 : i32 to vector<1x32xi32>
    %323 = arith.cmpi slt, %29, %322 : vector<1x32xi32>
    %324 = arith.andi %321, %323 : vector<1x32xi1>
    %325 = arith.extui %324 : vector<1x32xi1> to vector<1x32xi32>
    %326 = arith.sitofp %325 : vector<1x32xi32> to vector<1x32xf32>
    %327 = vector.broadcast %326 : vector<1x32xf32> to vector<8x32xf32>
    %328 = arith.mulf %229, %327 : vector<8x32xf32>
    %cst_156 = arith.constant dense<0.000000e+00> : vector<8x8xf32>
    %329 = tpu.matmul %222, %328, %cst_156 {dimension_numbers = #tpu.dot_dimension_numbers<[1], [1], [0], [0], [0, 0, 1, 0], [], []>} : vector<8x32xf32>, vector<8x32xf32>, vector<8x8xf32> -> vector<8x8xf32>
    %cst_157 = arith.constant 0.353553385 : f32
    %330 = vector.broadcast %cst_157 : f32 to vector<8x8xf32>
    %331 = arith.mulf %329, %330 : vector<8x8xf32>
    %332 = vector.broadcast %28 : vector<1x8xf32> to vector<8x8xf32>
    %333 = arith.addf %331, %332 : vector<8x8xf32>
    %cst_158 = arith.constant dense<0xFF800000> : vector<8xf32>
    %334 = vector.multi_reduction <maximumf>, %333, %cst_158 [1] : vector<8x8xf32> to vector<8xf32>
    %335 = vector.shape_cast %334 : vector<8xf32> to vector<8x1xf32>
    %336 = vector.broadcast %335 : vector<8x1xf32> to vector<8x8xf32>
    %337 = arith.subf %333, %336 : vector<8x8xf32>
    %338 = math.exp %337 : vector<8x8xf32>
    %cst_159 = arith.constant dense<0.000000e+00> : vector<8xf32>
    %339 = vector.multi_reduction <add>, %338, %cst_159 [1] : vector<8x8xf32> to vector<8xf32>
    %340 = vector.shape_cast %339 : vector<8xf32> to vector<8x1xf32>
    %341 = tpu.reciprocal %340 {approx = true} : vector<8x1xf32> -> vector<8x1xf32>
    %342 = vector.broadcast %341 : vector<8x1xf32> to vector<8x8xf32>
    %343 = arith.mulf %338, %342 : vector<8x8xf32>
    %344 = vector.broadcast %326 : vector<1x32xf32> to vector<8x32xf32>
    %345 = arith.mulf %236, %344 : vector<8x32xf32>
    %cst_160 = arith.constant dense<0.000000e+00> : vector<8x32xf32>
    %346 = tpu.matmul %343, %345, %cst_160 {dimension_numbers = #tpu.dot_dimension_numbers<[1], [0], [0], [1], [0, 0, 1, 1], [], []>} : vector<8x8xf32>, vector<8x32xf32>, vector<8x32xf32> -> vector<8x32xf32>
    %347 = arith.addf %319, %346 : vector<8x32xf32>
    %c0_161 = arith.constant 0 : index
    %c1_162 = arith.constant 1 : index
    %c0_163 = arith.constant 0 : index
    %c0_164 = arith.constant 0 : index
    %348 = vector.load %arg15[%c0_161, %c1_162, %c0_163, %c0_164] : memref<2x2x32x32xf32, #tpu.memory_space<vmem>>, vector<1x1x32x32xf32>
    %349 = vector.shape_cast %348 : vector<1x1x32x32xf32> to vector<32x32xf32>
    %c0_165 = arith.constant 0 : index
    %c1_166 = arith.constant 1 : index
    %c0_167 = arith.constant 0 : index
    %c0_168 = arith.constant 0 : index
    %350 = vector.load %arg16[%c0_165, %c1_166, %c0_167, %c0_168] : memref<2x2x1x32xf32, #tpu.memory_space<vmem>>, vector<1x1x1x32xf32>
    %351 = vector.shape_cast %350 : vector<1x1x1x32xf32> to vector<1x32xf32>
    %cst_169 = arith.constant dense<0.000000e+00> : vector<8x32xf32>
    %352 = tpu.matmul %347, %349, %cst_169 {dimension_numbers = #tpu.dot_dimension_numbers<[1], [0], [0], [1], [0, 0, 1, 1], [], []>} : vector<8x32xf32>, vector<32x32xf32>, vector<8x32xf32> -> vector<8x32xf32>
    %353 = vector.broadcast %351 : vector<1x32xf32> to vector<8x32xf32>
    %354 = arith.addf %352, %353 : vector<8x32xf32>
    %355 = arith.addf %190, %354 : vector<8x32xf32>
    %c0_170 = arith.constant 0 : index
    %c2 = arith.constant 2 : index
    %c0_171 = arith.constant 0 : index
    %c0_172 = arith.constant 0 : index
    %356 = vector.load %arg7[%c0_170, %c2, %c0_171, %c0_172] : memref<2x3x1x32xf32, #tpu.memory_space<vmem>>, vector<1x1x1x32xf32>
    %357 = vector.shape_cast %356 : vector<1x1x1x32xf32> to vector<1x32xf32>
    %c0_173 = arith.constant 0 : index
    %c2_174 = arith.constant 2 : index
    %c0_175 = arith.constant 0 : index
    %c0_176 = arith.constant 0 : index
    %358 = vector.load %arg8[%c0_173, %c2_174, %c0_175, %c0_176] : memref<2x3x1x32xf32, #tpu.memory_space<vmem>>, vector<1x1x1x32xf32>
    %359 = vector.shape_cast %358 : vector<1x1x1x32xf32> to vector<1x32xf32>
    %cst_177 = arith.constant dense<0.000000e+00> : vector<8xf32>
    %360 = vector.multi_reduction <add>, %355, %cst_177 [1] : vector<8x32xf32> to vector<8xf32>
    %361 = vector.shape_cast %360 : vector<8xf32> to vector<8x1xf32>
    %cst_178 = arith.constant 3.200000e+01 : f32
    %362 = vector.broadcast %cst_178 : f32 to vector<8x1xf32>
    %363 = arith.divf %361, %362 : vector<8x1xf32>
    %364 = vector.broadcast %363 : vector<8x1xf32> to vector<8x32xf32>
    %365 = arith.subf %355, %364 : vector<8x32xf32>
    %366 = arith.mulf %365, %365 : vector<8x32xf32>
    %cst_179 = arith.constant dense<0.000000e+00> : vector<8xf32>
    %367 = vector.multi_reduction <add>, %366, %cst_179 [1] : vector<8x32xf32> to vector<8xf32>
    %368 = vector.shape_cast %367 : vector<8xf32> to vector<8x1xf32>
    %cst_180 = arith.constant 0.0322580636 : f32
    %369 = vector.broadcast %cst_180 : f32 to vector<8x1xf32>
    %370 = arith.mulf %368, %369 : vector<8x1xf32>
    %371 = math.sqrt %370 : vector<8x1xf32>
    %cst_181 = arith.constant 9.99999997E-7 : f32
    %372 = vector.broadcast %cst_181 : f32 to vector<8x1xf32>
    %373 = arith.addf %371, %372 : vector<8x1xf32>
    %374 = tpu.reciprocal %373 : vector<8x1xf32> -> vector<8x1xf32>
    %375 = vector.broadcast %374 : vector<8x1xf32> to vector<8x32xf32>
    %376 = arith.mulf %365, %375 : vector<8x32xf32>
    %377 = vector.broadcast %357 : vector<1x32xf32> to vector<8x32xf32>
    %378 = arith.mulf %377, %376 : vector<8x32xf32>
    %379 = vector.broadcast %359 : vector<1x32xf32> to vector<8x32xf32>
    %380 = arith.addf %378, %379 : vector<8x32xf32>
    %c0_182 = arith.constant 0 : index
    %c0_183 = arith.constant 0 : index
    %c0_184 = arith.constant 0 : index
    %381 = vector.load %arg17[%c0_182, %c0_183, %c0_184] : memref<2x32x64xf32, #tpu.memory_space<vmem>>, vector<1x32x64xf32>
    %382 = vector.shape_cast %381 : vector<1x32x64xf32> to vector<32x64xf32>
    %c0_185 = arith.constant 0 : index
    %c0_186 = arith.constant 0 : index
    %c0_187 = arith.constant 0 : index
    %383 = vector.load %arg18[%c0_185, %c0_186, %c0_187] : memref<2x1x64xf32, #tpu.memory_space<vmem>>, vector<1x1x64xf32>
    %384 = vector.shape_cast %383 : vector<1x1x64xf32> to vector<1x64xf32>
    %cst_188 = arith.constant dense<0.000000e+00> : vector<8x64xf32>
    %385 = tpu.matmul %380, %382, %cst_188 {dimension_numbers = #tpu.dot_dimension_numbers<[1], [0], [0], [1], [0, 0, 1, 1], [], []>} : vector<8x32xf32>, vector<32x64xf32>, vector<8x64xf32> -> vector<8x64xf32>
    %386 = vector.broadcast %384 : vector<1x64xf32> to vector<8x64xf32>
    %387 = arith.addf %385, %386 : vector<8x64xf32>
    %cst_189 = arith.constant 0.000000e+00 : f32
    %388 = vector.broadcast %cst_189 : f32 to vector<8x64xf32>
    %389 = arith.maximumf %387, %388 : vector<8x64xf32>
    %c0_190 = arith.constant 0 : index
    %c0_191 = arith.constant 0 : index
    %c0_192 = arith.constant 0 : index
    %390 = vector.load %arg19[%c0_190, %c0_191, %c0_192] : memref<2x64x32xf32, #tpu.memory_space<vmem>>, vector<1x64x32xf32>
    %391 = vector.shape_cast %390 : vector<1x64x32xf32> to vector<64x32xf32>
    %c0_193 = arith.constant 0 : index
    %c0_194 = arith.constant 0 : index
    %c0_195 = arith.constant 0 : index
    %392 = vector.load %arg20[%c0_193, %c0_194, %c0_195] : memref<2x1x32xf32, #tpu.memory_space<vmem>>, vector<1x1x32xf32>
    %393 = vector.shape_cast %392 : vector<1x1x32xf32> to vector<1x32xf32>
    %cst_196 = arith.constant dense<0.000000e+00> : vector<8x32xf32>
    %394 = tpu.matmul %389, %391, %cst_196 {dimension_numbers = #tpu.dot_dimension_numbers<[1], [0], [0], [1], [0, 0, 1, 1], [], []>} : vector<8x64xf32>, vector<64x32xf32>, vector<8x32xf32> -> vector<8x32xf32>
    %395 = vector.broadcast %393 : vector<1x32xf32> to vector<8x32xf32>
    %396 = arith.addf %394, %395 : vector<8x32xf32>
    %397 = arith.addf %355, %396 : vector<8x32xf32>
    %c1_197 = arith.constant 1 : index
    %c0_198 = arith.constant 0 : index
    %c0_199 = arith.constant 0 : index
    %c0_200 = arith.constant 0 : index
    %398 = vector.load %arg7[%c1_197, %c0_198, %c0_199, %c0_200] : memref<2x3x1x32xf32, #tpu.memory_space<vmem>>, vector<1x1x1x32xf32>
    %399 = vector.shape_cast %398 : vector<1x1x1x32xf32> to vector<1x32xf32>
    %c1_201 = arith.constant 1 : index
    %c0_202 = arith.constant 0 : index
    %c0_203 = arith.constant 0 : index
    %c0_204 = arith.constant 0 : index
    %400 = vector.load %arg8[%c1_201, %c0_202, %c0_203, %c0_204] : memref<2x3x1x32xf32, #tpu.memory_space<vmem>>, vector<1x1x1x32xf32>
    %401 = vector.shape_cast %400 : vector<1x1x1x32xf32> to vector<1x32xf32>
    %cst_205 = arith.constant dense<0.000000e+00> : vector<8xf32>
    %402 = vector.multi_reduction <add>, %397, %cst_205 [1] : vector<8x32xf32> to vector<8xf32>
    %403 = vector.shape_cast %402 : vector<8xf32> to vector<8x1xf32>
    %cst_206 = arith.constant 3.200000e+01 : f32
    %404 = vector.broadcast %cst_206 : f32 to vector<8x1xf32>
    %405 = arith.divf %403, %404 : vector<8x1xf32>
    %406 = vector.broadcast %405 : vector<8x1xf32> to vector<8x32xf32>
    %407 = arith.subf %397, %406 : vector<8x32xf32>
    %408 = arith.mulf %407, %407 : vector<8x32xf32>
    %cst_207 = arith.constant dense<0.000000e+00> : vector<8xf32>
    %409 = vector.multi_reduction <add>, %408, %cst_207 [1] : vector<8x32xf32> to vector<8xf32>
    %410 = vector.shape_cast %409 : vector<8xf32> to vector<8x1xf32>
    %cst_208 = arith.constant 0.0322580636 : f32
    %411 = vector.broadcast %cst_208 : f32 to vector<8x1xf32>
    %412 = arith.mulf %410, %411 : vector<8x1xf32>
    %413 = math.sqrt %412 : vector<8x1xf32>
    %cst_209 = arith.constant 9.99999997E-7 : f32
    %414 = vector.broadcast %cst_209 : f32 to vector<8x1xf32>
    %415 = arith.addf %413, %414 : vector<8x1xf32>
    %416 = tpu.reciprocal %415 : vector<8x1xf32> -> vector<8x1xf32>
    %417 = vector.broadcast %416 : vector<8x1xf32> to vector<8x32xf32>
    %418 = arith.mulf %407, %417 : vector<8x32xf32>
    %419 = vector.broadcast %399 : vector<1x32xf32> to vector<8x32xf32>
    %420 = arith.mulf %419, %418 : vector<8x32xf32>
    %421 = vector.broadcast %401 : vector<1x32xf32> to vector<8x32xf32>
    %422 = arith.addf %420, %421 : vector<8x32xf32>
    %c1_210 = arith.constant 1 : index
    %c0_211 = arith.constant 0 : index
    %c0_212 = arith.constant 0 : index
    %c0_213 = arith.constant 0 : index
    %423 = vector.load %arg9[%c1_210, %c0_211, %c0_212, %c0_213] : memref<2x2x32x32xf32, #tpu.memory_space<vmem>>, vector<1x1x32x32xf32>
    %424 = vector.shape_cast %423 : vector<1x1x32x32xf32> to vector<32x32xf32>
    %c1_214 = arith.constant 1 : index
    %c0_215 = arith.constant 0 : index
    %c0_216 = arith.constant 0 : index
    %c0_217 = arith.constant 0 : index
    %425 = vector.load %arg10[%c1_214, %c0_215, %c0_216, %c0_217] : memref<2x2x1x32xf32, #tpu.memory_space<vmem>>, vector<1x1x1x32xf32>
    %426 = vector.shape_cast %425 : vector<1x1x1x32xf32> to vector<1x32xf32>
    %cst_218 = arith.constant dense<0.000000e+00> : vector<8x32xf32>
    %427 = tpu.matmul %422, %424, %cst_218 {dimension_numbers = #tpu.dot_dimension_numbers<[1], [0], [0], [1], [0, 0, 1, 1], [], []>} : vector<8x32xf32>, vector<32x32xf32>, vector<8x32xf32> -> vector<8x32xf32>
    %428 = vector.broadcast %426 : vector<1x32xf32> to vector<8x32xf32>
    %429 = arith.addf %427, %428 : vector<8x32xf32>
    %c1_219 = arith.constant 1 : index
    %c0_220 = arith.constant 0 : index
    %c0_221 = arith.constant 0 : index
    %c0_222 = arith.constant 0 : index
    %430 = vector.load %arg11[%c1_219, %c0_220, %c0_221, %c0_222] : memref<2x2x32x32xf32, #tpu.memory_space<vmem>>, vector<1x1x32x32xf32>
    %431 = vector.shape_cast %430 : vector<1x1x32x32xf32> to vector<32x32xf32>
    %c1_223 = arith.constant 1 : index
    %c0_224 = arith.constant 0 : index
    %c0_225 = arith.constant 0 : index
    %c0_226 = arith.constant 0 : index
    %432 = vector.load %arg12[%c1_223, %c0_224, %c0_225, %c0_226] : memref<2x2x1x32xf32, #tpu.memory_space<vmem>>, vector<1x1x1x32xf32>
    %433 = vector.shape_cast %432 : vector<1x1x1x32xf32> to vector<1x32xf32>
    %cst_227 = arith.constant dense<0.000000e+00> : vector<8x32xf32>
    %434 = tpu.matmul %422, %431, %cst_227 {dimension_numbers = #tpu.dot_dimension_numbers<[1], [0], [0], [1], [0, 0, 1, 1], [], []>} : vector<8x32xf32>, vector<32x32xf32>, vector<8x32xf32> -> vector<8x32xf32>
    %435 = vector.broadcast %433 : vector<1x32xf32> to vector<8x32xf32>
    %436 = arith.addf %434, %435 : vector<8x32xf32>
    %c1_228 = arith.constant 1 : index
    %c0_229 = arith.constant 0 : index
    %c0_230 = arith.constant 0 : index
    %c0_231 = arith.constant 0 : index
    %437 = vector.load %arg13[%c1_228, %c0_229, %c0_230, %c0_231] : memref<2x2x32x32xf32, #tpu.memory_space<vmem>>, vector<1x1x32x32xf32>
    %438 = vector.shape_cast %437 : vector<1x1x32x32xf32> to vector<32x32xf32>
    %c1_232 = arith.constant 1 : index
    %c0_233 = arith.constant 0 : index
    %c0_234 = arith.constant 0 : index
    %c0_235 = arith.constant 0 : index
    %439 = vector.load %arg14[%c1_232, %c0_233, %c0_234, %c0_235] : memref<2x2x1x32xf32, #tpu.memory_space<vmem>>, vector<1x1x1x32xf32>
    %440 = vector.shape_cast %439 : vector<1x1x1x32xf32> to vector<1x32xf32>
    %cst_236 = arith.constant dense<0.000000e+00> : vector<8x32xf32>
    %441 = tpu.matmul %422, %438, %cst_236 {dimension_numbers = #tpu.dot_dimension_numbers<[1], [0], [0], [1], [0, 0, 1, 1], [], []>} : vector<8x32xf32>, vector<32x32xf32>, vector<8x32xf32> -> vector<8x32xf32>
    %442 = vector.broadcast %440 : vector<1x32xf32> to vector<8x32xf32>
    %443 = arith.addf %441, %442 : vector<8x32xf32>
    %c0_i32_237 = arith.constant 0 : i32
    %444 = vector.broadcast %c0_i32_237 : i32 to vector<1x32xi32>
    %445 = arith.cmpi sge, %29, %444 : vector<1x32xi32>
    %c8_i32_238 = arith.constant 8 : i32
    %446 = vector.broadcast %c8_i32_238 : i32 to vector<1x32xi32>
    %447 = arith.cmpi slt, %29, %446 : vector<1x32xi32>
    %448 = arith.andi %445, %447 : vector<1x32xi1>
    %449 = arith.extui %448 : vector<1x32xi1> to vector<1x32xi32>
    %450 = arith.sitofp %449 : vector<1x32xi32> to vector<1x32xf32>
    %451 = vector.broadcast %450 : vector<1x32xf32> to vector<8x32xf32>
    %452 = arith.mulf %436, %451 : vector<8x32xf32>
    %cst_239 = arith.constant dense<0.000000e+00> : vector<8x8xf32>
    %453 = tpu.matmul %429, %452, %cst_239 {dimension_numbers = #tpu.dot_dimension_numbers<[1], [1], [0], [0], [0, 0, 1, 0], [], []>} : vector<8x32xf32>, vector<8x32xf32>, vector<8x8xf32> -> vector<8x8xf32>
    %cst_240 = arith.constant 0.353553385 : f32
    %454 = vector.broadcast %cst_240 : f32 to vector<8x8xf32>
    %455 = arith.mulf %453, %454 : vector<8x8xf32>
    %456 = arith.addf %455, %21 : vector<8x8xf32>
    %cst_241 = arith.constant dense<0xFF800000> : vector<8xf32>
    %457 = vector.multi_reduction <maximumf>, %456, %cst_241 [1] : vector<8x8xf32> to vector<8xf32>
    %458 = vector.shape_cast %457 : vector<8xf32> to vector<8x1xf32>
    %459 = vector.broadcast %458 : vector<8x1xf32> to vector<8x8xf32>
    %460 = arith.subf %456, %459 : vector<8x8xf32>
    %461 = math.exp %460 : vector<8x8xf32>
    %cst_242 = arith.constant dense<0.000000e+00> : vector<8xf32>
    %462 = vector.multi_reduction <add>, %461, %cst_242 [1] : vector<8x8xf32> to vector<8xf32>
    %463 = vector.shape_cast %462 : vector<8xf32> to vector<8x1xf32>
    %464 = tpu.reciprocal %463 {approx = true} : vector<8x1xf32> -> vector<8x1xf32>
    %465 = vector.broadcast %464 : vector<8x1xf32> to vector<8x8xf32>
    %466 = arith.mulf %461, %465 : vector<8x8xf32>
    %467 = vector.broadcast %450 : vector<1x32xf32> to vector<8x32xf32>
    %468 = arith.mulf %443, %467 : vector<8x32xf32>
    %cst_243 = arith.constant dense<0.000000e+00> : vector<8x32xf32>
    %469 = tpu.matmul %466, %468, %cst_243 {dimension_numbers = #tpu.dot_dimension_numbers<[1], [0], [0], [1], [0, 0, 1, 1], [], []>} : vector<8x8xf32>, vector<8x32xf32>, vector<8x32xf32> -> vector<8x32xf32>
    %c8_i32_244 = arith.constant 8 : i32
    %470 = vector.broadcast %c8_i32_244 : i32 to vector<1x32xi32>
    %471 = arith.cmpi sge, %29, %470 : vector<1x32xi32>
    %c16_i32_245 = arith.constant 16 : i32
    %472 = vector.broadcast %c16_i32_245 : i32 to vector<1x32xi32>
    %473 = arith.cmpi slt, %29, %472 : vector<1x32xi32>
    %474 = arith.andi %471, %473 : vector<1x32xi1>
    %475 = arith.extui %474 : vector<1x32xi1> to vector<1x32xi32>
    %476 = arith.sitofp %475 : vector<1x32xi32> to vector<1x32xf32>
    %477 = vector.broadcast %476 : vector<1x32xf32> to vector<8x32xf32>
    %478 = arith.mulf %436, %477 : vector<8x32xf32>
    %cst_246 = arith.constant dense<0.000000e+00> : vector<8x8xf32>
    %479 = tpu.matmul %429, %478, %cst_246 {dimension_numbers = #tpu.dot_dimension_numbers<[1], [1], [0], [0], [0, 0, 1, 0], [], []>} : vector<8x32xf32>, vector<8x32xf32>, vector<8x8xf32> -> vector<8x8xf32>
    %cst_247 = arith.constant 0.353553385 : f32
    %480 = vector.broadcast %cst_247 : f32 to vector<8x8xf32>
    %481 = arith.mulf %479, %480 : vector<8x8xf32>
    %482 = arith.addf %481, %21 : vector<8x8xf32>
    %cst_248 = arith.constant dense<0xFF800000> : vector<8xf32>
    %483 = vector.multi_reduction <maximumf>, %482, %cst_248 [1] : vector<8x8xf32> to vector<8xf32>
    %484 = vector.shape_cast %483 : vector<8xf32> to vector<8x1xf32>
    %485 = vector.broadcast %484 : vector<8x1xf32> to vector<8x8xf32>
    %486 = arith.subf %482, %485 : vector<8x8xf32>
    %487 = math.exp %486 : vector<8x8xf32>
    %cst_249 = arith.constant dense<0.000000e+00> : vector<8xf32>
    %488 = vector.multi_reduction <add>, %487, %cst_249 [1] : vector<8x8xf32> to vector<8xf32>
    %489 = vector.shape_cast %488 : vector<8xf32> to vector<8x1xf32>
    %490 = tpu.reciprocal %489 {approx = true} : vector<8x1xf32> -> vector<8x1xf32>
    %491 = vector.broadcast %490 : vector<8x1xf32> to vector<8x8xf32>
    %492 = arith.mulf %487, %491 : vector<8x8xf32>
    %493 = vector.broadcast %476 : vector<1x32xf32> to vector<8x32xf32>
    %494 = arith.mulf %443, %493 : vector<8x32xf32>
    %cst_250 = arith.constant dense<0.000000e+00> : vector<8x32xf32>
    %495 = tpu.matmul %492, %494, %cst_250 {dimension_numbers = #tpu.dot_dimension_numbers<[1], [0], [0], [1], [0, 0, 1, 1], [], []>} : vector<8x8xf32>, vector<8x32xf32>, vector<8x32xf32> -> vector<8x32xf32>
    %496 = arith.addf %469, %495 : vector<8x32xf32>
    %c16_i32_251 = arith.constant 16 : i32
    %497 = vector.broadcast %c16_i32_251 : i32 to vector<1x32xi32>
    %498 = arith.cmpi sge, %29, %497 : vector<1x32xi32>
    %c24_i32_252 = arith.constant 24 : i32
    %499 = vector.broadcast %c24_i32_252 : i32 to vector<1x32xi32>
    %500 = arith.cmpi slt, %29, %499 : vector<1x32xi32>
    %501 = arith.andi %498, %500 : vector<1x32xi1>
    %502 = arith.extui %501 : vector<1x32xi1> to vector<1x32xi32>
    %503 = arith.sitofp %502 : vector<1x32xi32> to vector<1x32xf32>
    %504 = vector.broadcast %503 : vector<1x32xf32> to vector<8x32xf32>
    %505 = arith.mulf %436, %504 : vector<8x32xf32>
    %cst_253 = arith.constant dense<0.000000e+00> : vector<8x8xf32>
    %506 = tpu.matmul %429, %505, %cst_253 {dimension_numbers = #tpu.dot_dimension_numbers<[1], [1], [0], [0], [0, 0, 1, 0], [], []>} : vector<8x32xf32>, vector<8x32xf32>, vector<8x8xf32> -> vector<8x8xf32>
    %cst_254 = arith.constant 0.353553385 : f32
    %507 = vector.broadcast %cst_254 : f32 to vector<8x8xf32>
    %508 = arith.mulf %506, %507 : vector<8x8xf32>
    %509 = arith.addf %508, %21 : vector<8x8xf32>
    %cst_255 = arith.constant dense<0xFF800000> : vector<8xf32>
    %510 = vector.multi_reduction <maximumf>, %509, %cst_255 [1] : vector<8x8xf32> to vector<8xf32>
    %511 = vector.shape_cast %510 : vector<8xf32> to vector<8x1xf32>
    %512 = vector.broadcast %511 : vector<8x1xf32> to vector<8x8xf32>
    %513 = arith.subf %509, %512 : vector<8x8xf32>
    %514 = math.exp %513 : vector<8x8xf32>
    %cst_256 = arith.constant dense<0.000000e+00> : vector<8xf32>
    %515 = vector.multi_reduction <add>, %514, %cst_256 [1] : vector<8x8xf32> to vector<8xf32>
    %516 = vector.shape_cast %515 : vector<8xf32> to vector<8x1xf32>
    %517 = tpu.reciprocal %516 {approx = true} : vector<8x1xf32> -> vector<8x1xf32>
    %518 = vector.broadcast %517 : vector<8x1xf32> to vector<8x8xf32>
    %519 = arith.mulf %514, %518 : vector<8x8xf32>
    %520 = vector.broadcast %503 : vector<1x32xf32> to vector<8x32xf32>
    %521 = arith.mulf %443, %520 : vector<8x32xf32>
    %cst_257 = arith.constant dense<0.000000e+00> : vector<8x32xf32>
    %522 = tpu.matmul %519, %521, %cst_257 {dimension_numbers = #tpu.dot_dimension_numbers<[1], [0], [0], [1], [0, 0, 1, 1], [], []>} : vector<8x8xf32>, vector<8x32xf32>, vector<8x32xf32> -> vector<8x32xf32>
    %523 = arith.addf %496, %522 : vector<8x32xf32>
    %c24_i32_258 = arith.constant 24 : i32
    %524 = vector.broadcast %c24_i32_258 : i32 to vector<1x32xi32>
    %525 = arith.cmpi sge, %29, %524 : vector<1x32xi32>
    %c32_i32_259 = arith.constant 32 : i32
    %526 = vector.broadcast %c32_i32_259 : i32 to vector<1x32xi32>
    %527 = arith.cmpi slt, %29, %526 : vector<1x32xi32>
    %528 = arith.andi %525, %527 : vector<1x32xi1>
    %529 = arith.extui %528 : vector<1x32xi1> to vector<1x32xi32>
    %530 = arith.sitofp %529 : vector<1x32xi32> to vector<1x32xf32>
    %531 = vector.broadcast %530 : vector<1x32xf32> to vector<8x32xf32>
    %532 = arith.mulf %436, %531 : vector<8x32xf32>
    %cst_260 = arith.constant dense<0.000000e+00> : vector<8x8xf32>
    %533 = tpu.matmul %429, %532, %cst_260 {dimension_numbers = #tpu.dot_dimension_numbers<[1], [1], [0], [0], [0, 0, 1, 0], [], []>} : vector<8x32xf32>, vector<8x32xf32>, vector<8x8xf32> -> vector<8x8xf32>
    %cst_261 = arith.constant 0.353553385 : f32
    %534 = vector.broadcast %cst_261 : f32 to vector<8x8xf32>
    %535 = arith.mulf %533, %534 : vector<8x8xf32>
    %536 = arith.addf %535, %21 : vector<8x8xf32>
    %cst_262 = arith.constant dense<0xFF800000> : vector<8xf32>
    %537 = vector.multi_reduction <maximumf>, %536, %cst_262 [1] : vector<8x8xf32> to vector<8xf32>
    %538 = vector.shape_cast %537 : vector<8xf32> to vector<8x1xf32>
    %539 = vector.broadcast %538 : vector<8x1xf32> to vector<8x8xf32>
    %540 = arith.subf %536, %539 : vector<8x8xf32>
    %541 = math.exp %540 : vector<8x8xf32>
    %cst_263 = arith.constant dense<0.000000e+00> : vector<8xf32>
    %542 = vector.multi_reduction <add>, %541, %cst_263 [1] : vector<8x8xf32> to vector<8xf32>
    %543 = vector.shape_cast %542 : vector<8xf32> to vector<8x1xf32>
    %544 = tpu.reciprocal %543 {approx = true} : vector<8x1xf32> -> vector<8x1xf32>
    %545 = vector.broadcast %544 : vector<8x1xf32> to vector<8x8xf32>
    %546 = arith.mulf %541, %545 : vector<8x8xf32>
    %547 = vector.broadcast %530 : vector<1x32xf32> to vector<8x32xf32>
    %548 = arith.mulf %443, %547 : vector<8x32xf32>
    %cst_264 = arith.constant dense<0.000000e+00> : vector<8x32xf32>
    %549 = tpu.matmul %546, %548, %cst_264 {dimension_numbers = #tpu.dot_dimension_numbers<[1], [0], [0], [1], [0, 0, 1, 1], [], []>} : vector<8x8xf32>, vector<8x32xf32>, vector<8x32xf32> -> vector<8x32xf32>
    %550 = arith.addf %523, %549 : vector<8x32xf32>
    %c1_265 = arith.constant 1 : index
    %c0_266 = arith.constant 0 : index
    %c0_267 = arith.constant 0 : index
    %c0_268 = arith.constant 0 : index
    %551 = vector.load %arg15[%c1_265, %c0_266, %c0_267, %c0_268] : memref<2x2x32x32xf32, #tpu.memory_space<vmem>>, vector<1x1x32x32xf32>
    %552 = vector.shape_cast %551 : vector<1x1x32x32xf32> to vector<32x32xf32>
    %c1_269 = arith.constant 1 : index
    %c0_270 = arith.constant 0 : index
    %c0_271 = arith.constant 0 : index
    %c0_272 = arith.constant 0 : index
    %553 = vector.load %arg16[%c1_269, %c0_270, %c0_271, %c0_272] : memref<2x2x1x32xf32, #tpu.memory_space<vmem>>, vector<1x1x1x32xf32>
    %554 = vector.shape_cast %553 : vector<1x1x1x32xf32> to vector<1x32xf32>
    %cst_273 = arith.constant dense<0.000000e+00> : vector<8x32xf32>
    %555 = tpu.matmul %550, %552, %cst_273 {dimension_numbers = #tpu.dot_dimension_numbers<[1], [0], [0], [1], [0, 0, 1, 1], [], []>} : vector<8x32xf32>, vector<32x32xf32>, vector<8x32xf32> -> vector<8x32xf32>
    %556 = vector.broadcast %554 : vector<1x32xf32> to vector<8x32xf32>
    %557 = arith.addf %555, %556 : vector<8x32xf32>
    %558 = arith.addf %397, %557 : vector<8x32xf32>
    %c1_274 = arith.constant 1 : index
    %c1_275 = arith.constant 1 : index
    %c0_276 = arith.constant 0 : index
    %c0_277 = arith.constant 0 : index
    %559 = vector.load %arg7[%c1_274, %c1_275, %c0_276, %c0_277] : memref<2x3x1x32xf32, #tpu.memory_space<vmem>>, vector<1x1x1x32xf32>
    %560 = vector.shape_cast %559 : vector<1x1x1x32xf32> to vector<1x32xf32>
    %c1_278 = arith.constant 1 : index
    %c1_279 = arith.constant 1 : index
    %c0_280 = arith.constant 0 : index
    %c0_281 = arith.constant 0 : index
    %561 = vector.load %arg8[%c1_278, %c1_279, %c0_280, %c0_281] : memref<2x3x1x32xf32, #tpu.memory_space<vmem>>, vector<1x1x1x32xf32>
    %562 = vector.shape_cast %561 : vector<1x1x1x32xf32> to vector<1x32xf32>
    %cst_282 = arith.constant dense<0.000000e+00> : vector<8xf32>
    %563 = vector.multi_reduction <add>, %558, %cst_282 [1] : vector<8x32xf32> to vector<8xf32>
    %564 = vector.shape_cast %563 : vector<8xf32> to vector<8x1xf32>
    %cst_283 = arith.constant 3.200000e+01 : f32
    %565 = vector.broadcast %cst_283 : f32 to vector<8x1xf32>
    %566 = arith.divf %564, %565 : vector<8x1xf32>
    %567 = vector.broadcast %566 : vector<8x1xf32> to vector<8x32xf32>
    %568 = arith.subf %558, %567 : vector<8x32xf32>
    %569 = arith.mulf %568, %568 : vector<8x32xf32>
    %cst_284 = arith.constant dense<0.000000e+00> : vector<8xf32>
    %570 = vector.multi_reduction <add>, %569, %cst_284 [1] : vector<8x32xf32> to vector<8xf32>
    %571 = vector.shape_cast %570 : vector<8xf32> to vector<8x1xf32>
    %cst_285 = arith.constant 0.0322580636 : f32
    %572 = vector.broadcast %cst_285 : f32 to vector<8x1xf32>
    %573 = arith.mulf %571, %572 : vector<8x1xf32>
    %574 = math.sqrt %573 : vector<8x1xf32>
    %cst_286 = arith.constant 9.99999997E-7 : f32
    %575 = vector.broadcast %cst_286 : f32 to vector<8x1xf32>
    %576 = arith.addf %574, %575 : vector<8x1xf32>
    %577 = tpu.reciprocal %576 : vector<8x1xf32> -> vector<8x1xf32>
    %578 = vector.broadcast %577 : vector<8x1xf32> to vector<8x32xf32>
    %579 = arith.mulf %568, %578 : vector<8x32xf32>
    %580 = vector.broadcast %560 : vector<1x32xf32> to vector<8x32xf32>
    %581 = arith.mulf %580, %579 : vector<8x32xf32>
    %582 = vector.broadcast %562 : vector<1x32xf32> to vector<8x32xf32>
    %583 = arith.addf %581, %582 : vector<8x32xf32>
    %c1_287 = arith.constant 1 : index
    %c1_288 = arith.constant 1 : index
    %c0_289 = arith.constant 0 : index
    %c0_290 = arith.constant 0 : index
    %584 = vector.load %arg9[%c1_287, %c1_288, %c0_289, %c0_290] : memref<2x2x32x32xf32, #tpu.memory_space<vmem>>, vector<1x1x32x32xf32>
    %585 = vector.shape_cast %584 : vector<1x1x32x32xf32> to vector<32x32xf32>
    %c1_291 = arith.constant 1 : index
    %c1_292 = arith.constant 1 : index
    %c0_293 = arith.constant 0 : index
    %c0_294 = arith.constant 0 : index
    %586 = vector.load %arg10[%c1_291, %c1_292, %c0_293, %c0_294] : memref<2x2x1x32xf32, #tpu.memory_space<vmem>>, vector<1x1x1x32xf32>
    %587 = vector.shape_cast %586 : vector<1x1x1x32xf32> to vector<1x32xf32>
    %cst_295 = arith.constant dense<0.000000e+00> : vector<8x32xf32>
    %588 = tpu.matmul %583, %585, %cst_295 {dimension_numbers = #tpu.dot_dimension_numbers<[1], [0], [0], [1], [0, 0, 1, 1], [], []>} : vector<8x32xf32>, vector<32x32xf32>, vector<8x32xf32> -> vector<8x32xf32>
    %589 = vector.broadcast %587 : vector<1x32xf32> to vector<8x32xf32>
    %590 = arith.addf %588, %589 : vector<8x32xf32>
    %c1_296 = arith.constant 1 : index
    %c1_297 = arith.constant 1 : index
    %c0_298 = arith.constant 0 : index
    %c0_299 = arith.constant 0 : index
    %591 = vector.load %arg11[%c1_296, %c1_297, %c0_298, %c0_299] : memref<2x2x32x32xf32, #tpu.memory_space<vmem>>, vector<1x1x32x32xf32>
    %592 = vector.shape_cast %591 : vector<1x1x32x32xf32> to vector<32x32xf32>
    %c1_300 = arith.constant 1 : index
    %c1_301 = arith.constant 1 : index
    %c0_302 = arith.constant 0 : index
    %c0_303 = arith.constant 0 : index
    %593 = vector.load %arg12[%c1_300, %c1_301, %c0_302, %c0_303] : memref<2x2x1x32xf32, #tpu.memory_space<vmem>>, vector<1x1x1x32xf32>
    %594 = vector.shape_cast %593 : vector<1x1x1x32xf32> to vector<1x32xf32>
    %cst_304 = arith.constant dense<0.000000e+00> : vector<8x32xf32>
    %595 = tpu.matmul %14, %592, %cst_304 {dimension_numbers = #tpu.dot_dimension_numbers<[1], [0], [0], [1], [0, 0, 1, 1], [], []>} : vector<8x32xf32>, vector<32x32xf32>, vector<8x32xf32> -> vector<8x32xf32>
    %596 = vector.broadcast %594 : vector<1x32xf32> to vector<8x32xf32>
    %597 = arith.addf %595, %596 : vector<8x32xf32>
    %c1_305 = arith.constant 1 : index
    %c1_306 = arith.constant 1 : index
    %c0_307 = arith.constant 0 : index
    %c0_308 = arith.constant 0 : index
    %598 = vector.load %arg13[%c1_305, %c1_306, %c0_307, %c0_308] : memref<2x2x32x32xf32, #tpu.memory_space<vmem>>, vector<1x1x32x32xf32>
    %599 = vector.shape_cast %598 : vector<1x1x32x32xf32> to vector<32x32xf32>
    %c1_309 = arith.constant 1 : index
    %c1_310 = arith.constant 1 : index
    %c0_311 = arith.constant 0 : index
    %c0_312 = arith.constant 0 : index
    %600 = vector.load %arg14[%c1_309, %c1_310, %c0_311, %c0_312] : memref<2x2x1x32xf32, #tpu.memory_space<vmem>>, vector<1x1x1x32xf32>
    %601 = vector.shape_cast %600 : vector<1x1x1x32xf32> to vector<1x32xf32>
    %cst_313 = arith.constant dense<0.000000e+00> : vector<8x32xf32>
    %602 = tpu.matmul %14, %599, %cst_313 {dimension_numbers = #tpu.dot_dimension_numbers<[1], [0], [0], [1], [0, 0, 1, 1], [], []>} : vector<8x32xf32>, vector<32x32xf32>, vector<8x32xf32> -> vector<8x32xf32>
    %603 = vector.broadcast %601 : vector<1x32xf32> to vector<8x32xf32>
    %604 = arith.addf %602, %603 : vector<8x32xf32>
    %c0_i32_314 = arith.constant 0 : i32
    %605 = vector.broadcast %c0_i32_314 : i32 to vector<1x32xi32>
    %606 = arith.cmpi sge, %29, %605 : vector<1x32xi32>
    %c8_i32_315 = arith.constant 8 : i32
    %607 = vector.broadcast %c8_i32_315 : i32 to vector<1x32xi32>
    %608 = arith.cmpi slt, %29, %607 : vector<1x32xi32>
    %609 = arith.andi %606, %608 : vector<1x32xi1>
    %610 = arith.extui %609 : vector<1x32xi1> to vector<1x32xi32>
    %611 = arith.sitofp %610 : vector<1x32xi32> to vector<1x32xf32>
    %612 = vector.broadcast %611 : vector<1x32xf32> to vector<8x32xf32>
    %613 = arith.mulf %597, %612 : vector<8x32xf32>
    %cst_316 = arith.constant dense<0.000000e+00> : vector<8x8xf32>
    %614 = tpu.matmul %590, %613, %cst_316 {dimension_numbers = #tpu.dot_dimension_numbers<[1], [1], [0], [0], [0, 0, 1, 0], [], []>} : vector<8x32xf32>, vector<8x32xf32>, vector<8x8xf32> -> vector<8x8xf32>
    %cst_317 = arith.constant 0.353553385 : f32
    %615 = vector.broadcast %cst_317 : f32 to vector<8x8xf32>
    %616 = arith.mulf %614, %615 : vector<8x8xf32>
    %617 = vector.broadcast %28 : vector<1x8xf32> to vector<8x8xf32>
    %618 = arith.addf %616, %617 : vector<8x8xf32>
    %cst_318 = arith.constant dense<0xFF800000> : vector<8xf32>
    %619 = vector.multi_reduction <maximumf>, %618, %cst_318 [1] : vector<8x8xf32> to vector<8xf32>
    %620 = vector.shape_cast %619 : vector<8xf32> to vector<8x1xf32>
    %621 = vector.broadcast %620 : vector<8x1xf32> to vector<8x8xf32>
    %622 = arith.subf %618, %621 : vector<8x8xf32>
    %623 = math.exp %622 : vector<8x8xf32>
    %cst_319 = arith.constant dense<0.000000e+00> : vector<8xf32>
    %624 = vector.multi_reduction <add>, %623, %cst_319 [1] : vector<8x8xf32> to vector<8xf32>
    %625 = vector.shape_cast %624 : vector<8xf32> to vector<8x1xf32>
    %626 = tpu.reciprocal %625 {approx = true} : vector<8x1xf32> -> vector<8x1xf32>
    %627 = vector.broadcast %626 : vector<8x1xf32> to vector<8x8xf32>
    %628 = arith.mulf %623, %627 : vector<8x8xf32>
    %629 = vector.broadcast %611 : vector<1x32xf32> to vector<8x32xf32>
    %630 = arith.mulf %604, %629 : vector<8x32xf32>
    %cst_320 = arith.constant dense<0.000000e+00> : vector<8x32xf32>
    %631 = tpu.matmul %628, %630, %cst_320 {dimension_numbers = #tpu.dot_dimension_numbers<[1], [0], [0], [1], [0, 0, 1, 1], [], []>} : vector<8x8xf32>, vector<8x32xf32>, vector<8x32xf32> -> vector<8x32xf32>
    %c8_i32_321 = arith.constant 8 : i32
    %632 = vector.broadcast %c8_i32_321 : i32 to vector<1x32xi32>
    %633 = arith.cmpi sge, %29, %632 : vector<1x32xi32>
    %c16_i32_322 = arith.constant 16 : i32
    %634 = vector.broadcast %c16_i32_322 : i32 to vector<1x32xi32>
    %635 = arith.cmpi slt, %29, %634 : vector<1x32xi32>
    %636 = arith.andi %633, %635 : vector<1x32xi1>
    %637 = arith.extui %636 : vector<1x32xi1> to vector<1x32xi32>
    %638 = arith.sitofp %637 : vector<1x32xi32> to vector<1x32xf32>
    %639 = vector.broadcast %638 : vector<1x32xf32> to vector<8x32xf32>
    %640 = arith.mulf %597, %639 : vector<8x32xf32>
    %cst_323 = arith.constant dense<0.000000e+00> : vector<8x8xf32>
    %641 = tpu.matmul %590, %640, %cst_323 {dimension_numbers = #tpu.dot_dimension_numbers<[1], [1], [0], [0], [0, 0, 1, 0], [], []>} : vector<8x32xf32>, vector<8x32xf32>, vector<8x8xf32> -> vector<8x8xf32>
    %cst_324 = arith.constant 0.353553385 : f32
    %642 = vector.broadcast %cst_324 : f32 to vector<8x8xf32>
    %643 = arith.mulf %641, %642 : vector<8x8xf32>
    %644 = vector.broadcast %28 : vector<1x8xf32> to vector<8x8xf32>
    %645 = arith.addf %643, %644 : vector<8x8xf32>
    %cst_325 = arith.constant dense<0xFF800000> : vector<8xf32>
    %646 = vector.multi_reduction <maximumf>, %645, %cst_325 [1] : vector<8x8xf32> to vector<8xf32>
    %647 = vector.shape_cast %646 : vector<8xf32> to vector<8x1xf32>
    %648 = vector.broadcast %647 : vector<8x1xf32> to vector<8x8xf32>
    %649 = arith.subf %645, %648 : vector<8x8xf32>
    %650 = math.exp %649 : vector<8x8xf32>
    %cst_326 = arith.constant dense<0.000000e+00> : vector<8xf32>
    %651 = vector.multi_reduction <add>, %650, %cst_326 [1] : vector<8x8xf32> to vector<8xf32>
    %652 = vector.shape_cast %651 : vector<8xf32> to vector<8x1xf32>
    %653 = tpu.reciprocal %652 {approx = true} : vector<8x1xf32> -> vector<8x1xf32>
    %654 = vector.broadcast %653 : vector<8x1xf32> to vector<8x8xf32>
    %655 = arith.mulf %650, %654 : vector<8x8xf32>
    %656 = vector.broadcast %638 : vector<1x32xf32> to vector<8x32xf32>
    %657 = arith.mulf %604, %656 : vector<8x32xf32>
    %cst_327 = arith.constant dense<0.000000e+00> : vector<8x32xf32>
    %658 = tpu.matmul %655, %657, %cst_327 {dimension_numbers = #tpu.dot_dimension_numbers<[1], [0], [0], [1], [0, 0, 1, 1], [], []>} : vector<8x8xf32>, vector<8x32xf32>, vector<8x32xf32> -> vector<8x32xf32>
    %659 = arith.addf %631, %658 : vector<8x32xf32>
    %c16_i32_328 = arith.constant 16 : i32
    %660 = vector.broadcast %c16_i32_328 : i32 to vector<1x32xi32>
    %661 = arith.cmpi sge, %29, %660 : vector<1x32xi32>
    %c24_i32_329 = arith.constant 24 : i32
    %662 = vector.broadcast %c24_i32_329 : i32 to vector<1x32xi32>
    %663 = arith.cmpi slt, %29, %662 : vector<1x32xi32>
    %664 = arith.andi %661, %663 : vector<1x32xi1>
    %665 = arith.extui %664 : vector<1x32xi1> to vector<1x32xi32>
    %666 = arith.sitofp %665 : vector<1x32xi32> to vector<1x32xf32>
    %667 = vector.broadcast %666 : vector<1x32xf32> to vector<8x32xf32>
    %668 = arith.mulf %597, %667 : vector<8x32xf32>
    %cst_330 = arith.constant dense<0.000000e+00> : vector<8x8xf32>
    %669 = tpu.matmul %590, %668, %cst_330 {dimension_numbers = #tpu.dot_dimension_numbers<[1], [1], [0], [0], [0, 0, 1, 0], [], []>} : vector<8x32xf32>, vector<8x32xf32>, vector<8x8xf32> -> vector<8x8xf32>
    %cst_331 = arith.constant 0.353553385 : f32
    %670 = vector.broadcast %cst_331 : f32 to vector<8x8xf32>
    %671 = arith.mulf %669, %670 : vector<8x8xf32>
    %672 = vector.broadcast %28 : vector<1x8xf32> to vector<8x8xf32>
    %673 = arith.addf %671, %672 : vector<8x8xf32>
    %cst_332 = arith.constant dense<0xFF800000> : vector<8xf32>
    %674 = vector.multi_reduction <maximumf>, %673, %cst_332 [1] : vector<8x8xf32> to vector<8xf32>
    %675 = vector.shape_cast %674 : vector<8xf32> to vector<8x1xf32>
    %676 = vector.broadcast %675 : vector<8x1xf32> to vector<8x8xf32>
    %677 = arith.subf %673, %676 : vector<8x8xf32>
    %678 = math.exp %677 : vector<8x8xf32>
    %cst_333 = arith.constant dense<0.000000e+00> : vector<8xf32>
    %679 = vector.multi_reduction <add>, %678, %cst_333 [1] : vector<8x8xf32> to vector<8xf32>
    %680 = vector.shape_cast %679 : vector<8xf32> to vector<8x1xf32>
    %681 = tpu.reciprocal %680 {approx = true} : vector<8x1xf32> -> vector<8x1xf32>
    %682 = vector.broadcast %681 : vector<8x1xf32> to vector<8x8xf32>
    %683 = arith.mulf %678, %682 : vector<8x8xf32>
    %684 = vector.broadcast %666 : vector<1x32xf32> to vector<8x32xf32>
    %685 = arith.mulf %604, %684 : vector<8x32xf32>
    %cst_334 = arith.constant dense<0.000000e+00> : vector<8x32xf32>
    %686 = tpu.matmul %683, %685, %cst_334 {dimension_numbers = #tpu.dot_dimension_numbers<[1], [0], [0], [1], [0, 0, 1, 1], [], []>} : vector<8x8xf32>, vector<8x32xf32>, vector<8x32xf32> -> vector<8x32xf32>
    %687 = arith.addf %659, %686 : vector<8x32xf32>
    %c24_i32_335 = arith.constant 24 : i32
    %688 = vector.broadcast %c24_i32_335 : i32 to vector<1x32xi32>
    %689 = arith.cmpi sge, %29, %688 : vector<1x32xi32>
    %c32_i32_336 = arith.constant 32 : i32
    %690 = vector.broadcast %c32_i32_336 : i32 to vector<1x32xi32>
    %691 = arith.cmpi slt, %29, %690 : vector<1x32xi32>
    %692 = arith.andi %689, %691 : vector<1x32xi1>
    %693 = arith.extui %692 : vector<1x32xi1> to vector<1x32xi32>
    %694 = arith.sitofp %693 : vector<1x32xi32> to vector<1x32xf32>
    %695 = vector.broadcast %694 : vector<1x32xf32> to vector<8x32xf32>
    %696 = arith.mulf %597, %695 : vector<8x32xf32>
    %cst_337 = arith.constant dense<0.000000e+00> : vector<8x8xf32>
    %697 = tpu.matmul %590, %696, %cst_337 {dimension_numbers = #tpu.dot_dimension_numbers<[1], [1], [0], [0], [0, 0, 1, 0], [], []>} : vector<8x32xf32>, vector<8x32xf32>, vector<8x8xf32> -> vector<8x8xf32>
    %cst_338 = arith.constant 0.353553385 : f32
    %698 = vector.broadcast %cst_338 : f32 to vector<8x8xf32>
    %699 = arith.mulf %697, %698 : vector<8x8xf32>
    %700 = vector.broadcast %28 : vector<1x8xf32> to vector<8x8xf32>
    %701 = arith.addf %699, %700 : vector<8x8xf32>
    %cst_339 = arith.constant dense<0xFF800000> : vector<8xf32>
    %702 = vector.multi_reduction <maximumf>, %701, %cst_339 [1] : vector<8x8xf32> to vector<8xf32>
    %703 = vector.shape_cast %702 : vector<8xf32> to vector<8x1xf32>
    %704 = vector.broadcast %703 : vector<8x1xf32> to vector<8x8xf32>
    %705 = arith.subf %701, %704 : vector<8x8xf32>
    %706 = math.exp %705 : vector<8x8xf32>
    %cst_340 = arith.constant dense<0.000000e+00> : vector<8xf32>
    %707 = vector.multi_reduction <add>, %706, %cst_340 [1] : vector<8x8xf32> to vector<8xf32>
    %708 = vector.shape_cast %707 : vector<8xf32> to vector<8x1xf32>
    %709 = tpu.reciprocal %708 {approx = true} : vector<8x1xf32> -> vector<8x1xf32>
    %710 = vector.broadcast %709 : vector<8x1xf32> to vector<8x8xf32>
    %711 = arith.mulf %706, %710 : vector<8x8xf32>
    %712 = vector.broadcast %694 : vector<1x32xf32> to vector<8x32xf32>
    %713 = arith.mulf %604, %712 : vector<8x32xf32>
    %cst_341 = arith.constant dense<0.000000e+00> : vector<8x32xf32>
    %714 = tpu.matmul %711, %713, %cst_341 {dimension_numbers = #tpu.dot_dimension_numbers<[1], [0], [0], [1], [0, 0, 1, 1], [], []>} : vector<8x8xf32>, vector<8x32xf32>, vector<8x32xf32> -> vector<8x32xf32>
    %715 = arith.addf %687, %714 : vector<8x32xf32>
    %c1_342 = arith.constant 1 : index
    %c1_343 = arith.constant 1 : index
    %c0_344 = arith.constant 0 : index
    %c0_345 = arith.constant 0 : index
    %716 = vector.load %arg15[%c1_342, %c1_343, %c0_344, %c0_345] : memref<2x2x32x32xf32, #tpu.memory_space<vmem>>, vector<1x1x32x32xf32>
    %717 = vector.shape_cast %716 : vector<1x1x32x32xf32> to vector<32x32xf32>
    %c1_346 = arith.constant 1 : index
    %c1_347 = arith.constant 1 : index
    %c0_348 = arith.constant 0 : index
    %c0_349 = arith.constant 0 : index
    %718 = vector.load %arg16[%c1_346, %c1_347, %c0_348, %c0_349] : memref<2x2x1x32xf32, #tpu.memory_space<vmem>>, vector<1x1x1x32xf32>
    %719 = vector.shape_cast %718 : vector<1x1x1x32xf32> to vector<1x32xf32>
    %cst_350 = arith.constant dense<0.000000e+00> : vector<8x32xf32>
    %720 = tpu.matmul %715, %717, %cst_350 {dimension_numbers = #tpu.dot_dimension_numbers<[1], [0], [0], [1], [0, 0, 1, 1], [], []>} : vector<8x32xf32>, vector<32x32xf32>, vector<8x32xf32> -> vector<8x32xf32>
    %721 = vector.broadcast %719 : vector<1x32xf32> to vector<8x32xf32>
    %722 = arith.addf %720, %721 : vector<8x32xf32>
    %723 = arith.addf %558, %722 : vector<8x32xf32>
    %c1_351 = arith.constant 1 : index
    %c2_352 = arith.constant 2 : index
    %c0_353 = arith.constant 0 : index
    %c0_354 = arith.constant 0 : index
    %724 = vector.load %arg7[%c1_351, %c2_352, %c0_353, %c0_354] : memref<2x3x1x32xf32, #tpu.memory_space<vmem>>, vector<1x1x1x32xf32>
    %725 = vector.shape_cast %724 : vector<1x1x1x32xf32> to vector<1x32xf32>
    %c1_355 = arith.constant 1 : index
    %c2_356 = arith.constant 2 : index
    %c0_357 = arith.constant 0 : index
    %c0_358 = arith.constant 0 : index
    %726 = vector.load %arg8[%c1_355, %c2_356, %c0_357, %c0_358] : memref<2x3x1x32xf32, #tpu.memory_space<vmem>>, vector<1x1x1x32xf32>
    %727 = vector.shape_cast %726 : vector<1x1x1x32xf32> to vector<1x32xf32>
    %cst_359 = arith.constant dense<0.000000e+00> : vector<8xf32>
    %728 = vector.multi_reduction <add>, %723, %cst_359 [1] : vector<8x32xf32> to vector<8xf32>
    %729 = vector.shape_cast %728 : vector<8xf32> to vector<8x1xf32>
    %cst_360 = arith.constant 3.200000e+01 : f32
    %730 = vector.broadcast %cst_360 : f32 to vector<8x1xf32>
    %731 = arith.divf %729, %730 : vector<8x1xf32>
    %732 = vector.broadcast %731 : vector<8x1xf32> to vector<8x32xf32>
    %733 = arith.subf %723, %732 : vector<8x32xf32>
    %734 = arith.mulf %733, %733 : vector<8x32xf32>
    %cst_361 = arith.constant dense<0.000000e+00> : vector<8xf32>
    %735 = vector.multi_reduction <add>, %734, %cst_361 [1] : vector<8x32xf32> to vector<8xf32>
    %736 = vector.shape_cast %735 : vector<8xf32> to vector<8x1xf32>
    %cst_362 = arith.constant 0.0322580636 : f32
    %737 = vector.broadcast %cst_362 : f32 to vector<8x1xf32>
    %738 = arith.mulf %736, %737 : vector<8x1xf32>
    %739 = math.sqrt %738 : vector<8x1xf32>
    %cst_363 = arith.constant 9.99999997E-7 : f32
    %740 = vector.broadcast %cst_363 : f32 to vector<8x1xf32>
    %741 = arith.addf %739, %740 : vector<8x1xf32>
    %742 = tpu.reciprocal %741 : vector<8x1xf32> -> vector<8x1xf32>
    %743 = vector.broadcast %742 : vector<8x1xf32> to vector<8x32xf32>
    %744 = arith.mulf %733, %743 : vector<8x32xf32>
    %745 = vector.broadcast %725 : vector<1x32xf32> to vector<8x32xf32>
    %746 = arith.mulf %745, %744 : vector<8x32xf32>
    %747 = vector.broadcast %727 : vector<1x32xf32> to vector<8x32xf32>
    %748 = arith.addf %746, %747 : vector<8x32xf32>
    %c1_364 = arith.constant 1 : index
    %c0_365 = arith.constant 0 : index
    %c0_366 = arith.constant 0 : index
    %749 = vector.load %arg17[%c1_364, %c0_365, %c0_366] : memref<2x32x64xf32, #tpu.memory_space<vmem>>, vector<1x32x64xf32>
    %750 = vector.shape_cast %749 : vector<1x32x64xf32> to vector<32x64xf32>
    %c1_367 = arith.constant 1 : index
    %c0_368 = arith.constant 0 : index
    %c0_369 = arith.constant 0 : index
    %751 = vector.load %arg18[%c1_367, %c0_368, %c0_369] : memref<2x1x64xf32, #tpu.memory_space<vmem>>, vector<1x1x64xf32>
    %752 = vector.shape_cast %751 : vector<1x1x64xf32> to vector<1x64xf32>
    %cst_370 = arith.constant dense<0.000000e+00> : vector<8x64xf32>
    %753 = tpu.matmul %748, %750, %cst_370 {dimension_numbers = #tpu.dot_dimension_numbers<[1], [0], [0], [1], [0, 0, 1, 1], [], []>} : vector<8x32xf32>, vector<32x64xf32>, vector<8x64xf32> -> vector<8x64xf32>
    %754 = vector.broadcast %752 : vector<1x64xf32> to vector<8x64xf32>
    %755 = arith.addf %753, %754 : vector<8x64xf32>
    %cst_371 = arith.constant 0.000000e+00 : f32
    %756 = vector.broadcast %cst_371 : f32 to vector<8x64xf32>
    %757 = arith.maximumf %755, %756 : vector<8x64xf32>
    %c1_372 = arith.constant 1 : index
    %c0_373 = arith.constant 0 : index
    %c0_374 = arith.constant 0 : index
    %758 = vector.load %arg19[%c1_372, %c0_373, %c0_374] : memref<2x64x32xf32, #tpu.memory_space<vmem>>, vector<1x64x32xf32>
    %759 = vector.shape_cast %758 : vector<1x64x32xf32> to vector<64x32xf32>
    %c1_375 = arith.constant 1 : index
    %c0_376 = arith.constant 0 : index
    %c0_377 = arith.constant 0 : index
    %760 = vector.load %arg20[%c1_375, %c0_376, %c0_377] : memref<2x1x32xf32, #tpu.memory_space<vmem>>, vector<1x1x32xf32>
    %761 = vector.shape_cast %760 : vector<1x1x32xf32> to vector<1x32xf32>
    %cst_378 = arith.constant dense<0.000000e+00> : vector<8x32xf32>
    %762 = tpu.matmul %757, %759, %cst_378 {dimension_numbers = #tpu.dot_dimension_numbers<[1], [0], [0], [1], [0, 0, 1, 1], [], []>} : vector<8x64xf32>, vector<64x32xf32>, vector<8x32xf32> -> vector<8x32xf32>
    %763 = vector.broadcast %761 : vector<1x32xf32> to vector<8x32xf32>
    %764 = arith.addf %762, %763 : vector<8x32xf32>
    %765 = arith.addf %723, %764 : vector<8x32xf32>
    %c0_379 = arith.constant 0 : index
    %c0_380 = arith.constant 0 : index
    %766 = vector.load %arg21[%c0_379, %c0_380] : memref<1x32xf32, #tpu.memory_space<vmem>>, vector<1x32xf32>
    %c0_381 = arith.constant 0 : index
    %c0_382 = arith.constant 0 : index
    %767 = vector.load %arg22[%c0_381, %c0_382] : memref<1x32xf32, #tpu.memory_space<vmem>>, vector<1x32xf32>
    %cst_383 = arith.constant dense<0.000000e+00> : vector<8xf32>
    %768 = vector.multi_reduction <add>, %765, %cst_383 [1] : vector<8x32xf32> to vector<8xf32>
    %769 = vector.shape_cast %768 : vector<8xf32> to vector<8x1xf32>
    %cst_384 = arith.constant 3.200000e+01 : f32
    %770 = vector.broadcast %cst_384 : f32 to vector<8x1xf32>
    %771 = arith.divf %769, %770 : vector<8x1xf32>
    %772 = vector.broadcast %771 : vector<8x1xf32> to vector<8x32xf32>
    %773 = arith.subf %765, %772 : vector<8x32xf32>
    %774 = arith.mulf %773, %773 : vector<8x32xf32>
    %cst_385 = arith.constant dense<0.000000e+00> : vector<8xf32>
    %775 = vector.multi_reduction <add>, %774, %cst_385 [1] : vector<8x32xf32> to vector<8xf32>
    %776 = vector.shape_cast %775 : vector<8xf32> to vector<8x1xf32>
    %cst_386 = arith.constant 0.0322580636 : f32
    %777 = vector.broadcast %cst_386 : f32 to vector<8x1xf32>
    %778 = arith.mulf %776, %777 : vector<8x1xf32>
    %779 = math.sqrt %778 : vector<8x1xf32>
    %cst_387 = arith.constant 9.99999997E-7 : f32
    %780 = vector.broadcast %cst_387 : f32 to vector<8x1xf32>
    %781 = arith.addf %779, %780 : vector<8x1xf32>
    %782 = tpu.reciprocal %781 : vector<8x1xf32> -> vector<8x1xf32>
    %783 = vector.broadcast %782 : vector<8x1xf32> to vector<8x32xf32>
    %784 = arith.mulf %773, %783 : vector<8x32xf32>
    %785 = vector.broadcast %766 : vector<1x32xf32> to vector<8x32xf32>
    %786 = arith.mulf %785, %784 : vector<8x32xf32>
    %787 = vector.broadcast %767 : vector<1x32xf32> to vector<8x32xf32>
    %788 = arith.addf %786, %787 : vector<8x32xf32>
    %c0_388 = arith.constant 0 : index
    %c0_389 = arith.constant 0 : index
    %c0_390 = arith.constant 0 : index
    %789 = vector.load %arg23[%c0_388, %c0_389, %c0_390] : memref<1x8x32xf32, #tpu.memory_space<vmem>>, vector<1x8x32xf32>
    %790 = vector.shape_cast %789 : vector<1x8x32xf32> to vector<8x32xf32>
    %791 = vector.shape_cast %788 : vector<8x32xf32> to vector<1x8x32xf32>
    tpu.vector_store %arg23[%c0_388, %c0_389, %c0_390], %791 {strides = array<i32>} : memref<1x8x32xf32, #tpu.memory_space<vmem>>, vector<1x8x32xf32>,
    return
  }
  func.func @transform_0(%arg0: i32) -> (i32, i32, i32) {
    %c0_i32 = arith.constant 0 : i32
    %c0_i32_0 = arith.constant 0 : i32
    %c0_i32_1 = arith.constant 0 : i32
    return %arg0, %c0_i32, %c0_i32_0 : i32, i32, i32
  }
  func.func @transform_1(%arg0: i32) -> (i32, i32, i32) {
    %c0_i32 = arith.constant 0 : i32
    %c0_i32_0 = arith.constant 0 : i32
    %c0_i32_1 = arith.constant 0 : i32
    return %arg0, %c0_i32, %c0_i32_0 : i32, i32, i32
  }
  func.func @transform_2(%arg0: i32) -> (i32, i32, i32) {
    %c0_i32 = arith.constant 0 : i32
    %c0_i32_0 = arith.constant 0 : i32
    %c0_i32_1 = arith.constant 0 : i32
    return %arg0, %c0_i32, %c0_i32_0 : i32, i32, i32
  }
  func.func @transform_3(%arg0: i32) -> (i32, i32, i32) {
    %c0_i32 = arith.constant 0 : i32
    %c0_i32_0 = arith.constant 0 : i32
    %c0_i32_1 = arith.constant 0 : i32
    return %arg0, %c0_i32, %c0_i32_0 : i32, i32, i32
  }
  func.func @transform_4(%arg0: i32) -> (i32, i32) {
    %c0_i32 = arith.constant 0 : i32
    %c0_i32_0 = arith.constant 0 : i32
    %c0_i32_1 = arith.constant 0 : i32
    return %c0_i32, %c0_i32_0 : i32, i32
  }
  func.func @transform_5(%arg0: i32) -> (i32, i32) {
    %c0_i32 = arith.constant 0 : i32
    %c0_i32_0 = arith.constant 0 : i32
    %c0_i32_1 = arith.constant 0 : i32
    return %c0_i32, %c0_i32_0 : i32, i32
  }
  func.func @transform_6(%arg0: i32) -> (i32, i32, i32, i32) {
    %c0_i32 = arith.constant 0 : i32
    %c0_i32_0 = arith.constant 0 : i32
    %c0_i32_1 = arith.constant 0 : i32
    %c0_i32_2 = arith.constant 0 : i32
    %c0_i32_3 = arith.constant 0 : i32
    return %c0_i32, %c0_i32_0, %c0_i32_1, %c0_i32_2 : i32, i32, i32, i32
  }
  func.func @transform_7(%arg0: i32) -> (i32, i32, i32, i32) {
    %c0_i32 = arith.constant 0 : i32
    %c0_i32_0 = arith.constant 0 : i32
    %c0_i32_1 = arith.constant 0 : i32
    %c0_i32_2 = arith.constant 0 : i32
    %c0_i32_3 = arith.constant 0 : i32
    return %c0_i32, %c0_i32_0, %c0_i32_1, %c0_i32_2 : i32, i32, i32, i32
  }
  func.func @transform_8(%arg0: i32) -> (i32, i32, i32, i32) {
    %c0_i32 = arith.constant 0 : i32
    %c0_i32_0 = arith.constant 0 : i32
    %c0_i32_1 = arith.constant 0 : i32
    %c0_i32_2 = arith.constant 0 : i32
    %c0_i32_3 = arith.constant 0 : i32
    return %c0_i32, %c0_i32_0, %c0_i32_1, %c0_i32_2 : i32, i32, i32, i32
  }
  func.func @transform_9(%arg0: i32) -> (i32, i32, i32, i32) {
    %c0_i32 = arith.constant 0 : i32
    %c0_i32_0 = arith.constant 0 : i32
    %c0_i32_1 = arith.constant 0 : i32
    %c0_i32_2 = arith.constant 0 : i32
    %c0_i32_3 = arith.constant 0 : i32
    return %c0_i32, %c0_i32_0, %c0_i32_1, %c0_i32_2 : i32, i32, i32, i32
  }
  func.func @transform_10(%arg0: i32) -> (i32, i32, i32, i32) {
    %c0_i32 = arith.constant 0 : i32
    %c0_i32_0 = arith.constant 0 : i32
    %c0_i32_1 = arith.constant 0 : i32
    %c0_i32_2 = arith.constant 0 : i32
    %c0_i32_3 = arith.constant 0 : i32
    return %c0_i32, %c0_i32_0, %c0_i32_1, %c0_i32_2 : i32, i32, i32, i32
  }
  func.func @transform_11(%arg0: i32) -> (i32, i32, i32, i32) {
    %c0_i32 = arith.constant 0 : i32
    %c0_i32_0 = arith.constant 0 : i32
    %c0_i32_1 = arith.constant 0 : i32
    %c0_i32_2 = arith.constant 0 : i32
    %c0_i32_3 = arith.constant 0 : i32
    return %c0_i32, %c0_i32_0, %c0_i32_1, %c0_i32_2 : i32, i32, i32, i32
  }
  func.func @transform_12(%arg0: i32) -> (i32, i32, i32, i32) {
    %c0_i32 = arith.constant 0 : i32
    %c0_i32_0 = arith.constant 0 : i32
    %c0_i32_1 = arith.constant 0 : i32
    %c0_i32_2 = arith.constant 0 : i32
    %c0_i32_3 = arith.constant 0 : i32
    return %c0_i32, %c0_i32_0, %c0_i32_1, %c0_i32_2 : i32, i32, i32, i32
  }
  func.func @transform_13(%arg0: i32) -> (i32, i32, i32, i32) {
    %c0_i32 = arith.constant 0 : i32
    %c0_i32_0 = arith.constant 0 : i32
    %c0_i32_1 = arith.constant 0 : i32
    %c0_i32_2 = arith.constant 0 : i32
    %c0_i32_3 = arith.constant 0 : i32
    return %c0_i32, %c0_i32_0, %c0_i32_1, %c0_i32_2 : i32, i32, i32, i32
  }
  func.func @transform_14(%arg0: i32) -> (i32, i32, i32, i32) {
    %c0_i32 = arith.constant 0 : i32
    %c0_i32_0 = arith.constant 0 : i32
    %c0_i32_1 = arith.constant 0 : i32
    %c0_i32_2 = arith.constant 0 : i32
    %c0_i32_3 = arith.constant 0 : i32
    return %c0_i32, %c0_i32_0, %c0_i32_1, %c0_i32_2 : i32, i32, i32, i32
  }
  func.func @transform_15(%arg0: i32) -> (i32, i32, i32, i32) {
    %c0_i32 = arith.constant 0 : i32
    %c0_i32_0 = arith.constant 0 : i32
    %c0_i32_1 = arith.constant 0 : i32
    %c0_i32_2 = arith.constant 0 : i32
    %c0_i32_3 = arith.constant 0 : i32
    return %c0_i32, %c0_i32_0, %c0_i32_1, %c0_i32_2 : i32, i32, i32, i32
  }
  func.func @transform_16(%arg0: i32) -> (i32, i32, i32) {
    %c0_i32 = arith.constant 0 : i32
    %c0_i32_0 = arith.constant 0 : i32
    %c0_i32_1 = arith.constant 0 : i32
    %c0_i32_2 = arith.constant 0 : i32
    return %c0_i32, %c0_i32_0, %c0_i32_1 : i32, i32, i32
  }
  func.func @transform_17(%arg0: i32) -> (i32, i32, i32) {
    %c0_i32 = arith.constant 0 : i32
    %c0_i32_0 = arith.constant 0 : i32
    %c0_i32_1 = arith.constant 0 : i32
    %c0_i32_2 = arith.constant 0 : i32
    return %c0_i32, %c0_i32_0, %c0_i32_1 : i32, i32, i32
  }
  func.func @transform_18(%arg0: i32) -> (i32, i32, i32) {
    %c0_i32 = arith.constant 0 : i32
    %c0_i32_0 = arith.constant 0 : i32
    %c0_i32_1 = arith.constant 0 : i32
    %c0_i32_2 = arith.constant 0 : i32
    return %c0_i32, %c0_i32_0, %c0_i32_1 : i32, i32, i32
  }
  func.func @transform_19(%arg0: i32) -> (i32, i32, i32) {
    %c0_i32 = arith.constant 0 : i32
    %c0_i32_0 = arith.constant 0 : i32
    %c0_i32_1 = arith.constant 0 : i32
    %c0_i32_2 = arith.constant 0 : i32
    return %c0_i32, %c0_i32_0, %c0_i32_1 : i32, i32, i32
  }
  func.func @transform_20(%arg0: i32) -> (i32, i32) {
    %c0_i32 = arith.constant 0 : i32
    %c0_i32_0 = arith.constant 0 : i32
    %c0_i32_1 = arith.constant 0 : i32
    return %c0_i32, %c0_i32_0 : i32, i32
  }
  func.func @transform_21(%arg0: i32) -> (i32, i32) {
    %c0_i32 = arith.constant 0 : i32
    %c0_i32_0 = arith.constant 0 : i32
    %c0_i32_1 = arith.constant 0 : i32
    return %c0_i32, %c0_i32_0 : i32, i32
  }
  func.func @transform_22(%arg0: i32) -> (i32, i32, i32) {
    %c0_i32 = arith.constant 0 : i32
    %c0_i32_0 = arith.constant 0 : i32
    %c0_i32_1 = arith.constant 0 : i32
    return %arg0, %c0_i32, %c0_i32_0 : i32, i32, i32
  }
}

</mosaic_0001>

<llo_original>
// kernel: decoder_forward.1
$region0: #{decoder_forward.1}
  #allocation0 [shape = 'u32[]', space=smem, size = 0x4, offset = 0x4, fixed_abs, tag = 'smem constant byte address 0x4 - core index']
  #allocation1 [shape = 'u32[144,128]{1,0:T(1,128)}', space=vmem, size = 0x12000, scoped, tag = 'internal scratch']
  %s0 = inlined_call_operand.vmem [shape: s32[2,8,1], index: 0, kind: input, shape index: {}]
  %s1 = inlined_call_operand.hbm [shape: f32[2,8,32], index: 1, kind: input, shape index: {}]
  %s2 = inlined_call_operand.vmem [shape: f32[2,8,8], index: 2, kind: input, shape index: {}]
  %s3 = inlined_call_operand.vmem [shape: f32[2,1,8], index: 3, kind: input, shape index: {}]
  %s4 = inlined_call_operand.vmem [shape: f32[50,32], index: 4, kind: input, shape index: {}]
  %s5 = inlined_call_operand.vmem [shape: f32[8,32], index: 5, kind: input, shape index: {}]
  %s6 = inlined_call_operand.hbm [shape: f32[2,3,1,32], index: 6, kind: input, shape index: {}]
  %s7 = inlined_call_operand.hbm [shape: f32[2,3,1,32], index: 7, kind: input, shape index: {}]
  %s8 = inlined_call_operand.vmem [shape: f32[2,2,32,32], index: 8, kind: input, shape index: {}]
  %s9 = inlined_call_operand.hbm [shape: f32[2,2,1,32], index: 9, kind: input, shape index: {}]
  %s10 = inlined_call_operand.vmem [shape: f32[2,2,32,32], index: 10, kind: input, shape index: {}]
  %s11 = inlined_call_operand.hbm [shape: f32[2,2,1,32], index: 11, kind: input, shape index: {}]
  %s12 = inlined_call_operand.vmem [shape: f32[2,2,32,32], index: 12, kind: input, shape index: {}]
  %s13 = inlined_call_operand.hbm [shape: f32[2,2,1,32], index: 13, kind: input, shape index: {}]
  %s14 = inlined_call_operand.hbm [shape: f32[2,2,32,32], index: 14, kind: input, shape index: {}]
  %s15 = inlined_call_operand.hbm [shape: f32[2,2,1,32], index: 15, kind: input, shape index: {}]
  %s16 = inlined_call_operand.hbm [shape: f32[2,32,64], index: 16, kind: input, shape index: {}]
  %s17 = inlined_call_operand.hbm [shape: f32[2,1,64], index: 17, kind: input, shape index: {}]
  %s18 = inlined_call_operand.vmem [shape: f32[2,64,32], index: 18, kind: input, shape index: {}]
  %s19 = inlined_call_operand.hbm [shape: f32[2,1,32], index: 19, kind: input, shape index: {}]
  %s20 = inlined_call_operand.vmem [shape: f32[1,32], index: 20, kind: input, shape index: {}]
  %s21 = inlined_call_operand.hbm [shape: f32[1,32], index: 21, kind: input, shape index: {}]
  %s22 = inlined_call_operand.hbm [shape: f32[2,8,32], index: 22, kind: output, shape index: {}]
  %s23 = sld [smem:[#allocation0]]
  $region169: #{decoder_forward.1} parent=0
    _
  %s25 = ssub.s32 1, %s23
  %s26 = scalar_select 0, %s25, %s23
  $region1: #{decoder_forward.1} parent=0
    #allocation2 [shape = 'u8[8192]{0}', space=vmem, size = 0x2000, scoped, tag = 'input window, operand 1']
    #allocation3 [shape = 's32[2]{0}', space=sflag, size = 0x8, scoped, tag = 'scoped memory for decoder_forward.1']
    #allocation4 [shape = 's32[2]{0}', space=sflag, size = 0x8, scoped, tag = 'scoped memory for decoder_forward.1']
    #allocation5 [shape = 'u8[3072]{0}', space=vmem, size = 0xc00, scoped, tag = 'input window, operand 6, single buffered']
    #allocation6 [shape = 's32[1]{0}', space=sflag, size = 0x4, scoped, tag = 'scoped memory for decoder_forward.1']
    #allocation7 [shape = 'u8[3072]{0}', space=vmem, size = 0xc00, scoped, tag = 'input window, operand 7, single buffered']
    #allocation8 [shape = 'u8[2048]{0}', space=vmem, size = 0x800, scoped, tag = 'input window, operand 9, single buffered']
    #allocation9 [shape = 's32[1]{0}', space=sflag, size = 0x4, scoped, tag = 'scoped memory for decoder_forward.1']
    #allocation10 [shape = 'u8[2048]{0}', space=vmem, size = 0x800, scoped, tag = 'input window, operand 11, single buffered']
    #allocation11 [shape = 'u8[2048]{0}', space=vmem, size = 0x800, scoped, tag = 'input window, operand 13, single buffered']
    #allocation12 [shape = 's32[1]{0}', space=sflag, size = 0x4, scoped, tag = 'scoped memory for decoder_forward.1']
    #allocation13 [shape = 'u8[65536]{0}', space=vmem, size = 0x10000, scoped, tag = 'input window, operand 14, single buffered']
    #allocation14 [shape = 'u8[2048]{0}', space=vmem, size = 0x800, scoped, tag = 'input window, operand 15, single buffered']
    #allocation15 [shape = 's32[1]{0}', space=sflag, size = 0x4, scoped, tag = 'scoped memory for decoder_forward.1']
    #allocation16 [shape = 'u8[32768]{0}', space=vmem, size = 0x8000, scoped, tag = 'input window, operand 16, single buffered']
    #allocation17 [shape = 'u8[1024]{0}', space=vmem, size = 0x400, scoped, tag = 'input window, operand 17, single buffered']
    #allocation18 [shape = 's32[1]{0}', space=sflag, size = 0x4, scoped, tag = 'scoped memory for decoder_forward.1']
    #allocation19 [shape = 'u8[1024]{0}', space=vmem, size = 0x400, scoped, tag = 'input window, operand 19, single buffered']
    #allocation20 [shape = 'u8[512]{0}', space=vmem, size = 0x400, scoped, tag = 'input window, operand 21, single buffered']
    #allocation21 [shape = 's32[1]{0}', space=sflag, size = 0x4, scoped, tag = 'scoped memory for decoder_forward.1']
    #allocation22 [shape = 'u8[8192]{0}', space=vmem, size = 0x2000, scoped, tag = 'output window, operand 0']
    %27 = vsyncpa [#allocation3], 0
    %s28 = scalar_lea.sflag [#allocation3], 1
    %29 = vsyncpa %s28, 0
    %30 = vsyncpa [#allocation6], 0
    %31 = vsyncpa [#allocation9], 0
    %32 = vsyncpa [#allocation12], 0
    %33 = vsyncpa [#allocation15], 0
    %34 = vsyncpa [#allocation18], 0
    %35 = vsyncpa [#allocation21], 0
    %36 = vsyncpa [#allocation4], 0
    %s37 = scalar_lea.sflag [#allocation4], 1
    %38 = vsyncpa %s37, 0
    loop: start=0, step=1, limit=4
    $region2: #{decoder_forward.1} parent=1 // loop_pre_header
      _
    $region3: #{decoder_forward.1} parent=1 // loop_header
      %s40 = sphi 0, %s44
      %p41 = scmp.ge.s32.totalorder %s40, 4
      %s50 = sphi 0, %s52
      %s53 = sphi 0, %s50
      %s54 = sphi 0, %s53
      %s70 = sphi 0, %s54
      %s76 = sphi 0, %s78
      %s79 = sphi 0, %s76
      %s80 = sphi 0, %s79
      %s96 = sphi 0, %s80
      %s102 = sphi 0, %s104
      %s105 = sphi 0, %s102
      %s106 = sphi 0, %s105
      %s122 = sphi 0, %s106
      %s128 = sphi 0, %s130
      %s131 = sphi 0, %s128
      %s132 = sphi 0, %s131
      %s148 = sphi 0, %s132
      %s152 = sphi 0, %s152
      %s154 = sphi 0, %s152
      %s155 = sphi 0, %s154
      %s169 = sphi 0, %s155
      %s173 = sphi 0, %s173
      %s175 = sphi 0, %s173
      %s176 = sphi 0, %s175
      %s190 = sphi 0, %s176
      %s194 = sphi 0, %s194
      %s196 = sphi 0, %s194
      %s197 = sphi 0, %s196
      %s211 = sphi 0, %s197
      %s215 = sphi 0, %s215
      %s217 = sphi 0, %s215
      %s218 = sphi 0, %s217
      %s232 = sphi 0, %s218
      %s236 = sphi 0, %s236
      %s238 = sphi 0, %s236
      %s239 = sphi 0, %s238
      %s253 = sphi 0, %s239
      %s257 = sphi 0, %s257
      %s259 = sphi 0, %s257
      %s260 = sphi 0, %s259
      %s274 = sphi 0, %s260
      %s278 = sphi 0, %s278
      %s280 = sphi 0, %s278
      %s281 = sphi 0, %s280
      %s295 = sphi 0, %s281
      %s299 = sphi 0, %s299
      %s301 = sphi 0, %s299
      %s302 = sphi 0, %s301
      %s316 = sphi 0, %s302
      %s320 = sphi 0, %s320
      %s322 = sphi 0, %s320
      %s323 = sphi 0, %s322
      %s337 = sphi 0, %s323
      %s341 = sphi 0, %s341
      %s343 = sphi 0, %s341
      %s344 = sphi 0, %s343
      %s358 = sphi 0, %s344
      %s362 = sphi 0, %s362
      %s364 = sphi 0, %s362
      %s365 = sphi 0, %s364
      %s379 = sphi 0, %s365
      %s383 = sphi 0, %s383
      %s385 = sphi 0, %s383
      %s386 = sphi 0, %s385
      %s400 = sphi 0, %s386
      %s404 = sphi 0, %s404
      %s406 = sphi 0, %s404
      %s407 = sphi 0, %s406
      %s421 = sphi 0, %s407
      %s425 = sphi 0, %s425
      %s427 = sphi 0, %s425
      %s428 = sphi 0, %s427
      %s442 = sphi 0, %s428
      %s446 = sphi 0, %s446
      %s448 = sphi 0, %s446
      %s449 = sphi 0, %s448
      %s463 = sphi 0, %s449
      %s467 = sphi 0, %s467
      %s469 = sphi 0, %s467
      %s470 = sphi 0, %s469
      %s484 = sphi 0, %s470
      %s488 = sphi 0, %s488
      %s490 = sphi 0, %s488
      %s491 = sphi 0, %s490
      %s505 = sphi 0, %s491
      %s509 = sphi 0, %s509
      %s511 = sphi 0, %s509
      %s512 = sphi 0, %s511
      %s526 = sphi 0, %s512
      %s532 = sphi 0, %s534
      %s535 = sphi 0, %s532
      %s536 = sphi 0, %s535
      %s552 = sphi 0, %s536
    $region4: #{decoder_forward.1} parent=1 // loop_header_branch
      %43 = sbr.rel (%p41) target = $region8
    $region5: #{decoder_forward.1} parent=1 // loop_body
      %s45 = ssub.s32 %s40, 1
      %s46 = ssub.s32 %s40, 2
      %s47 = sadd.s32 %s40, 1
      %s48 = ssub.s32 %s40, %s47
      %p49 = scmp.eq.s32.totalorder %s48, 0
      %s51 = sadd.s32 %s50, 1
      %s52 = scalar_select %p49, %s50, %s51
      %p55 = pneg %p49
      %p56 = scmp.eq.s32.totalorder %s40, 1
      %p57 = por %p55, %p56
      %p58 = scmp.ne.s32.totalorder %s50, %s53
      %p59 = scmp.eq.s32.totalorder %s40, 0
      %p60 = por %p58, %p59
      %p61 = scmp.ne.s32.totalorder %s50, %s53
      %p62 = scmp.eq.s32.totalorder %s45, 1
      %p63 = por %p61, %p62
      %p64 = scmp.ne.s32.totalorder %s53, %s54
      %p65 = scmp.eq.s32.totalorder %s45, 0
      %p66 = por %p64, %p65
      %p67 = scmp.ne.s32.totalorder %s53, %s54
      %p68 = scmp.eq.s32.totalorder %s46, 1
      %p69 = por %p67, %p68
      %p71 = scmp.ne.s32.totalorder %s54, %s70
      %p72 = scmp.eq.s32.totalorder %s46, 0
      %p73 = por %p71, %p72
      %s74 = ssub.s32 %s40, %s47
      %p75 = scmp.eq.s32.totalorder %s74, 0
      %s77 = sadd.s32 %s76, 1
      %s78 = scalar_select %p75, %s76, %s77
      %p81 = pneg %p75
      %p82 = scmp.eq.s32.totalorder %s40, 1
      %p83 = por %p81, %p82
      %p84 = scmp.ne.s32.totalorder %s76, %s79
      %p85 = scmp.eq.s32.totalorder %s40, 0
      %p86 = por %p84, %p85
      %p87 = scmp.ne.s32.totalorder %s76, %s79
      %p88 = scmp.eq.s32.totalorder %s45, 1
      %p89 = por %p87, %p88
      %p90 = scmp.ne.s32.totalorder %s79, %s80
      %p91 = scmp.eq.s32.totalorder %s45, 0
      %p92 = por %p90, %p91
      %p93 = scmp.ne.s32.totalorder %s79, %s80
      %p94 = scmp.eq.s32.totalorder %s46, 1
      %p95 = por %p93, %p94
      %p97 = scmp.ne.s32.totalorder %s80, %s96
      %p98 = scmp.eq.s32.totalorder %s46, 0
      %p99 = por %p97, %p98
      %s100 = ssub.s32 %s40, %s47
      %p101 = scmp.eq.s32.totalorder %s100, 0
      %s103 = sadd.s32 %s102, 1
      %s104 = scalar_select %p101, %s102, %s103
      %p107 = pneg %p101
      %p108 = scmp.eq.s32.totalorder %s40, 1
      %p109 = por %p107, %p108
      %p110 = scmp.ne.s32.totalorder %s102, %s105
      %p111 = scmp.eq.s32.totalorder %s40, 0
      %p112 = por %p110, %p111
      %p113 = scmp.ne.s32.totalorder %s102, %s105
      %p114 = scmp.eq.s32.totalorder %s45, 1
      %p115 = por %p113, %p114
      %p116 = scmp.ne.s32.totalorder %s105, %s106
      %p117 = scmp.eq.s32.totalorder %s45, 0
      %p118 = por %p116, %p117
      %p119 = scmp.ne.s32.totalorder %s105, %s106
      %p120 = scmp.eq.s32.totalorder %s46, 1
      %p121 = por %p119, %p120
      %p123 = scmp.ne.s32.totalorder %s106, %s122
      %p124 = scmp.eq.s32.totalorder %s46, 0
      %p125 = por %p123, %p124
      %s126 = ssub.s32 %s40, %s47
      %p127 = scmp.eq.s32.totalorder %s126, 0
      %s129 = sadd.s32 %s128, 1
      %s130 = scalar_select %p127, %s128, %s129
      %p133 = pneg %p127
      %p134 = scmp.eq.s32.totalorder %s40, 1
      %p135 = por %p133, %p134
      %p136 = scmp.ne.s32.totalorder %s128, %s131
      %p137 = scmp.eq.s32.totalorder %s40, 0
      %p138 = por %p136, %p137
      %p139 = scmp.ne.s32.totalorder %s128, %s131
      %p140 = scmp.eq.s32.totalorder %s45, 1
      %p141 = por %p139, %p140
      %p142 = scmp.ne.s32.totalorder %s131, %s132
      %p143 = scmp.eq.s32.totalorder %s45, 0
      %p144 = por %p142, %p143
      %p145 = scmp.ne.s32.totalorder %s131, %s132
      %p146 = scmp.eq.s32.totalorder %s46, 1
      %p147 = por %p145, %p146
      %p149 = scmp.ne.s32.totalorder %s132, %s148
      %p150 = scmp.eq.s32.totalorder %s46, 0
      %p151 = por %p149, %p150
      %s153 = sadd.s32 %s152, 1
      %p156 = scmp.eq.s32.totalorder %s40, 1
      %p157 = scmp.ne.s32.totalorder %s152, %s154
      %p158 = scmp.eq.s32.totalorder %s40, 0
      %p159 = por %p157, %p158
      %p160 = scmp.ne.s32.totalorder %s152, %s154
      %p161 = scmp.eq.s32.totalorder %s45, 1
      %p162 = por %p160, %p161
      %p163 = scmp.ne.s32.totalorder %s154, %s155
      %p164 = scmp.eq.s32.totalorder %s45, 0
      %p165 = por %p163, %p164
      %p166 = scmp.ne.s32.totalorder %s154, %s155
      %p167 = scmp.eq.s32.totalorder %s46, 1
      %p168 = por %p166, %p167
      %p170 = scmp.ne.s32.totalorder %s155, %s169
      %p171 = scmp.eq.s32.totalorder %s46, 0
      %p172 = por %p170, %p171
      %s174 = sadd.s32 %s173, 1
      %p177 = scmp.eq.s32.totalorder %s40, 1
      %p178 = scmp.ne.s32.totalorder %s173, %s175
      %p179 = scmp.eq.s32.totalorder %s40, 0
      %p180 = por %p178, %p179
      %p181 = scmp.ne.s32.totalorder %s173, %s175
      %p182 = scmp.eq.s32.totalorder %s45, 1
      %p183 = por %p181, %p182
      %p184 = scmp.ne.s32.totalorder %s175, %s176
      %p185 = scmp.eq.s32.totalorder %s45, 0
      %p186 = por %p184, %p185
      %p187 = scmp.ne.s32.totalorder %s175, %s176
      %p188 = scmp.eq.s32.totalorder %s46, 1
      %p189 = por %p187, %p188
      %p191 = scmp.ne.s32.totalorder %s176, %s190
      %p192 = scmp.eq.s32.totalorder %s46, 0
      %p193 = por %p191, %p192
      %s195 = sadd.s32 %s194, 1
      %p198 = scmp.eq.s32.totalorder %s40, 1
      %p199 = scmp.ne.s32.totalorder %s194, %s196
      %p200 = scmp.eq.s32.totalorder %s40, 0
      %p201 = por %p199, %p200
      %p202 = scmp.ne.s32.totalorder %s194, %s196
      %p203 = scmp.eq.s32.totalorder %s45, 1
      %p204 = por %p202, %p203
      %p205 = scmp.ne.s32.totalorder %s196, %s197
      %p206 = scmp.eq.s32.totalorder %s45, 0
      %p207 = por %p205, %p206
      %p208 = scmp.ne.s32.totalorder %s196, %s197
      %p209 = scmp.eq.s32.totalorder %s46, 1
      %p210 = por %p208, %p209
      %p212 = scmp.ne.s32.totalorder %s197, %s211
      %p213 = scmp.eq.s32.totalorder %s46, 0
      %p214 = por %p212, %p213
      %s216 = sadd.s32 %s215, 1
      %p219 = scmp.eq.s32.totalorder %s40, 1
      %p220 = scmp.ne.s32.totalorder %s215, %s217
      %p221 = scmp.eq.s32.totalorder %s40, 0
      %p222 = por %p220, %p221
      %p223 = scmp.ne.s32.totalorder %s215, %s217
      %p224 = scmp.eq.s32.totalorder %s45, 1
      %p225 = por %p223, %p224
      %p226 = scmp.ne.s32.totalorder %s217, %s218
      %p227 = scmp.eq.s32.totalorder %s45, 0
      %p228 = por %p226, %p227
      %p229 = scmp.ne.s32.totalorder %s217, %s218
      %p230 = scmp.eq.s32.totalorder %s46, 1
      %p231 = por %p229, %p230
      %p233 = scmp.ne.s32.totalorder %s218, %s232
      %p234 = scmp.eq.s32.totalorder %s46, 0
      %p235 = por %p233, %p234
      %s237 = sadd.s32 %s236, 1
      %p240 = scmp.eq.s32.totalorder %s40, 1
      %p241 = scmp.ne.s32.totalorder %s236, %s238
      %p242 = scmp.eq.s32.totalorder %s40, 0
      %p243 = por %p241, %p242
      %p244 = scmp.ne.s32.totalorder %s236, %s238
      %p245 = scmp.eq.s32.totalorder %s45, 1
      %p246 = por %p244, %p245
      %p247 = scmp.ne.s32.totalorder %s238, %s239
      %p248 = scmp.eq.s32.totalorder %s45, 0
      %p249 = por %p247, %p248
      %p250 = scmp.ne.s32.totalorder %s238, %s239
      %p251 = scmp.eq.s32.totalorder %s46, 1
      %p252 = por %p250, %p251
      %p254 = scmp.ne.s32.totalorder %s239, %s253
      %p255 = scmp.eq.s32.totalorder %s46, 0
      %p256 = por %p254, %p255
      %s258 = sadd.s32 %s257, 1
      %p261 = scmp.eq.s32.totalorder %s40, 1
      %p262 = scmp.ne.s32.totalorder %s257, %s259
      %p263 = scmp.eq.s32.totalorder %s40, 0
      %p264 = por %p262, %p263
      %p265 = scmp.ne.s32.totalorder %s257, %s259
      %p266 = scmp.eq.s32.totalorder %s45, 1
      %p267 = por %p265, %p266
      %p268 = scmp.ne.s32.totalorder %s259, %s260
      %p269 = scmp.eq.s32.totalorder %s45, 0
      %p270 = por %p268, %p269
      %p271 = scmp.ne.s32.totalorder %s259, %s260
      %p272 = scmp.eq.s32.totalorder %s46, 1
      %p273 = por %p271, %p272
      %p275 = scmp.ne.s32.totalorder %s260, %s274
      %p276 = scmp.eq.s32.totalorder %s46, 0
      %p277 = por %p275, %p276
      %s279 = sadd.s32 %s278, 1
      %p282 = scmp.eq.s32.totalorder %s40, 1
      %p283 = scmp.ne.s32.totalorder %s278, %s280
      %p284 = scmp.eq.s32.totalorder %s40, 0
      %p285 = por %p283, %p284
      %p286 = scmp.ne.s32.totalorder %s278, %s280
      %p287 = scmp.eq.s32.totalorder %s45, 1
      %p288 = por %p286, %p287
      %p289 = scmp.ne.s32.totalorder %s280, %s281
      %p290 = scmp.eq.s32.totalorder %s45, 0
      %p291 = por %p289, %p290
      %p292 = scmp.ne.s32.totalorder %s280, %s281
      %p293 = scmp.eq.s32.totalorder %s46, 1
      %p294 = por %p292, %p293
      %p296 = scmp.ne.s32.totalorder %s281, %s295
      %p297 = scmp.eq.s32.totalorder %s46, 0
      %p298 = por %p296, %p297
      %s300 = sadd.s32 %s299, 1
      %p303 = scmp.eq.s32.totalorder %s40, 1
      %p304 = scmp.ne.s32.totalorder %s299, %s301
      %p305 = scmp.eq.s32.totalorder %s40, 0
      %p306 = por %p304, %p305
      %p307 = scmp.ne.s32.totalorder %s299, %s301
      %p308 = scmp.eq.s32.totalorder %s45, 1
      %p309 = por %p307, %p308
      %p310 = scmp.ne.s32.totalorder %s301, %s302
      %p311 = scmp.eq.s32.totalorder %s45, 0
      %p312 = por %p310, %p311
      %p313 = scmp.ne.s32.totalorder %s301, %s302
      %p314 = scmp.eq.s32.totalorder %s46, 1
      %p315 = por %p313, %p314
      %p317 = scmp.ne.s32.totalorder %s302, %s316
      %p318 = scmp.eq.s32.totalorder %s46, 0
      %p319 = por %p317, %p318
      %s321 = sadd.s32 %s320, 1
      %p324 = scmp.eq.s32.totalorder %s40, 1
      %p325 = scmp.ne.s32.totalorder %s320, %s322
      %p326 = scmp.eq.s32.totalorder %s40, 0
      %p327 = por %p325, %p326
      %p328 = scmp.ne.s32.totalorder %s320, %s322
      %p329 = scmp.eq.s32.totalorder %s45, 1
      %p330 = por %p328, %p329
      %p331 = scmp.ne.s32.totalorder %s322, %s323
      %p332 = scmp.eq.s32.totalorder %s45, 0
      %p333 = por %p331, %p332
      %p334 = scmp.ne.s32.totalorder %s322, %s323
      %p335 = scmp.eq.s32.totalorder %s46, 1
      %p336 = por %p334, %p335
      %p338 = scmp.ne.s32.totalorder %s323, %s337
      %p339 = scmp.eq.s32.totalorder %s46, 0
      %p340 = por %p338, %p339
      %s342 = sadd.s32 %s341, 1
      %p345 = scmp.eq.s32.totalorder %s40, 1
      %p346 = scmp.ne.s32.totalorder %s341, %s343
      %p347 = scmp.eq.s32.totalorder %s40, 0
      %p348 = por %p346, %p347
      %p349 = scmp.ne.s32.totalorder %s341, %s343
      %p350 = scmp.eq.s32.totalorder %s45, 1
      %p351 = por %p349, %p350
      %p352 = scmp.ne.s32.totalorder %s343, %s344
      %p353 = scmp.eq.s32.totalorder %s45, 0
      %p354 = por %p352, %p353
      %p355 = scmp.ne.s32.totalorder %s343, %s344
      %p356 = scmp.eq.s32.totalorder %s46, 1
      %p357 = por %p355, %p356
      %p359 = scmp.ne.s32.totalorder %s344, %s358
      %p360 = scmp.eq.s32.totalorder %s46, 0
      %p361 = por %p359, %p360
      %s363 = sadd.s32 %s362, 1
      %p366 = scmp.eq.s32.totalorder %s40, 1
      %p367 = scmp.ne.s32.totalorder %s362, %s364
      %p368 = scmp.eq.s32.totalorder %s40, 0
      %p369 = por %p367, %p368
      %p370 = scmp.ne.s32.totalorder %s362, %s364
      %p371 = scmp.eq.s32.totalorder %s45, 1
      %p372 = por %p370, %p371
      %p373 = scmp.ne.s32.totalorder %s364, %s365
      %p374 = scmp.eq.s32.totalorder %s45, 0
      %p375 = por %p373, %p374
      %p376 = scmp.ne.s32.totalorder %s364, %s365
      %p377 = scmp.eq.s32.totalorder %s46, 1
      %p378 = por %p376, %p377
      %p380 = scmp.ne.s32.totalorder %s365, %s379
      %p381 = scmp.eq.s32.totalorder %s46, 0
      %p382 = por %p380, %p381
      %s384 = sadd.s32 %s383, 1
      %p387 = scmp.eq.s32.totalorder %s40, 1
      %p388 = scmp.ne.s32.totalorder %s383, %s385
      %p389 = scmp.eq.s32.totalorder %s40, 0
      %p390 = por %p388, %p389
      %p391 = scmp.ne.s32.totalorder %s383, %s385
      %p392 = scmp.eq.s32.totalorder %s45, 1
      %p393 = por %p391, %p392
      %p394 = scmp.ne.s32.totalorder %s385, %s386
      %p395 = scmp.eq.s32.totalorder %s45, 0
      %p396 = por %p394, %p395
      %p397 = scmp.ne.s32.totalorder %s385, %s386
      %p398 = scmp.eq.s32.totalorder %s46, 1
      %p399 = por %p397, %p398
      %p401 = scmp.ne.s32.totalorder %s386, %s400
      %p402 = scmp.eq.s32.totalorder %s46, 0
      %p403 = por %p401, %p402
      %s405 = sadd.s32 %s404, 1
      %p408 = scmp.eq.s32.totalorder %s40, 1
      %p409 = scmp.ne.s32.totalorder %s404, %s406
      %p410 = scmp.eq.s32.totalorder %s40, 0
      %p411 = por %p409, %p410
      %p412 = scmp.ne.s32.totalorder %s404, %s406
      %p413 = scmp.eq.s32.totalorder %s45, 1
      %p414 = por %p412, %p413
      %p415 = scmp.ne.s32.totalorder %s406, %s407
      %p416 = scmp.eq.s32.totalorder %s45, 0
      %p417 = por %p415, %p416
      %p418 = scmp.ne.s32.totalorder %s406, %s407
      %p419 = scmp.eq.s32.totalorder %s46, 1
      %p420 = por %p418, %p419
      %p422 = scmp.ne.s32.totalorder %s407, %s421
      %p423 = scmp.eq.s32.totalorder %s46, 0
      %p424 = por %p422, %p423
      %s426 = sadd.s32 %s425, 1
      %p429 = scmp.eq.s32.totalorder %s40, 1
      %p430 = scmp.ne.s32.totalorder %s425, %s427
      %p431 = scmp.eq.s32.totalorder %s40, 0
      %p432 = por %p430, %p431
      %p433 = scmp.ne.s32.totalorder %s425, %s427
      %p434 = scmp.eq.s32.totalorder %s45, 1
      %p435 = por %p433, %p434
      %p436 = scmp.ne.s32.totalorder %s427, %s428
      %p437 = scmp.eq.s32.totalorder %s45, 0
      %p438 = por %p436, %p437
      %p439 = scmp.ne.s32.totalorder %s427, %s428
      %p440 = scmp.eq.s32.totalorder %s46, 1
      %p441 = por %p439, %p440
      %p443 = scmp.ne.s32.totalorder %s428, %s442
      %p444 = scmp.eq.s32.totalorder %s46, 0
      %p445 = por %p443, %p444
      %s447 = sadd.s32 %s446, 1
      %p450 = scmp.eq.s32.totalorder %s40, 1
      %p451 = scmp.ne.s32.totalorder %s446, %s448
      %p452 = scmp.eq.s32.totalorder %s40, 0
      %p453 = por %p451, %p452
      %p454 = scmp.ne.s32.totalorder %s446, %s448
      %p455 = scmp.eq.s32.totalorder %s45, 1
      %p456 = por %p454, %p455
      %p457 = scmp.ne.s32.totalorder %s448, %s449
      %p458 = scmp.eq.s32.totalorder %s45, 0
      %p459 = por %p457, %p458
      %p460 = scmp.ne.s32.totalorder %s448, %s449
      %p461 = scmp.eq.s32.totalorder %s46, 1
      %p462 = por %p460, %p461
      %p464 = scmp.ne.s32.totalorder %s449, %s463
      %p465 = scmp.eq.s32.totalorder %s46, 0
      %p466 = por %p464, %p465
      %s468 = sadd.s32 %s467, 1
      %p471 = scmp.eq.s32.totalorder %s40, 1
      %p472 = scmp.ne.s32.totalorder %s467, %s469
      %p473 = scmp.eq.s32.totalorder %s40, 0
      %p474 = por %p472, %p473
      %p475 = scmp.ne.s32.totalorder %s467, %s469
      %p476 = scmp.eq.s32.totalorder %s45, 1
      %p477 = por %p475, %p476
      %p478 = scmp.ne.s32.totalorder %s469, %s470
      %p479 = scmp.eq.s32.totalorder %s45, 0
      %p480 = por %p478, %p479
      %p481 = scmp.ne.s32.totalorder %s469, %s470
      %p482 = scmp.eq.s32.totalorder %s46, 1
      %p483 = por %p481, %p482
      %p485 = scmp.ne.s32.totalorder %s470, %s484
      %p486 = scmp.eq.s32.totalorder %s46, 0
      %p487 = por %p485, %p486
      %s489 = sadd.s32 %s488, 1
      %p492 = scmp.eq.s32.totalorder %s40, 1
      %p493 = scmp.ne.s32.totalorder %s488, %s490
      %p494 = scmp.eq.s32.totalorder %s40, 0
      %p495 = por %p493, %p494
      %p496 = scmp.ne.s32.totalorder %s488, %s490
      %p497 = scmp.eq.s32.totalorder %s45, 1
      %p498 = por %p496, %p497
      %p499 = scmp.ne.s32.totalorder %s490, %s491
      %p500 = scmp.eq.s32.totalorder %s45, 0
      %p501 = por %p499, %p500
      %p502 = scmp.ne.s32.totalorder %s490, %s491
      %p503 = scmp.eq.s32.totalorder %s46, 1
      %p504 = por %p502, %p503
      %p506 = scmp.ne.s32.totalorder %s491, %s505
      %p507 = scmp.eq.s32.totalorder %s46, 0
      %p508 = por %p506, %p507
      %s510 = sadd.s32 %s509, 1
      %p513 = scmp.eq.s32.totalorder %s40, 1
      %p514 = scmp.ne.s32.totalorder %s509, %s511
      %p515 = scmp.eq.s32.totalorder %s40, 0
      %p516 = por %p514, %p515
      %p517 = scmp.ne.s32.totalorder %s509, %s511
      %p518 = scmp.eq.s32.totalorder %s45, 1
      %p519 = por %p517, %p518
      %p520 = scmp.ne.s32.totalorder %s511, %s512
      %p521 = scmp.eq.s32.totalorder %s45, 0
      %p522 = por %p520, %p521
      %p523 = scmp.ne.s32.totalorder %s511, %s512
      %p524 = scmp.eq.s32.totalorder %s46, 1
      %p525 = por %p523, %p524
      %p527 = scmp.ne.s32.totalorder %s512, %s526
      %p528 = scmp.eq.s32.totalorder %s46, 0
      %p529 = por %p527, %p528
      %s530 = ssub.s32 %s40, %s47
      %p531 = scmp.eq.s32.totalorder %s530, 0
      %s533 = sadd.s32 %s532, 1
      %s534 = scalar_select %p531, %s532, %s533
      %p537 = pneg %p531
      %p538 = scmp.eq.s32.totalorder %s40, 1
      %p539 = por %p537, %p538
      %p540 = scmp.ne.s32.totalorder %s532, %s535
      %p541 = scmp.eq.s32.totalorder %s40, 0
      %p542 = por %p540, %p541
      %p543 = scmp.ne.s32.totalorder %s532, %s535
      %p544 = scmp.eq.s32.totalorder %s45, 1
      %p545 = por %p543, %p544
      %p546 = scmp.ne.s32.totalorder %s535, %s536
      %p547 = scmp.eq.s32.totalorder %s45, 0
      %p548 = por %p546, %p547
      %p549 = scmp.ne.s32.totalorder %s535, %s536
      %p550 = scmp.eq.s32.totalorder %s46, 1
      %p551 = por %p549, %p550
      %p553 = scmp.ne.s32.totalorder %s536, %s552
      %p554 = scmp.eq.s32.totalorder %s46, 0
      %p555 = por %p553, %p554
      %p556 = scmp.le.s32.totalorder 1, %s40
      %p557 = scmp.lt.s32.totalorder %s40, 3
      %p558 = pnand %p556, %p557
      %p559 = pneg %p558
      // Predicated region
      $region9: #{decoder_forward.1} parent=5 // pred_check
        _
      $region10: #{decoder_forward.1} parent=5 // pred_check_branch
        %561 = sbr.rel (%p558) target = $region12
      $region11: #{decoder_forward.1} parent=5 // pred_region
        %s562 = ssub.s32 %s40, 1
        // Predicated region
        $region13: #{decoder_forward.1} parent=11 // pred_check
          %p563 = pneg %p165
        $region14: #{decoder_forward.1} parent=11 // pred_check_branch
          %565 = sbr.rel (%p563) target = $region16
        $region15: #{decoder_forward.1} parent=11 // pred_region
          _
        $region16: #{decoder_forward.1} parent=11 // pred_fallthru
          _
        // Predicated region
        $region17: #{decoder_forward.1} parent=11 // pred_check
          %p566 = pneg %p186
        $region18: #{decoder_forward.1} parent=11 // pred_check_branch
          %568 = sbr.rel (%p566) target = $region20
        $region19: #{decoder_forward.1} parent=11 // pred_region
          _
        $region20: #{decoder_forward.1} parent=11 // pred_fallthru
          _
        // Predicated region
        $region21: #{decoder_forward.1} parent=11 // pred_check
          %p569 = pneg %p207
        $region22: #{decoder_forward.1} parent=11 // pred_check_branch
          %571 = sbr.rel (%p569) target = $region24
        $region23: #{decoder_forward.1} parent=11 // pred_region
          %s573 = ssub.s32 96, 96
          %574 = vsyncadd [#allocation6], %s573
          %s575 = sshll.u32 [#allocation5], 4
          %s576 = int_to_ptr.vmem [resolvable:$true] %s575
          %581 = dma.hbm_to_vmem [thread:$0]  %s6, 96, %s576, [#allocation6], 16, 16, 1
        $region24: #{decoder_forward.1} parent=11 // pred_fallthru
          _
        // Predicated region
        $region25: #{decoder_forward.1} parent=11 // pred_check
          %p582 = pneg %p228
        $region26: #{decoder_forward.1} parent=11 // pred_check_branch
          %584 = sbr.rel (%p582) target = $region28
        $region27: #{decoder_forward.1} parent=11 // pred_region
          %s586 = ssub.s32 96, 96
          %587 = vsyncadd [#allocation6], %s586
          %s588 = sshll.u32 [#allocation7], 4
          %s589 = int_to_ptr.vmem [resolvable:$true] %s588
          %594 = dma.hbm_to_vmem [thread:$0]  %s7, 96, %s589, [#allocation6], 16, 16, 1
        $region28: #{decoder_forward.1} parent=11 // pred_fallthru
          _
        // Predicated region
        $region29: #{decoder_forward.1} parent=11 // pred_check
          %p595 = pneg %p249
        $region30: #{decoder_forward.1} parent=11 // pred_check_branch
          %597 = sbr.rel (%p595) target = $region32
        $region31: #{decoder_forward.1} parent=11 // pred_region
          _
        $region32: #{decoder_forward.1} parent=11 // pred_fallthru
          _
        // Predicated region
        $region33: #{decoder_forward.1} parent=11 // pred_check
          %p598 = pneg %p270
        $region34: #{decoder_forward.1} parent=11 // pred_check_branch
          %600 = sbr.rel (%p598) target = $region36
        $region35: #{decoder_forward.1} parent=11 // pred_region
          %s602 = ssub.s32 64, 64
          %603 = vsyncadd [#allocation9], %s602
          %s604 = sshll.u32 [#allocation8], 4
          %s605 = int_to_ptr.vmem [resolvable:$true] %s604
          %610 = dma.hbm_to_vmem [thread:$0]  %s9, 64, %s605, [#allocation9], 16, 16, 1
        $region36: #{decoder_forward.1} parent=11 // pred_fallthru
          _
        // Predicated region
        $region37: #{decoder_forward.1} parent=11 // pred_check
          %p611 = pneg %p291
        $region38: #{decoder_forward.1} parent=11 // pred_check_branch
          %613 = sbr.rel (%p611) target = $region40
        $region39: #{decoder_forward.1} parent=11 // pred_region
          _
        $region40: #{decoder_forward.1} parent=11 // pred_fallthru
          _
        // Predicated region
        $region41: #{decoder_forward.1} parent=11 // pred_check
          %p614 = pneg %p312
        $region42: #{decoder_forward.1} parent=11 // pred_check_branch
          %616 = sbr.rel (%p614) target = $region44
        $region43: #{decoder_forward.1} parent=11 // pred_region
          %s618 = ssub.s32 64, 64
          %619 = vsyncadd [#allocation9], %s618
          %s620 = sshll.u32 [#allocation10], 4
          %s621 = int_to_ptr.vmem [resolvable:$true] %s620
          %626 = dma.hbm_to_vmem [thread:$0]  %s11, 64, %s621, [#allocation9], 16, 16, 1
        $region44: #{decoder_forward.1} parent=11 // pred_fallthru
          _
        // Predicated region
        $region45: #{decoder_forward.1} parent=11 // pred_check
          %p627 = pneg %p333
        $region46: #{decoder_forward.1} parent=11 // pred_check_branch
          %629 = sbr.rel (%p627) target = $region48
        $region47: #{decoder_forward.1} parent=11 // pred_region
          _
        $region48: #{decoder_forward.1} parent=11 // pred_fallthru
          _
        // Predicated region
        $region49: #{decoder_forward.1} parent=11 // pred_check
          %p630 = pneg %p354
        $region50: #{decoder_forward.1} parent=11 // pred_check_branch
          %632 = sbr.rel (%p630) target = $region52
        $region51: #{decoder_forward.1} parent=11 // pred_region
          %s634 = ssub.s32 64, 64
          %635 = vsyncadd [#allocation12], %s634
          %s636 = sshll.u32 [#allocation11], 4
          %s637 = int_to_ptr.vmem [resolvable:$true] %s636
          %642 = dma.hbm_to_vmem [thread:$0]  %s13, 64, %s637, [#allocation12], 16, 16, 1
        $region52: #{decoder_forward.1} parent=11 // pred_fallthru
          _
        // Predicated region
        $region53: #{decoder_forward.1} parent=11 // pred_check
          %p643 = pneg %p375
        $region54: #{decoder_forward.1} parent=11 // pred_check_branch
          %645 = sbr.rel (%p643) target = $region56
        $region55: #{decoder_forward.1} parent=11 // pred_region
          %s647 = ssub.s32 2048, 2048
          %648 = vsyncadd [#allocation12], %s647
          %s649 = sshll.u32 [#allocation13], 4
          %s650 = int_to_ptr.vmem [resolvable:$true] %s649
          %655 = dma.hbm_to_vmem [thread:$0]  %s14, 2048, %s650, [#allocation12], 128, 128, 8
        $region56: #{decoder_forward.1} parent=11 // pred_fallthru
          _
        // Predicated region
        $region57: #{decoder_forward.1} parent=11 // pred_check
          %p656 = pneg %p396
        $region58: #{decoder_forward.1} parent=11 // pred_check_branch
          %658 = sbr.rel (%p656) target = $region60
        $region59: #{decoder_forward.1} parent=11 // pred_region
          %s660 = ssub.s32 64, 64
          %661 = vsyncadd [#allocation15], %s660
          %s662 = sshll.u32 [#allocation14], 4
          %s663 = int_to_ptr.vmem [resolvable:$true] %s662
          %668 = dma.hbm_to_vmem [thread:$0]  %s15, 64, %s663, [#allocation15], 16, 16, 1
        $region60: #{decoder_forward.1} parent=11 // pred_fallthru
          _
        // Predicated region
        $region61: #{decoder_forward.1} parent=11 // pred_check
          %p669 = pneg %p417
        $region62: #{decoder_forward.1} parent=11 // pred_check_branch
          %671 = sbr.rel (%p669) target = $region64
        $region63: #{decoder_forward.1} parent=11 // pred_region
          %s673 = ssub.s32 1024, 1024
          %674 = vsyncadd [#allocation15], %s673
          %s675 = sshll.u32 [#allocation16], 4
          %s676 = int_to_ptr.vmem [resolvable:$true] %s675
          %681 = dma.hbm_to_vmem [thread:$0]  %s16, 1024, %s676, [#allocation15], 128, 128, 8
        $region64: #{decoder_forward.1} parent=11 // pred_fallthru
          _
        // Predicated region
        $region65: #{decoder_forward.1} parent=11 // pred_check
          %p682 = pneg %p438
        $region66: #{decoder_forward.1} parent=11 // pred_check_branch
          %684 = sbr.rel (%p682) target = $region68
        $region67: #{decoder_forward.1} parent=11 // pred_region
          %s686 = ssub.s32 32, 32
          %687 = vsyncadd [#allocation18], %s686
          %s688 = sshll.u32 [#allocation17], 4
          %s689 = int_to_ptr.vmem [resolvable:$true] %s688
          %694 = dma.hbm_to_vmem [thread:$0]  %s17, 32, %s689, [#allocation18], 16, 16, 1
        $region68: #{decoder_forward.1} parent=11 // pred_fallthru
          _
        // Predicated region
        $region69: #{decoder_forward.1} parent=11 // pred_check
          %p695 = pneg %p459
        $region70: #{decoder_forward.1} parent=11 // pred_check_branch
          %697 = sbr.rel (%p695) target = $region72
        $region71: #{decoder_forward.1} parent=11 // pred_region
          _
        $region72: #{decoder_forward.1} parent=11 // pred_fallthru
          _
        // Predicated region
        $region73: #{decoder_forward.1} parent=11 // pred_check
          %p698 = pneg %p480
        $region74: #{decoder_forward.1} parent=11 // pred_check_branch
          %700 = sbr.rel (%p698) target = $region76
        $region75: #{decoder_forward.1} parent=11 // pred_region
          %s702 = ssub.s32 32, 32
          %703 = vsyncadd [#allocation18], %s702
          %s704 = sshll.u32 [#allocation19], 4
          %s705 = int_to_ptr.vmem [resolvable:$true] %s704
          %710 = dma.hbm_to_vmem [thread:$0]  %s19, 32, %s705, [#allocation18], 16, 16, 1
        $region76: #{decoder_forward.1} parent=11 // pred_fallthru
          _
        // Predicated region
        $region77: #{decoder_forward.1} parent=11 // pred_check
          %p711 = pneg %p501
        $region78: #{decoder_forward.1} parent=11 // pred_check_branch
          %713 = sbr.rel (%p711) target = $region80
        $region79: #{decoder_forward.1} parent=11 // pred_region
          _
        $region80: #{decoder_forward.1} parent=11 // pred_fallthru
          _
        // Predicated region
        $region81: #{decoder_forward.1} parent=11 // pred_check
          %p714 = pneg %p522
        $region82: #{decoder_forward.1} parent=11 // pred_check_branch
          %716 = sbr.rel (%p714) target = $region84
        $region83: #{decoder_forward.1} parent=11 // pred_region
          %s718 = ssub.s32 16, 16
          %719 = vsyncadd [#allocation21], %s718
          %s721 = sshll.u32 [#allocation20], 4
          %s722 = int_to_ptr.vmem [resolvable:$true] %s721
          %724 = dma.hbm_to_vmem [thread:$0]  %s21, 16, %s722, [#allocation21]
        $region84: #{decoder_forward.1} parent=11 // pred_fallthru
          _
      $region12: #{decoder_forward.1} parent=5 // pred_fallthru
        _
      %p725 = scmp.lt.s32.totalorder %s40, 2
      // Predicated region
      $region85: #{decoder_forward.1} parent=5 // pred_check
        %p726 = pneg %p725
      $region86: #{decoder_forward.1} parent=5 // pred_check_branch
        %728 = sbr.rel (%p726) target = $region88
      $region87: #{decoder_forward.1} parent=5 // pred_region
        // Predicated region
        $region89: #{decoder_forward.1} parent=87 // pred_check
          %p729 = pneg %p60
        $region90: #{decoder_forward.1} parent=87 // pred_check_branch
          %731 = sbr.rel (%p729) target = $region92
        $region91: #{decoder_forward.1} parent=87 // pred_region
          %p732 = scmp.lt.s32.totalorder %s40, 1
          %s733 = scalar_select %p732, %s40, 1
          %s734 = smul.addr %s733, 8
          %s735 = scalar_lea.vmem %s0, %s734
        $region92: #{decoder_forward.1} parent=87 // pred_fallthru
          _
        // Predicated region
        $region93: #{decoder_forward.1} parent=87 // pred_check
          %p736 = pneg %p86
        $region94: #{decoder_forward.1} parent=87 // pred_check_branch
          %738 = sbr.rel (%p736) target = $region96
        $region95: #{decoder_forward.1} parent=87 // pred_region
          %s739 = sand.u32 %s76, 1
          %s740 = scalar_lea.sflag [#allocation3], %s739
          %s741 = sand.u32 %s76, 1
          %s742 = smul.addr %s741, 8
          %s743 = scalar_lea.vmem [#allocation2], %s742
          %s745 = ssub.s32 128, 128
          %746 = vsyncadd %s740, %s745
          %s747 = smul.addr %s40, 128
          %s748 = scalar_lea.hbm %s1, %s747
          %s750 = sshll.u32 %s743, 4
          %s751 = int_to_ptr.vmem [resolvable:$true] %s750
          %753 = dma.hbm_to_vmem [thread:$0]  %s748, 128, %s751, %s740
        $region96: #{decoder_forward.1} parent=87 // pred_fallthru
          _
        // Predicated region
        $region97: #{decoder_forward.1} parent=87 // pred_check
          %p754 = pneg %p112
        $region98: #{decoder_forward.1} parent=87 // pred_check_branch
          %756 = sbr.rel (%p754) target = $region100
        $region99: #{decoder_forward.1} parent=87 // pred_region
          %p757 = scmp.lt.s32.totalorder %s40, 1
          %s758 = scalar_select %p757, %s40, 1
          %s759 = smul.addr %s758, 8
          %s760 = scalar_lea.vmem %s2, %s759
        $region100: #{decoder_forward.1} parent=87 // pred_fallthru
          _
        // Predicated region
        $region101: #{decoder_forward.1} parent=87 // pred_check
          %p761 = pneg %p138
        $region102: #{decoder_forward.1} parent=87 // pred_check_branch
          %763 = sbr.rel (%p761) target = $region104
        $region103: #{decoder_forward.1} parent=87 // pred_region
          %p764 = scmp.lt.s32.totalorder %s40, 1
          %s765 = scalar_select %p764, %s40, 1
          %s766 = scalar_lea.vmem %s3, %s765
        $region104: #{decoder_forward.1} parent=87 // pred_fallthru
          _
      $region88: #{decoder_forward.1} parent=5 // pred_fallthru
        _
      %p767 = scmp.le.s32.totalorder 1, %s40
      %p768 = scmp.lt.s32.totalorder %s40, 3
      %p769 = pnand %p767, %p768
      %p770 = pneg %p769
      // Predicated region
      $region105: #{decoder_forward.1} parent=5 // pred_check
        _
      $region106: #{decoder_forward.1} parent=5 // pred_check_branch
        %772 = sbr.rel (%p769) target = $region108
      $region107: #{decoder_forward.1} parent=5 // pred_region
        %s773 = ssub.s32 %s40, 1
        %s774 = sand.u32 %s79, 1
        %s775 = scalar_lea.sflag [#allocation3], %s774
        %s776 = sand.u32 %s79, 1
        %s777 = smul.addr %s776, 8
        %s778 = scalar_lea.vmem [#allocation2], %s777
        // Predicated region
        $region109: #{decoder_forward.1} parent=107 // pred_check
          %p779 = pneg %p92
        $region110: #{decoder_forward.1} parent=107 // pred_check_branch
          %781 = sbr.rel (%p779) target = $region112
        $region111: #{decoder_forward.1} parent=107 // pred_region
          %782 = dma.done %s775, 128
        $region112: #{decoder_forward.1} parent=107 // pred_fallthru
          _
        // Predicated region
        $region113: #{decoder_forward.1} parent=107 // pred_check
          %p783 = pneg %p207
        $region114: #{decoder_forward.1} parent=107 // pred_check_branch
          %785 = sbr.rel (%p783) target = $region116
        $region115: #{decoder_forward.1} parent=107 // pred_region
          %786 = dma.done [#allocation6], 96
        $region116: #{decoder_forward.1} parent=107 // pred_fallthru
          _
        // Predicated region
        $region117: #{decoder_forward.1} parent=107 // pred_check
          %p787 = pneg %p228
        $region118: #{decoder_forward.1} parent=107 // pred_check_branch
          %789 = sbr.rel (%p787) target = $region120
        $region119: #{decoder_forward.1} parent=107 // pred_region
          %790 = dma.done [#allocation6], 96
        $region120: #{decoder_forward.1} parent=107 // pred_fallthru
          _
        // Predicated region
        $region121: #{decoder_forward.1} parent=107 // pred_check
          %p791 = pneg %p270
        $region122: #{decoder_forward.1} parent=107 // pred_check_branch
          %793 = sbr.rel (%p791) target = $region124
        $region123: #{decoder_forward.1} parent=107 // pred_region
          %794 = dma.done [#allocation9], 64
        $region124: #{decoder_forward.1} parent=107 // pred_fallthru
          _
        // Predicated region
        $region125: #{decoder_forward.1} parent=107 // pred_check
          %p795 = pneg %p312
        $region126: #{decoder_forward.1} parent=107 // pred_check_branch
          %797 = sbr.rel (%p795) target = $region128
        $region127: #{decoder_forward.1} parent=107 // pred_region
          %798 = dma.done [#allocation9], 64
        $region128: #{decoder_forward.1} parent=107 // pred_fallthru
          _
        // Predicated region
        $region129: #{decoder_forward.1} parent=107 // pred_check
          %p799 = pneg %p354
        $region130: #{decoder_forward.1} parent=107 // pred_check_branch
          %801 = sbr.rel (%p799) target = $region132
        $region131: #{decoder_forward.1} parent=107 // pred_region
          %802 = dma.done [#allocation12], 64
        $region132: #{decoder_forward.1} parent=107 // pred_fallthru
          _
        // Predicated region
        $region133: #{decoder_forward.1} parent=107 // pred_check
          %p803 = pneg %p375
        $region134: #{decoder_forward.1} parent=107 // pred_check_branch
          %805 = sbr.rel (%p803) target = $region136
        $region135: #{decoder_forward.1} parent=107 // pred_region
          %806 = dma.done [#allocation12], 2048
        $region136: #{decoder_forward.1} parent=107 // pred_fallthru
          _
        // Predicated region
        $region137: #{decoder_forward.1} parent=107 // pred_check
          %p807 = pneg %p396
        $region138: #{decoder_forward.1} parent=107 // pred_check_branch
          %809 = sbr.rel (%p807) target = $region140
        $region139: #{decoder_forward.1} parent=107 // pred_region
          %810 = dma.done [#allocation15], 64
        $region140: #{decoder_forward.1} parent=107 // pred_fallthru
          _
        // Predicated region
        $region141: #{decoder_forward.1} parent=107 // pred_check
          %p811 = pneg %p417
        $region142: #{decoder_forward.1} parent=107 // pred_check_branch
          %813 = sbr.rel (%p811) target = $region144
        $region143: #{decoder_forward.1} parent=107 // pred_region
          %814 = dma.done [#allocation15], 1024
        $region144: #{decoder_forward.1} parent=107 // pred_fallthru
          _
        // Predicated region
        $region145: #{decoder_forward.1} parent=107 // pred_check
          %p815 = pneg %p438
        $region146: #{decoder_forward.1} parent=107 // pred_check_branch
          %817 = sbr.rel (%p815) target = $region148
        $region147: #{decoder_forward.1} parent=107 // pred_region
          %818 = dma.done [#allocation18], 32
        $region148: #{decoder_forward.1} parent=107 // pred_fallthru
          _
        // Predicated region
        $region149: #{decoder_forward.1} parent=107 // pred_check
          %p819 = pneg %p480
        $region150: #{decoder_forward.1} parent=107 // pred_check_branch
          %821 = sbr.rel (%p819) target = $region152
        $region151: #{decoder_forward.1} parent=107 // pred_region
          %822 = dma.done [#allocation18], 32
        $region152: #{decoder_forward.1} parent=107 // pred_fallthru
          _
        // Predicated region
        $region153: #{decoder_forward.1} parent=107 // pred_check
          %p823 = pneg %p522
        $region154: #{decoder_forward.1} parent=107 // pred_check_branch
          %825 = sbr.rel (%p823) target = $region156
        $region155: #{decoder_forward.1} parent=107 // pred_region
          %826 = dma.done [#allocation21], 16
        $region156: #{decoder_forward.1} parent=107 // pred_fallthru
          _
        %p827 = scmp.lt.s32.totalorder %s45, 1
        %s828 = scalar_select %p827, %s45, 1
        %s829 = smul.addr %s828, 8
        %s830 = scalar_lea.vmem %s0, %s829
        %p831 = pneg %p66
        %p832 = pneg %p63
        %s833 = sand.u32 %s79, 1
        %s834 = scalar_lea.sflag [#allocation3], %s833
        %s835 = sand.u32 %s79, 1
        %s836 = smul.addr %s835, 8
        %s837 = scalar_lea.vmem [#allocation2], %s836
        %p838 = pneg %p92
        %p839 = pneg %p89
        %p840 = scmp.lt.s32.totalorder %s45, 1
        %s841 = scalar_select %p840, %s45, 1
        %s842 = smul.addr %s841, 8
        %s843 = scalar_lea.vmem %s2, %s842
        %p844 = pneg %p118
        %p845 = pneg %p115
        %p846 = scmp.lt.s32.totalorder %s45, 1
        %s847 = scalar_select %p846, %s45, 1
        %s848 = scalar_lea.vmem %s3, %s847
        %p849 = pneg %p144
        %p850 = pneg %p141
        %p851 = pneg %p165
        %p852 = pneg %p162
        %p853 = pneg %p186
        %p854 = pneg %p183
        %p855 = pneg %p207
        %p856 = pneg %p204
        %p857 = pneg %p228
        %p858 = pneg %p225
        %p859 = pneg %p249
        %p860 = pneg %p246
        %p861 = pneg %p270
        %p862 = pneg %p267
        %p863 = pneg %p291
        %p864 = pneg %p288
        %p865 = pneg %p312
        %p866 = pneg %p309
        %p867 = pneg %p333
        %p868 = pneg %p330
        %p869 = pneg %p354
        %p870 = pneg %p351
        %p871 = pneg %p375
        %p872 = pneg %p372
        %p873 = pneg %p396
        %p874 = pneg %p393
        %p875 = pneg %p417
        %p876 = pneg %p414
        %p877 = pneg %p438
        %p878 = pneg %p435
        %p879 = pneg %p459
        %p880 = pneg %p456
        %p881 = pneg %p480
        %p882 = pneg %p477
        %p883 = pneg %p501
        %p884 = pneg %p498
        %p885 = pneg %p522
        %p886 = pneg %p519
        %p887 = pneg %p548
        %p888 = pneg %p545
        %s889 = sand.u32 %s535, 1
        %s890 = scalar_lea.sflag [#allocation4], %s889
        %s891 = sand.u32 %s535, 1
        %s892 = smul.addr %s891, 8
        %s893 = scalar_lea.vmem [#allocation22], %s892
        %p894 = scmp.lt.s32.totalorder %s45, 1
        %s895 = scalar_select %p894, %s45, 1
        %s896 = smul.addr %s895, 8
        %s897 = scalar_lea.vmem %s0, %s896
        %p898 = scmp.lt.s32.totalorder %s45, 1
        %s899 = scalar_select %p898, %s45, 1
        %s900 = smul.addr %s899, 8
        %s901 = scalar_lea.vmem %s2, %s900
        %p902 = scmp.lt.s32.totalorder %s45, 1
        %s903 = scalar_select %p902, %s45, 1
        %s904 = scalar_lea.vmem %s3, %s903
        %v905 = vld [vmem:[%s897] sm:$0xff]
        %v906 = vlaneseq
        %v907 = vand.u32 %v906, 127
        %908 = vset.pattern.permute.xlu0 0
        %909 = vperm.xlu0 %908, %v905
        %v910 = vpop.permute.xlu0 %909
        %vm911 = vcmp.eq.s32.totalorder %v907, %v910
        %v912 = vsel %vm911, 1, 0
        %v913 = vcvt.s32.f32 %v912
        %v914 = vld [vmem:[%s4] sm:$0xff]
        %v915 = vld [vmem:[%s4 + $0x8] sm:$0xff]
        %v916 = vld [vmem:[%s4 + $0x10] sm:$0xff]
        %v917 = vld [vmem:[%s4 + $0x18] sm:$0xff]
        %v918 = vld [vmem:[%s4 + $0x20] sm:$0xff]
        %v919 = vld [vmem:[%s4 + $0x28] sm:$0xff]
        %v920 = vld [vmem:[%s4 + $0x30] sm:$0x3]
        %vm921 = vcmask 408576
        %v923 = vsel %vm921, %v913, 0
        %vm925 = vcmask 1041408
        %v927 = vsel %vm925, %v920, 0
        %929 = vmatprep.subr.mxu0 0.0
        %930 = vmatpush1.msra.mxu0 0.0
        %931 = vmatprep.subr.mxu0 0.0
        %932 = vmatpush1.msra.mxu0 0.0
        %933 = vmatprep.subr.mxu0 0.0
        %934 = vmatpush1.msra.mxu0 0.0
        %935 = vmatprep.subr.mxu0 0.0
        %936 = vmatpush1.msra.mxu0 0.0
        %937 = vmatprep.subr.mxu0 0.0
        %938 = vmatpush1.msra.mxu0 0.0
        %939 = vmatprep.subr.mxu0 0.0
        %940 = vmatpush1.msra.mxu0 0.0
        %941 = vmatprep.subr.mxu0 0.0
        %942 = vmatpush1.msra.mxu0 0.0
        %943 = vmatprep.subr.mxu0 0.0
        %944 = vmatpush1.msra.mxu0 0.0
        %945 = vmatprep.subr.mxu0 0.0
        %946 = vmatpush1.msra.mxu0 0.0
        %947 = vmatprep.subr.mxu0 0.0
        %948 = vmatpush1.msra.mxu0 %v927
        %949 = vmatprep.subr.mxu0 0.0
        %950 = vmatpush1.msra.mxu0 %v919
        %951 = vmatprep.subr.mxu0 0.0
        %952 = vmatpush1.msra.mxu0 %v918
        %953 = vmatprep.subr.mxu0 0.0
        %954 = vmatpush1.msra.mxu0 %v917
        %955 = vmatprep.subr.mxu0 0.0
        %956 = vmatpush1.msra.mxu0 %v916
        %957 = vmatprep.subr.mxu0 0.0
        %958 = vmatpush1.msra.mxu0 %v915
        %959 = vmatprep.subr.mxu0 0.0
        %960 = vmatpush1.msra.mxu0 %v914
        %961 = vmatprep.subr.mxu0 0.0
        %962 = vmatpush2.msra.mxu0 0.0
        %963 = vmatprep.subr.mxu0 0.0
        %964 = vmatpush2.msra.mxu0 0.0
        %965 = vmatprep.subr.mxu0 0.0
        %966 = vmatpush2.msra.mxu0 0.0
        %967 = vmatprep.subr.mxu0 0.0
        %968 = vmatpush2.msra.mxu0 0.0
        %969 = vmatprep.subr.mxu0 0.0
        %970 = vmatpush2.msra.mxu0 0.0
        %971 = vmatprep.subr.mxu0 0.0
        %972 = vmatpush2.msra.mxu0 0.0
        %973 = vmatprep.subr.mxu0 0.0
        %974 = vmatpush2.msra.mxu0 0.0
        %975 = vmatprep.subr.mxu0 0.0
        %976 = vmatpush2.msra.mxu0 0.0
        %977 = vmatprep.subr.mxu0 0.0
        %978 = vmatpush2.msra.mxu0 0.0
        %979 = vmatprep.subr.mxu0 0.0
        %980 = vmatpush2.msra.mxu0 0.0
        %981 = vmatprep.subr.mxu0 0.0
        %982 = vmatpush2.msra.mxu0 0.0
        %983 = vmatprep.subr.mxu0 0.0
        %984 = vmatpush2.msra.mxu0 0.0
        %985 = vmatprep.subr.mxu0 0.0
        %986 = vmatpush2.msra.mxu0 0.0
        %987 = vmatprep.subr.mxu0 0.0
        %988 = vmatpush2.msra.mxu0 0.0
        %989 = vmatprep.subr.mxu0 0.0
        %990 = vmatpush2.msra.mxu0 0.0
        %991 = vmatprep.subr.mxu0 0.0
        %992 = vmatpush2.msra.mxu0 0.0
        %993 = vmatprep.mubr.f32.mxu0 0.0
        %994 = vmatmul.mubr.f32.gmra.mxu0 %v923
        %v995 = vpop.f32.mrf.mxu0
        %v996 = vadd.f32 0.0, %v995
        %v997 = vpop.f32.mrf.mxu0
        %998 = vdwg.mxu0
        %v999 = vmul.f32 %v996, 5.656854
        %v1000 = vld [vmem:[%s5] sm:$0xff]
        %v1001 = vadd.f32 %v999, %v1000
        %v1002 = vld [vmem:[%s778] sm:$0xff]
        %v1003 = vld [vmem:[%s901] sm:$0xff]
        %vm1004 = vcmp.eq.f32.partialorder %v1003, 0.0
        %v1005 = vsel %vm1004, -1e+09, 0.0
        %v1006 = vld [vmem:[%s904] sm:$0x1]
        %vm1007 = vcmp.eq.f32.partialorder %v1006, 0.0
        %v1008 = vsel %vm1007, -1e+09, 0.0
        %v1009 = vld [vmem:[#allocation5] sm:$0x1]
        %v1010 = vld [vmem:[#allocation7] sm:$0x1]
        %vm1011 = vcmask 261120
        %v1012 = vsel %vm1011, %v1001, 0.0
        %1013 = vadd.xlane.f32.xlu0 %v1012
        %v1014 = vpop.xlane.xlu0 %1013
        %v1015 = vrcp.pop 32.0
        %v1016 = vmul.f32 %v1014, %v1015
        %v1017 = vsub.f32 %v1001, %v1016
        %v1018 = vmul.f32 %v1017, %v1017
        %v1019 = vsel %vm1011, %v1018, 0.0
        %1020 = vadd.xlane.f32.xlu0 %v1019
        %v1021 = vpop.xlane.xlu0 %1020
        %v1022 = vmul.f32 %v1021, 0.032258064
        %v1023 = vrsqrt.pop %v1022
        %v1024 = vmul.f32 %v1022, %v1023
        %vm1025 = vcmp.eq.f32.partialorder %v1022, inf
        %v1026 = vsel %vm1025, %v1022, %v1024
        %vm1027 = vcmp.eq.f32.partialorder %v1022, 0.0
        %v1028 = vand.u32 %v1022, 2147483648
        %v1029 = vsel %vm1027, %v1028, %v1026
        %v1030 = vadd.f32 %v1029, 1e-06
        %v1031 = vrcp.pop %v1030
        %v1032 = vmul.f32 %v1017, %v1031
        %v1034 = vlaneseq
        %v1035 = vshrl.u32 %v1034, 7
        %v1036 = vsub.s32 0, %v1035
        %v1037 = vrot.slane %v1009, %v1036
        %v1039 = vmul.f32 %v1037, %v1032
        %v1041 = vlaneseq
        %v1042 = vshrl.u32 %v1041, 7
        %v1043 = vsub.s32 0, %v1042
        %v1044 = vrot.slane %v1010, %v1043
        %v1046 = vadd.f32 %v1039, %v1044
        %v1047 = vld [vmem:[%s8] sm:$0xff]
        %v1048 = vld [vmem:[%s8 + $0x8] sm:$0xff]
        %v1049 = vld [vmem:[%s8 + $0x10] sm:$0xff]
        %v1050 = vld [vmem:[%s8 + $0x18] sm:$0xff]
        %v1051 = vld [vmem:[#allocation8] sm:$0x1]
        %v1053 = vlaneseq
        %v1054 = vshrl.u32 %v1053, 7
        %v1055 = vsub.s32 0, %v1054
        %v1056 = vrot.slane %v1051, %v1055
        %v1059 = vsel %vm1011, %v1046, 0
        %1061 = vmatprep.subr.mxu0 0.0
        %1062 = vmatpush1.msra.mxu0 0.0
        %1063 = vmatprep.subr.mxu0 0.0
        %1064 = vmatpush1.msra.mxu0 0.0
        %1065 = vmatprep.subr.mxu0 0.0
        %1066 = vmatpush1.msra.mxu0 0.0
        %1067 = vmatprep.subr.mxu0 0.0
        %1068 = vmatpush1.msra.mxu0 0.0
        %1069 = vmatprep.subr.mxu0 0.0
        %1070 = vmatpush1.msra.mxu0 0.0
        %1071 = vmatprep.subr.mxu0 0.0
        %1072 = vmatpush1.msra.mxu0 0.0
        %1073 = vmatprep.subr.mxu0 0.0
        %1074 = vmatpush1.msra.mxu0 0.0
        %1075 = vmatprep.subr.mxu0 0.0
        %1076 = vmatpush1.msra.mxu0 0.0
        %1077 = vmatprep.subr.mxu0 0.0
        %1078 = vmatpush1.msra.mxu0 0.0
        %1079 = vmatprep.subr.mxu0 0.0
        %1080 = vmatpush1.msra.mxu0 0.0
        %1081 = vmatprep.subr.mxu0 0.0
        %1082 = vmatpush1.msra.mxu0 0.0
        %1083 = vmatprep.subr.mxu0 0.0
        %1084 = vmatpush1.msra.mxu0 0.0
        %1085 = vmatprep.subr.mxu0 0.0
        %1086 = vmatpush1.msra.mxu0 %v1050
        %1087 = vmatprep.subr.mxu0 0.0
        %1088 = vmatpush1.msra.mxu0 %v1049
        %1089 = vmatprep.subr.mxu0 0.0
        %1090 = vmatpush1.msra.mxu0 %v1048
        %1091 = vmatprep.subr.mxu0 0.0
        %1092 = vmatpush1.msra.mxu0 %v1047
        %1093 = vmatprep.subr.mxu0 0.0
        %1094 = vmatpush2.msra.mxu0 0.0
        %1095 = vmatprep.subr.mxu0 0.0
        %1096 = vmatpush2.msra.mxu0 0.0
        %1097 = vmatprep.subr.mxu0 0.0
        %1098 = vmatpush2.msra.mxu0 0.0
        %1099 = vmatprep.subr.mxu0 0.0
        %1100 = vmatpush2.msra.mxu0 0.0
        %1101 = vmatprep.subr.mxu0 0.0
        %1102 = vmatpush2.msra.mxu0 0.0
        %1103 = vmatprep.subr.mxu0 0.0
        %1104 = vmatpush2.msra.mxu0 0.0
        %1105 = vmatprep.subr.mxu0 0.0
        %1106 = vmatpush2.msra.mxu0 0.0
        %1107 = vmatprep.subr.mxu0 0.0
        %1108 = vmatpush2.msra.mxu0 0.0
        %1109 = vmatprep.subr.mxu0 0.0
        %1110 = vmatpush2.msra.mxu0 0.0
        %1111 = vmatprep.subr.mxu0 0.0
        %1112 = vmatpush2.msra.mxu0 0.0
        %1113 = vmatprep.subr.mxu0 0.0
        %1114 = vmatpush2.msra.mxu0 0.0
        %1115 = vmatprep.subr.mxu0 0.0
        %1116 = vmatpush2.msra.mxu0 0.0
        %1117 = vmatprep.subr.mxu0 0.0
        %1118 = vmatpush2.msra.mxu0 0.0
        %1119 = vmatprep.subr.mxu0 0.0
        %1120 = vmatpush2.msra.mxu0 0.0
        %1121 = vmatprep.subr.mxu0 0.0
        %1122 = vmatpush2.msra.mxu0 0.0
        %1123 = vmatprep.subr.mxu0 0.0
        %1124 = vmatpush2.msra.mxu0 0.0
        %1125 = vmatprep.mubr.f32.mxu0 0.0
        %1126 = vmatmul.mubr.f32.gmra.mxu0 %v1059
        %v1127 = vpop.f32.mrf.mxu0
        %v1128 = vadd.f32 %v1056, %v1127
        %v1129 = vpop.f32.mrf.mxu0
        %1130 = vdwg.mxu0
        %v1131 = vld [vmem:[%s10] sm:$0xff]
        %v1132 = vld [vmem:[%s10 + $0x8] sm:$0xff]
        %v1133 = vld [vmem:[%s10 + $0x10] sm:$0xff]
        %v1134 = vld [vmem:[%s10 + $0x18] sm:$0xff]
        %v1135 = vld [vmem:[#allocation10] sm:$0x1]
        %v1137 = vlaneseq
        %v1138 = vshrl.u32 %v1137, 7
        %v1139 = vsub.s32 0, %v1138
        %v1140 = vrot.slane %v1135, %v1139
        %1142 = vmatprep.subr.mxu0 0.0
        %1143 = vmatpush1.msra.mxu0 0.0
        %1144 = vmatprep.subr.mxu0 0.0
        %1145 = vmatpush1.msra.mxu0 0.0
        %1146 = vmatprep.subr.mxu0 0.0
        %1147 = vmatpush1.msra.mxu0 0.0
        %1148 = vmatprep.subr.mxu0 0.0
        %1149 = vmatpush1.msra.mxu0 0.0
        %1150 = vmatprep.subr.mxu0 0.0
        %1151 = vmatpush1.msra.mxu0 0.0
        %1152 = vmatprep.subr.mxu0 0.0
        %1153 = vmatpush1.msra.mxu0 0.0
        %1154 = vmatprep.subr.mxu0 0.0
        %1155 = vmatpush1.msra.mxu0 0.0
        %1156 = vmatprep.subr.mxu0 0.0
        %1157 = vmatpush1.msra.mxu0 0.0
        %1158 = vmatprep.subr.mxu0 0.0
        %1159 = vmatpush1.msra.mxu0 0.0
        %1160 = vmatprep.subr.mxu0 0.0
        %1161 = vmatpush1.msra.mxu0 0.0
        %1162 = vmatprep.subr.mxu0 0.0
        %1163 = vmatpush1.msra.mxu0 0.0
        %1164 = vmatprep.subr.mxu0 0.0
        %1165 = vmatpush1.msra.mxu0 0.0
        %1166 = vmatprep.subr.mxu0 0.0
        %1167 = vmatpush1.msra.mxu0 %v1134
        %1168 = vmatprep.subr.mxu0 0.0
        %1169 = vmatpush1.msra.mxu0 %v1133
        %1170 = vmatprep.subr.mxu0 0.0
        %1171 = vmatpush1.msra.mxu0 %v1132
        %1172 = vmatprep.subr.mxu0 0.0
        %1173 = vmatpush1.msra.mxu0 %v1131
        %1174 = vmatprep.subr.mxu0 0.0
        %1175 = vmatpush2.msra.mxu0 0.0
        %1176 = vmatprep.subr.mxu0 0.0
        %1177 = vmatpush2.msra.mxu0 0.0
        %1178 = vmatprep.subr.mxu0 0.0
        %1179 = vmatpush2.msra.mxu0 0.0
        %1180 = vmatprep.subr.mxu0 0.0
        %1181 = vmatpush2.msra.mxu0 0.0
        %1182 = vmatprep.subr.mxu0 0.0
        %1183 = vmatpush2.msra.mxu0 0.0
        %1184 = vmatprep.subr.mxu0 0.0
        %1185 = vmatpush2.msra.mxu0 0.0
        %1186 = vmatprep.subr.mxu0 0.0
        %1187 = vmatpush2.msra.mxu0 0.0
        %1188 = vmatprep.subr.mxu0 0.0
        %1189 = vmatpush2.msra.mxu0 0.0
        %1190 = vmatprep.subr.mxu0 0.0
        %1191 = vmatpush2.msra.mxu0 0.0
        %1192 = vmatprep.subr.mxu0 0.0
        %1193 = vmatpush2.msra.mxu0 0.0
        %1194 = vmatprep.subr.mxu0 0.0
        %1195 = vmatpush2.msra.mxu0 0.0
        %1196 = vmatprep.subr.mxu0 0.0
        %1197 = vmatpush2.msra.mxu0 0.0
        %1198 = vmatprep.subr.mxu0 0.0
        %1199 = vmatpush2.msra.mxu0 0.0
        %1200 = vmatprep.subr.mxu0 0.0
        %1201 = vmatpush2.msra.mxu0 0.0
        %1202 = vmatprep.subr.mxu0 0.0
        %1203 = vmatpush2.msra.mxu0 0.0
        %1204 = vmatprep.subr.mxu0 0.0
        %1205 = vmatpush2.msra.mxu0 0.0
        %1206 = vmatprep.mubr.f32.mxu0 0.0
        %1207 = vmatmul.mubr.f32.gmra.mxu0 %v1059
        %v1208 = vpop.f32.mrf.mxu0
        %v1209 = vadd.f32 %v1140, %v1208
        %v1210 = vpop.f32.mrf.mxu0
        %1211 = vdwg.mxu0
        %v1212 = vld [vmem:[%s12] sm:$0xff]
        %v1213 = vld [vmem:[%s12 + $0x8] sm:$0xff]
        %v1214 = vld [vmem:[%s12 + $0x10] sm:$0xff]
        %v1215 = vld [vmem:[%s12 + $0x18] sm:$0xff]
        %v1216 = vld [vmem:[#allocation11] sm:$0x1]
        %v1218 = vlaneseq
        %v1219 = vshrl.u32 %v1218, 7
        %v1220 = vsub.s32 0, %v1219
        %v1221 = vrot.slane %v1216, %v1220
        %1223 = vmatprep.subr.mxu0 0.0
        %1224 = vmatpush1.msra.mxu0 0.0
        %1225 = vmatprep.subr.mxu0 0.0
        %1226 = vmatpush1.msra.mxu0 0.0
        %1227 = vmatprep.subr.mxu0 0.0
        %1228 = vmatpush1.msra.mxu0 0.0
        %1229 = vmatprep.subr.mxu0 0.0
        %1230 = vmatpush1.msra.mxu0 0.0
        %1231 = vmatprep.subr.mxu0 0.0
        %1232 = vmatpush1.msra.mxu0 0.0
        %1233 = vmatprep.subr.mxu0 0.0
        %1234 = vmatpush1.msra.mxu0 0.0
        %1235 = vmatprep.subr.mxu0 0.0
        %1236 = vmatpush1.msra.mxu0 0.0
        %1237 = vmatprep.subr.mxu0 0.0
        %1238 = vmatpush1.msra.mxu0 0.0
        %1239 = vmatprep.subr.mxu0 0.0
        %1240 = vmatpush1.msra.mxu0 0.0
        %1241 = vmatprep.subr.mxu0 0.0
        %1242 = vmatpush1.msra.mxu0 0.0
        %1243 = vmatprep.subr.mxu0 0.0
        %1244 = vmatpush1.msra.mxu0 0.0
        %1245 = vmatprep.subr.mxu0 0.0
        %1246 = vmatpush1.msra.mxu0 0.0
        %1247 = vmatprep.subr.mxu0 0.0
        %1248 = vmatpush1.msra.mxu0 %v1215
        %1249 = vmatprep.subr.mxu0 0.0
        %1250 = vmatpush1.msra.mxu0 %v1214
        %1251 = vmatprep.subr.mxu0 0.0
        %1252 = vmatpush1.msra.mxu0 %v1213
        %1253 = vmatprep.subr.mxu0 0.0
        %1254 = vmatpush1.msra.mxu0 %v1212
        %1255 = vmatprep.subr.mxu0 0.0
        %1256 = vmatpush2.msra.mxu0 0.0
        %1257 = vmatprep.subr.mxu0 0.0
        %1258 = vmatpush2.msra.mxu0 0.0
        %1259 = vmatprep.subr.mxu0 0.0
        %1260 = vmatpush2.msra.mxu0 0.0
        %1261 = vmatprep.subr.mxu0 0.0
        %1262 = vmatpush2.msra.mxu0 0.0
        %1263 = vmatprep.subr.mxu0 0.0
        %1264 = vmatpush2.msra.mxu0 0.0
        %1265 = vmatprep.subr.mxu0 0.0
        %1266 = vmatpush2.msra.mxu0 0.0
        %1267 = vmatprep.subr.mxu0 0.0
        %1268 = vmatpush2.msra.mxu0 0.0
        %1269 = vmatprep.subr.mxu0 0.0
        %1270 = vmatpush2.msra.mxu0 0.0
        %1271 = vmatprep.subr.mxu0 0.0
        %1272 = vmatpush2.msra.mxu0 0.0
        %1273 = vmatprep.subr.mxu0 0.0
        %1274 = vmatpush2.msra.mxu0 0.0
        %1275 = vmatprep.subr.mxu0 0.0
        %1276 = vmatpush2.msra.mxu0 0.0
        %1277 = vmatprep.subr.mxu0 0.0
        %1278 = vmatpush2.msra.mxu0 0.0
        %1279 = vmatprep.subr.mxu0 0.0
        %1280 = vmatpush2.msra.mxu0 0.0
        %1281 = vmatprep.subr.mxu0 0.0
        %1282 = vmatpush2.msra.mxu0 0.0
        %1283 = vmatprep.subr.mxu0 0.0
        %1284 = vmatpush2.msra.mxu0 0.0
        %1285 = vmatprep.subr.mxu0 0.0
        %1286 = vmatpush2.msra.mxu0 0.0
        %1287 = vmatprep.mubr.f32.mxu0 0.0
        %1288 = vmatmul.mubr.f32.gmra.mxu0 %v1059
        %v1289 = vpop.f32.mrf.mxu0
        %v1290 = vadd.f32 %v1221, %v1289
        %v1291 = vpop.f32.mrf.mxu0
        %1292 = vdwg.mxu0
        %vm1293 = vcmp.ge.s32.totalorder %v907, 0
        %vm1294 = vcmp.lt.s32.totalorder %v907, 8
        %vm1295 = vmand %vm1293, %vm1294
        %v1296 = vsel %vm1295, 1, 0
        %v1297 = vcvt.s32.f32 %v1296
        %v1298 = vmul.f32 %v1209, %v1297
        %v1300 = vsel %vm1011, %v1128, 0
        %v1303 = vsel %vm1011, %v1298, 0
        %1305 = vmatprep.subr.mxu0 0.0
        %1306 = vmatpush1.xpose.msra.mxu0 0.0
        %1307 = vmatprep.subr.mxu0 0.0
        %1308 = vmatpush1.xpose.msra.mxu0 0.0
        %1309 = vmatprep.subr.mxu0 0.0
        %1310 = vmatpush1.xpose.msra.mxu0 0.0
        %1311 = vmatprep.subr.mxu0 0.0
        %1312 = vmatpush1.xpose.msra.mxu0 0.0
        %1313 = vmatprep.subr.mxu0 0.0
        %1314 = vmatpush1.xpose.msra.mxu0 0.0
        %1315 = vmatprep.subr.mxu0 0.0
        %1316 = vmatpush1.xpose.msra.mxu0 0.0
        %1317 = vmatprep.subr.mxu0 0.0
        %1318 = vmatpush1.xpose.msra.mxu0 0.0
        %1319 = vmatprep.subr.mxu0 0.0
        %1320 = vmatpush1.xpose.msra.mxu0 0.0
        %1321 = vmatprep.subr.mxu0 0.0
        %1322 = vmatpush1.xpose.msra.mxu0 0.0
        %1323 = vmatprep.subr.mxu0 0.0
        %1324 = vmatpush1.xpose.msra.mxu0 0.0
        %1325 = vmatprep.subr.mxu0 0.0
        %1326 = vmatpush1.xpose.msra.mxu0 0.0
        %1327 = vmatprep.subr.mxu0 0.0
        %1328 = vmatpush1.xpose.msra.mxu0 0.0
        %1329 = vmatprep.subr.mxu0 0.0
        %1330 = vmatpush1.xpose.msra.mxu0 0.0
        %1331 = vmatprep.subr.mxu0 0.0
        %1332 = vmatpush1.xpose.msra.mxu0 0.0
        %1333 = vmatprep.subr.mxu0 0.0
        %1334 = vmatpush1.xpose.msra.mxu0 0.0
        %1335 = vmatprep.subr.mxu0 0.0
        %1336 = vmatpush1.xpose.msra.mxu0 %v1303
        %1337 = vmatprep.subr.mxu0 0.0
        %1338 = vmatpush2.xpose.msra.mxu0 0.0
        %1339 = vmatprep.subr.mxu0 0.0
        %1340 = vmatpush2.xpose.msra.mxu0 0.0
        %1341 = vmatprep.subr.mxu0 0.0
        %1342 = vmatpush2.xpose.msra.mxu0 0.0
        %1343 = vmatprep.subr.mxu0 0.0
        %1344 = vmatpush2.xpose.msra.mxu0 0.0
        %1345 = vmatprep.subr.mxu0 0.0
        %1346 = vmatpush2.xpose.msra.mxu0 0.0
        %1347 = vmatprep.subr.mxu0 0.0
        %1348 = vmatpush2.xpose.msra.mxu0 0.0
        %1349 = vmatprep.subr.mxu0 0.0
        %1350 = vmatpush2.xpose.msra.mxu0 0.0
        %1351 = vmatprep.subr.mxu0 0.0
        %1352 = vmatpush2.xpose.msra.mxu0 0.0
        %1353 = vmatprep.subr.mxu0 0.0
        %1354 = vmatpush2.xpose.msra.mxu0 0.0
        %1355 = vmatprep.subr.mxu0 0.0
        %1356 = vmatpush2.xpose.msra.mxu0 0.0
        %1357 = vmatprep.subr.mxu0 0.0
        %1358 = vmatpush2.xpose.msra.mxu0 0.0
        %1359 = vmatprep.subr.mxu0 0.0
        %1360 = vmatpush2.xpose.msra.mxu0 0.0
        %1361 = vmatprep.subr.mxu0 0.0
        %1362 = vmatpush2.xpose.msra.mxu0 0.0
        %1363 = vmatprep.subr.mxu0 0.0
        %1364 = vmatpush2.xpose.msra.mxu0 0.0
        %1365 = vmatprep.subr.mxu0 0.0
        %1366 = vmatpush2.xpose.msra.mxu0 0.0
        %1367 = vmatprep.subr.mxu0 0.0
        %1368 = vmatpush2.xpose.msra.mxu0 0.0
        %1369 = vmatprep.mubr.f32.mxu0 0.0
        %1370 = vmatmul.mubr.f32.gmra.mxu0 %v1300
        %v1371 = vpop.f32.mrf.mxu0
        %v1372 = vadd.f32 0.0, %v1371
        %v1373 = vpop.f32.mrf.mxu0
        %1374 = vdwg.mxu0
        %v1375 = vmul.f32 %v1372, 0.35355338
        %v1376 = vadd.f32 %v1375, %v1005
        %vm1377 = vcmask 64512
        %v1378 = vsel %vm1377, %v1376, -inf
        %1379 = vmax.xlane.f32.xlu0 %v1378
        %v1380 = vpop.xlane.xlu0 %1379
        %v1381 = vsub.f32 %v1376, %v1380
        %v1382 = vmul.f32 %v1381, 1.442695
        %v1383 = vpow.pop %v1382
        %v1384 = vsel %vm1377, %v1383, 0.0
        %1385 = vadd.xlane.f32.xlu0 %v1384
        %v1386 = vpop.xlane.xlu0 %1385
        %v1387 = vrcp.pop %v1386
        %v1388 = vmul.f32 %v1383, %v1387
        %v1389 = vmul.f32 %v1290, %v1297
        %vm1390 = vcmp.ge.s32.totalorder %v907, 8
        %vm1391 = vcmp.lt.s32.totalorder %v907, 16
        %vm1392 = vmand %vm1390, %vm1391
        %v1393 = vsel %vm1392, 1, 0
        %v1394 = vcvt.s32.f32 %v1393
        %v1395 = vmul.f32 %v1209, %v1394
        %v1397 = vsel %vm1011, %v1395, 0
        %1399 = vmatprep.subr.mxu0 0.0
        %1400 = vmatpush1.xpose.msra.mxu0 0.0
        %1401 = vmatprep.subr.mxu0 0.0
        %1402 = vmatpush1.xpose.msra.mxu0 0.0
        %1403 = vmatprep.subr.mxu0 0.0
        %1404 = vmatpush1.xpose.msra.mxu0 0.0
        %1405 = vmatprep.subr.mxu0 0.0
        %1406 = vmatpush1.xpose.msra.mxu0 0.0
        %1407 = vmatprep.subr.mxu0 0.0
        %1408 = vmatpush1.xpose.msra.mxu0 0.0
        %1409 = vmatprep.subr.mxu0 0.0
        %1410 = vmatpush1.xpose.msra.mxu0 0.0
        %1411 = vmatprep.subr.mxu0 0.0
        %1412 = vmatpush1.xpose.msra.mxu0 0.0
        %1413 = vmatprep.subr.mxu0 0.0
        %1414 = vmatpush1.xpose.msra.mxu0 0.0
        %1415 = vmatprep.subr.mxu0 0.0
        %1416 = vmatpush1.xpose.msra.mxu0 0.0
        %1417 = vmatprep.subr.mxu0 0.0
        %1418 = vmatpush1.xpose.msra.mxu0 0.0
        %1419 = vmatprep.subr.mxu0 0.0
        %1420 = vmatpush1.xpose.msra.mxu0 0.0
        %1421 = vmatprep.subr.mxu0 0.0
        %1422 = vmatpush1.xpose.msra.mxu0 0.0
        %1423 = vmatprep.subr.mxu0 0.0
        %1424 = vmatpush1.xpose.msra.mxu0 0.0
        %1425 = vmatprep.subr.mxu0 0.0
        %1426 = vmatpush1.xpose.msra.mxu0 0.0
        %1427 = vmatprep.subr.mxu0 0.0
        %1428 = vmatpush1.xpose.msra.mxu0 0.0
        %1429 = vmatprep.subr.mxu0 0.0
        %1430 = vmatpush1.xpose.msra.mxu0 %v1397
        %1431 = vmatprep.subr.mxu0 0.0
        %1432 = vmatpush2.xpose.msra.mxu0 0.0
        %1433 = vmatprep.subr.mxu0 0.0
        %1434 = vmatpush2.xpose.msra.mxu0 0.0
        %1435 = vmatprep.subr.mxu0 0.0
        %1436 = vmatpush2.xpose.msra.mxu0 0.0
        %1437 = vmatprep.subr.mxu0 0.0
        %1438 = vmatpush2.xpose.msra.mxu0 0.0
        %1439 = vmatprep.subr.mxu0 0.0
        %1440 = vmatpush2.xpose.msra.mxu0 0.0
        %1441 = vmatprep.subr.mxu0 0.0
        %1442 = vmatpush2.xpose.msra.mxu0 0.0
        %1443 = vmatprep.subr.mxu0 0.0
        %1444 = vmatpush2.xpose.msra.mxu0 0.0
        %1445 = vmatprep.subr.mxu0 0.0
        %1446 = vmatpush2.xpose.msra.mxu0 0.0
        %1447 = vmatprep.subr.mxu0 0.0
        %1448 = vmatpush2.xpose.msra.mxu0 0.0
        %1449 = vmatprep.subr.mxu0 0.0
        %1450 = vmatpush2.xpose.msra.mxu0 0.0
        %1451 = vmatprep.subr.mxu0 0.0
        %1452 = vmatpush2.xpose.msra.mxu0 0.0
        %1453 = vmatprep.subr.mxu0 0.0
        %1454 = vmatpush2.xpose.msra.mxu0 0.0
        %1455 = vmatprep.subr.mxu0 0.0
        %1456 = vmatpush2.xpose.msra.mxu0 0.0
        %1457 = vmatprep.subr.mxu0 0.0
        %1458 = vmatpush2.xpose.msra.mxu0 0.0
        %1459 = vmatprep.subr.mxu0 0.0
        %1460 = vmatpush2.xpose.msra.mxu0 0.0
        %1461 = vmatprep.subr.mxu0 0.0
        %1462 = vmatpush2.xpose.msra.mxu0 0.0
        %1463 = vmatprep.mubr.f32.mxu0 0.0
        %1464 = vmatmul.mubr.f32.gmra.mxu0 %v1300
        %v1465 = vpop.f32.mrf.mxu0
        %v1466 = vadd.f32 0.0, %v1465
        %v1467 = vpop.f32.mrf.mxu0
        %1468 = vdwg.mxu0
        %v1469 = vmul.f32 %v1466, 0.35355338
        %v1470 = vadd.f32 %v1469, %v1005
        %v1471 = vsel %vm1377, %v1470, -inf
        %1472 = vmax.xlane.f32.xlu0 %v1471
        %v1473 = vpop.xlane.xlu0 %1472
        %v1474 = vsub.f32 %v1470, %v1473
        %v1475 = vmul.f32 %v1474, 1.442695
        %v1476 = vpow.pop %v1475
        %v1477 = vsel %vm1377, %v1476, 0.0
        %1478 = vadd.xlane.f32.xlu0 %v1477
        %v1479 = vpop.xlane.xlu0 %1478
        %v1480 = vrcp.pop %v1479
        %v1481 = vmul.f32 %v1476, %v1480
        %v1482 = vmul.f32 %v1290, %v1394
        %v1484 = vsel %vm1377, %v1481, 0
        %1486 = vmatprep.subr.mxu0 0.0
        %1487 = vmatpush1.msra.mxu0 0.0
        %1488 = vmatprep.subr.mxu0 0.0
        %1489 = vmatpush1.msra.mxu0 0.0
        %1490 = vmatprep.subr.mxu0 0.0
        %1491 = vmatpush1.msra.mxu0 0.0
        %1492 = vmatprep.subr.mxu0 0.0
        %1493 = vmatpush1.msra.mxu0 0.0
        %1494 = vmatprep.subr.mxu0 0.0
        %1495 = vmatpush1.msra.mxu0 0.0
        %1496 = vmatprep.subr.mxu0 0.0
        %1497 = vmatpush1.msra.mxu0 0.0
        %1498 = vmatprep.subr.mxu0 0.0
        %1499 = vmatpush1.msra.mxu0 0.0
        %1500 = vmatprep.subr.mxu0 0.0
        %1501 = vmatpush1.msra.mxu0 0.0
        %1502 = vmatprep.subr.mxu0 0.0
        %1503 = vmatpush1.msra.mxu0 0.0
        %1504 = vmatprep.subr.mxu0 0.0
        %1505 = vmatpush1.msra.mxu0 0.0
        %1506 = vmatprep.subr.mxu0 0.0
        %1507 = vmatpush1.msra.mxu0 0.0
        %1508 = vmatprep.subr.mxu0 0.0
        %1509 = vmatpush1.msra.mxu0 0.0
        %1510 = vmatprep.subr.mxu0 0.0
        %1511 = vmatpush1.msra.mxu0 0.0
        %1512 = vmatprep.subr.mxu0 0.0
        %1513 = vmatpush1.msra.mxu0 0.0
        %1514 = vmatprep.subr.mxu0 0.0
        %1515 = vmatpush1.msra.mxu0 0.0
        %1516 = vmatprep.subr.mxu0 0.0
        %1517 = vmatpush1.msra.mxu0 %v1482
        %1518 = vmatprep.subr.mxu0 0.0
        %1519 = vmatpush2.msra.mxu0 0.0
        %1520 = vmatprep.subr.mxu0 0.0
        %1521 = vmatpush2.msra.mxu0 0.0
        %1522 = vmatprep.subr.mxu0 0.0
        %1523 = vmatpush2.msra.mxu0 0.0
        %1524 = vmatprep.subr.mxu0 0.0
        %1525 = vmatpush2.msra.mxu0 0.0
        %1526 = vmatprep.subr.mxu0 0.0
        %1527 = vmatpush2.msra.mxu0 0.0
        %1528 = vmatprep.subr.mxu0 0.0
        %1529 = vmatpush2.msra.mxu0 0.0
        %1530 = vmatprep.subr.mxu0 0.0
        %1531 = vmatpush2.msra.mxu0 0.0
        %1532 = vmatprep.subr.mxu0 0.0
        %1533 = vmatpush2.msra.mxu0 0.0
        %1534 = vmatprep.subr.mxu0 0.0
        %1535 = vmatpush2.msra.mxu0 0.0
        %1536 = vmatprep.subr.mxu0 0.0
        %1537 = vmatpush2.msra.mxu0 0.0
        %1538 = vmatprep.subr.mxu0 0.0
        %1539 = vmatpush2.msra.mxu0 0.0
        %1540 = vmatprep.subr.mxu0 0.0
        %1541 = vmatpush2.msra.mxu0 0.0
        %1542 = vmatprep.subr.mxu0 0.0
        %1543 = vmatpush2.msra.mxu0 0.0
        %1544 = vmatprep.subr.mxu0 0.0
        %1545 = vmatpush2.msra.mxu0 0.0
        %1546 = vmatprep.subr.mxu0 0.0
        %1547 = vmatpush2.msra.mxu0 0.0
        %1548 = vmatprep.subr.mxu0 0.0
        %1549 = vmatpush2.msra.mxu0 0.0
        %1550 = vmatprep.mubr.f32.mxu0 0.0
        %1551 = vmatmul.mubr.f32.gmra.mxu0 %v1484
        %v1552 = vpop.f32.mrf.mxu0
        %v1553 = vadd.f32 0.0, %v1552
        %v1554 = vpop.f32.mrf.mxu0
        %1555 = vdwg.mxu0
        %v1557 = vsel %vm1377, %v1388, 0
        %1559 = vmatprep.subr.mxu0 0.0
        %1560 = vmatpush1.msra.mxu0 0.0
        %1561 = vmatprep.subr.mxu0 0.0
        %1562 = vmatpush1.msra.mxu0 0.0
        %1563 = vmatprep.subr.mxu0 0.0
        %1564 = vmatpush1.msra.mxu0 0.0
        %1565 = vmatprep.subr.mxu0 0.0
        %1566 = vmatpush1.msra.mxu0 0.0
        %1567 = vmatprep.subr.mxu0 0.0
        %1568 = vmatpush1.msra.mxu0 0.0
        %1569 = vmatprep.subr.mxu0 0.0
        %1570 = vmatpush1.msra.mxu0 0.0
        %1571 = vmatprep.subr.mxu0 0.0
        %1572 = vmatpush1.msra.mxu0 0.0
        %1573 = vmatprep.subr.mxu0 0.0
        %1574 = vmatpush1.msra.mxu0 0.0
        %1575 = vmatprep.subr.mxu0 0.0
        %1576 = vmatpush1.msra.mxu0 0.0
        %1577 = vmatprep.subr.mxu0 0.0
        %1578 = vmatpush1.msra.mxu0 0.0
        %1579 = vmatprep.subr.mxu0 0.0
        %1580 = vmatpush1.msra.mxu0 0.0
        %1581 = vmatprep.subr.mxu0 0.0
        %1582 = vmatpush1.msra.mxu0 0.0
        %1583 = vmatprep.subr.mxu0 0.0
        %1584 = vmatpush1.msra.mxu0 0.0
        %1585 = vmatprep.subr.mxu0 0.0
        %1586 = vmatpush1.msra.mxu0 0.0
        %1587 = vmatprep.subr.mxu0 0.0
        %1588 = vmatpush1.msra.mxu0 0.0
        %1589 = vmatprep.subr.mxu0 0.0
        %1590 = vmatpush1.msra.mxu0 %v1389
        %1591 = vmatprep.subr.mxu0 0.0
        %1592 = vmatpush2.msra.mxu0 0.0
        %1593 = vmatprep.subr.mxu0 0.0
        %1594 = vmatpush2.msra.mxu0 0.0
        %1595 = vmatprep.subr.mxu0 0.0
        %1596 = vmatpush2.msra.mxu0 0.0
        %1597 = vmatprep.subr.mxu0 0.0
        %1598 = vmatpush2.msra.mxu0 0.0
        %1599 = vmatprep.subr.mxu0 0.0
        %1600 = vmatpush2.msra.mxu0 0.0
        %1601 = vmatprep.subr.mxu0 0.0
        %1602 = vmatpush2.msra.mxu0 0.0
        %1603 = vmatprep.subr.mxu0 0.0
        %1604 = vmatpush2.msra.mxu0 0.0
        %1605 = vmatprep.subr.mxu0 0.0
        %1606 = vmatpush2.msra.mxu0 0.0
        %1607 = vmatprep.subr.mxu0 0.0
        %1608 = vmatpush2.msra.mxu0 0.0
        %1609 = vmatprep.subr.mxu0 0.0
        %1610 = vmatpush2.msra.mxu0 0.0
        %1611 = vmatprep.subr.mxu0 0.0
        %1612 = vmatpush2.msra.mxu0 0.0
        %1613 = vmatprep.subr.mxu0 0.0
        %1614 = vmatpush2.msra.mxu0 0.0
        %1615 = vmatprep.subr.mxu0 0.0
        %1616 = vmatpush2.msra.mxu0 0.0
        %1617 = vmatprep.subr.mxu0 0.0
        %1618 = vmatpush2.msra.mxu0 0.0
        %1619 = vmatprep.subr.mxu0 0.0
        %1620 = vmatpush2.msra.mxu0 0.0
        %1621 = vmatprep.subr.mxu0 0.0
        %1622 = vmatpush2.msra.mxu0 0.0
        %1623 = vmatprep.mubr.f32.mxu0 0.0
        %1624 = vmatmul.mubr.f32.gmra.mxu0 %v1557
        %v1625 = vpop.f32.mrf.mxu0
        %v1626 = vadd.f32 %v1553, %v1625
        %v1627 = vpop.f32.mrf.mxu0
        %1628 = vdwg.mxu0
        %vm1629 = vcmp.ge.s32.totalorder %v907, 16
        %vm1630 = vcmp.lt.s32.totalorder %v907, 24
        %vm1631 = vmand %vm1629, %vm1630
        %v1632 = vsel %vm1631, 1, 0
        %v1633 = vcvt.s32.f32 %v1632
        %v1634 = vmul.f32 %v1209, %v1633
        %v1636 = vsel %vm1011, %v1634, 0
        %1638 = vmatprep.subr.mxu0 0.0
        %1639 = vmatpush1.xpose.msra.mxu0 0.0
        %1640 = vmatprep.subr.mxu0 0.0
        %1641 = vmatpush1.xpose.msra.mxu0 0.0
        %1642 = vmatprep.subr.mxu0 0.0
        %1643 = vmatpush1.xpose.msra.mxu0 0.0
        %1644 = vmatprep.subr.mxu0 0.0
        %1645 = vmatpush1.xpose.msra.mxu0 0.0
        %1646 = vmatprep.subr.mxu0 0.0
        %1647 = vmatpush1.xpose.msra.mxu0 0.0
        %1648 = vmatprep.subr.mxu0 0.0
        %1649 = vmatpush1.xpose.msra.mxu0 0.0
        %1650 = vmatprep.subr.mxu0 0.0
        %1651 = vmatpush1.xpose.msra.mxu0 0.0
        %1652 = vmatprep.subr.mxu0 0.0
        %1653 = vmatpush1.xpose.msra.mxu0 0.0
        %1654 = vmatprep.subr.mxu0 0.0
        %1655 = vmatpush1.xpose.msra.mxu0 0.0
        %1656 = vmatprep.subr.mxu0 0.0
        %1657 = vmatpush1.xpose.msra.mxu0 0.0
        %1658 = vmatprep.subr.mxu0 0.0
        %1659 = vmatpush1.xpose.msra.mxu0 0.0
        %1660 = vmatprep.subr.mxu0 0.0
        %1661 = vmatpush1.xpose.msra.mxu0 0.0
        %1662 = vmatprep.subr.mxu0 0.0
        %1663 = vmatpush1.xpose.msra.mxu0 0.0
        %1664 = vmatprep.subr.mxu0 0.0
        %1665 = vmatpush1.xpose.msra.mxu0 0.0
        %1666 = vmatprep.subr.mxu0 0.0
        %1667 = vmatpush1.xpose.msra.mxu0 0.0
        %1668 = vmatprep.subr.mxu0 0.0
        %1669 = vmatpush1.xpose.msra.mxu0 %v1636
        %1670 = vmatprep.subr.mxu0 0.0
        %1671 = vmatpush2.xpose.msra.mxu0 0.0
        %1672 = vmatprep.subr.mxu0 0.0
        %1673 = vmatpush2.xpose.msra.mxu0 0.0
        %1674 = vmatprep.subr.mxu0 0.0
        %1675 = vmatpush2.xpose.msra.mxu0 0.0
        %1676 = vmatprep.subr.mxu0 0.0
        %1677 = vmatpush2.xpose.msra.mxu0 0.0
        %1678 = vmatprep.subr.mxu0 0.0
        %1679 = vmatpush2.xpose.msra.mxu0 0.0
        %1680 = vmatprep.subr.mxu0 0.0
        %1681 = vmatpush2.xpose.msra.mxu0 0.0
        %1682 = vmatprep.subr.mxu0 0.0
        %1683 = vmatpush2.xpose.msra.mxu0 0.0
        %1684 = vmatprep.subr.mxu0 0.0
        %1685 = vmatpush2.xpose.msra.mxu0 0.0
        %1686 = vmatprep.subr.mxu0 0.0
        %1687 = vmatpush2.xpose.msra.mxu0 0.0
        %1688 = vmatprep.subr.mxu0 0.0
        %1689 = vmatpush2.xpose.msra.mxu0 0.0
        %1690 = vmatprep.subr.mxu0 0.0
        %1691 = vmatpush2.xpose.msra.mxu0 0.0
        %1692 = vmatprep.subr.mxu0 0.0
        %1693 = vmatpush2.xpose.msra.mxu0 0.0
        %1694 = vmatprep.subr.mxu0 0.0
        %1695 = vmatpush2.xpose.msra.mxu0 0.0
        %1696 = vmatprep.subr.mxu0 0.0
        %1697 = vmatpush2.xpose.msra.mxu0 0.0
        %1698 = vmatprep.subr.mxu0 0.0
        %1699 = vmatpush2.xpose.msra.mxu0 0.0
        %1700 = vmatprep.subr.mxu0 0.0
        %1701 = vmatpush2.xpose.msra.mxu0 0.0
        %1702 = vmatprep.mubr.f32.mxu0 0.0
        %1703 = vmatmul.mubr.f32.gmra.mxu0 %v1300
        %v1704 = vpop.f32.mrf.mxu0
        %v1705 = vadd.f32 0.0, %v1704
        %v1706 = vpop.f32.mrf.mxu0
        %1707 = vdwg.mxu0
        %v1708 = vmul.f32 %v1705, 0.35355338
        %v1709 = vadd.f32 %v1708, %v1005
        %v1710 = vsel %vm1377, %v1709, -inf
        %1711 = vmax.xlane.f32.xlu0 %v1710
        %v1712 = vpop.xlane.xlu0 %1711
        %v1713 = vsub.f32 %v1709, %v1712
        %v1714 = vmul.f32 %v1713, 1.442695
        %v1715 = vpow.pop %v1714
        %v1716 = vsel %vm1377, %v1715, 0.0
        %1717 = vadd.xlane.f32.xlu0 %v1716
        %v1718 = vpop.xlane.xlu0 %1717
        %v1719 = vrcp.pop %v1718
        %v1720 = vmul.f32 %v1715, %v1719
        %v1721 = vmul.f32 %v1290, %v1633
        %v1723 = vsel %vm1377, %v1720, 0
        %1725 = vmatprep.subr.mxu0 0.0
        %1726 = vmatpush1.msra.mxu0 0.0
        %1727 = vmatprep.subr.mxu0 0.0
        %1728 = vmatpush1.msra.mxu0 0.0
        %1729 = vmatprep.subr.mxu0 0.0
        %1730 = vmatpush1.msra.mxu0 0.0
        %1731 = vmatprep.subr.mxu0 0.0
        %1732 = vmatpush1.msra.mxu0 0.0
        %1733 = vmatprep.subr.mxu0 0.0
        %1734 = vmatpush1.msra.mxu0 0.0
        %1735 = vmatprep.subr.mxu0 0.0
        %1736 = vmatpush1.msra.mxu0 0.0
        %1737 = vmatprep.subr.mxu0 0.0
        %1738 = vmatpush1.msra.mxu0 0.0
        %1739 = vmatprep.subr.mxu0 0.0
        %1740 = vmatpush1.msra.mxu0 0.0
        %1741 = vmatprep.subr.mxu0 0.0
        %1742 = vmatpush1.msra.mxu0 0.0
        %1743 = vmatprep.subr.mxu0 0.0
        %1744 = vmatpush1.msra.mxu0 0.0
        %1745 = vmatprep.subr.mxu0 0.0
        %1746 = vmatpush1.msra.mxu0 0.0
        %1747 = vmatprep.subr.mxu0 0.0
        %1748 = vmatpush1.msra.mxu0 0.0
        %1749 = vmatprep.subr.mxu0 0.0
        %1750 = vmatpush1.msra.mxu0 0.0
        %1751 = vmatprep.subr.mxu0 0.0
        %1752 = vmatpush1.msra.mxu0 0.0
        %1753 = vmatprep.subr.mxu0 0.0
        %1754 = vmatpush1.msra.mxu0 0.0
        %1755 = vmatprep.subr.mxu0 0.0
        %1756 = vmatpush1.msra.mxu0 %v1721
        %1757 = vmatprep.subr.mxu0 0.0
        %1758 = vmatpush2.msra.mxu0 0.0
        %1759 = vmatprep.subr.mxu0 0.0
        %1760 = vmatpush2.msra.mxu0 0.0
        %1761 = vmatprep.subr.mxu0 0.0
        %1762 = vmatpush2.msra.mxu0 0.0
        %1763 = vmatprep.subr.mxu0 0.0
        %1764 = vmatpush2.msra.mxu0 0.0
        %1765 = vmatprep.subr.mxu0 0.0
        %1766 = vmatpush2.msra.mxu0 0.0
        %1767 = vmatprep.subr.mxu0 0.0
        %1768 = vmatpush2.msra.mxu0 0.0
        %1769 = vmatprep.subr.mxu0 0.0
        %1770 = vmatpush2.msra.mxu0 0.0
        %1771 = vmatprep.subr.mxu0 0.0
        %1772 = vmatpush2.msra.mxu0 0.0
        %1773 = vmatprep.subr.mxu0 0.0
        %1774 = vmatpush2.msra.mxu0 0.0
        %1775 = vmatprep.subr.mxu0 0.0
        %1776 = vmatpush2.msra.mxu0 0.0
        %1777 = vmatprep.subr.mxu0 0.0
        %1778 = vmatpush2.msra.mxu0 0.0
        %1779 = vmatprep.subr.mxu0 0.0
        %1780 = vmatpush2.msra.mxu0 0.0
        %1781 = vmatprep.subr.mxu0 0.0
        %1782 = vmatpush2.msra.mxu0 0.0
        %1783 = vmatprep.subr.mxu0 0.0
        %1784 = vmatpush2.msra.mxu0 0.0
        %1785 = vmatprep.subr.mxu0 0.0
        %1786 = vmatpush2.msra.mxu0 0.0
        %1787 = vmatprep.subr.mxu0 0.0
        %1788 = vmatpush2.msra.mxu0 0.0
        %1789 = vmatprep.mubr.f32.mxu0 0.0
        %1790 = vmatmul.mubr.f32.gmra.mxu0 %v1723
        %v1791 = vpop.f32.mrf.mxu0
        %v1792 = vadd.f32 0.0, %v1791
        %v1793 = vpop.f32.mrf.mxu0
        %1794 = vdwg.mxu0
        %v1795 = vadd.f32 %v1626, %v1792
        %vm1796 = vcmp.ge.s32.totalorder %v907, 24
        %vm1797 = vcmp.lt.s32.totalorder %v907, 32
        %vm1798 = vmand %vm1796, %vm1797
        %v1799 = vsel %vm1798, 1, 0
        %v1800 = vcvt.s32.f32 %v1799
        %v1801 = vmul.f32 %v1209, %v1800
        %v1803 = vsel %vm1011, %v1801, 0
        %1805 = vmatprep.subr.mxu0 0.0
        %1806 = vmatpush1.xpose.msra.mxu0 0.0
        %1807 = vmatprep.subr.mxu0 0.0
        %1808 = vmatpush1.xpose.msra.mxu0 0.0
        %1809 = vmatprep.subr.mxu0 0.0
        %1810 = vmatpush1.xpose.msra.mxu0 0.0
        %1811 = vmatprep.subr.mxu0 0.0
        %1812 = vmatpush1.xpose.msra.mxu0 0.0
        %1813 = vmatprep.subr.mxu0 0.0
        %1814 = vmatpush1.xpose.msra.mxu0 0.0
        %1815 = vmatprep.subr.mxu0 0.0
        %1816 = vmatpush1.xpose.msra.mxu0 0.0
        %1817 = vmatprep.subr.mxu0 0.0
        %1818 = vmatpush1.xpose.msra.mxu0 0.0
        %1819 = vmatprep.subr.mxu0 0.0
        %1820 = vmatpush1.xpose.msra.mxu0 0.0
        %1821 = vmatprep.subr.mxu0 0.0
        %1822 = vmatpush1.xpose.msra.mxu0 0.0
        %1823 = vmatprep.subr.mxu0 0.0
        %1824 = vmatpush1.xpose.msra.mxu0 0.0
        %1825 = vmatprep.subr.mxu0 0.0
        %1826 = vmatpush1.xpose.msra.mxu0 0.0
        %1827 = vmatprep.subr.mxu0 0.0
        %1828 = vmatpush1.xpose.msra.mxu0 0.0
        %1829 = vmatprep.subr.mxu0 0.0
        %1830 = vmatpush1.xpose.msra.mxu0 0.0
        %1831 = vmatprep.subr.mxu0 0.0
        %1832 = vmatpush1.xpose.msra.mxu0 0.0
        %1833 = vmatprep.subr.mxu0 0.0
        %1834 = vmatpush1.xpose.msra.mxu0 0.0
        %1835 = vmatprep.subr.mxu0 0.0
        %1836 = vmatpush1.xpose.msra.mxu0 %v1803
        %1837 = vmatprep.subr.mxu0 0.0
        %1838 = vmatpush2.xpose.msra.mxu0 0.0
        %1839 = vmatprep.subr.mxu0 0.0
        %1840 = vmatpush2.xpose.msra.mxu0 0.0
        %1841 = vmatprep.subr.mxu0 0.0
        %1842 = vmatpush2.xpose.msra.mxu0 0.0
        %1843 = vmatprep.subr.mxu0 0.0
        %1844 = vmatpush2.xpose.msra.mxu0 0.0
        %1845 = vmatprep.subr.mxu0 0.0
        %1846 = vmatpush2.xpose.msra.mxu0 0.0
        %1847 = vmatprep.subr.mxu0 0.0
        %1848 = vmatpush2.xpose.msra.mxu0 0.0
        %1849 = vmatprep.subr.mxu0 0.0
        %1850 = vmatpush2.xpose.msra.mxu0 0.0
        %1851 = vmatprep.subr.mxu0 0.0
        %1852 = vmatpush2.xpose.msra.mxu0 0.0
        %1853 = vmatprep.subr.mxu0 0.0
        %1854 = vmatpush2.xpose.msra.mxu0 0.0
        %1855 = vmatprep.subr.mxu0 0.0
        %1856 = vmatpush2.xpose.msra.mxu0 0.0
        %1857 = vmatprep.subr.mxu0 0.0
        %1858 = vmatpush2.xpose.msra.mxu0 0.0
        %1859 = vmatprep.subr.mxu0 0.0
        %1860 = vmatpush2.xpose.msra.mxu0 0.0
        %1861 = vmatprep.subr.mxu0 0.0
        %1862 = vmatpush2.xpose.msra.mxu0 0.0
        %1863 = vmatprep.subr.mxu0 0.0
        %1864 = vmatpush2.xpose.msra.mxu0 0.0
        %1865 = vmatprep.subr.mxu0 0.0
        %1866 = vmatpush2.xpose.msra.mxu0 0.0
        %1867 = vmatprep.subr.mxu0 0.0
        %1868 = vmatpush2.xpose.msra.mxu0 0.0
        %1869 = vmatprep.mubr.f32.mxu0 0.0
        %1870 = vmatmul.mubr.f32.gmra.mxu0 %v1300
        %v1871 = vpop.f32.mrf.mxu0
        %v1872 = vadd.f32 0.0, %v1871
        %v1873 = vpop.f32.mrf.mxu0
        %1874 = vdwg.mxu0
        %v1875 = vmul.f32 %v1872, 0.35355338
        %v1876 = vadd.f32 %v1875, %v1005
        %v1877 = vsel %vm1377, %v1876, -inf
        %1878 = vmax.xlane.f32.xlu0 %v1877
        %v1879 = vpop.xlane.xlu0 %1878
        %v1880 = vsub.f32 %v1876, %v1879
        %v1881 = vmul.f32 %v1880, 1.442695
        %v1882 = vpow.pop %v1881
        %v1883 = vsel %vm1377, %v1882, 0.0
        %1884 = vadd.xlane.f32.xlu0 %v1883
        %v1885 = vpop.xlane.xlu0 %1884
        %v1886 = vrcp.pop %v1885
        %v1887 = vmul.f32 %v1882, %v1886
        %v1888 = vmul.f32 %v1290, %v1800
        %v1890 = vsel %vm1377, %v1887, 0
        %1892 = vmatprep.subr.mxu0 0.0
        %1893 = vmatpush1.msra.mxu0 0.0
        %1894 = vmatprep.subr.mxu0 0.0
        %1895 = vmatpush1.msra.mxu0 0.0
        %1896 = vmatprep.subr.mxu0 0.0
        %1897 = vmatpush1.msra.mxu0 0.0
        %1898 = vmatprep.subr.mxu0 0.0
        %1899 = vmatpush1.msra.mxu0 0.0
        %1900 = vmatprep.subr.mxu0 0.0
        %1901 = vmatpush1.msra.mxu0 0.0
        %1902 = vmatprep.subr.mxu0 0.0
        %1903 = vmatpush1.msra.mxu0 0.0
        %1904 = vmatprep.subr.mxu0 0.0
        %1905 = vmatpush1.msra.mxu0 0.0
        %1906 = vmatprep.subr.mxu0 0.0
        %1907 = vmatpush1.msra.mxu0 0.0
        %1908 = vmatprep.subr.mxu0 0.0
        %1909 = vmatpush1.msra.mxu0 0.0
        %1910 = vmatprep.subr.mxu0 0.0
        %1911 = vmatpush1.msra.mxu0 0.0
        %1912 = vmatprep.subr.mxu0 0.0
        %1913 = vmatpush1.msra.mxu0 0.0
        %1914 = vmatprep.subr.mxu0 0.0
        %1915 = vmatpush1.msra.mxu0 0.0
        %1916 = vmatprep.subr.mxu0 0.0
        %1917 = vmatpush1.msra.mxu0 0.0
        %1918 = vmatprep.subr.mxu0 0.0
        %1919 = vmatpush1.msra.mxu0 0.0
        %1920 = vmatprep.subr.mxu0 0.0
        %1921 = vmatpush1.msra.mxu0 0.0
        %1922 = vmatprep.subr.mxu0 0.0
        %1923 = vmatpush1.msra.mxu0 %v1888
        %1924 = vmatprep.subr.mxu0 0.0
        %1925 = vmatpush2.msra.mxu0 0.0
        %1926 = vmatprep.subr.mxu0 0.0
        %1927 = vmatpush2.msra.mxu0 0.0
        %1928 = vmatprep.subr.mxu0 0.0
        %1929 = vmatpush2.msra.mxu0 0.0
        %1930 = vmatprep.subr.mxu0 0.0
        %1931 = vmatpush2.msra.mxu0 0.0
        %1932 = vmatprep.subr.mxu0 0.0
        %1933 = vmatpush2.msra.mxu0 0.0
        %1934 = vmatprep.subr.mxu0 0.0
        %1935 = vmatpush2.msra.mxu0 0.0
        %1936 = vmatprep.subr.mxu0 0.0
        %1937 = vmatpush2.msra.mxu0 0.0
        %1938 = vmatprep.subr.mxu0 0.0
        %1939 = vmatpush2.msra.mxu0 0.0
        %1940 = vmatprep.subr.mxu0 0.0
        %1941 = vmatpush2.msra.mxu0 0.0
        %1942 = vmatprep.subr.mxu0 0.0
        %1943 = vmatpush2.msra.mxu0 0.0
        %1944 = vmatprep.subr.mxu0 0.0
        %1945 = vmatpush2.msra.mxu0 0.0
        %1946 = vmatprep.subr.mxu0 0.0
        %1947 = vmatpush2.msra.mxu0 0.0
        %1948 = vmatprep.subr.mxu0 0.0
        %1949 = vmatpush2.msra.mxu0 0.0
        %1950 = vmatprep.subr.mxu0 0.0
        %1951 = vmatpush2.msra.mxu0 0.0
        %1952 = vmatprep.subr.mxu0 0.0
        %1953 = vmatpush2.msra.mxu0 0.0
        %1954 = vmatprep.subr.mxu0 0.0
        %1955 = vmatpush2.msra.mxu0 0.0
        %1956 = vmatprep.mubr.f32.mxu0 0.0
        %1957 = vmatmul.mubr.f32.gmra.mxu0 %v1890
        %v1958 = vpop.f32.mrf.mxu0
        %v1959 = vadd.f32 0.0, %v1958
        %v1960 = vpop.f32.mrf.mxu0
        %1961 = vdwg.mxu0
        %v1962 = vadd.f32 %v1795, %v1959
        %v1963 = vld [vmem:[#allocation13] sm:$0xff]
        %v1964 = vld [vmem:[#allocation13 + $0x8] sm:$0xff]
        %v1965 = vld [vmem:[#allocation13 + $0x10] sm:$0xff]
        %v1966 = vld [vmem:[#allocation13 + $0x18] sm:$0xff]
        %v1967 = vld [vmem:[#allocation14] sm:$0x1]
        %v1969 = vlaneseq
        %v1970 = vshrl.u32 %v1969, 7
        %v1971 = vsub.s32 0, %v1970
        %v1972 = vrot.slane %v1967, %v1971
        %v1975 = vsel %vm1011, %v1962, 0
        %1977 = vmatprep.subr.mxu0 0.0
        %1978 = vmatpush1.msra.mxu0 0.0
        %1979 = vmatprep.subr.mxu0 0.0
        %1980 = vmatpush1.msra.mxu0 0.0
        %1981 = vmatprep.subr.mxu0 0.0
        %1982 = vmatpush1.msra.mxu0 0.0
        %1983 = vmatprep.subr.mxu0 0.0
        %1984 = vmatpush1.msra.mxu0 0.0
        %1985 = vmatprep.subr.mxu0 0.0
        %1986 = vmatpush1.msra.mxu0 0.0
        %1987 = vmatprep.subr.mxu0 0.0
        %1988 = vmatpush1.msra.mxu0 0.0
        %1989 = vmatprep.subr.mxu0 0.0
        %1990 = vmatpush1.msra.mxu0 0.0
        %1991 = vmatprep.subr.mxu0 0.0
        %1992 = vmatpush1.msra.mxu0 0.0
        %1993 = vmatprep.subr.mxu0 0.0
        %1994 = vmatpush1.msra.mxu0 0.0
        %1995 = vmatprep.subr.mxu0 0.0
        %1996 = vmatpush1.msra.mxu0 0.0
        %1997 = vmatprep.subr.mxu0 0.0
        %1998 = vmatpush1.msra.mxu0 0.0
        %1999 = vmatprep.subr.mxu0 0.0
        %2000 = vmatpush1.msra.mxu0 0.0
        %2001 = vmatprep.subr.mxu0 0.0
        %2002 = vmatpush1.msra.mxu0 %v1966
        %2003 = vmatprep.subr.mxu0 0.0
        %2004 = vmatpush1.msra.mxu0 %v1965
        %2005 = vmatprep.subr.mxu0 0.0
        %2006 = vmatpush1.msra.mxu0 %v1964
        %2007 = vmatprep.subr.mxu0 0.0
        %2008 = vmatpush1.msra.mxu0 %v1963
        %2009 = vmatprep.subr.mxu0 0.0
        %2010 = vmatpush2.msra.mxu0 0.0
        %2011 = vmatprep.subr.mxu0 0.0
        %2012 = vmatpush2.msra.mxu0 0.0
        %2013 = vmatprep.subr.mxu0 0.0
        %2014 = vmatpush2.msra.mxu0 0.0
        %2015 = vmatprep.subr.mxu0 0.0
        %2016 = vmatpush2.msra.mxu0 0.0
        %2017 = vmatprep.subr.mxu0 0.0
        %2018 = vmatpush2.msra.mxu0 0.0
        %2019 = vmatprep.subr.mxu0 0.0
        %2020 = vmatpush2.msra.mxu0 0.0
        %2021 = vmatprep.subr.mxu0 0.0
        %2022 = vmatpush2.msra.mxu0 0.0
        %2023 = vmatprep.subr.mxu0 0.0
        %2024 = vmatpush2.msra.mxu0 0.0
        %2025 = vmatprep.subr.mxu0 0.0
        %2026 = vmatpush2.msra.mxu0 0.0
        %2027 = vmatprep.subr.mxu0 0.0
        %2028 = vmatpush2.msra.mxu0 0.0
        %2029 = vmatprep.subr.mxu0 0.0
        %2030 = vmatpush2.msra.mxu0 0.0
        %2031 = vmatprep.subr.mxu0 0.0
        %2032 = vmatpush2.msra.mxu0 0.0
        %2033 = vmatprep.subr.mxu0 0.0
        %2034 = vmatpush2.msra.mxu0 0.0
        %2035 = vmatprep.subr.mxu0 0.0
        %2036 = vmatpush2.msra.mxu0 0.0
        %2037 = vmatprep.subr.mxu0 0.0
        %2038 = vmatpush2.msra.mxu0 0.0
        %2039 = vmatprep.subr.mxu0 0.0
        %2040 = vmatpush2.msra.mxu0 0.0
        %2041 = vmatprep.mubr.f32.mxu0 0.0
        %2042 = vmatmul.mubr.f32.gmra.mxu0 %v1975
        %v2043 = vpop.f32.mrf.mxu0
        %v2044 = vadd.f32 %v1972, %v2043
        %v2045 = vpop.f32.mrf.mxu0
        %2046 = vdwg.mxu0
        %v2047 = vadd.f32 %v1001, %v2044
        %s2048 = scalar_lea.vmem [#allocation5], 1
        %v2049 = vld [vmem:[%s2048] sm:$0x1]
        %s2050 = scalar_lea.vmem [#allocation7], 1
        %v2051 = vld [vmem:[%s2050] sm:$0x1]
        %v2052 = vsel %vm1011, %v2047, 0.0
        %2053 = vadd.xlane.f32.xlu0 %v2052
        %v2054 = vpop.xlane.xlu0 %2053
        %v2055 = vmul.f32 %v2054, %v1015
        %v2056 = vsub.f32 %v2047, %v2055
        %v2057 = vmul.f32 %v2056, %v2056
        %v2058 = vsel %vm1011, %v2057, 0.0
        %2059 = vadd.xlane.f32.xlu0 %v2058
        %v2060 = vpop.xlane.xlu0 %2059
        %v2061 = vmul.f32 %v2060, 0.032258064
        %v2062 = vrsqrt.pop %v2061
        %v2063 = vmul.f32 %v2061, %v2062
        %vm2064 = vcmp.eq.f32.partialorder %v2061, inf
        %v2065 = vsel %vm2064, %v2061, %v2063
        %vm2066 = vcmp.eq.f32.partialorder %v2061, 0.0
        %v2067 = vand.u32 %v2061, 2147483648
        %v2068 = vsel %vm2066, %v2067, %v2065
        %v2069 = vadd.f32 %v2068, 1e-06
        %v2070 = vrcp.pop %v2069
        %v2071 = vmul.f32 %v2056, %v2070
        %v2073 = vlaneseq
        %v2074 = vshrl.u32 %v2073, 7
        %v2075 = vsub.s32 0, %v2074
        %v2076 = vrot.slane %v2049, %v2075
        %v2078 = vmul.f32 %v2076, %v2071
        %v2080 = vlaneseq
        %v2081 = vshrl.u32 %v2080, 7
        %v2082 = vsub.s32 0, %v2081
        %v2083 = vrot.slane %v2051, %v2082
        %v2085 = vadd.f32 %v2078, %v2083
        %s2086 = scalar_lea.vmem %s8, 32
        %v2087 = vld [vmem:[%s2086] sm:$0xff]
        %v2088 = vld [vmem:[%s2086 + $0x8] sm:$0xff]
        %v2089 = vld [vmem:[%s2086 + $0x10] sm:$0xff]
        %v2090 = vld [vmem:[%s2086 + $0x18] sm:$0xff]
        %s2091 = scalar_lea.vmem [#allocation8], 1
        %v2092 = vld [vmem:[%s2091] sm:$0x1]
        %v2094 = vlaneseq
        %v2095 = vshrl.u32 %v2094, 7
        %v2096 = vsub.s32 0, %v2095
        %v2097 = vrot.slane %v2092, %v2096
        %v2100 = vsel %vm1011, %v2085, 0
        %2102 = vmatprep.subr.mxu0 0.0
        %2103 = vmatpush1.msra.mxu0 0.0
        %2104 = vmatprep.subr.mxu0 0.0
        %2105 = vmatpush1.msra.mxu0 0.0
        %2106 = vmatprep.subr.mxu0 0.0
        %2107 = vmatpush1.msra.mxu0 0.0
        %2108 = vmatprep.subr.mxu0 0.0
        %2109 = vmatpush1.msra.mxu0 0.0
        %2110 = vmatprep.subr.mxu0 0.0
        %2111 = vmatpush1.msra.mxu0 0.0
        %2112 = vmatprep.subr.mxu0 0.0
        %2113 = vmatpush1.msra.mxu0 0.0
        %2114 = vmatprep.subr.mxu0 0.0
        %2115 = vmatpush1.msra.mxu0 0.0
        %2116 = vmatprep.subr.mxu0 0.0
        %2117 = vmatpush1.msra.mxu0 0.0
        %2118 = vmatprep.subr.mxu0 0.0
        %2119 = vmatpush1.msra.mxu0 0.0
        %2120 = vmatprep.subr.mxu0 0.0
        %2121 = vmatpush1.msra.mxu0 0.0
        %2122 = vmatprep.subr.mxu0 0.0
        %2123 = vmatpush1.msra.mxu0 0.0
        %2124 = vmatprep.subr.mxu0 0.0
        %2125 = vmatpush1.msra.mxu0 0.0
        %2126 = vmatprep.subr.mxu0 0.0
        %2127 = vmatpush1.msra.mxu0 %v2090
        %2128 = vmatprep.subr.mxu0 0.0
        %2129 = vmatpush1.msra.mxu0 %v2089
        %2130 = vmatprep.subr.mxu0 0.0
        %2131 = vmatpush1.msra.mxu0 %v2088
        %2132 = vmatprep.subr.mxu0 0.0
        %2133 = vmatpush1.msra.mxu0 %v2087
        %2134 = vmatprep.subr.mxu0 0.0
        %2135 = vmatpush2.msra.mxu0 0.0
        %2136 = vmatprep.subr.mxu0 0.0
        %2137 = vmatpush2.msra.mxu0 0.0
        %2138 = vmatprep.subr.mxu0 0.0
        %2139 = vmatpush2.msra.mxu0 0.0
        %2140 = vmatprep.subr.mxu0 0.0
        %2141 = vmatpush2.msra.mxu0 0.0
        %2142 = vmatprep.subr.mxu0 0.0
        %2143 = vmatpush2.msra.mxu0 0.0
        %2144 = vmatprep.subr.mxu0 0.0
        %2145 = vmatpush2.msra.mxu0 0.0
        %2146 = vmatprep.subr.mxu0 0.0
        %2147 = vmatpush2.msra.mxu0 0.0
        %2148 = vmatprep.subr.mxu0 0.0
        %2149 = vmatpush2.msra.mxu0 0.0
        %2150 = vmatprep.subr.mxu0 0.0
        %2151 = vmatpush2.msra.mxu0 0.0
        %2152 = vmatprep.subr.mxu0 0.0
        %2153 = vmatpush2.msra.mxu0 0.0
        %2154 = vmatprep.subr.mxu0 0.0
        %2155 = vmatpush2.msra.mxu0 0.0
        %2156 = vmatprep.subr.mxu0 0.0
        %2157 = vmatpush2.msra.mxu0 0.0
        %2158 = vmatprep.subr.mxu0 0.0
        %2159 = vmatpush2.msra.mxu0 0.0
        %2160 = vmatprep.subr.mxu0 0.0
        %2161 = vmatpush2.msra.mxu0 0.0
        %2162 = vmatprep.subr.mxu0 0.0
        %2163 = vmatpush2.msra.mxu0 0.0
        %2164 = vmatprep.subr.mxu0 0.0
        %2165 = vmatpush2.msra.mxu0 0.0
        %2166 = vmatprep.mubr.f32.mxu0 0.0
        %2167 = vmatmul.mubr.f32.gmra.mxu0 %v2100
        %v2168 = vpop.f32.mrf.mxu0
        %v2169 = vadd.f32 %v2097, %v2168
        %v2170 = vpop.f32.mrf.mxu0
        %2171 = vdwg.mxu0
        %s2172 = scalar_lea.vmem %s10, 32
        %v2173 = vld [vmem:[%s2172] sm:$0xff]
        %v2174 = vld [vmem:[%s2172 + $0x8] sm:$0xff]
        %v2175 = vld [vmem:[%s2172 + $0x10] sm:$0xff]
        %v2176 = vld [vmem:[%s2172 + $0x18] sm:$0xff]
        %s2177 = scalar_lea.vmem [#allocation10], 1
        %v2178 = vld [vmem:[%s2177] sm:$0x1]
        %v2180 = vlaneseq
        %v2181 = vshrl.u32 %v2180, 7
        %v2182 = vsub.s32 0, %v2181
        %v2183 = vrot.slane %v2178, %v2182
        %v2186 = vsel %vm1011, %v1002, 0
        %2188 = vmatprep.subr.mxu0 0.0
        %2189 = vmatpush1.msra.mxu0 0.0
        %2190 = vmatprep.subr.mxu0 0.0
        %2191 = vmatpush1.msra.mxu0 0.0
        %2192 = vmatprep.subr.mxu0 0.0
        %2193 = vmatpush1.msra.mxu0 0.0
        %2194 = vmatprep.subr.mxu0 0.0
        %2195 = vmatpush1.msra.mxu0 0.0
        %2196 = vmatprep.subr.mxu0 0.0
        %2197 = vmatpush1.msra.mxu0 0.0
        %2198 = vmatprep.subr.mxu0 0.0
        %2199 = vmatpush1.msra.mxu0 0.0
        %2200 = vmatprep.subr.mxu0 0.0
        %2201 = vmatpush1.msra.mxu0 0.0
        %2202 = vmatprep.subr.mxu0 0.0
        %2203 = vmatpush1.msra.mxu0 0.0
        %2204 = vmatprep.subr.mxu0 0.0
        %2205 = vmatpush1.msra.mxu0 0.0
        %2206 = vmatprep.subr.mxu0 0.0
        %2207 = vmatpush1.msra.mxu0 0.0
        %2208 = vmatprep.subr.mxu0 0.0
        %2209 = vmatpush1.msra.mxu0 0.0
        %2210 = vmatprep.subr.mxu0 0.0
        %2211 = vmatpush1.msra.mxu0 0.0
        %2212 = vmatprep.subr.mxu0 0.0
        %2213 = vmatpush1.msra.mxu0 %v2176
        %2214 = vmatprep.subr.mxu0 0.0
        %2215 = vmatpush1.msra.mxu0 %v2175
        %2216 = vmatprep.subr.mxu0 0.0
        %2217 = vmatpush1.msra.mxu0 %v2174
        %2218 = vmatprep.subr.mxu0 0.0
        %2219 = vmatpush1.msra.mxu0 %v2173
        %2220 = vmatprep.subr.mxu0 0.0
        %2221 = vmatpush2.msra.mxu0 0.0
        %2222 = vmatprep.subr.mxu0 0.0
        %2223 = vmatpush2.msra.mxu0 0.0
        %2224 = vmatprep.subr.mxu0 0.0
        %2225 = vmatpush2.msra.mxu0 0.0
        %2226 = vmatprep.subr.mxu0 0.0
        %2227 = vmatpush2.msra.mxu0 0.0
        %2228 = vmatprep.subr.mxu0 0.0
        %2229 = vmatpush2.msra.mxu0 0.0
        %2230 = vmatprep.subr.mxu0 0.0
        %2231 = vmatpush2.msra.mxu0 0.0
        %2232 = vmatprep.subr.mxu0 0.0
        %2233 = vmatpush2.msra.mxu0 0.0
        %2234 = vmatprep.subr.mxu0 0.0
        %2235 = vmatpush2.msra.mxu0 0.0
        %2236 = vmatprep.subr.mxu0 0.0
        %2237 = vmatpush2.msra.mxu0 0.0
        %2238 = vmatprep.subr.mxu0 0.0
        %2239 = vmatpush2.msra.mxu0 0.0
        %2240 = vmatprep.subr.mxu0 0.0
        %2241 = vmatpush2.msra.mxu0 0.0
        %2242 = vmatprep.subr.mxu0 0.0
        %2243 = vmatpush2.msra.mxu0 0.0
        %2244 = vmatprep.subr.mxu0 0.0
        %2245 = vmatpush2.msra.mxu0 0.0
        %2246 = vmatprep.subr.mxu0 0.0
        %2247 = vmatpush2.msra.mxu0 0.0
        %2248 = vmatprep.subr.mxu0 0.0
        %2249 = vmatpush2.msra.mxu0 0.0
        %2250 = vmatprep.subr.mxu0 0.0
        %2251 = vmatpush2.msra.mxu0 0.0
        %2252 = vmatprep.mubr.f32.mxu0 0.0
        %2253 = vmatmul.mubr.f32.gmra.mxu0 %v2186
        %v2254 = vpop.f32.mrf.mxu0
        %v2255 = vadd.f32 %v2183, %v2254
        %v2256 = vpop.f32.mrf.mxu0
        %2257 = vdwg.mxu0
        %s2258 = scalar_lea.vmem %s12, 32
        %v2259 = vld [vmem:[%s2258] sm:$0xff]
        %v2260 = vld [vmem:[%s2258 + $0x8] sm:$0xff]
        %v2261 = vld [vmem:[%s2258 + $0x10] sm:$0xff]
        %v2262 = vld [vmem:[%s2258 + $0x18] sm:$0xff]
        %s2263 = scalar_lea.vmem [#allocation11], 1
        %v2264 = vld [vmem:[%s2263] sm:$0x1]
        %v2266 = vlaneseq
        %v2267 = vshrl.u32 %v2266, 7
        %v2268 = vsub.s32 0, %v2267
        %v2269 = vrot.slane %v2264, %v2268
        %2271 = vmatprep.subr.mxu0 0.0
        %2272 = vmatpush1.msra.mxu0 0.0
        %2273 = vmatprep.subr.mxu0 0.0
        %2274 = vmatpush1.msra.mxu0 0.0
        %2275 = vmatprep.subr.mxu0 0.0
        %2276 = vmatpush1.msra.mxu0 0.0
        %2277 = vmatprep.subr.mxu0 0.0
        %2278 = vmatpush1.msra.mxu0 0.0
        %2279 = vmatprep.subr.mxu0 0.0
        %2280 = vmatpush1.msra.mxu0 0.0
        %2281 = vmatprep.subr.mxu0 0.0
        %2282 = vmatpush1.msra.mxu0 0.0
        %2283 = vmatprep.subr.mxu0 0.0
        %2284 = vmatpush1.msra.mxu0 0.0
        %2285 = vmatprep.subr.mxu0 0.0
        %2286 = vmatpush1.msra.mxu0 0.0
        %2287 = vmatprep.subr.mxu0 0.0
        %2288 = vmatpush1.msra.mxu0 0.0
        %2289 = vmatprep.subr.mxu0 0.0
        %2290 = vmatpush1.msra.mxu0 0.0
        %2291 = vmatprep.subr.mxu0 0.0
        %2292 = vmatpush1.msra.mxu0 0.0
        %2293 = vmatprep.subr.mxu0 0.0
        %2294 = vmatpush1.msra.mxu0 0.0
        %2295 = vmatprep.subr.mxu0 0.0
        %2296 = vmatpush1.msra.mxu0 %v2262
        %2297 = vmatprep.subr.mxu0 0.0
        %2298 = vmatpush1.msra.mxu0 %v2261
        %2299 = vmatprep.subr.mxu0 0.0
        %2300 = vmatpush1.msra.mxu0 %v2260
        %2301 = vmatprep.subr.mxu0 0.0
        %2302 = vmatpush1.msra.mxu0 %v2259
        %2303 = vmatprep.subr.mxu0 0.0
        %2304 = vmatpush2.msra.mxu0 0.0
        %2305 = vmatprep.subr.mxu0 0.0
        %2306 = vmatpush2.msra.mxu0 0.0
        %2307 = vmatprep.subr.mxu0 0.0
        %2308 = vmatpush2.msra.mxu0 0.0
        %2309 = vmatprep.subr.mxu0 0.0
        %2310 = vmatpush2.msra.mxu0 0.0
        %2311 = vmatprep.subr.mxu0 0.0
        %2312 = vmatpush2.msra.mxu0 0.0
        %2313 = vmatprep.subr.mxu0 0.0
        %2314 = vmatpush2.msra.mxu0 0.0
        %2315 = vmatprep.subr.mxu0 0.0
        %2316 = vmatpush2.msra.mxu0 0.0
        %2317 = vmatprep.subr.mxu0 0.0
        %2318 = vmatpush2.msra.mxu0 0.0
        %2319 = vmatprep.subr.mxu0 0.0
        %2320 = vmatpush2.msra.mxu0 0.0
        %2321 = vmatprep.subr.mxu0 0.0
        %2322 = vmatpush2.msra.mxu0 0.0
        %2323 = vmatprep.subr.mxu0 0.0
        %2324 = vmatpush2.msra.mxu0 0.0
        %2325 = vmatprep.subr.mxu0 0.0
        %2326 = vmatpush2.msra.mxu0 0.0
        %2327 = vmatprep.subr.mxu0 0.0
        %2328 = vmatpush2.msra.mxu0 0.0
        %2329 = vmatprep.subr.mxu0 0.0
        %2330 = vmatpush2.msra.mxu0 0.0
        %2331 = vmatprep.subr.mxu0 0.0
        %2332 = vmatpush2.msra.mxu0 0.0
        %2333 = vmatprep.subr.mxu0 0.0
        %2334 = vmatpush2.msra.mxu0 0.0
        %2335 = vmatprep.mubr.f32.mxu0 0.0
        %2336 = vmatmul.mubr.f32.gmra.mxu0 %v2186
        %v2337 = vpop.f32.mrf.mxu0
        %v2338 = vadd.f32 %v2269, %v2337
        %v2339 = vpop.f32.mrf.mxu0
        %2340 = vdwg.mxu0
        %v2341 = vmul.f32 %v2255, %v1297
        %v2343 = vsel %vm1011, %v2169, 0
        %v2346 = vsel %vm1011, %v2341, 0
        %2348 = vmatprep.subr.mxu0 0.0
        %2349 = vmatpush1.xpose.msra.mxu0 0.0
        %2350 = vmatprep.subr.mxu0 0.0
        %2351 = vmatpush1.xpose.msra.mxu0 0.0
        %2352 = vmatprep.subr.mxu0 0.0
        %2353 = vmatpush1.xpose.msra.mxu0 0.0
        %2354 = vmatprep.subr.mxu0 0.0
        %2355 = vmatpush1.xpose.msra.mxu0 0.0
        %2356 = vmatprep.subr.mxu0 0.0
        %2357 = vmatpush1.xpose.msra.mxu0 0.0
        %2358 = vmatprep.subr.mxu0 0.0
        %2359 = vmatpush1.xpose.msra.mxu0 0.0
        %2360 = vmatprep.subr.mxu0 0.0
        %2361 = vmatpush1.xpose.msra.mxu0 0.0
        %2362 = vmatprep.subr.mxu0 0.0
        %2363 = vmatpush1.xpose.msra.mxu0 0.0
        %2364 = vmatprep.subr.mxu0 0.0
        %2365 = vmatpush1.xpose.msra.mxu0 0.0
        %2366 = vmatprep.subr.mxu0 0.0
        %2367 = vmatpush1.xpose.msra.mxu0 0.0
        %2368 = vmatprep.subr.mxu0 0.0
        %2369 = vmatpush1.xpose.msra.mxu0 0.0
        %2370 = vmatprep.subr.mxu0 0.0
        %2371 = vmatpush1.xpose.msra.mxu0 0.0
        %2372 = vmatprep.subr.mxu0 0.0
        %2373 = vmatpush1.xpose.msra.mxu0 0.0
        %2374 = vmatprep.subr.mxu0 0.0
        %2375 = vmatpush1.xpose.msra.mxu0 0.0
        %2376 = vmatprep.subr.mxu0 0.0
        %2377 = vmatpush1.xpose.msra.mxu0 0.0
        %2378 = vmatprep.subr.mxu0 0.0
        %2379 = vmatpush1.xpose.msra.mxu0 %v2346
        %2380 = vmatprep.subr.mxu0 0.0
        %2381 = vmatpush2.xpose.msra.mxu0 0.0
        %2382 = vmatprep.subr.mxu0 0.0
        %2383 = vmatpush2.xpose.msra.mxu0 0.0
        %2384 = vmatprep.subr.mxu0 0.0
        %2385 = vmatpush2.xpose.msra.mxu0 0.0
        %2386 = vmatprep.subr.mxu0 0.0
        %2387 = vmatpush2.xpose.msra.mxu0 0.0
        %2388 = vmatprep.subr.mxu0 0.0
        %2389 = vmatpush2.xpose.msra.mxu0 0.0
        %2390 = vmatprep.subr.mxu0 0.0
        %2391 = vmatpush2.xpose.msra.mxu0 0.0
        %2392 = vmatprep.subr.mxu0 0.0
        %2393 = vmatpush2.xpose.msra.mxu0 0.0
        %2394 = vmatprep.subr.mxu0 0.0
        %2395 = vmatpush2.xpose.msra.mxu0 0.0
        %2396 = vmatprep.subr.mxu0 0.0
        %2397 = vmatpush2.xpose.msra.mxu0 0.0
        %2398 = vmatprep.subr.mxu0 0.0
        %2399 = vmatpush2.xpose.msra.mxu0 0.0
        %2400 = vmatprep.subr.mxu0 0.0
        %2401 = vmatpush2.xpose.msra.mxu0 0.0
        %2402 = vmatprep.subr.mxu0 0.0
        %2403 = vmatpush2.xpose.msra.mxu0 0.0
        %2404 = vmatprep.subr.mxu0 0.0
        %2405 = vmatpush2.xpose.msra.mxu0 0.0
        %2406 = vmatprep.subr.mxu0 0.0
        %2407 = vmatpush2.xpose.msra.mxu0 0.0
        %2408 = vmatprep.subr.mxu0 0.0
        %2409 = vmatpush2.xpose.msra.mxu0 0.0
        %2410 = vmatprep.subr.mxu0 0.0
        %2411 = vmatpush2.xpose.msra.mxu0 0.0
        %2412 = vmatprep.mubr.f32.mxu0 0.0
        %2413 = vmatmul.mubr.f32.gmra.mxu0 %v2343
        %v2414 = vpop.f32.mrf.mxu0
        %v2415 = vadd.f32 0.0, %v2414
        %v2416 = vpop.f32.mrf.mxu0
        %2417 = vdwg.mxu0
        %v2418 = vmul.f32 %v2415, 0.35355338
        %v2420 = vlaneseq
        %v2421 = vshrl.u32 %v2420, 7
        %v2422 = vsub.s32 0, %v2421
        %v2423 = vrot.slane %v1008, %v2422
        %v2425 = vadd.f32 %v2418, %v2423
        %v2426 = vsel %vm1377, %v2425, -inf
        %2427 = vmax.xlane.f32.xlu0 %v2426
        %v2428 = vpop.xlane.xlu0 %2427
        %v2429 = vsub.f32 %v2425, %v2428
        %v2430 = vmul.f32 %v2429, 1.442695
        %v2431 = vpow.pop %v2430
        %v2432 = vsel %vm1377, %v2431, 0.0
        %2433 = vadd.xlane.f32.xlu0 %v2432
        %v2434 = vpop.xlane.xlu0 %2433
        %v2435 = vrcp.pop %v2434
        %v2436 = vmul.f32 %v2431, %v2435
        %v2437 = vmul.f32 %v2338, %v1297
        %v2438 = vmul.f32 %v2255, %v1394
        %v2440 = vsel %vm1011, %v2438, 0
        %2442 = vmatprep.subr.mxu0 0.0
        %2443 = vmatpush1.xpose.msra.mxu0 0.0
        %2444 = vmatprep.subr.mxu0 0.0
        %2445 = vmatpush1.xpose.msra.mxu0 0.0
        %2446 = vmatprep.subr.mxu0 0.0
        %2447 = vmatpush1.xpose.msra.mxu0 0.0
        %2448 = vmatprep.subr.mxu0 0.0
        %2449 = vmatpush1.xpose.msra.mxu0 0.0
        %2450 = vmatprep.subr.mxu0 0.0
        %2451 = vmatpush1.xpose.msra.mxu0 0.0
        %2452 = vmatprep.subr.mxu0 0.0
        %2453 = vmatpush1.xpose.msra.mxu0 0.0
        %2454 = vmatprep.subr.mxu0 0.0
        %2455 = vmatpush1.xpose.msra.mxu0 0.0
        %2456 = vmatprep.subr.mxu0 0.0
        %2457 = vmatpush1.xpose.msra.mxu0 0.0
        %2458 = vmatprep.subr.mxu0 0.0
        %2459 = vmatpush1.xpose.msra.mxu0 0.0
        %2460 = vmatprep.subr.mxu0 0.0
        %2461 = vmatpush1.xpose.msra.mxu0 0.0
        %2462 = vmatprep.subr.mxu0 0.0
        %2463 = vmatpush1.xpose.msra.mxu0 0.0
        %2464 = vmatprep.subr.mxu0 0.0
        %2465 = vmatpush1.xpose.msra.mxu0 0.0
        %2466 = vmatprep.subr.mxu0 0.0
        %2467 = vmatpush1.xpose.msra.mxu0 0.0
        %2468 = vmatprep.subr.mxu0 0.0
        %2469 = vmatpush1.xpose.msra.mxu0 0.0
        %2470 = vmatprep.subr.mxu0 0.0
        %2471 = vmatpush1.xpose.msra.mxu0 0.0
        %2472 = vmatprep.subr.mxu0 0.0
        %2473 = vmatpush1.xpose.msra.mxu0 %v2440
        %2474 = vmatprep.subr.mxu0 0.0
        %2475 = vmatpush2.xpose.msra.mxu0 0.0
        %2476 = vmatprep.subr.mxu0 0.0
        %2477 = vmatpush2.xpose.msra.mxu0 0.0
        %2478 = vmatprep.subr.mxu0 0.0
        %2479 = vmatpush2.xpose.msra.mxu0 0.0
        %2480 = vmatprep.subr.mxu0 0.0
        %2481 = vmatpush2.xpose.msra.mxu0 0.0
        %2482 = vmatprep.subr.mxu0 0.0
        %2483 = vmatpush2.xpose.msra.mxu0 0.0
        %2484 = vmatprep.subr.mxu0 0.0
        %2485 = vmatpush2.xpose.msra.mxu0 0.0
        %2486 = vmatprep.subr.mxu0 0.0
        %2487 = vmatpush2.xpose.msra.mxu0 0.0
        %2488 = vmatprep.subr.mxu0 0.0
        %2489 = vmatpush2.xpose.msra.mxu0 0.0
        %2490 = vmatprep.subr.mxu0 0.0
        %2491 = vmatpush2.xpose.msra.mxu0 0.0
        %2492 = vmatprep.subr.mxu0 0.0
        %2493 = vmatpush2.xpose.msra.mxu0 0.0
        %2494 = vmatprep.subr.mxu0 0.0
        %2495 = vmatpush2.xpose.msra.mxu0 0.0
        %2496 = vmatprep.subr.mxu0 0.0
        %2497 = vmatpush2.xpose.msra.mxu0 0.0
        %2498 = vmatprep.subr.mxu0 0.0
        %2499 = vmatpush2.xpose.msra.mxu0 0.0
        %2500 = vmatprep.subr.mxu0 0.0
        %2501 = vmatpush2.xpose.msra.mxu0 0.0
        %2502 = vmatprep.subr.mxu0 0.0
        %2503 = vmatpush2.xpose.msra.mxu0 0.0
        %2504 = vmatprep.subr.mxu0 0.0
        %2505 = vmatpush2.xpose.msra.mxu0 0.0
        %2506 = vmatprep.mubr.f32.mxu0 0.0
        %2507 = vmatmul.mubr.f32.gmra.mxu0 %v2343
        %v2508 = vpop.f32.mrf.mxu0
        %v2509 = vadd.f32 0.0, %v2508
        %v2510 = vpop.f32.mrf.mxu0
        %2511 = vdwg.mxu0
        %v2512 = vmul.f32 %v2509, 0.35355338
        %v2513 = vadd.f32 %v2512, %v2423
        %v2514 = vsel %vm1377, %v2513, -inf
        %2515 = vmax.xlane.f32.xlu0 %v2514
        %v2516 = vpop.xlane.xlu0 %2515
        %v2517 = vsub.f32 %v2513, %v2516
        %v2518 = vmul.f32 %v2517, 1.442695
        %v2519 = vpow.pop %v2518
        %v2520 = vsel %vm1377, %v2519, 0.0
        %2521 = vadd.xlane.f32.xlu0 %v2520
        %v2522 = vpop.xlane.xlu0 %2521
        %v2523 = vrcp.pop %v2522
        %v2524 = vmul.f32 %v2519, %v2523
        %v2525 = vmul.f32 %v2338, %v1394
        %v2527 = vsel %vm1377, %v2524, 0
        %2529 = vmatprep.subr.mxu0 0.0
        %2530 = vmatpush1.msra.mxu0 0.0
        %2531 = vmatprep.subr.mxu0 0.0
        %2532 = vmatpush1.msra.mxu0 0.0
        %2533 = vmatprep.subr.mxu0 0.0
        %2534 = vmatpush1.msra.mxu0 0.0
        %2535 = vmatprep.subr.mxu0 0.0
        %2536 = vmatpush1.msra.mxu0 0.0
        %2537 = vmatprep.subr.mxu0 0.0
        %2538 = vmatpush1.msra.mxu0 0.0
        %2539 = vmatprep.subr.mxu0 0.0
        %2540 = vmatpush1.msra.mxu0 0.0
        %2541 = vmatprep.subr.mxu0 0.0
        %2542 = vmatpush1.msra.mxu0 0.0
        %2543 = vmatprep.subr.mxu0 0.0
        %2544 = vmatpush1.msra.mxu0 0.0
        %2545 = vmatprep.subr.mxu0 0.0
        %2546 = vmatpush1.msra.mxu0 0.0
        %2547 = vmatprep.subr.mxu0 0.0
        %2548 = vmatpush1.msra.mxu0 0.0
        %2549 = vmatprep.subr.mxu0 0.0
        %2550 = vmatpush1.msra.mxu0 0.0
        %2551 = vmatprep.subr.mxu0 0.0
        %2552 = vmatpush1.msra.mxu0 0.0
        %2553 = vmatprep.subr.mxu0 0.0
        %2554 = vmatpush1.msra.mxu0 0.0
        %2555 = vmatprep.subr.mxu0 0.0
        %2556 = vmatpush1.msra.mxu0 0.0
        %2557 = vmatprep.subr.mxu0 0.0
        %2558 = vmatpush1.msra.mxu0 0.0
        %2559 = vmatprep.subr.mxu0 0.0
        %2560 = vmatpush1.msra.mxu0 %v2525
        %2561 = vmatprep.subr.mxu0 0.0
        %2562 = vmatpush2.msra.mxu0 0.0
        %2563 = vmatprep.subr.mxu0 0.0
        %2564 = vmatpush2.msra.mxu0 0.0
        %2565 = vmatprep.subr.mxu0 0.0
        %2566 = vmatpush2.msra.mxu0 0.0
        %2567 = vmatprep.subr.mxu0 0.0
        %2568 = vmatpush2.msra.mxu0 0.0
        %2569 = vmatprep.subr.mxu0 0.0
        %2570 = vmatpush2.msra.mxu0 0.0
        %2571 = vmatprep.subr.mxu0 0.0
        %2572 = vmatpush2.msra.mxu0 0.0
        %2573 = vmatprep.subr.mxu0 0.0
        %2574 = vmatpush2.msra.mxu0 0.0
        %2575 = vmatprep.subr.mxu0 0.0
        %2576 = vmatpush2.msra.mxu0 0.0
        %2577 = vmatprep.subr.mxu0 0.0
        %2578 = vmatpush2.msra.mxu0 0.0
        %2579 = vmatprep.subr.mxu0 0.0
        %2580 = vmatpush2.msra.mxu0 0.0
        %2581 = vmatprep.subr.mxu0 0.0
        %2582 = vmatpush2.msra.mxu0 0.0
        %2583 = vmatprep.subr.mxu0 0.0
        %2584 = vmatpush2.msra.mxu0 0.0
        %2585 = vmatprep.subr.mxu0 0.0
        %2586 = vmatpush2.msra.mxu0 0.0
        %2587 = vmatprep.subr.mxu0 0.0
        %2588 = vmatpush2.msra.mxu0 0.0
        %2589 = vmatprep.subr.mxu0 0.0
        %2590 = vmatpush2.msra.mxu0 0.0
        %2591 = vmatprep.subr.mxu0 0.0
        %2592 = vmatpush2.msra.mxu0 0.0
        %2593 = vmatprep.mubr.f32.mxu0 0.0
        %2594 = vmatmul.mubr.f32.gmra.mxu0 %v2527
        %v2595 = vpop.f32.mrf.mxu0
        %v2596 = vadd.f32 0.0, %v2595
        %v2597 = vpop.f32.mrf.mxu0
        %2598 = vdwg.mxu0
        %v2600 = vsel %vm1377, %v2436, 0
        %2602 = vmatprep.subr.mxu0 0.0
        %2603 = vmatpush1.msra.mxu0 0.0
        %2604 = vmatprep.subr.mxu0 0.0
        %2605 = vmatpush1.msra.mxu0 0.0
        %2606 = vmatprep.subr.mxu0 0.0
        %2607 = vmatpush1.msra.mxu0 0.0
        %2608 = vmatprep.subr.mxu0 0.0
        %2609 = vmatpush1.msra.mxu0 0.0
        %2610 = vmatprep.subr.mxu0 0.0
        %2611 = vmatpush1.msra.mxu0 0.0
        %2612 = vmatprep.subr.mxu0 0.0
        %2613 = vmatpush1.msra.mxu0 0.0
        %2614 = vmatprep.subr.mxu0 0.0
        %2615 = vmatpush1.msra.mxu0 0.0
        %2616 = vmatprep.subr.mxu0 0.0
        %2617 = vmatpush1.msra.mxu0 0.0
        %2618 = vmatprep.subr.mxu0 0.0
        %2619 = vmatpush1.msra.mxu0 0.0
        %2620 = vmatprep.subr.mxu0 0.0
        %2621 = vmatpush1.msra.mxu0 0.0
        %2622 = vmatprep.subr.mxu0 0.0
        %2623 = vmatpush1.msra.mxu0 0.0
        %2624 = vmatprep.subr.mxu0 0.0
        %2625 = vmatpush1.msra.mxu0 0.0
        %2626 = vmatprep.subr.mxu0 0.0
        %2627 = vmatpush1.msra.mxu0 0.0
        %2628 = vmatprep.subr.mxu0 0.0
        %2629 = vmatpush1.msra.mxu0 0.0
        %2630 = vmatprep.subr.mxu0 0.0
        %2631 = vmatpush1.msra.mxu0 0.0
        %2632 = vmatprep.subr.mxu0 0.0
        %2633 = vmatpush1.msra.mxu0 %v2437
        %2634 = vmatprep.subr.mxu0 0.0
        %2635 = vmatpush2.msra.mxu0 0.0
        %2636 = vmatprep.subr.mxu0 0.0
        %2637 = vmatpush2.msra.mxu0 0.0
        %2638 = vmatprep.subr.mxu0 0.0
        %2639 = vmatpush2.msra.mxu0 0.0
        %2640 = vmatprep.subr.mxu0 0.0
        %2641 = vmatpush2.msra.mxu0 0.0
        %2642 = vmatprep.subr.mxu0 0.0
        %2643 = vmatpush2.msra.mxu0 0.0
        %2644 = vmatprep.subr.mxu0 0.0
        %2645 = vmatpush2.msra.mxu0 0.0
        %2646 = vmatprep.subr.mxu0 0.0
        %2647 = vmatpush2.msra.mxu0 0.0
        %2648 = vmatprep.subr.mxu0 0.0
        %2649 = vmatpush2.msra.mxu0 0.0
        %2650 = vmatprep.subr.mxu0 0.0
        %2651 = vmatpush2.msra.mxu0 0.0
        %2652 = vmatprep.subr.mxu0 0.0
        %2653 = vmatpush2.msra.mxu0 0.0
        %2654 = vmatprep.subr.mxu0 0.0
        %2655 = vmatpush2.msra.mxu0 0.0
        %2656 = vmatprep.subr.mxu0 0.0
        %2657 = vmatpush2.msra.mxu0 0.0
        %2658 = vmatprep.subr.mxu0 0.0
        %2659 = vmatpush2.msra.mxu0 0.0
        %2660 = vmatprep.subr.mxu0 0.0
        %2661 = vmatpush2.msra.mxu0 0.0
        %2662 = vmatprep.subr.mxu0 0.0
        %2663 = vmatpush2.msra.mxu0 0.0
        %2664 = vmatprep.subr.mxu0 0.0
        %2665 = vmatpush2.msra.mxu0 0.0
        %2666 = vmatprep.mubr.f32.mxu0 0.0
        %2667 = vmatmul.mubr.f32.gmra.mxu0 %v2600
        %v2668 = vpop.f32.mrf.mxu0
        %v2669 = vadd.f32 %v2596, %v2668
        %v2670 = vpop.f32.mrf.mxu0
        %2671 = vdwg.mxu0
        %v2672 = vmul.f32 %v2255, %v1633
        %v2674 = vsel %vm1011, %v2672, 0
        %2676 = vmatprep.subr.mxu0 0.0
        %2677 = vmatpush1.xpose.msra.mxu0 0.0
        %2678 = vmatprep.subr.mxu0 0.0
        %2679 = vmatpush1.xpose.msra.mxu0 0.0
        %2680 = vmatprep.subr.mxu0 0.0
        %2681 = vmatpush1.xpose.msra.mxu0 0.0
        %2682 = vmatprep.subr.mxu0 0.0
        %2683 = vmatpush1.xpose.msra.mxu0 0.0
        %2684 = vmatprep.subr.mxu0 0.0
        %2685 = vmatpush1.xpose.msra.mxu0 0.0
        %2686 = vmatprep.subr.mxu0 0.0
        %2687 = vmatpush1.xpose.msra.mxu0 0.0
        %2688 = vmatprep.subr.mxu0 0.0
        %2689 = vmatpush1.xpose.msra.mxu0 0.0
        %2690 = vmatprep.subr.mxu0 0.0
        %2691 = vmatpush1.xpose.msra.mxu0 0.0
        %2692 = vmatprep.subr.mxu0 0.0
        %2693 = vmatpush1.xpose.msra.mxu0 0.0
        %2694 = vmatprep.subr.mxu0 0.0
        %2695 = vmatpush1.xpose.msra.mxu0 0.0
        %2696 = vmatprep.subr.mxu0 0.0
        %2697 = vmatpush1.xpose.msra.mxu0 0.0
        %2698 = vmatprep.subr.mxu0 0.0
        %2699 = vmatpush1.xpose.msra.mxu0 0.0
        %2700 = vmatprep.subr.mxu0 0.0
        %2701 = vmatpush1.xpose.msra.mxu0 0.0
        %2702 = vmatprep.subr.mxu0 0.0
        %2703 = vmatpush1.xpose.msra.mxu0 0.0
        %2704 = vmatprep.subr.mxu0 0.0
        %2705 = vmatpush1.xpose.msra.mxu0 0.0
        %2706 = vmatprep.subr.mxu0 0.0
        %2707 = vmatpush1.xpose.msra.mxu0 %v2674
        %2708 = vmatprep.subr.mxu0 0.0
        %2709 = vmatpush2.xpose.msra.mxu0 0.0
        %2710 = vmatprep.subr.mxu0 0.0
        %2711 = vmatpush2.xpose.msra.mxu0 0.0
        %2712 = vmatprep.subr.mxu0 0.0
        %2713 = vmatpush2.xpose.msra.mxu0 0.0
        %2714 = vmatprep.subr.mxu0 0.0
        %2715 = vmatpush2.xpose.msra.mxu0 0.0
        %2716 = vmatprep.subr.mxu0 0.0
        %2717 = vmatpush2.xpose.msra.mxu0 0.0
        %2718 = vmatprep.subr.mxu0 0.0
        %2719 = vmatpush2.xpose.msra.mxu0 0.0
        %2720 = vmatprep.subr.mxu0 0.0
        %2721 = vmatpush2.xpose.msra.mxu0 0.0
        %2722 = vmatprep.subr.mxu0 0.0
        %2723 = vmatpush2.xpose.msra.mxu0 0.0
        %2724 = vmatprep.subr.mxu0 0.0
        %2725 = vmatpush2.xpose.msra.mxu0 0.0
        %2726 = vmatprep.subr.mxu0 0.0
        %2727 = vmatpush2.xpose.msra.mxu0 0.0
        %2728 = vmatprep.subr.mxu0 0.0
        %2729 = vmatpush2.xpose.msra.mxu0 0.0
        %2730 = vmatprep.subr.mxu0 0.0
        %2731 = vmatpush2.xpose.msra.mxu0 0.0
        %2732 = vmatprep.subr.mxu0 0.0
        %2733 = vmatpush2.xpose.msra.mxu0 0.0
        %2734 = vmatprep.subr.mxu0 0.0
        %2735 = vmatpush2.xpose.msra.mxu0 0.0
        %2736 = vmatprep.subr.mxu0 0.0
        %2737 = vmatpush2.xpose.msra.mxu0 0.0
        %2738 = vmatprep.subr.mxu0 0.0
        %2739 = vmatpush2.xpose.msra.mxu0 0.0
        %2740 = vmatprep.mubr.f32.mxu0 0.0
        %2741 = vmatmul.mubr.f32.gmra.mxu0 %v2343
        %v2742 = vpop.f32.mrf.mxu0
        %v2743 = vadd.f32 0.0, %v2742
        %v2744 = vpop.f32.mrf.mxu0
        %2745 = vdwg.mxu0
        %v2746 = vmul.f32 %v2743, 0.35355338
        %v2747 = vadd.f32 %v2746, %v2423
        %v2748 = vsel %vm1377, %v2747, -inf
        %2749 = vmax.xlane.f32.xlu0 %v2748
        %v2750 = vpop.xlane.xlu0 %2749
        %v2751 = vsub.f32 %v2747, %v2750
        %v2752 = vmul.f32 %v2751, 1.442695
        %v2753 = vpow.pop %v2752
        %v2754 = vsel %vm1377, %v2753, 0.0
        %2755 = vadd.xlane.f32.xlu0 %v2754
        %v2756 = vpop.xlane.xlu0 %2755
        %v2757 = vrcp.pop %v2756
        %v2758 = vmul.f32 %v2753, %v2757
        %v2759 = vmul.f32 %v2338, %v1633
        %v2761 = vsel %vm1377, %v2758, 0
        %2763 = vmatprep.subr.mxu0 0.0
        %2764 = vmatpush1.msra.mxu0 0.0
        %2765 = vmatprep.subr.mxu0 0.0
        %2766 = vmatpush1.msra.mxu0 0.0
        %2767 = vmatprep.subr.mxu0 0.0
        %2768 = vmatpush1.msra.mxu0 0.0
        %2769 = vmatprep.subr.mxu0 0.0
        %2770 = vmatpush1.msra.mxu0 0.0
        %2771 = vmatprep.subr.mxu0 0.0
        %2772 = vmatpush1.msra.mxu0 0.0
        %2773 = vmatprep.subr.mxu0 0.0
        %2774 = vmatpush1.msra.mxu0 0.0
        %2775 = vmatprep.subr.mxu0 0.0
        %2776 = vmatpush1.msra.mxu0 0.0
        %2777 = vmatprep.subr.mxu0 0.0
        %2778 = vmatpush1.msra.mxu0 0.0
        %2779 = vmatprep.subr.mxu0 0.0
        %2780 = vmatpush1.msra.mxu0 0.0
        %2781 = vmatprep.subr.mxu0 0.0
        %2782 = vmatpush1.msra.mxu0 0.0
        %2783 = vmatprep.subr.mxu0 0.0
        %2784 = vmatpush1.msra.mxu0 0.0
        %2785 = vmatprep.subr.mxu0 0.0
        %2786 = vmatpush1.msra.mxu0 0.0
        %2787 = vmatprep.subr.mxu0 0.0
        %2788 = vmatpush1.msra.mxu0 0.0
        %2789 = vmatprep.subr.mxu0 0.0
        %2790 = vmatpush1.msra.mxu0 0.0
        %2791 = vmatprep.subr.mxu0 0.0
        %2792 = vmatpush1.msra.mxu0 0.0
        %2793 = vmatprep.subr.mxu0 0.0
        %2794 = vmatpush1.msra.mxu0 %v2759
        %2795 = vmatprep.subr.mxu0 0.0
        %2796 = vmatpush2.msra.mxu0 0.0
        %2797 = vmatprep.subr.mxu0 0.0
        %2798 = vmatpush2.msra.mxu0 0.0
        %2799 = vmatprep.subr.mxu0 0.0
        %2800 = vmatpush2.msra.mxu0 0.0
        %2801 = vmatprep.subr.mxu0 0.0
        %2802 = vmatpush2.msra.mxu0 0.0
        %2803 = vmatprep.subr.mxu0 0.0
        %2804 = vmatpush2.msra.mxu0 0.0
        %2805 = vmatprep.subr.mxu0 0.0
        %2806 = vmatpush2.msra.mxu0 0.0
        %2807 = vmatprep.subr.mxu0 0.0
        %2808 = vmatpush2.msra.mxu0 0.0
        %2809 = vmatprep.subr.mxu0 0.0
        %2810 = vmatpush2.msra.mxu0 0.0
        %2811 = vmatprep.subr.mxu0 0.0
        %2812 = vmatpush2.msra.mxu0 0.0
        %2813 = vmatprep.subr.mxu0 0.0
        %2814 = vmatpush2.msra.mxu0 0.0
        %2815 = vmatprep.subr.mxu0 0.0
        %2816 = vmatpush2.msra.mxu0 0.0
        %2817 = vmatprep.subr.mxu0 0.0
        %2818 = vmatpush2.msra.mxu0 0.0
        %2819 = vmatprep.subr.mxu0 0.0
        %2820 = vmatpush2.msra.mxu0 0.0
        %2821 = vmatprep.subr.mxu0 0.0
        %2822 = vmatpush2.msra.mxu0 0.0
        %2823 = vmatprep.subr.mxu0 0.0
        %2824 = vmatpush2.msra.mxu0 0.0
        %2825 = vmatprep.subr.mxu0 0.0
        %2826 = vmatpush2.msra.mxu0 0.0
        %2827 = vmatprep.mubr.f32.mxu0 0.0
        %2828 = vmatmul.mubr.f32.gmra.mxu0 %v2761
        %v2829 = vpop.f32.mrf.mxu0
        %v2830 = vadd.f32 0.0, %v2829
        %v2831 = vpop.f32.mrf.mxu0
        %2832 = vdwg.mxu0
        %v2833 = vadd.f32 %v2669, %v2830
        %v2834 = vmul.f32 %v2255, %v1800
        %v2836 = vsel %vm1011, %v2834, 0
        %2838 = vmatprep.subr.mxu0 0.0
        %2839 = vmatpush1.xpose.msra.mxu0 0.0
        %2840 = vmatprep.subr.mxu0 0.0
        %2841 = vmatpush1.xpose.msra.mxu0 0.0
        %2842 = vmatprep.subr.mxu0 0.0
        %2843 = vmatpush1.xpose.msra.mxu0 0.0
        %2844 = vmatprep.subr.mxu0 0.0
        %2845 = vmatpush1.xpose.msra.mxu0 0.0
        %2846 = vmatprep.subr.mxu0 0.0
        %2847 = vmatpush1.xpose.msra.mxu0 0.0
        %2848 = vmatprep.subr.mxu0 0.0
        %2849 = vmatpush1.xpose.msra.mxu0 0.0
        %2850 = vmatprep.subr.mxu0 0.0
        %2851 = vmatpush1.xpose.msra.mxu0 0.0
        %2852 = vmatprep.subr.mxu0 0.0
        %2853 = vmatpush1.xpose.msra.mxu0 0.0
        %2854 = vmatprep.subr.mxu0 0.0
        %2855 = vmatpush1.xpose.msra.mxu0 0.0
        %2856 = vmatprep.subr.mxu0 0.0
        %2857 = vmatpush1.xpose.msra.mxu0 0.0
        %2858 = vmatprep.subr.mxu0 0.0
        %2859 = vmatpush1.xpose.msra.mxu0 0.0
        %2860 = vmatprep.subr.mxu0 0.0
        %2861 = vmatpush1.xpose.msra.mxu0 0.0
        %2862 = vmatprep.subr.mxu0 0.0
        %2863 = vmatpush1.xpose.msra.mxu0 0.0
        %2864 = vmatprep.subr.mxu0 0.0
        %2865 = vmatpush1.xpose.msra.mxu0 0.0
        %2866 = vmatprep.subr.mxu0 0.0
        %2867 = vmatpush1.xpose.msra.mxu0 0.0
        %2868 = vmatprep.subr.mxu0 0.0
        %2869 = vmatpush1.xpose.msra.mxu0 %v2836
        %2870 = vmatprep.subr.mxu0 0.0
        %2871 = vmatpush2.xpose.msra.mxu0 0.0
        %2872 = vmatprep.subr.mxu0 0.0
        %2873 = vmatpush2.xpose.msra.mxu0 0.0
        %2874 = vmatprep.subr.mxu0 0.0
        %2875 = vmatpush2.xpose.msra.mxu0 0.0
        %2876 = vmatprep.subr.mxu0 0.0
        %2877 = vmatpush2.xpose.msra.mxu0 0.0
        %2878 = vmatprep.subr.mxu0 0.0
        %2879 = vmatpush2.xpose.msra.mxu0 0.0
        %2880 = vmatprep.subr.mxu0 0.0
        %2881 = vmatpush2.xpose.msra.mxu0 0.0
        %2882 = vmatprep.subr.mxu0 0.0
        %2883 = vmatpush2.xpose.msra.mxu0 0.0
        %2884 = vmatprep.subr.mxu0 0.0
        %2885 = vmatpush2.xpose.msra.mxu0 0.0
        %2886 = vmatprep.subr.mxu0 0.0
        %2887 = vmatpush2.xpose.msra.mxu0 0.0
        %2888 = vmatprep.subr.mxu0 0.0
        %2889 = vmatpush2.xpose.msra.mxu0 0.0
        %2890 = vmatprep.subr.mxu0 0.0
        %2891 = vmatpush2.xpose.msra.mxu0 0.0
        %2892 = vmatprep.subr.mxu0 0.0
        %2893 = vmatpush2.xpose.msra.mxu0 0.0
        %2894 = vmatprep.subr.mxu0 0.0
        %2895 = vmatpush2.xpose.msra.mxu0 0.0
        %2896 = vmatprep.subr.mxu0 0.0
        %2897 = vmatpush2.xpose.msra.mxu0 0.0
        %2898 = vmatprep.subr.mxu0 0.0
        %2899 = vmatpush2.xpose.msra.mxu0 0.0
        %2900 = vmatprep.subr.mxu0 0.0
        %2901 = vmatpush2.xpose.msra.mxu0 0.0
        %2902 = vmatprep.mubr.f32.mxu0 0.0
        %2903 = vmatmul.mubr.f32.gmra.mxu0 %v2343
        %v2904 = vpop.f32.mrf.mxu0
        %v2905 = vadd.f32 0.0, %v2904
        %v2906 = vpop.f32.mrf.mxu0
        %2907 = vdwg.mxu0
        %v2908 = vmul.f32 %v2905, 0.35355338
        %v2909 = vadd.f32 %v2908, %v2423
        %v2910 = vsel %vm1377, %v2909, -inf
        %2911 = vmax.xlane.f32.xlu0 %v2910
        %v2912 = vpop.xlane.xlu0 %2911
        %v2913 = vsub.f32 %v2909, %v2912
        %v2914 = vmul.f32 %v2913, 1.442695
        %v2915 = vpow.pop %v2914
        %v2916 = vsel %vm1377, %v2915, 0.0
        %2917 = vadd.xlane.f32.xlu0 %v2916
        %v2918 = vpop.xlane.xlu0 %2917
        %v2919 = vrcp.pop %v2918
        %v2920 = vmul.f32 %v2915, %v2919
        %v2921 = vmul.f32 %v2338, %v1800
        %v2923 = vsel %vm1377, %v2920, 0
        %2925 = vmatprep.subr.mxu0 0.0
        %2926 = vmatpush1.msra.mxu0 0.0
        %2927 = vmatprep.subr.mxu0 0.0
        %2928 = vmatpush1.msra.mxu0 0.0
        %2929 = vmatprep.subr.mxu0 0.0
        %2930 = vmatpush1.msra.mxu0 0.0
        %2931 = vmatprep.subr.mxu0 0.0
        %2932 = vmatpush1.msra.mxu0 0.0
        %2933 = vmatprep.subr.mxu0 0.0
        %2934 = vmatpush1.msra.mxu0 0.0
        %2935 = vmatprep.subr.mxu0 0.0
        %2936 = vmatpush1.msra.mxu0 0.0
        %2937 = vmatprep.subr.mxu0 0.0
        %2938 = vmatpush1.msra.mxu0 0.0
        %2939 = vmatprep.subr.mxu0 0.0
        %2940 = vmatpush1.msra.mxu0 0.0
        %2941 = vmatprep.subr.mxu0 0.0
        %2942 = vmatpush1.msra.mxu0 0.0
        %2943 = vmatprep.subr.mxu0 0.0
        %2944 = vmatpush1.msra.mxu0 0.0
        %2945 = vmatprep.subr.mxu0 0.0
        %2946 = vmatpush1.msra.mxu0 0.0
        %2947 = vmatprep.subr.mxu0 0.0
        %2948 = vmatpush1.msra.mxu0 0.0
        %2949 = vmatprep.subr.mxu0 0.0
        %2950 = vmatpush1.msra.mxu0 0.0
        %2951 = vmatprep.subr.mxu0 0.0
        %2952 = vmatpush1.msra.mxu0 0.0
        %2953 = vmatprep.subr.mxu0 0.0
        %2954 = vmatpush1.msra.mxu0 0.0
        %2955 = vmatprep.subr.mxu0 0.0
        %2956 = vmatpush1.msra.mxu0 %v2921
        %2957 = vmatprep.subr.mxu0 0.0
        %2958 = vmatpush2.msra.mxu0 0.0
        %2959 = vmatprep.subr.mxu0 0.0
        %2960 = vmatpush2.msra.mxu0 0.0
        %2961 = vmatprep.subr.mxu0 0.0
        %2962 = vmatpush2.msra.mxu0 0.0
        %2963 = vmatprep.subr.mxu0 0.0
        %2964 = vmatpush2.msra.mxu0 0.0
        %2965 = vmatprep.subr.mxu0 0.0
        %2966 = vmatpush2.msra.mxu0 0.0
        %2967 = vmatprep.subr.mxu0 0.0
        %2968 = vmatpush2.msra.mxu0 0.0
        %2969 = vmatprep.subr.mxu0 0.0
        %2970 = vmatpush2.msra.mxu0 0.0
        %2971 = vmatprep.subr.mxu0 0.0
        %2972 = vmatpush2.msra.mxu0 0.0
        %2973 = vmatprep.subr.mxu0 0.0
        %2974 = vmatpush2.msra.mxu0 0.0
        %2975 = vmatprep.subr.mxu0 0.0
        %2976 = vmatpush2.msra.mxu0 0.0
        %2977 = vmatprep.subr.mxu0 0.0
        %2978 = vmatpush2.msra.mxu0 0.0
        %2979 = vmatprep.subr.mxu0 0.0
        %2980 = vmatpush2.msra.mxu0 0.0
        %2981 = vmatprep.subr.mxu0 0.0
        %2982 = vmatpush2.msra.mxu0 0.0
        %2983 = vmatprep.subr.mxu0 0.0
        %2984 = vmatpush2.msra.mxu0 0.0
        %2985 = vmatprep.subr.mxu0 0.0
        %2986 = vmatpush2.msra.mxu0 0.0
        %2987 = vmatprep.subr.mxu0 0.0
        %2988 = vmatpush2.msra.mxu0 0.0
        %2989 = vmatprep.mubr.f32.mxu0 0.0
        %2990 = vmatmul.mubr.f32.gmra.mxu0 %v2923
        %v2991 = vpop.f32.mrf.mxu0
        %v2992 = vadd.f32 0.0, %v2991
        %v2993 = vpop.f32.mrf.mxu0
        %2994 = vdwg.mxu0
        %v2995 = vadd.f32 %v2833, %v2992
        %s2996 = scalar_lea.vmem [#allocation13], 32
        %v2997 = vld [vmem:[%s2996] sm:$0xff]
        %v2998 = vld [vmem:[%s2996 + $0x8] sm:$0xff]
        %v2999 = vld [vmem:[%s2996 + $0x10] sm:$0xff]
        %v3000 = vld [vmem:[%s2996 + $0x18] sm:$0xff]
        %s3001 = scalar_lea.vmem [#allocation14], 1
        %v3002 = vld [vmem:[%s3001] sm:$0x1]
        %v3004 = vlaneseq
        %v3005 = vshrl.u32 %v3004, 7
        %v3006 = vsub.s32 0, %v3005
        %v3007 = vrot.slane %v3002, %v3006
        %v3010 = vsel %vm1011, %v2995, 0
        %3012 = vmatprep.subr.mxu0 0.0
        %3013 = vmatpush1.msra.mxu0 0.0
        %3014 = vmatprep.subr.mxu0 0.0
        %3015 = vmatpush1.msra.mxu0 0.0
        %3016 = vmatprep.subr.mxu0 0.0
        %3017 = vmatpush1.msra.mxu0 0.0
        %3018 = vmatprep.subr.mxu0 0.0
        %3019 = vmatpush1.msra.mxu0 0.0
        %3020 = vmatprep.subr.mxu0 0.0
        %3021 = vmatpush1.msra.mxu0 0.0
        %3022 = vmatprep.subr.mxu0 0.0
        %3023 = vmatpush1.msra.mxu0 0.0
        %3024 = vmatprep.subr.mxu0 0.0
        %3025 = vmatpush1.msra.mxu0 0.0
        %3026 = vmatprep.subr.mxu0 0.0
        %3027 = vmatpush1.msra.mxu0 0.0
        %3028 = vmatprep.subr.mxu0 0.0
        %3029 = vmatpush1.msra.mxu0 0.0
        %3030 = vmatprep.subr.mxu0 0.0
        %3031 = vmatpush1.msra.mxu0 0.0
        %3032 = vmatprep.subr.mxu0 0.0
        %3033 = vmatpush1.msra.mxu0 0.0
        %3034 = vmatprep.subr.mxu0 0.0
        %3035 = vmatpush1.msra.mxu0 0.0
        %3036 = vmatprep.subr.mxu0 0.0
        %3037 = vmatpush1.msra.mxu0 %v3000
        %3038 = vmatprep.subr.mxu0 0.0
        %3039 = vmatpush1.msra.mxu0 %v2999
        %3040 = vmatprep.subr.mxu0 0.0
        %3041 = vmatpush1.msra.mxu0 %v2998
        %3042 = vmatprep.subr.mxu0 0.0
        %3043 = vmatpush1.msra.mxu0 %v2997
        %3044 = vmatprep.subr.mxu0 0.0
        %3045 = vmatpush2.msra.mxu0 0.0
        %3046 = vmatprep.subr.mxu0 0.0
        %3047 = vmatpush2.msra.mxu0 0.0
        %3048 = vmatprep.subr.mxu0 0.0
        %3049 = vmatpush2.msra.mxu0 0.0
        %3050 = vmatprep.subr.mxu0 0.0
        %3051 = vmatpush2.msra.mxu0 0.0
        %3052 = vmatprep.subr.mxu0 0.0
        %3053 = vmatpush2.msra.mxu0 0.0
        %3054 = vmatprep.subr.mxu0 0.0
        %3055 = vmatpush2.msra.mxu0 0.0
        %3056 = vmatprep.subr.mxu0 0.0
        %3057 = vmatpush2.msra.mxu0 0.0
        %3058 = vmatprep.subr.mxu0 0.0
        %3059 = vmatpush2.msra.mxu0 0.0
        %3060 = vmatprep.subr.mxu0 0.0
        %3061 = vmatpush2.msra.mxu0 0.0
        %3062 = vmatprep.subr.mxu0 0.0
        %3063 = vmatpush2.msra.mxu0 0.0
        %3064 = vmatprep.subr.mxu0 0.0
        %3065 = vmatpush2.msra.mxu0 0.0
        %3066 = vmatprep.subr.mxu0 0.0
        %3067 = vmatpush2.msra.mxu0 0.0
        %3068 = vmatprep.subr.mxu0 0.0
        %3069 = vmatpush2.msra.mxu0 0.0
        %3070 = vmatprep.subr.mxu0 0.0
        %3071 = vmatpush2.msra.mxu0 0.0
        %3072 = vmatprep.subr.mxu0 0.0
        %3073 = vmatpush2.msra.mxu0 0.0
        %3074 = vmatprep.subr.mxu0 0.0
        %3075 = vmatpush2.msra.mxu0 0.0
        %3076 = vmatprep.mubr.f32.mxu0 0.0
        %3077 = vmatmul.mubr.f32.gmra.mxu0 %v3010
        %v3078 = vpop.f32.mrf.mxu0
        %v3079 = vadd.f32 %v3007, %v3078
        %v3080 = vpop.f32.mrf.mxu0
        %3081 = vdwg.mxu0
        %v3082 = vadd.f32 %v2047, %v3079
        %s3083 = scalar_lea.vmem [#allocation5], 2
        %v3084 = vld [vmem:[%s3083] sm:$0x1]
        %s3085 = scalar_lea.vmem [#allocation7], 2
        %v3086 = vld [vmem:[%s3085] sm:$0x1]
        %v3087 = vsel %vm1011, %v3082, 0.0
        %3088 = vadd.xlane.f32.xlu0 %v3087
        %v3089 = vpop.xlane.xlu0 %3088
        %v3090 = vmul.f32 %v3089, %v1015
        %v3091 = vsub.f32 %v3082, %v3090
        %v3092 = vmul.f32 %v3091, %v3091
        %v3093 = vsel %vm1011, %v3092, 0.0
        %3094 = vadd.xlane.f32.xlu0 %v3093
        %v3095 = vpop.xlane.xlu0 %3094
        %v3096 = vmul.f32 %v3095, 0.032258064
        %v3097 = vrsqrt.pop %v3096
        %v3098 = vmul.f32 %v3096, %v3097
        %vm3099 = vcmp.eq.f32.partialorder %v3096, inf
        %v3100 = vsel %vm3099, %v3096, %v3098
        %vm3101 = vcmp.eq.f32.partialorder %v3096, 0.0
        %v3102 = vand.u32 %v3096, 2147483648
        %v3103 = vsel %vm3101, %v3102, %v3100
        %v3104 = vadd.f32 %v3103, 1e-06
        %v3105 = vrcp.pop %v3104
        %v3106 = vmul.f32 %v3091, %v3105
        %v3108 = vlaneseq
        %v3109 = vshrl.u32 %v3108, 7
        %v3110 = vsub.s32 0, %v3109
        %v3111 = vrot.slane %v3084, %v3110
        %v3113 = vmul.f32 %v3111, %v3106
        %v3115 = vlaneseq
        %v3116 = vshrl.u32 %v3115, 7
        %v3117 = vsub.s32 0, %v3116
        %v3118 = vrot.slane %v3086, %v3117
        %v3120 = vadd.f32 %v3113, %v3118
        %v3121 = vld [vmem:[#allocation16] sm:$0xff]
        %v3122 = vld [vmem:[#allocation16 + $0x8] sm:$0xff]
        %v3123 = vld [vmem:[#allocation16 + $0x10] sm:$0xff]
        %v3124 = vld [vmem:[#allocation16 + $0x18] sm:$0xff]
        %v3125 = vld [vmem:[#allocation17] sm:$0x1]
        %v3127 = vlaneseq
        %v3128 = vshrl.u32 %v3127, 7
        %v3129 = vsub.s32 0, %v3128
        %v3130 = vrot.slane %v3125, %v3129
        %v3133 = vsel %vm1011, %v3120, 0
        %3135 = vmatprep.subr.mxu0 0.0
        %3136 = vmatpush1.msra.mxu0 0.0
        %3137 = vmatprep.subr.mxu0 0.0
        %3138 = vmatpush1.msra.mxu0 0.0
        %3139 = vmatprep.subr.mxu0 0.0
        %3140 = vmatpush1.msra.mxu0 0.0
        %3141 = vmatprep.subr.mxu0 0.0
        %3142 = vmatpush1.msra.mxu0 0.0
        %3143 = vmatprep.subr.mxu0 0.0
        %3144 = vmatpush1.msra.mxu0 0.0
        %3145 = vmatprep.subr.mxu0 0.0
        %3146 = vmatpush1.msra.mxu0 0.0
        %3147 = vmatprep.subr.mxu0 0.0
        %3148 = vmatpush1.msra.mxu0 0.0
        %3149 = vmatprep.subr.mxu0 0.0
        %3150 = vmatpush1.msra.mxu0 0.0
        %3151 = vmatprep.subr.mxu0 0.0
        %3152 = vmatpush1.msra.mxu0 0.0
        %3153 = vmatprep.subr.mxu0 0.0
        %3154 = vmatpush1.msra.mxu0 0.0
        %3155 = vmatprep.subr.mxu0 0.0
        %3156 = vmatpush1.msra.mxu0 0.0
        %3157 = vmatprep.subr.mxu0 0.0
        %3158 = vmatpush1.msra.mxu0 0.0
        %3159 = vmatprep.subr.mxu0 0.0
        %3160 = vmatpush1.msra.mxu0 %v3124
        %3161 = vmatprep.subr.mxu0 0.0
        %3162 = vmatpush1.msra.mxu0 %v3123
        %3163 = vmatprep.subr.mxu0 0.0
        %3164 = vmatpush1.msra.mxu0 %v3122
        %3165 = vmatprep.subr.mxu0 0.0
        %3166 = vmatpush1.msra.mxu0 %v3121
        %3167 = vmatprep.subr.mxu0 0.0
        %3168 = vmatpush2.msra.mxu0 0.0
        %3169 = vmatprep.subr.mxu0 0.0
        %3170 = vmatpush2.msra.mxu0 0.0
        %3171 = vmatprep.subr.mxu0 0.0
        %3172 = vmatpush2.msra.mxu0 0.0
        %3173 = vmatprep.subr.mxu0 0.0
        %3174 = vmatpush2.msra.mxu0 0.0
        %3175 = vmatprep.subr.mxu0 0.0
        %3176 = vmatpush2.msra.mxu0 0.0
        %3177 = vmatprep.subr.mxu0 0.0
        %3178 = vmatpush2.msra.mxu0 0.0
        %3179 = vmatprep.subr.mxu0 0.0
        %3180 = vmatpush2.msra.mxu0 0.0
        %3181 = vmatprep.subr.mxu0 0.0
        %3182 = vmatpush2.msra.mxu0 0.0
        %3183 = vmatprep.subr.mxu0 0.0
        %3184 = vmatpush2.msra.mxu0 0.0
        %3185 = vmatprep.subr.mxu0 0.0
        %3186 = vmatpush2.msra.mxu0 0.0
        %3187 = vmatprep.subr.mxu0 0.0
        %3188 = vmatpush2.msra.mxu0 0.0
        %3189 = vmatprep.subr.mxu0 0.0
        %3190 = vmatpush2.msra.mxu0 0.0
        %3191 = vmatprep.subr.mxu0 0.0
        %3192 = vmatpush2.msra.mxu0 0.0
        %3193 = vmatprep.subr.mxu0 0.0
        %3194 = vmatpush2.msra.mxu0 0.0
        %3195 = vmatprep.subr.mxu0 0.0
        %3196 = vmatpush2.msra.mxu0 0.0
        %3197 = vmatprep.subr.mxu0 0.0
        %3198 = vmatpush2.msra.mxu0 0.0
        %3199 = vmatprep.mubr.f32.mxu0 0.0
        %3200 = vmatmul.mubr.f32.gmra.mxu0 %v3133
        %v3201 = vpop.f32.mrf.mxu0
        %v3202 = vadd.f32 %v3130, %v3201
        %v3203 = vpop.f32.mrf.mxu0
        %3204 = vdwg.mxu0
        %v3205 = vmax.f32 %v3202, 0.0
        %v3206 = vld [vmem:[%s18] sm:$0xff]
        %v3207 = vld [vmem:[%s18 + $0x8] sm:$0xff]
        %v3208 = vld [vmem:[%s18 + $0x10] sm:$0xff]
        %v3209 = vld [vmem:[%s18 + $0x18] sm:$0xff]
        %v3210 = vld [vmem:[%s18 + $0x20] sm:$0xff]
        %v3211 = vld [vmem:[%s18 + $0x28] sm:$0xff]
        %v3212 = vld [vmem:[%s18 + $0x30] sm:$0xff]
        %v3213 = vld [vmem:[%s18 + $0x38] sm:$0xff]
        %v3214 = vld [vmem:[#allocation19] sm:$0x1]
        %v3216 = vlaneseq
        %v3217 = vshrl.u32 %v3216, 7
        %v3218 = vsub.s32 0, %v3217
        %v3219 = vrot.slane %v3214, %v3218
        %vm3221 = vcmask 523264
        %v3223 = vsel %vm3221, %v3205, 0
        %3225 = vmatprep.subr.mxu0 0.0
        %3226 = vmatpush1.msra.mxu0 0.0
        %3227 = vmatprep.subr.mxu0 0.0
        %3228 = vmatpush1.msra.mxu0 0.0
        %3229 = vmatprep.subr.mxu0 0.0
        %3230 = vmatpush1.msra.mxu0 0.0
        %3231 = vmatprep.subr.mxu0 0.0
        %3232 = vmatpush1.msra.mxu0 0.0
        %3233 = vmatprep.subr.mxu0 0.0
        %3234 = vmatpush1.msra.mxu0 0.0
        %3235 = vmatprep.subr.mxu0 0.0
        %3236 = vmatpush1.msra.mxu0 0.0
        %3237 = vmatprep.subr.mxu0 0.0
        %3238 = vmatpush1.msra.mxu0 0.0
        %3239 = vmatprep.subr.mxu0 0.0
        %3240 = vmatpush1.msra.mxu0 0.0
        %3241 = vmatprep.subr.mxu0 0.0
        %3242 = vmatpush1.msra.mxu0 %v3213
        %3243 = vmatprep.subr.mxu0 0.0
        %3244 = vmatpush1.msra.mxu0 %v3212
        %3245 = vmatprep.subr.mxu0 0.0
        %3246 = vmatpush1.msra.mxu0 %v3211
        %3247 = vmatprep.subr.mxu0 0.0
        %3248 = vmatpush1.msra.mxu0 %v3210
        %3249 = vmatprep.subr.mxu0 0.0
        %3250 = vmatpush1.msra.mxu0 %v3209
        %3251 = vmatprep.subr.mxu0 0.0
        %3252 = vmatpush1.msra.mxu0 %v3208
        %3253 = vmatprep.subr.mxu0 0.0
        %3254 = vmatpush1.msra.mxu0 %v3207
        %3255 = vmatprep.subr.mxu0 0.0
        %3256 = vmatpush1.msra.mxu0 %v3206
        %3257 = vmatprep.subr.mxu0 0.0
        %3258 = vmatpush2.msra.mxu0 0.0
        %3259 = vmatprep.subr.mxu0 0.0
        %3260 = vmatpush2.msra.mxu0 0.0
        %3261 = vmatprep.subr.mxu0 0.0
        %3262 = vmatpush2.msra.mxu0 0.0
        %3263 = vmatprep.subr.mxu0 0.0
        %3264 = vmatpush2.msra.mxu0 0.0
        %3265 = vmatprep.subr.mxu0 0.0
        %3266 = vmatpush2.msra.mxu0 0.0
        %3267 = vmatprep.subr.mxu0 0.0
        %3268 = vmatpush2.msra.mxu0 0.0
        %3269 = vmatprep.subr.mxu0 0.0
        %3270 = vmatpush2.msra.mxu0 0.0
        %3271 = vmatprep.subr.mxu0 0.0
        %3272 = vmatpush2.msra.mxu0 0.0
        %3273 = vmatprep.subr.mxu0 0.0
        %3274 = vmatpush2.msra.mxu0 0.0
        %3275 = vmatprep.subr.mxu0 0.0
        %3276 = vmatpush2.msra.mxu0 0.0
        %3277 = vmatprep.subr.mxu0 0.0
        %3278 = vmatpush2.msra.mxu0 0.0
        %3279 = vmatprep.subr.mxu0 0.0
        %3280 = vmatpush2.msra.mxu0 0.0
        %3281 = vmatprep.subr.mxu0 0.0
        %3282 = vmatpush2.msra.mxu0 0.0
        %3283 = vmatprep.subr.mxu0 0.0
        %3284 = vmatpush2.msra.mxu0 0.0
        %3285 = vmatprep.subr.mxu0 0.0
        %3286 = vmatpush2.msra.mxu0 0.0
        %3287 = vmatprep.subr.mxu0 0.0
        %3288 = vmatpush2.msra.mxu0 0.0
        %3289 = vmatprep.mubr.f32.mxu0 0.0
        %3290 = vmatmul.mubr.f32.gmra.mxu0 %v3223
        %v3291 = vpop.f32.mrf.mxu0
        %v3292 = vadd.f32 %v3219, %v3291
        %v3293 = vpop.f32.mrf.mxu0
        %3294 = vdwg.mxu0
        %v3295 = vadd.f32 %v3082, %v3292
        %s3296 = scalar_lea.vmem [#allocation5], 3
        %v3297 = vld [vmem:[%s3296] sm:$0x1]
        %s3298 = scalar_lea.vmem [#allocation7], 3
        %v3299 = vld [vmem:[%s3298] sm:$0x1]
        %v3300 = vsel %vm1011, %v3295, 0.0
        %3301 = vadd.xlane.f32.xlu0 %v3300
        %v3302 = vpop.xlane.xlu0 %3301
        %v3303 = vmul.f32 %v3302, %v1015
        %v3304 = vsub.f32 %v3295, %v3303
        %v3305 = vmul.f32 %v3304, %v3304
        %v3306 = vsel %vm1011, %v3305, 0.0
        %3307 = vadd.xlane.f32.xlu0 %v3306
        %v3308 = vpop.xlane.xlu0 %3307
        %v3309 = vmul.f32 %v3308, 0.032258064
        %v3310 = vrsqrt.pop %v3309
        %v3311 = vmul.f32 %v3309, %v3310
        %vm3312 = vcmp.eq.f32.partialorder %v3309, inf
        %v3313 = vsel %vm3312, %v3309, %v3311
        %vm3314 = vcmp.eq.f32.partialorder %v3309, 0.0
        %v3315 = vand.u32 %v3309, 2147483648
        %v3316 = vsel %vm3314, %v3315, %v3313
        %v3317 = vadd.f32 %v3316, 1e-06
        %v3318 = vrcp.pop %v3317
        %v3319 = vmul.f32 %v3304, %v3318
        %v3321 = vlaneseq
        %v3322 = vshrl.u32 %v3321, 7
        %v3323 = vsub.s32 0, %v3322
        %v3324 = vrot.slane %v3297, %v3323
        %v3326 = vmul.f32 %v3324, %v3319
        %v3328 = vlaneseq
        %v3329 = vshrl.u32 %v3328, 7
        %v3330 = vsub.s32 0, %v3329
        %v3331 = vrot.slane %v3299, %v3330
        %v3333 = vadd.f32 %v3326, %v3331
        %s3334 = scalar_lea.vmem %s8, 64
        %v3335 = vld [vmem:[%s3334] sm:$0xff]
        %v3336 = vld [vmem:[%s3334 + $0x8] sm:$0xff]
        %v3337 = vld [vmem:[%s3334 + $0x10] sm:$0xff]
        %v3338 = vld [vmem:[%s3334 + $0x18] sm:$0xff]
        %s3339 = scalar_lea.vmem [#allocation8], 2
        %v3340 = vld [vmem:[%s3339] sm:$0x1]
        %v3342 = vlaneseq
        %v3343 = vshrl.u32 %v3342, 7
        %v3344 = vsub.s32 0, %v3343
        %v3345 = vrot.slane %v3340, %v3344
        %v3348 = vsel %vm1011, %v3333, 0
        %3350 = vmatprep.subr.mxu0 0.0
        %3351 = vmatpush1.msra.mxu0 0.0
        %3352 = vmatprep.subr.mxu0 0.0
        %3353 = vmatpush1.msra.mxu0 0.0
        %3354 = vmatprep.subr.mxu0 0.0
        %3355 = vmatpush1.msra.mxu0 0.0
        %3356 = vmatprep.subr.mxu0 0.0
        %3357 = vmatpush1.msra.mxu0 0.0
        %3358 = vmatprep.subr.mxu0 0.0
        %3359 = vmatpush1.msra.mxu0 0.0
        %3360 = vmatprep.subr.mxu0 0.0
        %3361 = vmatpush1.msra.mxu0 0.0
        %3362 = vmatprep.subr.mxu0 0.0
        %3363 = vmatpush1.msra.mxu0 0.0
        %3364 = vmatprep.subr.mxu0 0.0
        %3365 = vmatpush1.msra.mxu0 0.0
        %3366 = vmatprep.subr.mxu0 0.0
        %3367 = vmatpush1.msra.mxu0 0.0
        %3368 = vmatprep.subr.mxu0 0.0
        %3369 = vmatpush1.msra.mxu0 0.0
        %3370 = vmatprep.subr.mxu0 0.0
        %3371 = vmatpush1.msra.mxu0 0.0
        %3372 = vmatprep.subr.mxu0 0.0
        %3373 = vmatpush1.msra.mxu0 0.0
        %3374 = vmatprep.subr.mxu0 0.0
        %3375 = vmatpush1.msra.mxu0 %v3338
        %3376 = vmatprep.subr.mxu0 0.0
        %3377 = vmatpush1.msra.mxu0 %v3337
        %3378 = vmatprep.subr.mxu0 0.0
        %3379 = vmatpush1.msra.mxu0 %v3336
        %3380 = vmatprep.subr.mxu0 0.0
        %3381 = vmatpush1.msra.mxu0 %v3335
        %3382 = vmatprep.subr.mxu0 0.0
        %3383 = vmatpush2.msra.mxu0 0.0
        %3384 = vmatprep.subr.mxu0 0.0
        %3385 = vmatpush2.msra.mxu0 0.0
        %3386 = vmatprep.subr.mxu0 0.0
        %3387 = vmatpush2.msra.mxu0 0.0
        %3388 = vmatprep.subr.mxu0 0.0
        %3389 = vmatpush2.msra.mxu0 0.0
        %3390 = vmatprep.subr.mxu0 0.0
        %3391 = vmatpush2.msra.mxu0 0.0
        %3392 = vmatprep.subr.mxu0 0.0
        %3393 = vmatpush2.msra.mxu0 0.0
        %3394 = vmatprep.subr.mxu0 0.0
        %3395 = vmatpush2.msra.mxu0 0.0
        %3396 = vmatprep.subr.mxu0 0.0
        %3397 = vmatpush2.msra.mxu0 0.0
        %3398 = vmatprep.subr.mxu0 0.0
        %3399 = vmatpush2.msra.mxu0 0.0
        %3400 = vmatprep.subr.mxu0 0.0
        %3401 = vmatpush2.msra.mxu0 0.0
        %3402 = vmatprep.subr.mxu0 0.0
        %3403 = vmatpush2.msra.mxu0 0.0
        %3404 = vmatprep.subr.mxu0 0.0
        %3405 = vmatpush2.msra.mxu0 0.0
        %3406 = vmatprep.subr.mxu0 0.0
        %3407 = vmatpush2.msra.mxu0 0.0
        %3408 = vmatprep.subr.mxu0 0.0
        %3409 = vmatpush2.msra.mxu0 0.0
        %3410 = vmatprep.subr.mxu0 0.0
        %3411 = vmatpush2.msra.mxu0 0.0
        %3412 = vmatprep.subr.mxu0 0.0
        %3413 = vmatpush2.msra.mxu0 0.0
        %3414 = vmatprep.mubr.f32.mxu0 0.0
        %3415 = vmatmul.mubr.f32.gmra.mxu0 %v3348
        %v3416 = vpop.f32.mrf.mxu0
        %v3417 = vadd.f32 %v3345, %v3416
        %v3418 = vpop.f32.mrf.mxu0
        %3419 = vdwg.mxu0
        %s3420 = scalar_lea.vmem %s10, 64
        %v3421 = vld [vmem:[%s3420] sm:$0xff]
        %v3422 = vld [vmem:[%s3420 + $0x8] sm:$0xff]
        %v3423 = vld [vmem:[%s3420 + $0x10] sm:$0xff]
        %v3424 = vld [vmem:[%s3420 + $0x18] sm:$0xff]
        %s3425 = scalar_lea.vmem [#allocation10], 2
        %v3426 = vld [vmem:[%s3425] sm:$0x1]
        %v3428 = vlaneseq
        %v3429 = vshrl.u32 %v3428, 7
        %v3430 = vsub.s32 0, %v3429
        %v3431 = vrot.slane %v3426, %v3430
        %3433 = vmatprep.subr.mxu0 0.0
        %3434 = vmatpush1.msra.mxu0 0.0
        %3435 = vmatprep.subr.mxu0 0.0
        %3436 = vmatpush1.msra.mxu0 0.0
        %3437 = vmatprep.subr.mxu0 0.0
        %3438 = vmatpush1.msra.mxu0 0.0
        %3439 = vmatprep.subr.mxu0 0.0
        %3440 = vmatpush1.msra.mxu0 0.0
        %3441 = vmatprep.subr.mxu0 0.0
        %3442 = vmatpush1.msra.mxu0 0.0
        %3443 = vmatprep.subr.mxu0 0.0
        %3444 = vmatpush1.msra.mxu0 0.0
        %3445 = vmatprep.subr.mxu0 0.0
        %3446 = vmatpush1.msra.mxu0 0.0
        %3447 = vmatprep.subr.mxu0 0.0
        %3448 = vmatpush1.msra.mxu0 0.0
        %3449 = vmatprep.subr.mxu0 0.0
        %3450 = vmatpush1.msra.mxu0 0.0
        %3451 = vmatprep.subr.mxu0 0.0
        %3452 = vmatpush1.msra.mxu0 0.0
        %3453 = vmatprep.subr.mxu0 0.0
        %3454 = vmatpush1.msra.mxu0 0.0
        %3455 = vmatprep.subr.mxu0 0.0
        %3456 = vmatpush1.msra.mxu0 0.0
        %3457 = vmatprep.subr.mxu0 0.0
        %3458 = vmatpush1.msra.mxu0 %v3424
        %3459 = vmatprep.subr.mxu0 0.0
        %3460 = vmatpush1.msra.mxu0 %v3423
        %3461 = vmatprep.subr.mxu0 0.0
        %3462 = vmatpush1.msra.mxu0 %v3422
        %3463 = vmatprep.subr.mxu0 0.0
        %3464 = vmatpush1.msra.mxu0 %v3421
        %3465 = vmatprep.subr.mxu0 0.0
        %3466 = vmatpush2.msra.mxu0 0.0
        %3467 = vmatprep.subr.mxu0 0.0
        %3468 = vmatpush2.msra.mxu0 0.0
        %3469 = vmatprep.subr.mxu0 0.0
        %3470 = vmatpush2.msra.mxu0 0.0
        %3471 = vmatprep.subr.mxu0 0.0
        %3472 = vmatpush2.msra.mxu0 0.0
        %3473 = vmatprep.subr.mxu0 0.0
        %3474 = vmatpush2.msra.mxu0 0.0
        %3475 = vmatprep.subr.mxu0 0.0
        %3476 = vmatpush2.msra.mxu0 0.0
        %3477 = vmatprep.subr.mxu0 0.0
        %3478 = vmatpush2.msra.mxu0 0.0
        %3479 = vmatprep.subr.mxu0 0.0
        %3480 = vmatpush2.msra.mxu0 0.0
        %3481 = vmatprep.subr.mxu0 0.0
        %3482 = vmatpush2.msra.mxu0 0.0
        %3483 = vmatprep.subr.mxu0 0.0
        %3484 = vmatpush2.msra.mxu0 0.0
        %3485 = vmatprep.subr.mxu0 0.0
        %3486 = vmatpush2.msra.mxu0 0.0
        %3487 = vmatprep.subr.mxu0 0.0
        %3488 = vmatpush2.msra.mxu0 0.0
        %3489 = vmatprep.subr.mxu0 0.0
        %3490 = vmatpush2.msra.mxu0 0.0
        %3491 = vmatprep.subr.mxu0 0.0
        %3492 = vmatpush2.msra.mxu0 0.0
        %3493 = vmatprep.subr.mxu0 0.0
        %3494 = vmatpush2.msra.mxu0 0.0
        %3495 = vmatprep.subr.mxu0 0.0
        %3496 = vmatpush2.msra.mxu0 0.0
        %3497 = vmatprep.mubr.f32.mxu0 0.0
        %3498 = vmatmul.mubr.f32.gmra.mxu0 %v3348
        %v3499 = vpop.f32.mrf.mxu0
        %v3500 = vadd.f32 %v3431, %v3499
        %v3501 = vpop.f32.mrf.mxu0
        %3502 = vdwg.mxu0
        %s3503 = scalar_lea.vmem %s12, 64
        %v3504 = vld [vmem:[%s3503] sm:$0xff]
        %v3505 = vld [vmem:[%s3503 + $0x8] sm:$0xff]
        %v3506 = vld [vmem:[%s3503 + $0x10] sm:$0xff]
        %v3507 = vld [vmem:[%s3503 + $0x18] sm:$0xff]
        %s3508 = scalar_lea.vmem [#allocation11], 2
        %v3509 = vld [vmem:[%s3508] sm:$0x1]
        %v3511 = vlaneseq
        %v3512 = vshrl.u32 %v3511, 7
        %v3513 = vsub.s32 0, %v3512
        %v3514 = vrot.slane %v3509, %v3513
        %3516 = vmatprep.subr.mxu0 0.0
        %3517 = vmatpush1.msra.mxu0 0.0
        %3518 = vmatprep.subr.mxu0 0.0
        %3519 = vmatpush1.msra.mxu0 0.0
        %3520 = vmatprep.subr.mxu0 0.0
        %3521 = vmatpush1.msra.mxu0 0.0
        %3522 = vmatprep.subr.mxu0 0.0
        %3523 = vmatpush1.msra.mxu0 0.0
        %3524 = vmatprep.subr.mxu0 0.0
        %3525 = vmatpush1.msra.mxu0 0.0
        %3526 = vmatprep.subr.mxu0 0.0
        %3527 = vmatpush1.msra.mxu0 0.0
        %3528 = vmatprep.subr.mxu0 0.0
        %3529 = vmatpush1.msra.mxu0 0.0
        %3530 = vmatprep.subr.mxu0 0.0
        %3531 = vmatpush1.msra.mxu0 0.0
        %3532 = vmatprep.subr.mxu0 0.0
        %3533 = vmatpush1.msra.mxu0 0.0
        %3534 = vmatprep.subr.mxu0 0.0
        %3535 = vmatpush1.msra.mxu0 0.0
        %3536 = vmatprep.subr.mxu0 0.0
        %3537 = vmatpush1.msra.mxu0 0.0
        %3538 = vmatprep.subr.mxu0 0.0
        %3539 = vmatpush1.msra.mxu0 0.0
        %3540 = vmatprep.subr.mxu0 0.0
        %3541 = vmatpush1.msra.mxu0 %v3507
        %3542 = vmatprep.subr.mxu0 0.0
        %3543 = vmatpush1.msra.mxu0 %v3506
        %3544 = vmatprep.subr.mxu0 0.0
        %3545 = vmatpush1.msra.mxu0 %v3505
        %3546 = vmatprep.subr.mxu0 0.0
        %3547 = vmatpush1.msra.mxu0 %v3504
        %3548 = vmatprep.subr.mxu0 0.0
        %3549 = vmatpush2.msra.mxu0 0.0
        %3550 = vmatprep.subr.mxu0 0.0
        %3551 = vmatpush2.msra.mxu0 0.0
        %3552 = vmatprep.subr.mxu0 0.0
        %3553 = vmatpush2.msra.mxu0 0.0
        %3554 = vmatprep.subr.mxu0 0.0
        %3555 = vmatpush2.msra.mxu0 0.0
        %3556 = vmatprep.subr.mxu0 0.0
        %3557 = vmatpush2.msra.mxu0 0.0
        %3558 = vmatprep.subr.mxu0 0.0
        %3559 = vmatpush2.msra.mxu0 0.0
        %3560 = vmatprep.subr.mxu0 0.0
        %3561 = vmatpush2.msra.mxu0 0.0
        %3562 = vmatprep.subr.mxu0 0.0
        %3563 = vmatpush2.msra.mxu0 0.0
        %3564 = vmatprep.subr.mxu0 0.0
        %3565 = vmatpush2.msra.mxu0 0.0
        %3566 = vmatprep.subr.mxu0 0.0
        %3567 = vmatpush2.msra.mxu0 0.0
        %3568 = vmatprep.subr.mxu0 0.0
        %3569 = vmatpush2.msra.mxu0 0.0
        %3570 = vmatprep.subr.mxu0 0.0
        %3571 = vmatpush2.msra.mxu0 0.0
        %3572 = vmatprep.subr.mxu0 0.0
        %3573 = vmatpush2.msra.mxu0 0.0
        %3574 = vmatprep.subr.mxu0 0.0
        %3575 = vmatpush2.msra.mxu0 0.0
        %3576 = vmatprep.subr.mxu0 0.0
        %3577 = vmatpush2.msra.mxu0 0.0
        %3578 = vmatprep.subr.mxu0 0.0
        %3579 = vmatpush2.msra.mxu0 0.0
        %3580 = vmatprep.mubr.f32.mxu0 0.0
        %3581 = vmatmul.mubr.f32.gmra.mxu0 %v3348
        %v3582 = vpop.f32.mrf.mxu0
        %v3583 = vadd.f32 %v3514, %v3582
        %v3584 = vpop.f32.mrf.mxu0
        %3585 = vdwg.mxu0
        %v3586 = vmul.f32 %v3500, %v1297
        %v3588 = vsel %vm1011, %v3417, 0
        %v3591 = vsel %vm1011, %v3586, 0
        %3593 = vmatprep.subr.mxu0 0.0
        %3594 = vmatpush1.xpose.msra.mxu0 0.0
        %3595 = vmatprep.subr.mxu0 0.0
        %3596 = vmatpush1.xpose.msra.mxu0 0.0
        %3597 = vmatprep.subr.mxu0 0.0
        %3598 = vmatpush1.xpose.msra.mxu0 0.0
        %3599 = vmatprep.subr.mxu0 0.0
        %3600 = vmatpush1.xpose.msra.mxu0 0.0
        %3601 = vmatprep.subr.mxu0 0.0
        %3602 = vmatpush1.xpose.msra.mxu0 0.0
        %3603 = vmatprep.subr.mxu0 0.0
        %3604 = vmatpush1.xpose.msra.mxu0 0.0
        %3605 = vmatprep.subr.mxu0 0.0
        %3606 = vmatpush1.xpose.msra.mxu0 0.0
        %3607 = vmatprep.subr.mxu0 0.0
        %3608 = vmatpush1.xpose.msra.mxu0 0.0
        %3609 = vmatprep.subr.mxu0 0.0
        %3610 = vmatpush1.xpose.msra.mxu0 0.0
        %3611 = vmatprep.subr.mxu0 0.0
        %3612 = vmatpush1.xpose.msra.mxu0 0.0
        %3613 = vmatprep.subr.mxu0 0.0
        %3614 = vmatpush1.xpose.msra.mxu0 0.0
        %3615 = vmatprep.subr.mxu0 0.0
        %3616 = vmatpush1.xpose.msra.mxu0 0.0
        %3617 = vmatprep.subr.mxu0 0.0
        %3618 = vmatpush1.xpose.msra.mxu0 0.0
        %3619 = vmatprep.subr.mxu0 0.0
        %3620 = vmatpush1.xpose.msra.mxu0 0.0
        %3621 = vmatprep.subr.mxu0 0.0
        %3622 = vmatpush1.xpose.msra.mxu0 0.0
        %3623 = vmatprep.subr.mxu0 0.0
        %3624 = vmatpush1.xpose.msra.mxu0 %v3591
        %3625 = vmatprep.subr.mxu0 0.0
        %3626 = vmatpush2.xpose.msra.mxu0 0.0
        %3627 = vmatprep.subr.mxu0 0.0
        %3628 = vmatpush2.xpose.msra.mxu0 0.0
        %3629 = vmatprep.subr.mxu0 0.0
        %3630 = vmatpush2.xpose.msra.mxu0 0.0
        %3631 = vmatprep.subr.mxu0 0.0
        %3632 = vmatpush2.xpose.msra.mxu0 0.0
        %3633 = vmatprep.subr.mxu0 0.0
        %3634 = vmatpush2.xpose.msra.mxu0 0.0
        %3635 = vmatprep.subr.mxu0 0.0
        %3636 = vmatpush2.xpose.msra.mxu0 0.0
        %3637 = vmatprep.subr.mxu0 0.0
        %3638 = vmatpush2.xpose.msra.mxu0 0.0
        %3639 = vmatprep.subr.mxu0 0.0
        %3640 = vmatpush2.xpose.msra.mxu0 0.0
        %3641 = vmatprep.subr.mxu0 0.0
        %3642 = vmatpush2.xpose.msra.mxu0 0.0
        %3643 = vmatprep.subr.mxu0 0.0
        %3644 = vmatpush2.xpose.msra.mxu0 0.0
        %3645 = vmatprep.subr.mxu0 0.0
        %3646 = vmatpush2.xpose.msra.mxu0 0.0
        %3647 = vmatprep.subr.mxu0 0.0
        %3648 = vmatpush2.xpose.msra.mxu0 0.0
        %3649 = vmatprep.subr.mxu0 0.0
        %3650 = vmatpush2.xpose.msra.mxu0 0.0
        %3651 = vmatprep.subr.mxu0 0.0
        %3652 = vmatpush2.xpose.msra.mxu0 0.0
        %3653 = vmatprep.subr.mxu0 0.0
        %3654 = vmatpush2.xpose.msra.mxu0 0.0
        %3655 = vmatprep.subr.mxu0 0.0
        %3656 = vmatpush2.xpose.msra.mxu0 0.0
        %3657 = vmatprep.mubr.f32.mxu0 0.0
        %3658 = vmatmul.mubr.f32.gmra.mxu0 %v3588
        %v3659 = vpop.f32.mrf.mxu0
        %v3660 = vadd.f32 0.0, %v3659
        %v3661 = vpop.f32.mrf.mxu0
        %3662 = vdwg.mxu0
        %v3663 = vmul.f32 %v3660, 0.35355338
        %v3664 = vadd.f32 %v3663, %v1005
        %v3665 = vsel %vm1377, %v3664, -inf
        %3666 = vmax.xlane.f32.xlu0 %v3665
        %v3667 = vpop.xlane.xlu0 %3666
        %v3668 = vsub.f32 %v3664, %v3667
        %v3669 = vmul.f32 %v3668, 1.442695
        %v3670 = vpow.pop %v3669
        %v3671 = vsel %vm1377, %v3670, 0.0
        %3672 = vadd.xlane.f32.xlu0 %v3671
        %v3673 = vpop.xlane.xlu0 %3672
        %v3674 = vrcp.pop %v3673
        %v3675 = vmul.f32 %v3670, %v3674
        %v3676 = vmul.f32 %v3583, %v1297
        %v3677 = vmul.f32 %v3500, %v1394
        %v3679 = vsel %vm1011, %v3677, 0
        %3681 = vmatprep.subr.mxu0 0.0
        %3682 = vmatpush1.xpose.msra.mxu0 0.0
        %3683 = vmatprep.subr.mxu0 0.0
        %3684 = vmatpush1.xpose.msra.mxu0 0.0
        %3685 = vmatprep.subr.mxu0 0.0
        %3686 = vmatpush1.xpose.msra.mxu0 0.0
        %3687 = vmatprep.subr.mxu0 0.0
        %3688 = vmatpush1.xpose.msra.mxu0 0.0
        %3689 = vmatprep.subr.mxu0 0.0
        %3690 = vmatpush1.xpose.msra.mxu0 0.0
        %3691 = vmatprep.subr.mxu0 0.0
        %3692 = vmatpush1.xpose.msra.mxu0 0.0
        %3693 = vmatprep.subr.mxu0 0.0
        %3694 = vmatpush1.xpose.msra.mxu0 0.0
        %3695 = vmatprep.subr.mxu0 0.0
        %3696 = vmatpush1.xpose.msra.mxu0 0.0
        %3697 = vmatprep.subr.mxu0 0.0
        %3698 = vmatpush1.xpose.msra.mxu0 0.0
        %3699 = vmatprep.subr.mxu0 0.0
        %3700 = vmatpush1.xpose.msra.mxu0 0.0
        %3701 = vmatprep.subr.mxu0 0.0
        %3702 = vmatpush1.xpose.msra.mxu0 0.0
        %3703 = vmatprep.subr.mxu0 0.0
        %3704 = vmatpush1.xpose.msra.mxu0 0.0
        %3705 = vmatprep.subr.mxu0 0.0
        %3706 = vmatpush1.xpose.msra.mxu0 0.0
        %3707 = vmatprep.subr.mxu0 0.0
        %3708 = vmatpush1.xpose.msra.mxu0 0.0
        %3709 = vmatprep.subr.mxu0 0.0
        %3710 = vmatpush1.xpose.msra.mxu0 0.0
        %3711 = vmatprep.subr.mxu0 0.0
        %3712 = vmatpush1.xpose.msra.mxu0 %v3679
        %3713 = vmatprep.subr.mxu0 0.0
        %3714 = vmatpush2.xpose.msra.mxu0 0.0
        %3715 = vmatprep.subr.mxu0 0.0
        %3716 = vmatpush2.xpose.msra.mxu0 0.0
        %3717 = vmatprep.subr.mxu0 0.0
        %3718 = vmatpush2.xpose.msra.mxu0 0.0
        %3719 = vmatprep.subr.mxu0 0.0
        %3720 = vmatpush2.xpose.msra.mxu0 0.0
        %3721 = vmatprep.subr.mxu0 0.0
        %3722 = vmatpush2.xpose.msra.mxu0 0.0
        %3723 = vmatprep.subr.mxu0 0.0
        %3724 = vmatpush2.xpose.msra.mxu0 0.0
        %3725 = vmatprep.subr.mxu0 0.0
        %3726 = vmatpush2.xpose.msra.mxu0 0.0
        %3727 = vmatprep.subr.mxu0 0.0
        %3728 = vmatpush2.xpose.msra.mxu0 0.0
        %3729 = vmatprep.subr.mxu0 0.0
        %3730 = vmatpush2.xpose.msra.mxu0 0.0
        %3731 = vmatprep.subr.mxu0 0.0
        %3732 = vmatpush2.xpose.msra.mxu0 0.0
        %3733 = vmatprep.subr.mxu0 0.0
        %3734 = vmatpush2.xpose.msra.mxu0 0.0
        %3735 = vmatprep.subr.mxu0 0.0
        %3736 = vmatpush2.xpose.msra.mxu0 0.0
        %3737 = vmatprep.subr.mxu0 0.0
        %3738 = vmatpush2.xpose.msra.mxu0 0.0
        %3739 = vmatprep.subr.mxu0 0.0
        %3740 = vmatpush2.xpose.msra.mxu0 0.0
        %3741 = vmatprep.subr.mxu0 0.0
        %3742 = vmatpush2.xpose.msra.mxu0 0.0
        %3743 = vmatprep.subr.mxu0 0.0
        %3744 = vmatpush2.xpose.msra.mxu0 0.0
        %3745 = vmatprep.mubr.f32.mxu0 0.0
        %3746 = vmatmul.mubr.f32.gmra.mxu0 %v3588
        %v3747 = vpop.f32.mrf.mxu0
        %v3748 = vadd.f32 0.0, %v3747
        %v3749 = vpop.f32.mrf.mxu0
        %3750 = vdwg.mxu0
        %v3751 = vmul.f32 %v3748, 0.35355338
        %v3752 = vadd.f32 %v3751, %v1005
        %v3753 = vsel %vm1377, %v3752, -inf
        %3754 = vmax.xlane.f32.xlu0 %v3753
        %v3755 = vpop.xlane.xlu0 %3754
        %v3756 = vsub.f32 %v3752, %v3755
        %v3757 = vmul.f32 %v3756, 1.442695
        %v3758 = vpow.pop %v3757
        %v3759 = vsel %vm1377, %v3758, 0.0
        %3760 = vadd.xlane.f32.xlu0 %v3759
        %v3761 = vpop.xlane.xlu0 %3760
        %v3762 = vrcp.pop %v3761
        %v3763 = vmul.f32 %v3758, %v3762
        %v3764 = vmul.f32 %v3583, %v1394
        %v3766 = vsel %vm1377, %v3763, 0
        %3768 = vmatprep.subr.mxu0 0.0
        %3769 = vmatpush1.msra.mxu0 0.0
        %3770 = vmatprep.subr.mxu0 0.0
        %3771 = vmatpush1.msra.mxu0 0.0
        %3772 = vmatprep.subr.mxu0 0.0
        %3773 = vmatpush1.msra.mxu0 0.0
        %3774 = vmatprep.subr.mxu0 0.0
        %3775 = vmatpush1.msra.mxu0 0.0
        %3776 = vmatprep.subr.mxu0 0.0
        %3777 = vmatpush1.msra.mxu0 0.0
        %3778 = vmatprep.subr.mxu0 0.0
        %3779 = vmatpush1.msra.mxu0 0.0
        %3780 = vmatprep.subr.mxu0 0.0
        %3781 = vmatpush1.msra.mxu0 0.0
        %3782 = vmatprep.subr.mxu0 0.0
        %3783 = vmatpush1.msra.mxu0 0.0
        %3784 = vmatprep.subr.mxu0 0.0
        %3785 = vmatpush1.msra.mxu0 0.0
        %3786 = vmatprep.subr.mxu0 0.0
        %3787 = vmatpush1.msra.mxu0 0.0
        %3788 = vmatprep.subr.mxu0 0.0
        %3789 = vmatpush1.msra.mxu0 0.0
        %3790 = vmatprep.subr.mxu0 0.0
        %3791 = vmatpush1.msra.mxu0 0.0
        %3792 = vmatprep.subr.mxu0 0.0
        %3793 = vmatpush1.msra.mxu0 0.0
        %3794 = vmatprep.subr.mxu0 0.0
        %3795 = vmatpush1.msra.mxu0 0.0
        %3796 = vmatprep.subr.mxu0 0.0
        %3797 = vmatpush1.msra.mxu0 0.0
        %3798 = vmatprep.subr.mxu0 0.0
        %3799 = vmatpush1.msra.mxu0 %v3764
        %3800 = vmatprep.subr.mxu0 0.0
        %3801 = vmatpush2.msra.mxu0 0.0
        %3802 = vmatprep.subr.mxu0 0.0
        %3803 = vmatpush2.msra.mxu0 0.0
        %3804 = vmatprep.subr.mxu0 0.0
        %3805 = vmatpush2.msra.mxu0 0.0
        %3806 = vmatprep.subr.mxu0 0.0
        %3807 = vmatpush2.msra.mxu0 0.0
        %3808 = vmatprep.subr.mxu0 0.0
        %3809 = vmatpush2.msra.mxu0 0.0
        %3810 = vmatprep.subr.mxu0 0.0
        %3811 = vmatpush2.msra.mxu0 0.0
        %3812 = vmatprep.subr.mxu0 0.0
        %3813 = vmatpush2.msra.mxu0 0.0
        %3814 = vmatprep.subr.mxu0 0.0
        %3815 = vmatpush2.msra.mxu0 0.0
        %3816 = vmatprep.subr.mxu0 0.0
        %3817 = vmatpush2.msra.mxu0 0.0
        %3818 = vmatprep.subr.mxu0 0.0
        %3819 = vmatpush2.msra.mxu0 0.0
        %3820 = vmatprep.subr.mxu0 0.0
        %3821 = vmatpush2.msra.mxu0 0.0
        %3822 = vmatprep.subr.mxu0 0.0
        %3823 = vmatpush2.msra.mxu0 0.0
        %3824 = vmatprep.subr.mxu0 0.0
        %3825 = vmatpush2.msra.mxu0 0.0
        %3826 = vmatprep.subr.mxu0 0.0
        %3827 = vmatpush2.msra.mxu0 0.0
        %3828 = vmatprep.subr.mxu0 0.0
        %3829 = vmatpush2.msra.mxu0 0.0
        %3830 = vmatprep.subr.mxu0 0.0
        %3831 = vmatpush2.msra.mxu0 0.0
        %3832 = vmatprep.mubr.f32.mxu0 0.0
        %3833 = vmatmul.mubr.f32.gmra.mxu0 %v3766
        %v3834 = vpop.f32.mrf.mxu0
        %v3835 = vadd.f32 0.0, %v3834
        %v3836 = vpop.f32.mrf.mxu0
        %3837 = vdwg.mxu0
        %v3839 = vsel %vm1377, %v3675, 0
        %3841 = vmatprep.subr.mxu0 0.0
        %3842 = vmatpush1.msra.mxu0 0.0
        %3843 = vmatprep.subr.mxu0 0.0
        %3844 = vmatpush1.msra.mxu0 0.0
        %3845 = vmatprep.subr.mxu0 0.0
        %3846 = vmatpush1.msra.mxu0 0.0
        %3847 = vmatprep.subr.mxu0 0.0
        %3848 = vmatpush1.msra.mxu0 0.0
        %3849 = vmatprep.subr.mxu0 0.0
        %3850 = vmatpush1.msra.mxu0 0.0
        %3851 = vmatprep.subr.mxu0 0.0
        %3852 = vmatpush1.msra.mxu0 0.0
        %3853 = vmatprep.subr.mxu0 0.0
        %3854 = vmatpush1.msra.mxu0 0.0
        %3855 = vmatprep.subr.mxu0 0.0
        %3856 = vmatpush1.msra.mxu0 0.0
        %3857 = vmatprep.subr.mxu0 0.0
        %3858 = vmatpush1.msra.mxu0 0.0
        %3859 = vmatprep.subr.mxu0 0.0
        %3860 = vmatpush1.msra.mxu0 0.0
        %3861 = vmatprep.subr.mxu0 0.0
        %3862 = vmatpush1.msra.mxu0 0.0
        %3863 = vmatprep.subr.mxu0 0.0
        %3864 = vmatpush1.msra.mxu0 0.0
        %3865 = vmatprep.subr.mxu0 0.0
        %3866 = vmatpush1.msra.mxu0 0.0
        %3867 = vmatprep.subr.mxu0 0.0
        %3868 = vmatpush1.msra.mxu0 0.0
        %3869 = vmatprep.subr.mxu0 0.0
        %3870 = vmatpush1.msra.mxu0 0.0
        %3871 = vmatprep.subr.mxu0 0.0
        %3872 = vmatpush1.msra.mxu0 %v3676
        %3873 = vmatprep.subr.mxu0 0.0
        %3874 = vmatpush2.msra.mxu0 0.0
        %3875 = vmatprep.subr.mxu0 0.0
        %3876 = vmatpush2.msra.mxu0 0.0
        %3877 = vmatprep.subr.mxu0 0.0
        %3878 = vmatpush2.msra.mxu0 0.0
        %3879 = vmatprep.subr.mxu0 0.0
        %3880 = vmatpush2.msra.mxu0 0.0
        %3881 = vmatprep.subr.mxu0 0.0
        %3882 = vmatpush2.msra.mxu0 0.0
        %3883 = vmatprep.subr.mxu0 0.0
        %3884 = vmatpush2.msra.mxu0 0.0
        %3885 = vmatprep.subr.mxu0 0.0
        %3886 = vmatpush2.msra.mxu0 0.0
        %3887 = vmatprep.subr.mxu0 0.0
        %3888 = vmatpush2.msra.mxu0 0.0
        %3889 = vmatprep.subr.mxu0 0.0
        %3890 = vmatpush2.msra.mxu0 0.0
        %3891 = vmatprep.subr.mxu0 0.0
        %3892 = vmatpush2.msra.mxu0 0.0
        %3893 = vmatprep.subr.mxu0 0.0
        %3894 = vmatpush2.msra.mxu0 0.0
        %3895 = vmatprep.subr.mxu0 0.0
        %3896 = vmatpush2.msra.mxu0 0.0
        %3897 = vmatprep.subr.mxu0 0.0
        %3898 = vmatpush2.msra.mxu0 0.0
        %3899 = vmatprep.subr.mxu0 0.0
        %3900 = vmatpush2.msra.mxu0 0.0
        %3901 = vmatprep.subr.mxu0 0.0
        %3902 = vmatpush2.msra.mxu0 0.0
        %3903 = vmatprep.subr.mxu0 0.0
        %3904 = vmatpush2.msra.mxu0 0.0
        %3905 = vmatprep.mubr.f32.mxu0 0.0
        %3906 = vmatmul.mubr.f32.gmra.mxu0 %v3839
        %v3907 = vpop.f32.mrf.mxu0
        %v3908 = vadd.f32 %v3835, %v3907
        %v3909 = vpop.f32.mrf.mxu0
        %3910 = vdwg.mxu0
        %v3911 = vmul.f32 %v3500, %v1633
        %v3913 = vsel %vm1011, %v3911, 0
        %3915 = vmatprep.subr.mxu0 0.0
        %3916 = vmatpush1.xpose.msra.mxu0 0.0
        %3917 = vmatprep.subr.mxu0 0.0
        %3918 = vmatpush1.xpose.msra.mxu0 0.0
        %3919 = vmatprep.subr.mxu0 0.0
        %3920 = vmatpush1.xpose.msra.mxu0 0.0
        %3921 = vmatprep.subr.mxu0 0.0
        %3922 = vmatpush1.xpose.msra.mxu0 0.0
        %3923 = vmatprep.subr.mxu0 0.0
        %3924 = vmatpush1.xpose.msra.mxu0 0.0
        %3925 = vmatprep.subr.mxu0 0.0
        %3926 = vmatpush1.xpose.msra.mxu0 0.0
        %3927 = vmatprep.subr.mxu0 0.0
        %3928 = vmatpush1.xpose.msra.mxu0 0.0
        %3929 = vmatprep.subr.mxu0 0.0
        %3930 = vmatpush1.xpose.msra.mxu0 0.0
        %3931 = vmatprep.subr.mxu0 0.0
        %3932 = vmatpush1.xpose.msra.mxu0 0.0
        %3933 = vmatprep.subr.mxu0 0.0
        %3934 = vmatpush1.xpose.msra.mxu0 0.0
        %3935 = vmatprep.subr.mxu0 0.0
        %3936 = vmatpush1.xpose.msra.mxu0 0.0
        %3937 = vmatprep.subr.mxu0 0.0
        %3938 = vmatpush1.xpose.msra.mxu0 0.0
        %3939 = vmatprep.subr.mxu0 0.0
        %3940 = vmatpush1.xpose.msra.mxu0 0.0
        %3941 = vmatprep.subr.mxu0 0.0
        %3942 = vmatpush1.xpose.msra.mxu0 0.0
        %3943 = vmatprep.subr.mxu0 0.0
        %3944 = vmatpush1.xpose.msra.mxu0 0.0
        %3945 = vmatprep.subr.mxu0 0.0
        %3946 = vmatpush1.xpose.msra.mxu0 %v3913
        %3947 = vmatprep.subr.mxu0 0.0
        %3948 = vmatpush2.xpose.msra.mxu0 0.0
        %3949 = vmatprep.subr.mxu0 0.0
        %3950 = vmatpush2.xpose.msra.mxu0 0.0
        %3951 = vmatprep.subr.mxu0 0.0
        %3952 = vmatpush2.xpose.msra.mxu0 0.0
        %3953 = vmatprep.subr.mxu0 0.0
        %3954 = vmatpush2.xpose.msra.mxu0 0.0
        %3955 = vmatprep.subr.mxu0 0.0
        %3956 = vmatpush2.xpose.msra.mxu0 0.0
        %3957 = vmatprep.subr.mxu0 0.0
        %3958 = vmatpush2.xpose.msra.mxu0 0.0
        %3959 = vmatprep.subr.mxu0 0.0
        %3960 = vmatpush2.xpose.msra.mxu0 0.0
        %3961 = vmatprep.subr.mxu0 0.0
        %3962 = vmatpush2.xpose.msra.mxu0 0.0
        %3963 = vmatprep.subr.mxu0 0.0
        %3964 = vmatpush2.xpose.msra.mxu0 0.0
        %3965 = vmatprep.subr.mxu0 0.0
        %3966 = vmatpush2.xpose.msra.mxu0 0.0
        %3967 = vmatprep.subr.mxu0 0.0
        %3968 = vmatpush2.xpose.msra.mxu0 0.0
        %3969 = vmatprep.subr.mxu0 0.0
        %3970 = vmatpush2.xpose.msra.mxu0 0.0
        %3971 = vmatprep.subr.mxu0 0.0
        %3972 = vmatpush2.xpose.msra.mxu0 0.0
        %3973 = vmatprep.subr.mxu0 0.0
        %3974 = vmatpush2.xpose.msra.mxu0 0.0
        %3975 = vmatprep.subr.mxu0 0.0
        %3976 = vmatpush2.xpose.msra.mxu0 0.0
        %3977 = vmatprep.subr.mxu0 0.0
        %3978 = vmatpush2.xpose.msra.mxu0 0.0
        %3979 = vmatprep.mubr.f32.mxu0 0.0
        %3980 = vmatmul.mubr.f32.gmra.mxu0 %v3588
        %v3981 = vpop.f32.mrf.mxu0
        %v3982 = vadd.f32 0.0, %v3981
        %v3983 = vpop.f32.mrf.mxu0
        %3984 = vdwg.mxu0
        %v3985 = vmul.f32 %v3982, 0.35355338
        %v3986 = vadd.f32 %v3985, %v1005
        %v3987 = vsel %vm1377, %v3986, -inf
        %3988 = vmax.xlane.f32.xlu0 %v3987
        %v3989 = vpop.xlane.xlu0 %3988
        %v3990 = vsub.f32 %v3986, %v3989
        %v3991 = vmul.f32 %v3990, 1.442695
        %v3992 = vpow.pop %v3991
        %v3993 = vsel %vm1377, %v3992, 0.0
        %3994 = vadd.xlane.f32.xlu0 %v3993
        %v3995 = vpop.xlane.xlu0 %3994
        %v3996 = vrcp.pop %v3995
        %v3997 = vmul.f32 %v3992, %v3996
        %v3998 = vmul.f32 %v3583, %v1633
        %v4000 = vsel %vm1377, %v3997, 0
        %4002 = vmatprep.subr.mxu0 0.0
        %4003 = vmatpush1.msra.mxu0 0.0
        %4004 = vmatprep.subr.mxu0 0.0
        %4005 = vmatpush1.msra.mxu0 0.0
        %4006 = vmatprep.subr.mxu0 0.0
        %4007 = vmatpush1.msra.mxu0 0.0
        %4008 = vmatprep.subr.mxu0 0.0
        %4009 = vmatpush1.msra.mxu0 0.0
        %4010 = vmatprep.subr.mxu0 0.0
        %4011 = vmatpush1.msra.mxu0 0.0
        %4012 = vmatprep.subr.mxu0 0.0
        %4013 = vmatpush1.msra.mxu0 0.0
        %4014 = vmatprep.subr.mxu0 0.0
        %4015 = vmatpush1.msra.mxu0 0.0
        %4016 = vmatprep.subr.mxu0 0.0
        %4017 = vmatpush1.msra.mxu0 0.0
        %4018 = vmatprep.subr.mxu0 0.0
        %4019 = vmatpush1.msra.mxu0 0.0
        %4020 = vmatprep.subr.mxu0 0.0
        %4021 = vmatpush1.msra.mxu0 0.0
        %4022 = vmatprep.subr.mxu0 0.0
        %4023 = vmatpush1.msra.mxu0 0.0
        %4024 = vmatprep.subr.mxu0 0.0
        %4025 = vmatpush1.msra.mxu0 0.0
        %4026 = vmatprep.subr.mxu0 0.0
        %4027 = vmatpush1.msra.mxu0 0.0
        %4028 = vmatprep.subr.mxu0 0.0
        %4029 = vmatpush1.msra.mxu0 0.0
        %4030 = vmatprep.subr.mxu0 0.0
        %4031 = vmatpush1.msra.mxu0 0.0
        %4032 = vmatprep.subr.mxu0 0.0
        %4033 = vmatpush1.msra.mxu0 %v3998
        %4034 = vmatprep.subr.mxu0 0.0
        %4035 = vmatpush2.msra.mxu0 0.0
        %4036 = vmatprep.subr.mxu0 0.0
        %4037 = vmatpush2.msra.mxu0 0.0
        %4038 = vmatprep.subr.mxu0 0.0
        %4039 = vmatpush2.msra.mxu0 0.0
        %4040 = vmatprep.subr.mxu0 0.0
        %4041 = vmatpush2.msra.mxu0 0.0
        %4042 = vmatprep.subr.mxu0 0.0
        %4043 = vmatpush2.msra.mxu0 0.0
        %4044 = vmatprep.subr.mxu0 0.0
        %4045 = vmatpush2.msra.mxu0 0.0
        %4046 = vmatprep.subr.mxu0 0.0
        %4047 = vmatpush2.msra.mxu0 0.0
        %4048 = vmatprep.subr.mxu0 0.0
        %4049 = vmatpush2.msra.mxu0 0.0
        %4050 = vmatprep.subr.mxu0 0.0
        %4051 = vmatpush2.msra.mxu0 0.0
        %4052 = vmatprep.subr.mxu0 0.0
        %4053 = vmatpush2.msra.mxu0 0.0
        %4054 = vmatprep.subr.mxu0 0.0
        %4055 = vmatpush2.msra.mxu0 0.0
        %4056 = vmatprep.subr.mxu0 0.0
        %4057 = vmatpush2.msra.mxu0 0.0
        %4058 = vmatprep.subr.mxu0 0.0
        %4059 = vmatpush2.msra.mxu0 0.0
        %4060 = vmatprep.subr.mxu0 0.0
        %4061 = vmatpush2.msra.mxu0 0.0
        %4062 = vmatprep.subr.mxu0 0.0
        %4063 = vmatpush2.msra.mxu0 0.0
        %4064 = vmatprep.subr.mxu0 0.0
        %4065 = vmatpush2.msra.mxu0 0.0
        %4066 = vmatprep.mubr.f32.mxu0 0.0
        %4067 = vmatmul.mubr.f32.gmra.mxu0 %v4000
        %v4068 = vpop.f32.mrf.mxu0
        %v4069 = vadd.f32 0.0, %v4068
        %v4070 = vpop.f32.mrf.mxu0
        %4071 = vdwg.mxu0
        %v4072 = vadd.f32 %v3908, %v4069
        %v4073 = vmul.f32 %v3500, %v1800
        %v4075 = vsel %vm1011, %v4073, 0
        %4077 = vmatprep.subr.mxu0 0.0
        %4078 = vmatpush1.xpose.msra.mxu0 0.0
        %4079 = vmatprep.subr.mxu0 0.0
        %4080 = vmatpush1.xpose.msra.mxu0 0.0
        %4081 = vmatprep.subr.mxu0 0.0
        %4082 = vmatpush1.xpose.msra.mxu0 0.0
        %4083 = vmatprep.subr.mxu0 0.0
        %4084 = vmatpush1.xpose.msra.mxu0 0.0
        %4085 = vmatprep.subr.mxu0 0.0
        %4086 = vmatpush1.xpose.msra.mxu0 0.0
        %4087 = vmatprep.subr.mxu0 0.0
        %4088 = vmatpush1.xpose.msra.mxu0 0.0
        %4089 = vmatprep.subr.mxu0 0.0
        %4090 = vmatpush1.xpose.msra.mxu0 0.0
        %4091 = vmatprep.subr.mxu0 0.0
        %4092 = vmatpush1.xpose.msra.mxu0 0.0
        %4093 = vmatprep.subr.mxu0 0.0
        %4094 = vmatpush1.xpose.msra.mxu0 0.0
        %4095 = vmatprep.subr.mxu0 0.0
        %4096 = vmatpush1.xpose.msra.mxu0 0.0
        %4097 = vmatprep.subr.mxu0 0.0
        %4098 = vmatpush1.xpose.msra.mxu0 0.0
        %4099 = vmatprep.subr.mxu0 0.0
        %4100 = vmatpush1.xpose.msra.mxu0 0.0
        %4101 = vmatprep.subr.mxu0 0.0
        %4102 = vmatpush1.xpose.msra.mxu0 0.0
        %4103 = vmatprep.subr.mxu0 0.0
        %4104 = vmatpush1.xpose.msra.mxu0 0.0
        %4105 = vmatprep.subr.mxu0 0.0
        %4106 = vmatpush1.xpose.msra.mxu0 0.0
        %4107 = vmatprep.subr.mxu0 0.0
        %4108 = vmatpush1.xpose.msra.mxu0 %v4075
        %4109 = vmatprep.subr.mxu0 0.0
        %4110 = vmatpush2.xpose.msra.mxu0 0.0
        %4111 = vmatprep.subr.mxu0 0.0
        %4112 = vmatpush2.xpose.msra.mxu0 0.0
        %4113 = vmatprep.subr.mxu0 0.0
        %4114 = vmatpush2.xpose.msra.mxu0 0.0
        %4115 = vmatprep.subr.mxu0 0.0
        %4116 = vmatpush2.xpose.msra.mxu0 0.0
        %4117 = vmatprep.subr.mxu0 0.0
        %4118 = vmatpush2.xpose.msra.mxu0 0.0
        %4119 = vmatprep.subr.mxu0 0.0
        %4120 = vmatpush2.xpose.msra.mxu0 0.0
        %4121 = vmatprep.subr.mxu0 0.0
        %4122 = vmatpush2.xpose.msra.mxu0 0.0
        %4123 = vmatprep.subr.mxu0 0.0
        %4124 = vmatpush2.xpose.msra.mxu0 0.0
        %4125 = vmatprep.subr.mxu0 0.0
        %4126 = vmatpush2.xpose.msra.mxu0 0.0
        %4127 = vmatprep.subr.mxu0 0.0
        %4128 = vmatpush2.xpose.msra.mxu0 0.0
        %4129 = vmatprep.subr.mxu0 0.0
        %4130 = vmatpush2.xpose.msra.mxu0 0.0
        %4131 = vmatprep.subr.mxu0 0.0
        %4132 = vmatpush2.xpose.msra.mxu0 0.0
        %4133 = vmatprep.subr.mxu0 0.0
        %4134 = vmatpush2.xpose.msra.mxu0 0.0
        %4135 = vmatprep.subr.mxu0 0.0
        %4136 = vmatpush2.xpose.msra.mxu0 0.0
        %4137 = vmatprep.subr.mxu0 0.0
        %4138 = vmatpush2.xpose.msra.mxu0 0.0
        %4139 = vmatprep.subr.mxu0 0.0
        %4140 = vmatpush2.xpose.msra.mxu0 0.0
        %4141 = vmatprep.mubr.f32.mxu0 0.0
        %4142 = vmatmul.mubr.f32.gmra.mxu0 %v3588
        %v4143 = vpop.f32.mrf.mxu0
        %v4144 = vadd.f32 0.0, %v4143
        %v4145 = vpop.f32.mrf.mxu0
        %4146 = vdwg.mxu0
        %v4147 = vmul.f32 %v4144, 0.35355338
        %v4148 = vadd.f32 %v4147, %v1005
        %v4149 = vsel %vm1377, %v4148, -inf
        %4150 = vmax.xlane.f32.xlu0 %v4149
        %v4151 = vpop.xlane.xlu0 %4150
        %v4152 = vsub.f32 %v4148, %v4151
        %v4153 = vmul.f32 %v4152, 1.442695
        %v4154 = vpow.pop %v4153
        %v4155 = vsel %vm1377, %v4154, 0.0
        %4156 = vadd.xlane.f32.xlu0 %v4155
        %v4157 = vpop.xlane.xlu0 %4156
        %v4158 = vrcp.pop %v4157
        %v4159 = vmul.f32 %v4154, %v4158
        %v4160 = vmul.f32 %v3583, %v1800
        %v4162 = vsel %vm1377, %v4159, 0
        %4164 = vmatprep.subr.mxu0 0.0
        %4165 = vmatpush1.msra.mxu0 0.0
        %4166 = vmatprep.subr.mxu0 0.0
        %4167 = vmatpush1.msra.mxu0 0.0
        %4168 = vmatprep.subr.mxu0 0.0
        %4169 = vmatpush1.msra.mxu0 0.0
        %4170 = vmatprep.subr.mxu0 0.0
        %4171 = vmatpush1.msra.mxu0 0.0
        %4172 = vmatprep.subr.mxu0 0.0
        %4173 = vmatpush1.msra.mxu0 0.0
        %4174 = vmatprep.subr.mxu0 0.0
        %4175 = vmatpush1.msra.mxu0 0.0
        %4176 = vmatprep.subr.mxu0 0.0
        %4177 = vmatpush1.msra.mxu0 0.0
        %4178 = vmatprep.subr.mxu0 0.0
        %4179 = vmatpush1.msra.mxu0 0.0
        %4180 = vmatprep.subr.mxu0 0.0
        %4181 = vmatpush1.msra.mxu0 0.0
        %4182 = vmatprep.subr.mxu0 0.0
        %4183 = vmatpush1.msra.mxu0 0.0
        %4184 = vmatprep.subr.mxu0 0.0
        %4185 = vmatpush1.msra.mxu0 0.0
        %4186 = vmatprep.subr.mxu0 0.0
        %4187 = vmatpush1.msra.mxu0 0.0
        %4188 = vmatprep.subr.mxu0 0.0
        %4189 = vmatpush1.msra.mxu0 0.0
        %4190 = vmatprep.subr.mxu0 0.0
        %4191 = vmatpush1.msra.mxu0 0.0
        %4192 = vmatprep.subr.mxu0 0.0
        %4193 = vmatpush1.msra.mxu0 0.0
        %4194 = vmatprep.subr.mxu0 0.0
        %4195 = vmatpush1.msra.mxu0 %v4160
        %4196 = vmatprep.subr.mxu0 0.0
        %4197 = vmatpush2.msra.mxu0 0.0
        %4198 = vmatprep.subr.mxu0 0.0
        %4199 = vmatpush2.msra.mxu0 0.0
        %4200 = vmatprep.subr.mxu0 0.0
        %4201 = vmatpush2.msra.mxu0 0.0
        %4202 = vmatprep.subr.mxu0 0.0
        %4203 = vmatpush2.msra.mxu0 0.0
        %4204 = vmatprep.subr.mxu0 0.0
        %4205 = vmatpush2.msra.mxu0 0.0
        %4206 = vmatprep.subr.mxu0 0.0
        %4207 = vmatpush2.msra.mxu0 0.0
        %4208 = vmatprep.subr.mxu0 0.0
        %4209 = vmatpush2.msra.mxu0 0.0
        %4210 = vmatprep.subr.mxu0 0.0
        %4211 = vmatpush2.msra.mxu0 0.0
        %4212 = vmatprep.subr.mxu0 0.0
        %4213 = vmatpush2.msra.mxu0 0.0
        %4214 = vmatprep.subr.mxu0 0.0
        %4215 = vmatpush2.msra.mxu0 0.0
        %4216 = vmatprep.subr.mxu0 0.0
        %4217 = vmatpush2.msra.mxu0 0.0
        %4218 = vmatprep.subr.mxu0 0.0
        %4219 = vmatpush2.msra.mxu0 0.0
        %4220 = vmatprep.subr.mxu0 0.0
        %4221 = vmatpush2.msra.mxu0 0.0
        %4222 = vmatprep.subr.mxu0 0.0
        %4223 = vmatpush2.msra.mxu0 0.0
        %4224 = vmatprep.subr.mxu0 0.0
        %4225 = vmatpush2.msra.mxu0 0.0
        %4226 = vmatprep.subr.mxu0 0.0
        %4227 = vmatpush2.msra.mxu0 0.0
        %4228 = vmatprep.mubr.f32.mxu0 0.0
        %4229 = vmatmul.mubr.f32.gmra.mxu0 %v4162
        %v4230 = vpop.f32.mrf.mxu0
        %v4231 = vadd.f32 0.0, %v4230
        %v4232 = vpop.f32.mrf.mxu0
        %4233 = vdwg.mxu0
        %v4234 = vadd.f32 %v4072, %v4231
        %s4235 = scalar_lea.vmem [#allocation13], 64
        %v4236 = vld [vmem:[%s4235] sm:$0xff]
        %v4237 = vld [vmem:[%s4235 + $0x8] sm:$0xff]
        %v4238 = vld [vmem:[%s4235 + $0x10] sm:$0xff]
        %v4239 = vld [vmem:[%s4235 + $0x18] sm:$0xff]
        %s4240 = scalar_lea.vmem [#allocation14], 2
        %v4241 = vld [vmem:[%s4240] sm:$0x1]
        %v4243 = vlaneseq
        %v4244 = vshrl.u32 %v4243, 7
        %v4245 = vsub.s32 0, %v4244
        %v4246 = vrot.slane %v4241, %v4245
        %v4249 = vsel %vm1011, %v4234, 0
        %4251 = vmatprep.subr.mxu0 0.0
        %4252 = vmatpush1.msra.mxu0 0.0
        %4253 = vmatprep.subr.mxu0 0.0
        %4254 = vmatpush1.msra.mxu0 0.0
        %4255 = vmatprep.subr.mxu0 0.0
        %4256 = vmatpush1.msra.mxu0 0.0
        %4257 = vmatprep.subr.mxu0 0.0
        %4258 = vmatpush1.msra.mxu0 0.0
        %4259 = vmatprep.subr.mxu0 0.0
        %4260 = vmatpush1.msra.mxu0 0.0
        %4261 = vmatprep.subr.mxu0 0.0
        %4262 = vmatpush1.msra.mxu0 0.0
        %4263 = vmatprep.subr.mxu0 0.0
        %4264 = vmatpush1.msra.mxu0 0.0
        %4265 = vmatprep.subr.mxu0 0.0
        %4266 = vmatpush1.msra.mxu0 0.0
        %4267 = vmatprep.subr.mxu0 0.0
        %4268 = vmatpush1.msra.mxu0 0.0
        %4269 = vmatprep.subr.mxu0 0.0
        %4270 = vmatpush1.msra.mxu0 0.0
        %4271 = vmatprep.subr.mxu0 0.0
        %4272 = vmatpush1.msra.mxu0 0.0
        %4273 = vmatprep.subr.mxu0 0.0
        %4274 = vmatpush1.msra.mxu0 0.0
        %4275 = vmatprep.subr.mxu0 0.0
        %4276 = vmatpush1.msra.mxu0 %v4239
        %4277 = vmatprep.subr.mxu0 0.0
        %4278 = vmatpush1.msra.mxu0 %v4238
        %4279 = vmatprep.subr.mxu0 0.0
        %4280 = vmatpush1.msra.mxu0 %v4237
        %4281 = vmatprep.subr.mxu0 0.0
        %4282 = vmatpush1.msra.mxu0 %v4236
        %4283 = vmatprep.subr.mxu0 0.0
        %4284 = vmatpush2.msra.mxu0 0.0
        %4285 = vmatprep.subr.mxu0 0.0
        %4286 = vmatpush2.msra.mxu0 0.0
        %4287 = vmatprep.subr.mxu0 0.0
        %4288 = vmatpush2.msra.mxu0 0.0
        %4289 = vmatprep.subr.mxu0 0.0
        %4290 = vmatpush2.msra.mxu0 0.0
        %4291 = vmatprep.subr.mxu0 0.0
        %4292 = vmatpush2.msra.mxu0 0.0
        %4293 = vmatprep.subr.mxu0 0.0
        %4294 = vmatpush2.msra.mxu0 0.0
        %4295 = vmatprep.subr.mxu0 0.0
        %4296 = vmatpush2.msra.mxu0 0.0
        %4297 = vmatprep.subr.mxu0 0.0
        %4298 = vmatpush2.msra.mxu0 0.0
        %4299 = vmatprep.subr.mxu0 0.0
        %4300 = vmatpush2.msra.mxu0 0.0
        %4301 = vmatprep.subr.mxu0 0.0
        %4302 = vmatpush2.msra.mxu0 0.0
        %4303 = vmatprep.subr.mxu0 0.0
        %4304 = vmatpush2.msra.mxu0 0.0
        %4305 = vmatprep.subr.mxu0 0.0
        %4306 = vmatpush2.msra.mxu0 0.0
        %4307 = vmatprep.subr.mxu0 0.0
        %4308 = vmatpush2.msra.mxu0 0.0
        %4309 = vmatprep.subr.mxu0 0.0
        %4310 = vmatpush2.msra.mxu0 0.0
        %4311 = vmatprep.subr.mxu0 0.0
        %4312 = vmatpush2.msra.mxu0 0.0
        %4313 = vmatprep.subr.mxu0 0.0
        %4314 = vmatpush2.msra.mxu0 0.0
        %4315 = vmatprep.mubr.f32.mxu0 0.0
        %4316 = vmatmul.mubr.f32.gmra.mxu0 %v4249
        %v4317 = vpop.f32.mrf.mxu0
        %v4318 = vadd.f32 %v4246, %v4317
        %v4319 = vpop.f32.mrf.mxu0
        %4320 = vdwg.mxu0
        %v4321 = vadd.f32 %v3295, %v4318
        %s4322 = scalar_lea.vmem [#allocation5], 4
        %v4323 = vld [vmem:[%s4322] sm:$0x1]
        %s4324 = scalar_lea.vmem [#allocation7], 4
        %v4325 = vld [vmem:[%s4324] sm:$0x1]
        %v4326 = vsel %vm1011, %v4321, 0.0
        %4327 = vadd.xlane.f32.xlu0 %v4326
        %v4328 = vpop.xlane.xlu0 %4327
        %v4329 = vmul.f32 %v4328, %v1015
        %v4330 = vsub.f32 %v4321, %v4329
        %v4331 = vmul.f32 %v4330, %v4330
        %v4332 = vsel %vm1011, %v4331, 0.0
        %4333 = vadd.xlane.f32.xlu0 %v4332
        %v4334 = vpop.xlane.xlu0 %4333
        %v4335 = vmul.f32 %v4334, 0.032258064
        %v4336 = vrsqrt.pop %v4335
        %v4337 = vmul.f32 %v4335, %v4336
        %vm4338 = vcmp.eq.f32.partialorder %v4335, inf
        %v4339 = vsel %vm4338, %v4335, %v4337
        %vm4340 = vcmp.eq.f32.partialorder %v4335, 0.0
        %v4341 = vand.u32 %v4335, 2147483648
        %v4342 = vsel %vm4340, %v4341, %v4339
        %v4343 = vadd.f32 %v4342, 1e-06
        %v4344 = vrcp.pop %v4343
        %v4345 = vmul.f32 %v4330, %v4344
        %v4347 = vlaneseq
        %v4348 = vshrl.u32 %v4347, 7
        %v4349 = vsub.s32 0, %v4348
        %v4350 = vrot.slane %v4323, %v4349
        %v4352 = vmul.f32 %v4350, %v4345
        %v4354 = vlaneseq
        %v4355 = vshrl.u32 %v4354, 7
        %v4356 = vsub.s32 0, %v4355
        %v4357 = vrot.slane %v4325, %v4356
        %v4359 = vadd.f32 %v4352, %v4357
        %s4360 = scalar_lea.vmem %s8, 96
        %v4361 = vld [vmem:[%s4360] sm:$0xff]
        %v4362 = vld [vmem:[%s4360 + $0x8] sm:$0xff]
        %v4363 = vld [vmem:[%s4360 + $0x10] sm:$0xff]
        %v4364 = vld [vmem:[%s4360 + $0x18] sm:$0xff]
        %s4365 = scalar_lea.vmem [#allocation8], 3
        %v4366 = vld [vmem:[%s4365] sm:$0x1]
        %v4368 = vlaneseq
        %v4369 = vshrl.u32 %v4368, 7
        %v4370 = vsub.s32 0, %v4369
        %v4371 = vrot.slane %v4366, %v4370
        %v4374 = vsel %vm1011, %v4359, 0
        %4376 = vmatprep.subr.mxu0 0.0
        %4377 = vmatpush1.msra.mxu0 0.0
        %4378 = vmatprep.subr.mxu0 0.0
        %4379 = vmatpush1.msra.mxu0 0.0
        %4380 = vmatprep.subr.mxu0 0.0
        %4381 = vmatpush1.msra.mxu0 0.0
        %4382 = vmatprep.subr.mxu0 0.0
        %4383 = vmatpush1.msra.mxu0 0.0
        %4384 = vmatprep.subr.mxu0 0.0
        %4385 = vmatpush1.msra.mxu0 0.0
        %4386 = vmatprep.subr.mxu0 0.0
        %4387 = vmatpush1.msra.mxu0 0.0
        %4388 = vmatprep.subr.mxu0 0.0
        %4389 = vmatpush1.msra.mxu0 0.0
        %4390 = vmatprep.subr.mxu0 0.0
        %4391 = vmatpush1.msra.mxu0 0.0
        %4392 = vmatprep.subr.mxu0 0.0
        %4393 = vmatpush1.msra.mxu0 0.0
        %4394 = vmatprep.subr.mxu0 0.0
        %4395 = vmatpush1.msra.mxu0 0.0
        %4396 = vmatprep.subr.mxu0 0.0
        %4397 = vmatpush1.msra.mxu0 0.0
        %4398 = vmatprep.subr.mxu0 0.0
        %4399 = vmatpush1.msra.mxu0 0.0
        %4400 = vmatprep.subr.mxu0 0.0
        %4401 = vmatpush1.msra.mxu0 %v4364
        %4402 = vmatprep.subr.mxu0 0.0
        %4403 = vmatpush1.msra.mxu0 %v4363
        %4404 = vmatprep.subr.mxu0 0.0
        %4405 = vmatpush1.msra.mxu0 %v4362
        %4406 = vmatprep.subr.mxu0 0.0
        %4407 = vmatpush1.msra.mxu0 %v4361
        %4408 = vmatprep.subr.mxu0 0.0
        %4409 = vmatpush2.msra.mxu0 0.0
        %4410 = vmatprep.subr.mxu0 0.0
        %4411 = vmatpush2.msra.mxu0 0.0
        %4412 = vmatprep.subr.mxu0 0.0
        %4413 = vmatpush2.msra.mxu0 0.0
        %4414 = vmatprep.subr.mxu0 0.0
        %4415 = vmatpush2.msra.mxu0 0.0
        %4416 = vmatprep.subr.mxu0 0.0
        %4417 = vmatpush2.msra.mxu0 0.0
        %4418 = vmatprep.subr.mxu0 0.0
        %4419 = vmatpush2.msra.mxu0 0.0
        %4420 = vmatprep.subr.mxu0 0.0
        %4421 = vmatpush2.msra.mxu0 0.0
        %4422 = vmatprep.subr.mxu0 0.0
        %4423 = vmatpush2.msra.mxu0 0.0
        %4424 = vmatprep.subr.mxu0 0.0
        %4425 = vmatpush2.msra.mxu0 0.0
        %4426 = vmatprep.subr.mxu0 0.0
        %4427 = vmatpush2.msra.mxu0 0.0
        %4428 = vmatprep.subr.mxu0 0.0
        %4429 = vmatpush2.msra.mxu0 0.0
        %4430 = vmatprep.subr.mxu0 0.0
        %4431 = vmatpush2.msra.mxu0 0.0
        %4432 = vmatprep.subr.mxu0 0.0
        %4433 = vmatpush2.msra.mxu0 0.0
        %4434 = vmatprep.subr.mxu0 0.0
        %4435 = vmatpush2.msra.mxu0 0.0
        %4436 = vmatprep.subr.mxu0 0.0
        %4437 = vmatpush2.msra.mxu0 0.0
        %4438 = vmatprep.subr.mxu0 0.0
        %4439 = vmatpush2.msra.mxu0 0.0
        %4440 = vmatprep.mubr.f32.mxu0 0.0
        %4441 = vmatmul.mubr.f32.gmra.mxu0 %v4374
        %v4442 = vpop.f32.mrf.mxu0
        %v4443 = vadd.f32 %v4371, %v4442
        %v4444 = vpop.f32.mrf.mxu0
        %4445 = vdwg.mxu0
        %s4446 = scalar_lea.vmem %s10, 96
        %v4447 = vld [vmem:[%s4446] sm:$0xff]
        %v4448 = vld [vmem:[%s4446 + $0x8] sm:$0xff]
        %v4449 = vld [vmem:[%s4446 + $0x10] sm:$0xff]
        %v4450 = vld [vmem:[%s4446 + $0x18] sm:$0xff]
        %s4451 = scalar_lea.vmem [#allocation10], 3
        %v4452 = vld [vmem:[%s4451] sm:$0x1]
        %v4454 = vlaneseq
        %v4455 = vshrl.u32 %v4454, 7
        %v4456 = vsub.s32 0, %v4455
        %v4457 = vrot.slane %v4452, %v4456
        %4459 = vmatprep.subr.mxu0 0.0
        %4460 = vmatpush1.msra.mxu0 0.0
        %4461 = vmatprep.subr.mxu0 0.0
        %4462 = vmatpush1.msra.mxu0 0.0
        %4463 = vmatprep.subr.mxu0 0.0
        %4464 = vmatpush1.msra.mxu0 0.0
        %4465 = vmatprep.subr.mxu0 0.0
        %4466 = vmatpush1.msra.mxu0 0.0
        %4467 = vmatprep.subr.mxu0 0.0
        %4468 = vmatpush1.msra.mxu0 0.0
        %4469 = vmatprep.subr.mxu0 0.0
        %4470 = vmatpush1.msra.mxu0 0.0
        %4471 = vmatprep.subr.mxu0 0.0
        %4472 = vmatpush1.msra.mxu0 0.0
        %4473 = vmatprep.subr.mxu0 0.0
        %4474 = vmatpush1.msra.mxu0 0.0
        %4475 = vmatprep.subr.mxu0 0.0
        %4476 = vmatpush1.msra.mxu0 0.0
        %4477 = vmatprep.subr.mxu0 0.0
        %4478 = vmatpush1.msra.mxu0 0.0
        %4479 = vmatprep.subr.mxu0 0.0
        %4480 = vmatpush1.msra.mxu0 0.0
        %4481 = vmatprep.subr.mxu0 0.0
        %4482 = vmatpush1.msra.mxu0 0.0
        %4483 = vmatprep.subr.mxu0 0.0
        %4484 = vmatpush1.msra.mxu0 %v4450
        %4485 = vmatprep.subr.mxu0 0.0
        %4486 = vmatpush1.msra.mxu0 %v4449
        %4487 = vmatprep.subr.mxu0 0.0
        %4488 = vmatpush1.msra.mxu0 %v4448
        %4489 = vmatprep.subr.mxu0 0.0
        %4490 = vmatpush1.msra.mxu0 %v4447
        %4491 = vmatprep.subr.mxu0 0.0
        %4492 = vmatpush2.msra.mxu0 0.0
        %4493 = vmatprep.subr.mxu0 0.0
        %4494 = vmatpush2.msra.mxu0 0.0
        %4495 = vmatprep.subr.mxu0 0.0
        %4496 = vmatpush2.msra.mxu0 0.0
        %4497 = vmatprep.subr.mxu0 0.0
        %4498 = vmatpush2.msra.mxu0 0.0
        %4499 = vmatprep.subr.mxu0 0.0
        %4500 = vmatpush2.msra.mxu0 0.0
        %4501 = vmatprep.subr.mxu0 0.0
        %4502 = vmatpush2.msra.mxu0 0.0
        %4503 = vmatprep.subr.mxu0 0.0
        %4504 = vmatpush2.msra.mxu0 0.0
        %4505 = vmatprep.subr.mxu0 0.0
        %4506 = vmatpush2.msra.mxu0 0.0
        %4507 = vmatprep.subr.mxu0 0.0
        %4508 = vmatpush2.msra.mxu0 0.0
        %4509 = vmatprep.subr.mxu0 0.0
        %4510 = vmatpush2.msra.mxu0 0.0
        %4511 = vmatprep.subr.mxu0 0.0
        %4512 = vmatpush2.msra.mxu0 0.0
        %4513 = vmatprep.subr.mxu0 0.0
        %4514 = vmatpush2.msra.mxu0 0.0
        %4515 = vmatprep.subr.mxu0 0.0
        %4516 = vmatpush2.msra.mxu0 0.0
        %4517 = vmatprep.subr.mxu0 0.0
        %4518 = vmatpush2.msra.mxu0 0.0
        %4519 = vmatprep.subr.mxu0 0.0
        %4520 = vmatpush2.msra.mxu0 0.0
        %4521 = vmatprep.subr.mxu0 0.0
        %4522 = vmatpush2.msra.mxu0 0.0
        %4523 = vmatprep.mubr.f32.mxu0 0.0
        %4524 = vmatmul.mubr.f32.gmra.mxu0 %v2186
        %v4525 = vpop.f32.mrf.mxu0
        %v4526 = vadd.f32 %v4457, %v4525
        %v4527 = vpop.f32.mrf.mxu0
        %4528 = vdwg.mxu0
        %s4529 = scalar_lea.vmem %s12, 96
        %v4530 = vld [vmem:[%s4529] sm:$0xff]
        %v4531 = vld [vmem:[%s4529 + $0x8] sm:$0xff]
        %v4532 = vld [vmem:[%s4529 + $0x10] sm:$0xff]
        %v4533 = vld [vmem:[%s4529 + $0x18] sm:$0xff]
        %s4534 = scalar_lea.vmem [#allocation11], 3
        %v4535 = vld [vmem:[%s4534] sm:$0x1]
        %v4537 = vlaneseq
        %v4538 = vshrl.u32 %v4537, 7
        %v4539 = vsub.s32 0, %v4538
        %v4540 = vrot.slane %v4535, %v4539
        %4542 = vmatprep.subr.mxu0 0.0
        %4543 = vmatpush1.msra.mxu0 0.0
        %4544 = vmatprep.subr.mxu0 0.0
        %4545 = vmatpush1.msra.mxu0 0.0
        %4546 = vmatprep.subr.mxu0 0.0
        %4547 = vmatpush1.msra.mxu0 0.0
        %4548 = vmatprep.subr.mxu0 0.0
        %4549 = vmatpush1.msra.mxu0 0.0
        %4550 = vmatprep.subr.mxu0 0.0
        %4551 = vmatpush1.msra.mxu0 0.0
        %4552 = vmatprep.subr.mxu0 0.0
        %4553 = vmatpush1.msra.mxu0 0.0
        %4554 = vmatprep.subr.mxu0 0.0
        %4555 = vmatpush1.msra.mxu0 0.0
        %4556 = vmatprep.subr.mxu0 0.0
        %4557 = vmatpush1.msra.mxu0 0.0
        %4558 = vmatprep.subr.mxu0 0.0
        %4559 = vmatpush1.msra.mxu0 0.0
        %4560 = vmatprep.subr.mxu0 0.0
        %4561 = vmatpush1.msra.mxu0 0.0
        %4562 = vmatprep.subr.mxu0 0.0
        %4563 = vmatpush1.msra.mxu0 0.0
        %4564 = vmatprep.subr.mxu0 0.0
        %4565 = vmatpush1.msra.mxu0 0.0
        %4566 = vmatprep.subr.mxu0 0.0
        %4567 = vmatpush1.msra.mxu0 %v4533
        %4568 = vmatprep.subr.mxu0 0.0
        %4569 = vmatpush1.msra.mxu0 %v4532
        %4570 = vmatprep.subr.mxu0 0.0
        %4571 = vmatpush1.msra.mxu0 %v4531
        %4572 = vmatprep.subr.mxu0 0.0
        %4573 = vmatpush1.msra.mxu0 %v4530
        %4574 = vmatprep.subr.mxu0 0.0
        %4575 = vmatpush2.msra.mxu0 0.0
        %4576 = vmatprep.subr.mxu0 0.0
        %4577 = vmatpush2.msra.mxu0 0.0
        %4578 = vmatprep.subr.mxu0 0.0
        %4579 = vmatpush2.msra.mxu0 0.0
        %4580 = vmatprep.subr.mxu0 0.0
        %4581 = vmatpush2.msra.mxu0 0.0
        %4582 = vmatprep.subr.mxu0 0.0
        %4583 = vmatpush2.msra.mxu0 0.0
        %4584 = vmatprep.subr.mxu0 0.0
        %4585 = vmatpush2.msra.mxu0 0.0
        %4586 = vmatprep.subr.mxu0 0.0
        %4587 = vmatpush2.msra.mxu0 0.0
        %4588 = vmatprep.subr.mxu0 0.0
        %4589 = vmatpush2.msra.mxu0 0.0
        %4590 = vmatprep.subr.mxu0 0.0
        %4591 = vmatpush2.msra.mxu0 0.0
        %4592 = vmatprep.subr.mxu0 0.0
        %4593 = vmatpush2.msra.mxu0 0.0
        %4594 = vmatprep.subr.mxu0 0.0
        %4595 = vmatpush2.msra.mxu0 0.0
        %4596 = vmatprep.subr.mxu0 0.0
        %4597 = vmatpush2.msra.mxu0 0.0
        %4598 = vmatprep.subr.mxu0 0.0
        %4599 = vmatpush2.msra.mxu0 0.0
        %4600 = vmatprep.subr.mxu0 0.0
        %4601 = vmatpush2.msra.mxu0 0.0
        %4602 = vmatprep.subr.mxu0 0.0
        %4603 = vmatpush2.msra.mxu0 0.0
        %4604 = vmatprep.subr.mxu0 0.0
        %4605 = vmatpush2.msra.mxu0 0.0
        %4606 = vmatprep.mubr.f32.mxu0 0.0
        %4607 = vmatmul.mubr.f32.gmra.mxu0 %v2186
        %v4608 = vpop.f32.mrf.mxu0
        %v4609 = vadd.f32 %v4540, %v4608
        %v4610 = vpop.f32.mrf.mxu0
        %4611 = vdwg.mxu0
        %v4612 = vmul.f32 %v4526, %v1297
        %v4614 = vsel %vm1011, %v4443, 0
        %v4617 = vsel %vm1011, %v4612, 0
        %4619 = vmatprep.subr.mxu0 0.0
        %4620 = vmatpush1.xpose.msra.mxu0 0.0
        %4621 = vmatprep.subr.mxu0 0.0
        %4622 = vmatpush1.xpose.msra.mxu0 0.0
        %4623 = vmatprep.subr.mxu0 0.0
        %4624 = vmatpush1.xpose.msra.mxu0 0.0
        %4625 = vmatprep.subr.mxu0 0.0
        %4626 = vmatpush1.xpose.msra.mxu0 0.0
        %4627 = vmatprep.subr.mxu0 0.0
        %4628 = vmatpush1.xpose.msra.mxu0 0.0
        %4629 = vmatprep.subr.mxu0 0.0
        %4630 = vmatpush1.xpose.msra.mxu0 0.0
        %4631 = vmatprep.subr.mxu0 0.0
        %4632 = vmatpush1.xpose.msra.mxu0 0.0
        %4633 = vmatprep.subr.mxu0 0.0
        %4634 = vmatpush1.xpose.msra.mxu0 0.0
        %4635 = vmatprep.subr.mxu0 0.0
        %4636 = vmatpush1.xpose.msra.mxu0 0.0
        %4637 = vmatprep.subr.mxu0 0.0
        %4638 = vmatpush1.xpose.msra.mxu0 0.0
        %4639 = vmatprep.subr.mxu0 0.0
        %4640 = vmatpush1.xpose.msra.mxu0 0.0
        %4641 = vmatprep.subr.mxu0 0.0
        %4642 = vmatpush1.xpose.msra.mxu0 0.0
        %4643 = vmatprep.subr.mxu0 0.0
        %4644 = vmatpush1.xpose.msra.mxu0 0.0
        %4645 = vmatprep.subr.mxu0 0.0
        %4646 = vmatpush1.xpose.msra.mxu0 0.0
        %4647 = vmatprep.subr.mxu0 0.0
        %4648 = vmatpush1.xpose.msra.mxu0 0.0
        %4649 = vmatprep.subr.mxu0 0.0
        %4650 = vmatpush1.xpose.msra.mxu0 %v4617
        %4651 = vmatprep.subr.mxu0 0.0
        %4652 = vmatpush2.xpose.msra.mxu0 0.0
        %4653 = vmatprep.subr.mxu0 0.0
        %4654 = vmatpush2.xpose.msra.mxu0 0.0
        %4655 = vmatprep.subr.mxu0 0.0
        %4656 = vmatpush2.xpose.msra.mxu0 0.0
        %4657 = vmatprep.subr.mxu0 0.0
        %4658 = vmatpush2.xpose.msra.mxu0 0.0
        %4659 = vmatprep.subr.mxu0 0.0
        %4660 = vmatpush2.xpose.msra.mxu0 0.0
        %4661 = vmatprep.subr.mxu0 0.0
        %4662 = vmatpush2.xpose.msra.mxu0 0.0
        %4663 = vmatprep.subr.mxu0 0.0
        %4664 = vmatpush2.xpose.msra.mxu0 0.0
        %4665 = vmatprep.subr.mxu0 0.0
        %4666 = vmatpush2.xpose.msra.mxu0 0.0
        %4667 = vmatprep.subr.mxu0 0.0
        %4668 = vmatpush2.xpose.msra.mxu0 0.0
        %4669 = vmatprep.subr.mxu0 0.0
        %4670 = vmatpush2.xpose.msra.mxu0 0.0
        %4671 = vmatprep.subr.mxu0 0.0
        %4672 = vmatpush2.xpose.msra.mxu0 0.0
        %4673 = vmatprep.subr.mxu0 0.0
        %4674 = vmatpush2.xpose.msra.mxu0 0.0
        %4675 = vmatprep.subr.mxu0 0.0
        %4676 = vmatpush2.xpose.msra.mxu0 0.0
        %4677 = vmatprep.subr.mxu0 0.0
        %4678 = vmatpush2.xpose.msra.mxu0 0.0
        %4679 = vmatprep.subr.mxu0 0.0
        %4680 = vmatpush2.xpose.msra.mxu0 0.0
        %4681 = vmatprep.subr.mxu0 0.0
        %4682 = vmatpush2.xpose.msra.mxu0 0.0
        %4683 = vmatprep.mubr.f32.mxu0 0.0
        %4684 = vmatmul.mubr.f32.gmra.mxu0 %v4614
        %v4685 = vpop.f32.mrf.mxu0
        %v4686 = vadd.f32 0.0, %v4685
        %v4687 = vpop.f32.mrf.mxu0
        %4688 = vdwg.mxu0
        %v4689 = vmul.f32 %v4686, 0.35355338
        %v4690 = vadd.f32 %v4689, %v2423
        %v4691 = vsel %vm1377, %v4690, -inf
        %4692 = vmax.xlane.f32.xlu0 %v4691
        %v4693 = vpop.xlane.xlu0 %4692
        %v4694 = vsub.f32 %v4690, %v4693
        %v4695 = vmul.f32 %v4694, 1.442695
        %v4696 = vpow.pop %v4695
        %v4697 = vsel %vm1377, %v4696, 0.0
        %4698 = vadd.xlane.f32.xlu0 %v4697
        %v4699 = vpop.xlane.xlu0 %4698
        %v4700 = vrcp.pop %v4699
        %v4701 = vmul.f32 %v4696, %v4700
        %v4702 = vmul.f32 %v4609, %v1297
        %v4703 = vmul.f32 %v4526, %v1394
        %v4705 = vsel %vm1011, %v4703, 0
        %4707 = vmatprep.subr.mxu0 0.0
        %4708 = vmatpush1.xpose.msra.mxu0 0.0
        %4709 = vmatprep.subr.mxu0 0.0
        %4710 = vmatpush1.xpose.msra.mxu0 0.0
        %4711 = vmatprep.subr.mxu0 0.0
        %4712 = vmatpush1.xpose.msra.mxu0 0.0
        %4713 = vmatprep.subr.mxu0 0.0
        %4714 = vmatpush1.xpose.msra.mxu0 0.0
        %4715 = vmatprep.subr.mxu0 0.0
        %4716 = vmatpush1.xpose.msra.mxu0 0.0
        %4717 = vmatprep.subr.mxu0 0.0
        %4718 = vmatpush1.xpose.msra.mxu0 0.0
        %4719 = vmatprep.subr.mxu0 0.0
        %4720 = vmatpush1.xpose.msra.mxu0 0.0
        %4721 = vmatprep.subr.mxu0 0.0
        %4722 = vmatpush1.xpose.msra.mxu0 0.0
        %4723 = vmatprep.subr.mxu0 0.0
        %4724 = vmatpush1.xpose.msra.mxu0 0.0
        %4725 = vmatprep.subr.mxu0 0.0
        %4726 = vmatpush1.xpose.msra.mxu0 0.0
        %4727 = vmatprep.subr.mxu0 0.0
        %4728 = vmatpush1.xpose.msra.mxu0 0.0
        %4729 = vmatprep.subr.mxu0 0.0
        %4730 = vmatpush1.xpose.msra.mxu0 0.0
        %4731 = vmatprep.subr.mxu0 0.0
        %4732 = vmatpush1.xpose.msra.mxu0 0.0
        %4733 = vmatprep.subr.mxu0 0.0
        %4734 = vmatpush1.xpose.msra.mxu0 0.0
        %4735 = vmatprep.subr.mxu0 0.0
        %4736 = vmatpush1.xpose.msra.mxu0 0.0
        %4737 = vmatprep.subr.mxu0 0.0
        %4738 = vmatpush1.xpose.msra.mxu0 %v4705
        %4739 = vmatprep.subr.mxu0 0.0
        %4740 = vmatpush2.xpose.msra.mxu0 0.0
        %4741 = vmatprep.subr.mxu0 0.0
        %4742 = vmatpush2.xpose.msra.mxu0 0.0
        %4743 = vmatprep.subr.mxu0 0.0
        %4744 = vmatpush2.xpose.msra.mxu0 0.0
        %4745 = vmatprep.subr.mxu0 0.0
        %4746 = vmatpush2.xpose.msra.mxu0 0.0
        %4747 = vmatprep.subr.mxu0 0.0
        %4748 = vmatpush2.xpose.msra.mxu0 0.0
        %4749 = vmatprep.subr.mxu0 0.0
        %4750 = vmatpush2.xpose.msra.mxu0 0.0
        %4751 = vmatprep.subr.mxu0 0.0
        %4752 = vmatpush2.xpose.msra.mxu0 0.0
        %4753 = vmatprep.subr.mxu0 0.0
        %4754 = vmatpush2.xpose.msra.mxu0 0.0
        %4755 = vmatprep.subr.mxu0 0.0
        %4756 = vmatpush2.xpose.msra.mxu0 0.0
        %4757 = vmatprep.subr.mxu0 0.0
        %4758 = vmatpush2.xpose.msra.mxu0 0.0
        %4759 = vmatprep.subr.mxu0 0.0
        %4760 = vmatpush2.xpose.msra.mxu0 0.0
        %4761 = vmatprep.subr.mxu0 0.0
        %4762 = vmatpush2.xpose.msra.mxu0 0.0
        %4763 = vmatprep.subr.mxu0 0.0
        %4764 = vmatpush2.xpose.msra.mxu0 0.0
        %4765 = vmatprep.subr.mxu0 0.0
        %4766 = vmatpush2.xpose.msra.mxu0 0.0
        %4767 = vmatprep.subr.mxu0 0.0
        %4768 = vmatpush2.xpose.msra.mxu0 0.0
        %4769 = vmatprep.subr.mxu0 0.0
        %4770 = vmatpush2.xpose.msra.mxu0 0.0
        %4771 = vmatprep.mubr.f32.mxu0 0.0
        %4772 = vmatmul.mubr.f32.gmra.mxu0 %v4614
        %v4773 = vpop.f32.mrf.mxu0
        %v4774 = vadd.f32 0.0, %v4773
        %v4775 = vpop.f32.mrf.mxu0
        %4776 = vdwg.mxu0
        %v4777 = vmul.f32 %v4774, 0.35355338
        %v4778 = vadd.f32 %v4777, %v2423
        %v4779 = vsel %vm1377, %v4778, -inf
        %4780 = vmax.xlane.f32.xlu0 %v4779
        %v4781 = vpop.xlane.xlu0 %4780
        %v4782 = vsub.f32 %v4778, %v4781
        %v4783 = vmul.f32 %v4782, 1.442695
        %v4784 = vpow.pop %v4783
        %v4785 = vsel %vm1377, %v4784, 0.0
        %4786 = vadd.xlane.f32.xlu0 %v4785
        %v4787 = vpop.xlane.xlu0 %4786
        %v4788 = vrcp.pop %v4787
        %v4789 = vmul.f32 %v4784, %v4788
        %v4790 = vmul.f32 %v4609, %v1394
        %v4792 = vsel %vm1377, %v4789, 0
        %4794 = vmatprep.subr.mxu0 0.0
        %4795 = vmatpush1.msra.mxu0 0.0
        %4796 = vmatprep.subr.mxu0 0.0
        %4797 = vmatpush1.msra.mxu0 0.0
        %4798 = vmatprep.subr.mxu0 0.0
        %4799 = vmatpush1.msra.mxu0 0.0
        %4800 = vmatprep.subr.mxu0 0.0
        %4801 = vmatpush1.msra.mxu0 0.0
        %4802 = vmatprep.subr.mxu0 0.0
        %4803 = vmatpush1.msra.mxu0 0.0
        %4804 = vmatprep.subr.mxu0 0.0
        %4805 = vmatpush1.msra.mxu0 0.0
        %4806 = vmatprep.subr.mxu0 0.0
        %4807 = vmatpush1.msra.mxu0 0.0
        %4808 = vmatprep.subr.mxu0 0.0
        %4809 = vmatpush1.msra.mxu0 0.0
        %4810 = vmatprep.subr.mxu0 0.0
        %4811 = vmatpush1.msra.mxu0 0.0
        %4812 = vmatprep.subr.mxu0 0.0
        %4813 = vmatpush1.msra.mxu0 0.0
        %4814 = vmatprep.subr.mxu0 0.0
        %4815 = vmatpush1.msra.mxu0 0.0
        %4816 = vmatprep.subr.mxu0 0.0
        %4817 = vmatpush1.msra.mxu0 0.0
        %4818 = vmatprep.subr.mxu0 0.0
        %4819 = vmatpush1.msra.mxu0 0.0
        %4820 = vmatprep.subr.mxu0 0.0
        %4821 = vmatpush1.msra.mxu0 0.0
        %4822 = vmatprep.subr.mxu0 0.0
        %4823 = vmatpush1.msra.mxu0 0.0
        %4824 = vmatprep.subr.mxu0 0.0
        %4825 = vmatpush1.msra.mxu0 %v4790
        %4826 = vmatprep.subr.mxu0 0.0
        %4827 = vmatpush2.msra.mxu0 0.0
        %4828 = vmatprep.subr.mxu0 0.0
        %4829 = vmatpush2.msra.mxu0 0.0
        %4830 = vmatprep.subr.mxu0 0.0
        %4831 = vmatpush2.msra.mxu0 0.0
        %4832 = vmatprep.subr.mxu0 0.0
        %4833 = vmatpush2.msra.mxu0 0.0
        %4834 = vmatprep.subr.mxu0 0.0
        %4835 = vmatpush2.msra.mxu0 0.0
        %4836 = vmatprep.subr.mxu0 0.0
        %4837 = vmatpush2.msra.mxu0 0.0
        %4838 = vmatprep.subr.mxu0 0.0
        %4839 = vmatpush2.msra.mxu0 0.0
        %4840 = vmatprep.subr.mxu0 0.0
        %4841 = vmatpush2.msra.mxu0 0.0
        %4842 = vmatprep.subr.mxu0 0.0
        %4843 = vmatpush2.msra.mxu0 0.0
        %4844 = vmatprep.subr.mxu0 0.0
        %4845 = vmatpush2.msra.mxu0 0.0
        %4846 = vmatprep.subr.mxu0 0.0
        %4847 = vmatpush2.msra.mxu0 0.0
        %4848 = vmatprep.subr.mxu0 0.0
        %4849 = vmatpush2.msra.mxu0 0.0
        %4850 = vmatprep.subr.mxu0 0.0
        %4851 = vmatpush2.msra.mxu0 0.0
        %4852 = vmatprep.subr.mxu0 0.0
        %4853 = vmatpush2.msra.mxu0 0.0
        %4854 = vmatprep.subr.mxu0 0.0
        %4855 = vmatpush2.msra.mxu0 0.0
        %4856 = vmatprep.subr.mxu0 0.0
        %4857 = vmatpush2.msra.mxu0 0.0
        %4858 = vmatprep.mubr.f32.mxu0 0.0
        %4859 = vmatmul.mubr.f32.gmra.mxu0 %v4792
        %v4860 = vpop.f32.mrf.mxu0
        %v4861 = vadd.f32 0.0, %v4860
        %v4862 = vpop.f32.mrf.mxu0
        %4863 = vdwg.mxu0
        %v4865 = vsel %vm1377, %v4701, 0
        %4867 = vmatprep.subr.mxu0 0.0
        %4868 = vmatpush1.msra.mxu0 0.0
        %4869 = vmatprep.subr.mxu0 0.0
        %4870 = vmatpush1.msra.mxu0 0.0
        %4871 = vmatprep.subr.mxu0 0.0
        %4872 = vmatpush1.msra.mxu0 0.0
        %4873 = vmatprep.subr.mxu0 0.0
        %4874 = vmatpush1.msra.mxu0 0.0
        %4875 = vmatprep.subr.mxu0 0.0
        %4876 = vmatpush1.msra.mxu0 0.0
        %4877 = vmatprep.subr.mxu0 0.0
        %4878 = vmatpush1.msra.mxu0 0.0
        %4879 = vmatprep.subr.mxu0 0.0
        %4880 = vmatpush1.msra.mxu0 0.0
        %4881 = vmatprep.subr.mxu0 0.0
        %4882 = vmatpush1.msra.mxu0 0.0
        %4883 = vmatprep.subr.mxu0 0.0
        %4884 = vmatpush1.msra.mxu0 0.0
        %4885 = vmatprep.subr.mxu0 0.0
        %4886 = vmatpush1.msra.mxu0 0.0
        %4887 = vmatprep.subr.mxu0 0.0
        %4888 = vmatpush1.msra.mxu0 0.0
        %4889 = vmatprep.subr.mxu0 0.0
        %4890 = vmatpush1.msra.mxu0 0.0
        %4891 = vmatprep.subr.mxu0 0.0
        %4892 = vmatpush1.msra.mxu0 0.0
        %4893 = vmatprep.subr.mxu0 0.0
        %4894 = vmatpush1.msra.mxu0 0.0
        %4895 = vmatprep.subr.mxu0 0.0
        %4896 = vmatpush1.msra.mxu0 0.0
        %4897 = vmatprep.subr.mxu0 0.0
        %4898 = vmatpush1.msra.mxu0 %v4702
        %4899 = vmatprep.subr.mxu0 0.0
        %4900 = vmatpush2.msra.mxu0 0.0
        %4901 = vmatprep.subr.mxu0 0.0
        %4902 = vmatpush2.msra.mxu0 0.0
        %4903 = vmatprep.subr.mxu0 0.0
        %4904 = vmatpush2.msra.mxu0 0.0
        %4905 = vmatprep.subr.mxu0 0.0
        %4906 = vmatpush2.msra.mxu0 0.0
        %4907 = vmatprep.subr.mxu0 0.0
        %4908 = vmatpush2.msra.mxu0 0.0
        %4909 = vmatprep.subr.mxu0 0.0
        %4910 = vmatpush2.msra.mxu0 0.0
        %4911 = vmatprep.subr.mxu0 0.0
        %4912 = vmatpush2.msra.mxu0 0.0
        %4913 = vmatprep.subr.mxu0 0.0
        %4914 = vmatpush2.msra.mxu0 0.0
        %4915 = vmatprep.subr.mxu0 0.0
        %4916 = vmatpush2.msra.mxu0 0.0
        %4917 = vmatprep.subr.mxu0 0.0
        %4918 = vmatpush2.msra.mxu0 0.0
        %4919 = vmatprep.subr.mxu0 0.0
        %4920 = vmatpush2.msra.mxu0 0.0
        %4921 = vmatprep.subr.mxu0 0.0
        %4922 = vmatpush2.msra.mxu0 0.0
        %4923 = vmatprep.subr.mxu0 0.0
        %4924 = vmatpush2.msra.mxu0 0.0
        %4925 = vmatprep.subr.mxu0 0.0
        %4926 = vmatpush2.msra.mxu0 0.0
        %4927 = vmatprep.subr.mxu0 0.0
        %4928 = vmatpush2.msra.mxu0 0.0
        %4929 = vmatprep.subr.mxu0 0.0
        %4930 = vmatpush2.msra.mxu0 0.0
        %4931 = vmatprep.mubr.f32.mxu0 0.0
        %4932 = vmatmul.mubr.f32.gmra.mxu0 %v4865
        %v4933 = vpop.f32.mrf.mxu0
        %v4934 = vadd.f32 %v4861, %v4933
        %v4935 = vpop.f32.mrf.mxu0
        %4936 = vdwg.mxu0
        %v4937 = vmul.f32 %v4526, %v1633
        %v4939 = vsel %vm1011, %v4937, 0
        %4941 = vmatprep.subr.mxu0 0.0
        %4942 = vmatpush1.xpose.msra.mxu0 0.0
        %4943 = vmatprep.subr.mxu0 0.0
        %4944 = vmatpush1.xpose.msra.mxu0 0.0
        %4945 = vmatprep.subr.mxu0 0.0
        %4946 = vmatpush1.xpose.msra.mxu0 0.0
        %4947 = vmatprep.subr.mxu0 0.0
        %4948 = vmatpush1.xpose.msra.mxu0 0.0
        %4949 = vmatprep.subr.mxu0 0.0
        %4950 = vmatpush1.xpose.msra.mxu0 0.0
        %4951 = vmatprep.subr.mxu0 0.0
        %4952 = vmatpush1.xpose.msra.mxu0 0.0
        %4953 = vmatprep.subr.mxu0 0.0
        %4954 = vmatpush1.xpose.msra.mxu0 0.0
        %4955 = vmatprep.subr.mxu0 0.0
        %4956 = vmatpush1.xpose.msra.mxu0 0.0
        %4957 = vmatprep.subr.mxu0 0.0
        %4958 = vmatpush1.xpose.msra.mxu0 0.0
        %4959 = vmatprep.subr.mxu0 0.0
        %4960 = vmatpush1.xpose.msra.mxu0 0.0
        %4961 = vmatprep.subr.mxu0 0.0
        %4962 = vmatpush1.xpose.msra.mxu0 0.0
        %4963 = vmatprep.subr.mxu0 0.0
        %4964 = vmatpush1.xpose.msra.mxu0 0.0
        %4965 = vmatprep.subr.mxu0 0.0
        %4966 = vmatpush1.xpose.msra.mxu0 0.0
        %4967 = vmatprep.subr.mxu0 0.0
        %4968 = vmatpush1.xpose.msra.mxu0 0.0
        %4969 = vmatprep.subr.mxu0 0.0
        %4970 = vmatpush1.xpose.msra.mxu0 0.0
        %4971 = vmatprep.subr.mxu0 0.0
        %4972 = vmatpush1.xpose.msra.mxu0 %v4939
        %4973 = vmatprep.subr.mxu0 0.0
        %4974 = vmatpush2.xpose.msra.mxu0 0.0
        %4975 = vmatprep.subr.mxu0 0.0
        %4976 = vmatpush2.xpose.msra.mxu0 0.0
        %4977 = vmatprep.subr.mxu0 0.0
        %4978 = vmatpush2.xpose.msra.mxu0 0.0
        %4979 = vmatprep.subr.mxu0 0.0
        %4980 = vmatpush2.xpose.msra.mxu0 0.0
        %4981 = vmatprep.subr.mxu0 0.0
        %4982 = vmatpush2.xpose.msra.mxu0 0.0
        %4983 = vmatprep.subr.mxu0 0.0
        %4984 = vmatpush2.xpose.msra.mxu0 0.0
        %4985 = vmatprep.subr.mxu0 0.0
        %4986 = vmatpush2.xpose.msra.mxu0 0.0
        %4987 = vmatprep.subr.mxu0 0.0
        %4988 = vmatpush2.xpose.msra.mxu0 0.0
        %4989 = vmatprep.subr.mxu0 0.0
        %4990 = vmatpush2.xpose.msra.mxu0 0.0
        %4991 = vmatprep.subr.mxu0 0.0
        %4992 = vmatpush2.xpose.msra.mxu0 0.0
        %4993 = vmatprep.subr.mxu0 0.0
        %4994 = vmatpush2.xpose.msra.mxu0 0.0
        %4995 = vmatprep.subr.mxu0 0.0
        %4996 = vmatpush2.xpose.msra.mxu0 0.0
        %4997 = vmatprep.subr.mxu0 0.0
        %4998 = vmatpush2.xpose.msra.mxu0 0.0
        %4999 = vmatprep.subr.mxu0 0.0
        %5000 = vmatpush2.xpose.msra.mxu0 0.0
        %5001 = vmatprep.subr.mxu0 0.0
        %5002 = vmatpush2.xpose.msra.mxu0 0.0
        %5003 = vmatprep.subr.mxu0 0.0
        %5004 = vmatpush2.xpose.msra.mxu0 0.0
        %5005 = vmatprep.mubr.f32.mxu0 0.0
        %5006 = vmatmul.mubr.f32.gmra.mxu0 %v4614
        %v5007 = vpop.f32.mrf.mxu0
        %v5008 = vadd.f32 0.0, %v5007
        %v5009 = vpop.f32.mrf.mxu0
        %5010 = vdwg.mxu0
        %v5011 = vmul.f32 %v5008, 0.35355338
        %v5012 = vadd.f32 %v5011, %v2423
        %v5013 = vsel %vm1377, %v5012, -inf
        %5014 = vmax.xlane.f32.xlu0 %v5013
        %v5015 = vpop.xlane.xlu0 %5014
        %v5016 = vsub.f32 %v5012, %v5015
        %v5017 = vmul.f32 %v5016, 1.442695
        %v5018 = vpow.pop %v5017
        %v5019 = vsel %vm1377, %v5018, 0.0
        %5020 = vadd.xlane.f32.xlu0 %v5019
        %v5021 = vpop.xlane.xlu0 %5020
        %v5022 = vrcp.pop %v5021
        %v5023 = vmul.f32 %v5018, %v5022
        %v5024 = vmul.f32 %v4609, %v1633
        %v5026 = vsel %vm1377, %v5023, 0
        %5028 = vmatprep.subr.mxu0 0.0
        %5029 = vmatpush1.msra.mxu0 0.0
        %5030 = vmatprep.subr.mxu0 0.0
        %5031 = vmatpush1.msra.mxu0 0.0
        %5032 = vmatprep.subr.mxu0 0.0
        %5033 = vmatpush1.msra.mxu0 0.0
        %5034 = vmatprep.subr.mxu0 0.0
        %5035 = vmatpush1.msra.mxu0 0.0
        %5036 = vmatprep.subr.mxu0 0.0
        %5037 = vmatpush1.msra.mxu0 0.0
        %5038 = vmatprep.subr.mxu0 0.0
        %5039 = vmatpush1.msra.mxu0 0.0
        %5040 = vmatprep.subr.mxu0 0.0
        %5041 = vmatpush1.msra.mxu0 0.0
        %5042 = vmatprep.subr.mxu0 0.0
        %5043 = vmatpush1.msra.mxu0 0.0
        %5044 = vmatprep.subr.mxu0 0.0
        %5045 = vmatpush1.msra.mxu0 0.0
        %5046 = vmatprep.subr.mxu0 0.0
        %5047 = vmatpush1.msra.mxu0 0.0
        %5048 = vmatprep.subr.mxu0 0.0
        %5049 = vmatpush1.msra.mxu0 0.0
        %5050 = vmatprep.subr.mxu0 0.0
        %5051 = vmatpush1.msra.mxu0 0.0
        %5052 = vmatprep.subr.mxu0 0.0
        %5053 = vmatpush1.msra.mxu0 0.0
        %5054 = vmatprep.subr.mxu0 0.0
        %5055 = vmatpush1.msra.mxu0 0.0
        %5056 = vmatprep.subr.mxu0 0.0
        %5057 = vmatpush1.msra.mxu0 0.0
        %5058 = vmatprep.subr.mxu0 0.0
        %5059 = vmatpush1.msra.mxu0 %v5024
        %5060 = vmatprep.subr.mxu0 0.0
        %5061 = vmatpush2.msra.mxu0 0.0
        %5062 = vmatprep.subr.mxu0 0.0
        %5063 = vmatpush2.msra.mxu0 0.0
        %5064 = vmatprep.subr.mxu0 0.0
        %5065 = vmatpush2.msra.mxu0 0.0
        %5066 = vmatprep.subr.mxu0 0.0
        %5067 = vmatpush2.msra.mxu0 0.0
        %5068 = vmatprep.subr.mxu0 0.0
        %5069 = vmatpush2.msra.mxu0 0.0
        %5070 = vmatprep.subr.mxu0 0.0
        %5071 = vmatpush2.msra.mxu0 0.0
        %5072 = vmatprep.subr.mxu0 0.0
        %5073 = vmatpush2.msra.mxu0 0.0
        %5074 = vmatprep.subr.mxu0 0.0
        %5075 = vmatpush2.msra.mxu0 0.0
        %5076 = vmatprep.subr.mxu0 0.0
        %5077 = vmatpush2.msra.mxu0 0.0
        %5078 = vmatprep.subr.mxu0 0.0
        %5079 = vmatpush2.msra.mxu0 0.0
        %5080 = vmatprep.subr.mxu0 0.0
        %5081 = vmatpush2.msra.mxu0 0.0
        %5082 = vmatprep.subr.mxu0 0.0
        %5083 = vmatpush2.msra.mxu0 0.0
        %5084 = vmatprep.subr.mxu0 0.0
        %5085 = vmatpush2.msra.mxu0 0.0
        %5086 = vmatprep.subr.mxu0 0.0
        %5087 = vmatpush2.msra.mxu0 0.0
        %5088 = vmatprep.subr.mxu0 0.0
        %5089 = vmatpush2.msra.mxu0 0.0
        %5090 = vmatprep.subr.mxu0 0.0
        %5091 = vmatpush2.msra.mxu0 0.0
        %5092 = vmatprep.mubr.f32.mxu0 0.0
        %5093 = vmatmul.mubr.f32.gmra.mxu0 %v5026
        %v5094 = vpop.f32.mrf.mxu0
        %v5095 = vadd.f32 0.0, %v5094
        %v5096 = vpop.f32.mrf.mxu0
        %5097 = vdwg.mxu0
        %v5098 = vadd.f32 %v4934, %v5095
        %v5099 = vmul.f32 %v4526, %v1800
        %v5101 = vsel %vm1011, %v5099, 0
        %5103 = vmatprep.subr.mxu0 0.0
        %5104 = vmatpush1.xpose.msra.mxu0 0.0
        %5105 = vmatprep.subr.mxu0 0.0
        %5106 = vmatpush1.xpose.msra.mxu0 0.0
        %5107 = vmatprep.subr.mxu0 0.0
        %5108 = vmatpush1.xpose.msra.mxu0 0.0
        %5109 = vmatprep.subr.mxu0 0.0
        %5110 = vmatpush1.xpose.msra.mxu0 0.0
        %5111 = vmatprep.subr.mxu0 0.0
        %5112 = vmatpush1.xpose.msra.mxu0 0.0
        %5113 = vmatprep.subr.mxu0 0.0
        %5114 = vmatpush1.xpose.msra.mxu0 0.0
        %5115 = vmatprep.subr.mxu0 0.0
        %5116 = vmatpush1.xpose.msra.mxu0 0.0
        %5117 = vmatprep.subr.mxu0 0.0
        %5118 = vmatpush1.xpose.msra.mxu0 0.0
        %5119 = vmatprep.subr.mxu0 0.0
        %5120 = vmatpush1.xpose.msra.mxu0 0.0
        %5121 = vmatprep.subr.mxu0 0.0
        %5122 = vmatpush1.xpose.msra.mxu0 0.0
        %5123 = vmatprep.subr.mxu0 0.0
        %5124 = vmatpush1.xpose.msra.mxu0 0.0
        %5125 = vmatprep.subr.mxu0 0.0
        %5126 = vmatpush1.xpose.msra.mxu0 0.0
        %5127 = vmatprep.subr.mxu0 0.0
        %5128 = vmatpush1.xpose.msra.mxu0 0.0
        %5129 = vmatprep.subr.mxu0 0.0
        %5130 = vmatpush1.xpose.msra.mxu0 0.0
        %5131 = vmatprep.subr.mxu0 0.0
        %5132 = vmatpush1.xpose.msra.mxu0 0.0
        %5133 = vmatprep.subr.mxu0 0.0
        %5134 = vmatpush1.xpose.msra.mxu0 %v5101
        %5135 = vmatprep.subr.mxu0 0.0
        %5136 = vmatpush2.xpose.msra.mxu0 0.0
        %5137 = vmatprep.subr.mxu0 0.0
        %5138 = vmatpush2.xpose.msra.mxu0 0.0
        %5139 = vmatprep.subr.mxu0 0.0
        %5140 = vmatpush2.xpose.msra.mxu0 0.0
        %5141 = vmatprep.subr.mxu0 0.0
        %5142 = vmatpush2.xpose.msra.mxu0 0.0
        %5143 = vmatprep.subr.mxu0 0.0
        %5144 = vmatpush2.xpose.msra.mxu0 0.0
        %5145 = vmatprep.subr.mxu0 0.0
        %5146 = vmatpush2.xpose.msra.mxu0 0.0
        %5147 = vmatprep.subr.mxu0 0.0
        %5148 = vmatpush2.xpose.msra.mxu0 0.0
        %5149 = vmatprep.subr.mxu0 0.0
        %5150 = vmatpush2.xpose.msra.mxu0 0.0
        %5151 = vmatprep.subr.mxu0 0.0
        %5152 = vmatpush2.xpose.msra.mxu0 0.0
        %5153 = vmatprep.subr.mxu0 0.0
        %5154 = vmatpush2.xpose.msra.mxu0 0.0
        %5155 = vmatprep.subr.mxu0 0.0
        %5156 = vmatpush2.xpose.msra.mxu0 0.0
        %5157 = vmatprep.subr.mxu0 0.0
        %5158 = vmatpush2.xpose.msra.mxu0 0.0
        %5159 = vmatprep.subr.mxu0 0.0
        %5160 = vmatpush2.xpose.msra.mxu0 0.0
        %5161 = vmatprep.subr.mxu0 0.0
        %5162 = vmatpush2.xpose.msra.mxu0 0.0
        %5163 = vmatprep.subr.mxu0 0.0
        %5164 = vmatpush2.xpose.msra.mxu0 0.0
        %5165 = vmatprep.subr.mxu0 0.0
        %5166 = vmatpush2.xpose.msra.mxu0 0.0
        %5167 = vmatprep.mubr.f32.mxu0 0.0
        %5168 = vmatmul.mubr.f32.gmra.mxu0 %v4614
        %v5169 = vpop.f32.mrf.mxu0
        %v5170 = vadd.f32 0.0, %v5169
        %v5171 = vpop.f32.mrf.mxu0
        %5172 = vdwg.mxu0
        %v5173 = vmul.f32 %v5170, 0.35355338
        %v5174 = vadd.f32 %v5173, %v2423
        %v5175 = vsel %vm1377, %v5174, -inf
        %5176 = vmax.xlane.f32.xlu0 %v5175
        %v5177 = vpop.xlane.xlu0 %5176
        %v5178 = vsub.f32 %v5174, %v5177
        %v5179 = vmul.f32 %v5178, 1.442695
        %v5180 = vpow.pop %v5179
        %v5181 = vsel %vm1377, %v5180, 0.0
        %5182 = vadd.xlane.f32.xlu0 %v5181
        %v5183 = vpop.xlane.xlu0 %5182
        %v5184 = vrcp.pop %v5183
        %v5185 = vmul.f32 %v5180, %v5184
        %v5186 = vmul.f32 %v4609, %v1800
        %v5188 = vsel %vm1377, %v5185, 0
        %5190 = vmatprep.subr.mxu0 0.0
        %5191 = vmatpush1.msra.mxu0 0.0
        %5192 = vmatprep.subr.mxu0 0.0
        %5193 = vmatpush1.msra.mxu0 0.0
        %5194 = vmatprep.subr.mxu0 0.0
        %5195 = vmatpush1.msra.mxu0 0.0
        %5196 = vmatprep.subr.mxu0 0.0
        %5197 = vmatpush1.msra.mxu0 0.0
        %5198 = vmatprep.subr.mxu0 0.0
        %5199 = vmatpush1.msra.mxu0 0.0
        %5200 = vmatprep.subr.mxu0 0.0
        %5201 = vmatpush1.msra.mxu0 0.0
        %5202 = vmatprep.subr.mxu0 0.0
        %5203 = vmatpush1.msra.mxu0 0.0
        %5204 = vmatprep.subr.mxu0 0.0
        %5205 = vmatpush1.msra.mxu0 0.0
        %5206 = vmatprep.subr.mxu0 0.0
        %5207 = vmatpush1.msra.mxu0 0.0
        %5208 = vmatprep.subr.mxu0 0.0
        %5209 = vmatpush1.msra.mxu0 0.0
        %5210 = vmatprep.subr.mxu0 0.0
        %5211 = vmatpush1.msra.mxu0 0.0
        %5212 = vmatprep.subr.mxu0 0.0
        %5213 = vmatpush1.msra.mxu0 0.0
        %5214 = vmatprep.subr.mxu0 0.0
        %5215 = vmatpush1.msra.mxu0 0.0
        %5216 = vmatprep.subr.mxu0 0.0
        %5217 = vmatpush1.msra.mxu0 0.0
        %5218 = vmatprep.subr.mxu0 0.0
        %5219 = vmatpush1.msra.mxu0 0.0
        %5220 = vmatprep.subr.mxu0 0.0
        %5221 = vmatpush1.msra.mxu0 %v5186
        %5222 = vmatprep.subr.mxu0 0.0
        %5223 = vmatpush2.msra.mxu0 0.0
        %5224 = vmatprep.subr.mxu0 0.0
        %5225 = vmatpush2.msra.mxu0 0.0
        %5226 = vmatprep.subr.mxu0 0.0
        %5227 = vmatpush2.msra.mxu0 0.0
        %5228 = vmatprep.subr.mxu0 0.0
        %5229 = vmatpush2.msra.mxu0 0.0
        %5230 = vmatprep.subr.mxu0 0.0
        %5231 = vmatpush2.msra.mxu0 0.0
        %5232 = vmatprep.subr.mxu0 0.0
        %5233 = vmatpush2.msra.mxu0 0.0
        %5234 = vmatprep.subr.mxu0 0.0
        %5235 = vmatpush2.msra.mxu0 0.0
        %5236 = vmatprep.subr.mxu0 0.0
        %5237 = vmatpush2.msra.mxu0 0.0
        %5238 = vmatprep.subr.mxu0 0.0
        %5239 = vmatpush2.msra.mxu0 0.0
        %5240 = vmatprep.subr.mxu0 0.0
        %5241 = vmatpush2.msra.mxu0 0.0
        %5242 = vmatprep.subr.mxu0 0.0
        %5243 = vmatpush2.msra.mxu0 0.0
        %5244 = vmatprep.subr.mxu0 0.0
        %5245 = vmatpush2.msra.mxu0 0.0
        %5246 = vmatprep.subr.mxu0 0.0
        %5247 = vmatpush2.msra.mxu0 0.0
        %5248 = vmatprep.subr.mxu0 0.0
        %5249 = vmatpush2.msra.mxu0 0.0
        %5250 = vmatprep.subr.mxu0 0.0
        %5251 = vmatpush2.msra.mxu0 0.0
        %5252 = vmatprep.subr.mxu0 0.0
        %5253 = vmatpush2.msra.mxu0 0.0
        %5254 = vmatprep.mubr.f32.mxu0 0.0
        %5255 = vmatmul.mubr.f32.gmra.mxu0 %v5188
        %v5256 = vpop.f32.mrf.mxu0
        %v5257 = vadd.f32 0.0, %v5256
        %v5258 = vpop.f32.mrf.mxu0
        %5259 = vdwg.mxu0
        %v5260 = vadd.f32 %v5098, %v5257
        %s5261 = scalar_lea.vmem [#allocation13], 96
        %v5262 = vld [vmem:[%s5261] sm:$0xff]
        %v5263 = vld [vmem:[%s5261 + $0x8] sm:$0xff]
        %v5264 = vld [vmem:[%s5261 + $0x10] sm:$0xff]
        %v5265 = vld [vmem:[%s5261 + $0x18] sm:$0xff]
        %s5266 = scalar_lea.vmem [#allocation14], 3
        %v5267 = vld [vmem:[%s5266] sm:$0x1]
        %v5269 = vlaneseq
        %v5270 = vshrl.u32 %v5269, 7
        %v5271 = vsub.s32 0, %v5270
        %v5272 = vrot.slane %v5267, %v5271
        %v5275 = vsel %vm1011, %v5260, 0
        %5277 = vmatprep.subr.mxu0 0.0
        %5278 = vmatpush1.msra.mxu0 0.0
        %5279 = vmatprep.subr.mxu0 0.0
        %5280 = vmatpush1.msra.mxu0 0.0
        %5281 = vmatprep.subr.mxu0 0.0
        %5282 = vmatpush1.msra.mxu0 0.0
        %5283 = vmatprep.subr.mxu0 0.0
        %5284 = vmatpush1.msra.mxu0 0.0
        %5285 = vmatprep.subr.mxu0 0.0
        %5286 = vmatpush1.msra.mxu0 0.0
        %5287 = vmatprep.subr.mxu0 0.0
        %5288 = vmatpush1.msra.mxu0 0.0
        %5289 = vmatprep.subr.mxu0 0.0
        %5290 = vmatpush1.msra.mxu0 0.0
        %5291 = vmatprep.subr.mxu0 0.0
        %5292 = vmatpush1.msra.mxu0 0.0
        %5293 = vmatprep.subr.mxu0 0.0
        %5294 = vmatpush1.msra.mxu0 0.0
        %5295 = vmatprep.subr.mxu0 0.0
        %5296 = vmatpush1.msra.mxu0 0.0
        %5297 = vmatprep.subr.mxu0 0.0
        %5298 = vmatpush1.msra.mxu0 0.0
        %5299 = vmatprep.subr.mxu0 0.0
        %5300 = vmatpush1.msra.mxu0 0.0
        %5301 = vmatprep.subr.mxu0 0.0
        %5302 = vmatpush1.msra.mxu0 %v5265
        %5303 = vmatprep.subr.mxu0 0.0
        %5304 = vmatpush1.msra.mxu0 %v5264
        %5305 = vmatprep.subr.mxu0 0.0
        %5306 = vmatpush1.msra.mxu0 %v5263
        %5307 = vmatprep.subr.mxu0 0.0
        %5308 = vmatpush1.msra.mxu0 %v5262
        %5309 = vmatprep.subr.mxu0 0.0
        %5310 = vmatpush2.msra.mxu0 0.0
        %5311 = vmatprep.subr.mxu0 0.0
        %5312 = vmatpush2.msra.mxu0 0.0
        %5313 = vmatprep.subr.mxu0 0.0
        %5314 = vmatpush2.msra.mxu0 0.0
        %5315 = vmatprep.subr.mxu0 0.0
        %5316 = vmatpush2.msra.mxu0 0.0
        %5317 = vmatprep.subr.mxu0 0.0
        %5318 = vmatpush2.msra.mxu0 0.0
        %5319 = vmatprep.subr.mxu0 0.0
        %5320 = vmatpush2.msra.mxu0 0.0
        %5321 = vmatprep.subr.mxu0 0.0
        %5322 = vmatpush2.msra.mxu0 0.0
        %5323 = vmatprep.subr.mxu0 0.0
        %5324 = vmatpush2.msra.mxu0 0.0
        %5325 = vmatprep.subr.mxu0 0.0
        %5326 = vmatpush2.msra.mxu0 0.0
        %5327 = vmatprep.subr.mxu0 0.0
        %5328 = vmatpush2.msra.mxu0 0.0
        %5329 = vmatprep.subr.mxu0 0.0
        %5330 = vmatpush2.msra.mxu0 0.0
        %5331 = vmatprep.subr.mxu0 0.0
        %5332 = vmatpush2.msra.mxu0 0.0
        %5333 = vmatprep.subr.mxu0 0.0
        %5334 = vmatpush2.msra.mxu0 0.0
        %5335 = vmatprep.subr.mxu0 0.0
        %5336 = vmatpush2.msra.mxu0 0.0
        %5337 = vmatprep.subr.mxu0 0.0
        %5338 = vmatpush2.msra.mxu0 0.0
        %5339 = vmatprep.subr.mxu0 0.0
        %5340 = vmatpush2.msra.mxu0 0.0
        %5341 = vmatprep.mubr.f32.mxu0 0.0
        %5342 = vmatmul.mubr.f32.gmra.mxu0 %v5275
        %v5343 = vpop.f32.mrf.mxu0
        %v5344 = vadd.f32 %v5272, %v5343
        %v5345 = vpop.f32.mrf.mxu0
        %5346 = vdwg.mxu0
        %v5347 = vadd.f32 %v4321, %v5344
        %s5348 = scalar_lea.vmem [#allocation5], 5
        %v5349 = vld [vmem:[%s5348] sm:$0x1]
        %s5350 = scalar_lea.vmem [#allocation7], 5
        %v5351 = vld [vmem:[%s5350] sm:$0x1]
        %v5352 = vsel %vm1011, %v5347, 0.0
        %5353 = vadd.xlane.f32.xlu0 %v5352
        %v5354 = vpop.xlane.xlu0 %5353
        %v5355 = vmul.f32 %v5354, %v1015
        %v5356 = vsub.f32 %v5347, %v5355
        %v5357 = vmul.f32 %v5356, %v5356
        %v5358 = vsel %vm1011, %v5357, 0.0
        %5359 = vadd.xlane.f32.xlu0 %v5358
        %v5360 = vpop.xlane.xlu0 %5359
        %v5361 = vmul.f32 %v5360, 0.032258064
        %v5362 = vrsqrt.pop %v5361
        %v5363 = vmul.f32 %v5361, %v5362
        %vm5364 = vcmp.eq.f32.partialorder %v5361, inf
        %v5365 = vsel %vm5364, %v5361, %v5363
        %vm5366 = vcmp.eq.f32.partialorder %v5361, 0.0
        %v5367 = vand.u32 %v5361, 2147483648
        %v5368 = vsel %vm5366, %v5367, %v5365
        %v5369 = vadd.f32 %v5368, 1e-06
        %v5370 = vrcp.pop %v5369
        %v5371 = vmul.f32 %v5356, %v5370
        %v5373 = vlaneseq
        %v5374 = vshrl.u32 %v5373, 7
        %v5375 = vsub.s32 0, %v5374
        %v5376 = vrot.slane %v5349, %v5375
        %v5378 = vmul.f32 %v5376, %v5371
        %v5380 = vlaneseq
        %v5381 = vshrl.u32 %v5380, 7
        %v5382 = vsub.s32 0, %v5381
        %v5383 = vrot.slane %v5351, %v5382
        %v5385 = vadd.f32 %v5378, %v5383
        %s5386 = scalar_lea.vmem [#allocation16], 32
        %v5387 = vld [vmem:[%s5386] sm:$0xff]
        %v5388 = vld [vmem:[%s5386 + $0x8] sm:$0xff]
        %v5389 = vld [vmem:[%s5386 + $0x10] sm:$0xff]
        %v5390 = vld [vmem:[%s5386 + $0x18] sm:$0xff]
        %s5391 = scalar_lea.vmem [#allocation17], 1
        %v5392 = vld [vmem:[%s5391] sm:$0x1]
        %v5394 = vlaneseq
        %v5395 = vshrl.u32 %v5394, 7
        %v5396 = vsub.s32 0, %v5395
        %v5397 = vrot.slane %v5392, %v5396
        %v5400 = vsel %vm1011, %v5385, 0
        %5402 = vmatprep.subr.mxu0 0.0
        %5403 = vmatpush1.msra.mxu0 0.0
        %5404 = vmatprep.subr.mxu0 0.0
        %5405 = vmatpush1.msra.mxu0 0.0
        %5406 = vmatprep.subr.mxu0 0.0
        %5407 = vmatpush1.msra.mxu0 0.0
        %5408 = vmatprep.subr.mxu0 0.0
        %5409 = vmatpush1.msra.mxu0 0.0
        %5410 = vmatprep.subr.mxu0 0.0
        %5411 = vmatpush1.msra.mxu0 0.0
        %5412 = vmatprep.subr.mxu0 0.0
        %5413 = vmatpush1.msra.mxu0 0.0
        %5414 = vmatprep.subr.mxu0 0.0
        %5415 = vmatpush1.msra.mxu0 0.0
        %5416 = vmatprep.subr.mxu0 0.0
        %5417 = vmatpush1.msra.mxu0 0.0
        %5418 = vmatprep.subr.mxu0 0.0
        %5419 = vmatpush1.msra.mxu0 0.0
        %5420 = vmatprep.subr.mxu0 0.0
        %5421 = vmatpush1.msra.mxu0 0.0
        %5422 = vmatprep.subr.mxu0 0.0
        %5423 = vmatpush1.msra.mxu0 0.0
        %5424 = vmatprep.subr.mxu0 0.0
        %5425 = vmatpush1.msra.mxu0 0.0
        %5426 = vmatprep.subr.mxu0 0.0
        %5427 = vmatpush1.msra.mxu0 %v5390
        %5428 = vmatprep.subr.mxu0 0.0
        %5429 = vmatpush1.msra.mxu0 %v5389
        %5430 = vmatprep.subr.mxu0 0.0
        %5431 = vmatpush1.msra.mxu0 %v5388
        %5432 = vmatprep.subr.mxu0 0.0
        %5433 = vmatpush1.msra.mxu0 %v5387
        %5434 = vmatprep.subr.mxu0 0.0
        %5435 = vmatpush2.msra.mxu0 0.0
        %5436 = vmatprep.subr.mxu0 0.0
        %5437 = vmatpush2.msra.mxu0 0.0
        %5438 = vmatprep.subr.mxu0 0.0
        %5439 = vmatpush2.msra.mxu0 0.0
        %5440 = vmatprep.subr.mxu0 0.0
        %5441 = vmatpush2.msra.mxu0 0.0
        %5442 = vmatprep.subr.mxu0 0.0
        %5443 = vmatpush2.msra.mxu0 0.0
        %5444 = vmatprep.subr.mxu0 0.0
        %5445 = vmatpush2.msra.mxu0 0.0
        %5446 = vmatprep.subr.mxu0 0.0
        %5447 = vmatpush2.msra.mxu0 0.0
        %5448 = vmatprep.subr.mxu0 0.0
        %5449 = vmatpush2.msra.mxu0 0.0
        %5450 = vmatprep.subr.mxu0 0.0
        %5451 = vmatpush2.msra.mxu0 0.0
        %5452 = vmatprep.subr.mxu0 0.0
        %5453 = vmatpush2.msra.mxu0 0.0
        %5454 = vmatprep.subr.mxu0 0.0
        %5455 = vmatpush2.msra.mxu0 0.0
        %5456 = vmatprep.subr.mxu0 0.0
        %5457 = vmatpush2.msra.mxu0 0.0
        %5458 = vmatprep.subr.mxu0 0.0
        %5459 = vmatpush2.msra.mxu0 0.0
        %5460 = vmatprep.subr.mxu0 0.0
        %5461 = vmatpush2.msra.mxu0 0.0
        %5462 = vmatprep.subr.mxu0 0.0
        %5463 = vmatpush2.msra.mxu0 0.0
        %5464 = vmatprep.subr.mxu0 0.0
        %5465 = vmatpush2.msra.mxu0 0.0
        %5466 = vmatprep.mubr.f32.mxu0 0.0
        %5467 = vmatmul.mubr.f32.gmra.mxu0 %v5400
        %v5468 = vpop.f32.mrf.mxu0
        %v5469 = vadd.f32 %v5397, %v5468
        %v5470 = vpop.f32.mrf.mxu0
        %5471 = vdwg.mxu0
        %v5472 = vmax.f32 %v5469, 0.0
        %s5473 = scalar_lea.vmem %s18, 64
        %v5474 = vld [vmem:[%s5473] sm:$0xff]
        %v5475 = vld [vmem:[%s5473 + $0x8] sm:$0xff]
        %v5476 = vld [vmem:[%s5473 + $0x10] sm:$0xff]
        %v5477 = vld [vmem:[%s5473 + $0x18] sm:$0xff]
        %v5478 = vld [vmem:[%s5473 + $0x20] sm:$0xff]
        %v5479 = vld [vmem:[%s5473 + $0x28] sm:$0xff]
        %v5480 = vld [vmem:[%s5473 + $0x30] sm:$0xff]
        %v5481 = vld [vmem:[%s5473 + $0x38] sm:$0xff]
        %s5482 = scalar_lea.vmem [#allocation19], 1
        %v5483 = vld [vmem:[%s5482] sm:$0x1]
        %v5485 = vlaneseq
        %v5486 = vshrl.u32 %v5485, 7
        %v5487 = vsub.s32 0, %v5486
        %v5488 = vrot.slane %v5483, %v5487
        %v5491 = vsel %vm3221, %v5472, 0
        %5493 = vmatprep.subr.mxu0 0.0
        %5494 = vmatpush1.msra.mxu0 0.0
        %5495 = vmatprep.subr.mxu0 0.0
        %5496 = vmatpush1.msra.mxu0 0.0
        %5497 = vmatprep.subr.mxu0 0.0
        %5498 = vmatpush1.msra.mxu0 0.0
        %5499 = vmatprep.subr.mxu0 0.0
        %5500 = vmatpush1.msra.mxu0 0.0
        %5501 = vmatprep.subr.mxu0 0.0
        %5502 = vmatpush1.msra.mxu0 0.0
        %5503 = vmatprep.subr.mxu0 0.0
        %5504 = vmatpush1.msra.mxu0 0.0
        %5505 = vmatprep.subr.mxu0 0.0
        %5506 = vmatpush1.msra.mxu0 0.0
        %5507 = vmatprep.subr.mxu0 0.0
        %5508 = vmatpush1.msra.mxu0 0.0
        %5509 = vmatprep.subr.mxu0 0.0
        %5510 = vmatpush1.msra.mxu0 %v5481
        %5511 = vmatprep.subr.mxu0 0.0
        %5512 = vmatpush1.msra.mxu0 %v5480
        %5513 = vmatprep.subr.mxu0 0.0
        %5514 = vmatpush1.msra.mxu0 %v5479
        %5515 = vmatprep.subr.mxu0 0.0
        %5516 = vmatpush1.msra.mxu0 %v5478
        %5517 = vmatprep.subr.mxu0 0.0
        %5518 = vmatpush1.msra.mxu0 %v5477
        %5519 = vmatprep.subr.mxu0 0.0
        %5520 = vmatpush1.msra.mxu0 %v5476
        %5521 = vmatprep.subr.mxu0 0.0
        %5522 = vmatpush1.msra.mxu0 %v5475
        %5523 = vmatprep.subr.mxu0 0.0
        %5524 = vmatpush1.msra.mxu0 %v5474
        %5525 = vmatprep.subr.mxu0 0.0
        %5526 = vmatpush2.msra.mxu0 0.0
        %5527 = vmatprep.subr.mxu0 0.0
        %5528 = vmatpush2.msra.mxu0 0.0
        %5529 = vmatprep.subr.mxu0 0.0
        %5530 = vmatpush2.msra.mxu0 0.0
        %5531 = vmatprep.subr.mxu0 0.0
        %5532 = vmatpush2.msra.mxu0 0.0
        %5533 = vmatprep.subr.mxu0 0.0
        %5534 = vmatpush2.msra.mxu0 0.0
        %5535 = vmatprep.subr.mxu0 0.0
        %5536 = vmatpush2.msra.mxu0 0.0
        %5537 = vmatprep.subr.mxu0 0.0
        %5538 = vmatpush2.msra.mxu0 0.0
        %5539 = vmatprep.subr.mxu0 0.0
        %5540 = vmatpush2.msra.mxu0 0.0
        %5541 = vmatprep.subr.mxu0 0.0
        %5542 = vmatpush2.msra.mxu0 0.0
        %5543 = vmatprep.subr.mxu0 0.0
        %5544 = vmatpush2.msra.mxu0 0.0
        %5545 = vmatprep.subr.mxu0 0.0
        %5546 = vmatpush2.msra.mxu0 0.0
        %5547 = vmatprep.subr.mxu0 0.0
        %5548 = vmatpush2.msra.mxu0 0.0
        %5549 = vmatprep.subr.mxu0 0.0
        %5550 = vmatpush2.msra.mxu0 0.0
        %5551 = vmatprep.subr.mxu0 0.0
        %5552 = vmatpush2.msra.mxu0 0.0
        %5553 = vmatprep.subr.mxu0 0.0
        %5554 = vmatpush2.msra.mxu0 0.0
        %5555 = vmatprep.subr.mxu0 0.0
        %5556 = vmatpush2.msra.mxu0 0.0
        %5557 = vmatprep.mubr.f32.mxu0 0.0
        %5558 = vmatmul.mubr.f32.gmra.mxu0 %v5491
        %v5559 = vpop.f32.mrf.mxu0
        %v5560 = vadd.f32 %v5488, %v5559
        %v5561 = vpop.f32.mrf.mxu0
        %5562 = vdwg.mxu0
        %v5563 = vadd.f32 %v5347, %v5560
        %v5564 = vld [vmem:[%s20] sm:$0x1]
        %v5565 = vld [vmem:[#allocation20] sm:$0x1]
        %v5566 = vsel %vm1011, %v5563, 0.0
        %5567 = vadd.xlane.f32.xlu0 %v5566
        %v5568 = vpop.xlane.xlu0 %5567
        %v5569 = vmul.f32 %v5568, %v1015
        %v5570 = vsub.f32 %v5563, %v5569
        %v5571 = vmul.f32 %v5570, %v5570
        %v5572 = vsel %vm1011, %v5571, 0.0
        %5573 = vadd.xlane.f32.xlu0 %v5572
        %v5574 = vpop.xlane.xlu0 %5573
        %v5575 = vmul.f32 %v5574, 0.032258064
        %v5576 = vrsqrt.pop %v5575
        %v5577 = vmul.f32 %v5575, %v5576
        %vm5578 = vcmp.eq.f32.partialorder %v5575, inf
        %v5579 = vsel %vm5578, %v5575, %v5577
        %vm5580 = vcmp.eq.f32.partialorder %v5575, 0.0
        %v5581 = vand.u32 %v5575, 2147483648
        %v5582 = vsel %vm5580, %v5581, %v5579
        %v5583 = vadd.f32 %v5582, 1e-06
        %v5584 = vrcp.pop %v5583
        %v5585 = vmul.f32 %v5570, %v5584
        %v5587 = vlaneseq
        %v5588 = vshrl.u32 %v5587, 7
        %v5589 = vsub.s32 0, %v5588
        %v5590 = vrot.slane %v5564, %v5589
        %v5592 = vmul.f32 %v5590, %v5585
        %v5594 = vlaneseq
        %v5595 = vshrl.u32 %v5594, 7
        %v5596 = vsub.s32 0, %v5595
        %v5597 = vrot.slane %v5565, %v5596
        %v5599 = vadd.f32 %v5592, %v5597
        %5600 = vst.msk [vmem:[%s893] sm:$0xff] %vm1011, %v5599
        %s5601 = sand.u32 %s535, 1
        %s5602 = scalar_lea.sflag [#allocation4], %s5601
        %s5603 = sand.u32 %s535, 1
        %s5604 = smul.addr %s5603, 8
        %s5605 = scalar_lea.vmem [#allocation22], %s5604
        // Predicated region
        $region157: #{decoder_forward.1} parent=107 // pred_check
          %p5606 = pneg %p545
        $region158: #{decoder_forward.1} parent=107 // pred_check_branch
          %5608 = sbr.rel (%p5606) target = $region160
        $region159: #{decoder_forward.1} parent=107 // pred_region
          %s5610 = ssub.s32 128, 128
          %5611 = vsyncadd %s5602, %s5610
          %s5612 = smul.addr %s45, 128
          %s5613 = scalar_lea.hbm %s22, %s5612
          %s5615 = sshll.u32 %s5605, 4
          %s5616 = int_to_ptr.vmem [resolvable:$true] %s5615
          %5618 = dma.vmem_to_hbm [thread:$0]  %s5616, 128, %s5613, %s5602
        $region160: #{decoder_forward.1} parent=107 // pred_fallthru
          _
      $region108: #{decoder_forward.1} parent=5 // pred_fallthru
        _
      %p5619 = scmp.le.s32.totalorder 2, %s40
      // Predicated region
      $region161: #{decoder_forward.1} parent=5 // pred_check
        %p5620 = pneg %p5619
      $region162: #{decoder_forward.1} parent=5 // pred_check_branch
        %5622 = sbr.rel (%p5620) target = $region164
      $region163: #{decoder_forward.1} parent=5 // pred_region
        %s5623 = ssub.s32 %s40, 2
        // Predicated region
        $region165: #{decoder_forward.1} parent=163 // pred_check
          %p5624 = pneg %p551
        $region166: #{decoder_forward.1} parent=163 // pred_check_branch
          %5626 = sbr.rel (%p5624) target = $region168
        $region167: #{decoder_forward.1} parent=163 // pred_region
          %s5627 = sand.u32 %s536, 1
          %s5628 = scalar_lea.sflag [#allocation4], %s5627
          %s5629 = sand.u32 %s536, 1
          %s5630 = smul.addr %s5629, 8
          %s5631 = scalar_lea.vmem [#allocation22], %s5630
          %5632 = dma.done %s5628, 128
        $region168: #{decoder_forward.1} parent=163 // pred_fallthru
          _
      $region164: #{decoder_forward.1} parent=5 // pred_fallthru
        _
    $region6: #{decoder_forward.1} parent=1 // loop_footer
      %s44 = sadd.s32 1, %s40
    $region7: #{decoder_forward.1} parent=1 // loop_footer_branch
      %39 = sbr.rel target = $region3
    $region8: #{decoder_forward.1} parent=1 // loop_exit
      _
    %5633 = vsyncpa [#allocation3], 1
    %s5634 = scalar_lea.sflag [#allocation3], 1
    %5635 = vsyncpa %s5634, 1
    %5636 = vsyncpa [#allocation6], 1
    %5637 = vsyncpa [#allocation9], 1
    %5638 = vsyncpa [#allocation12], 1
    %5639 = vsyncpa [#allocation15], 1
    %5640 = vsyncpa [#allocation18], 1
    %5641 = vsyncpa [#allocation21], 1
    %5642 = vsyncpa [#allocation4], 1
    %s5643 = scalar_lea.sflag [#allocation4], 1
    %5644 = vsyncpa %s5643, 1

</llo_original>
